<compile_context>
chip_gen: v7x
topology: tpu7x:2x2x1
jax: 0.10.0
libtpu: 0.0.40
codegen_flags: <defaults>
</compile_context>

<pallas_src>
import jax
import jax.numpy as jnp
from jax.experimental import pallas as pl
from jax.experimental.pallas import tpu as pltpu

# ----------------------------- configuration --------------------------------
B = 2                      # batch
C = 3                      # image channels
IMG = 16                   # image height / width
PATCH = 8                  # patch size
NUM_PATCHES = (IMG // PATCH) ** 2          # 4
SEQ = NUM_PATCHES + 1                      # +1 CLS token -> 5
PATCH_DIM = C * PATCH * PATCH              # 192
HIDDEN = 32                # hidden_size (small stand-in for 1024)
HEADS = 4
HEAD_DIM = HIDDEN // HEADS                 # 8
MLP = 4 * HIDDEN                           # 128
LAYERS = 2
OUT_DIM = 384              # fc head output, fixed by the module
EPS = 1e-12                # HF ViT layer_norm_eps (tiny vs f32 eps; kept for parity)
SCALE = 1.0 / (HEAD_DIM ** 0.5)

PARAM_ORDER = [
    "patch_w", "patch_b", "cls", "pos",
    "ln1_g", "ln1_b", "w_qkv", "b_qkv", "w_o", "b_o",
    "ln2_g", "ln2_b", "w_mlp1", "b_mlp1", "w_mlp2", "b_mlp2",
    "lnf_g", "lnf_b", "w_pool", "b_pool", "w_head", "b_head",
]


# ------------------------------ Pallas kernel --------------------------------
def _layer_norm(z, g, b):
    mu = jnp.mean(z, axis=-1, keepdims=True)
    var = jnp.mean(jnp.square(z - mu), axis=-1, keepdims=True)
    return (z - mu) * jax.lax.rsqrt(var + EPS) * g + b


def vit_kernel(patches_ref, patch_w_ref, patch_b_ref, cls_ref, pos_ref,
               ln1_g_ref, ln1_b_ref, w_qkv_ref, b_qkv_ref, w_o_ref, b_o_ref,
               ln2_g_ref, ln2_b_ref, w_mlp1_ref, b_mlp1_ref,
               w_mlp2_ref, b_mlp2_ref, lnf_g_ref, lnf_b_ref,
               w_pool_ref, b_pool_ref, w_head_ref, b_head_ref,
               out_ref):
    bf16 = jnp.bfloat16

    # ---- patch embedding for the WHOLE batch: (B*NP, PATCH_DIM) @ (PATCH_DIM, H) ----
    emb = jnp.dot(patches_ref[...], patch_w_ref[...],
                  preferred_element_type=jnp.float32) + patch_b_ref[...]   # (B*NP, H) f32

    # ---- prepend CLS token per image, add positional embeddings (all in vregs) ----
    emb3 = emb.reshape(B, NUM_PATCHES, HIDDEN)
    cls3 = jnp.broadcast_to(cls_ref[...].reshape(1, 1, HIDDEN), (B, 1, HIDDEN))
    x3 = jnp.concatenate([cls3, emb3], axis=1) + pos_ref[...]              # (B, SEQ, H)
    x = x3.reshape(B * SEQ, HIDDEN)                                        # residual, f32

    def merge_heads(t3):
        # (B, SEQ, HIDDEN) -> (HEADS*B, SEQ, HEAD_DIM); block i holds head i for all b.
        return jnp.concatenate(
            [t3[:, :, i * HEAD_DIM:(i + 1) * HEAD_DIM] for i in range(HEADS)], axis=0)

    # ---- transformer encoder (pre-norm, HF ViTLayer structure) ----
    for l in range(LAYERS):
        # --- self-attention block ---
        h = _layer_norm(x, ln1_g_ref[l], ln1_b_ref[l]).astype(bf16)
        qkv = jnp.dot(h, w_qkv_ref[l],
                      preferred_element_type=jnp.float32) + b_qkv_ref[l]   # (B*SEQ, 3H)
        qkv3 = qkv.reshape(B, SEQ, 3 * HIDDEN)

        q = merge_heads(qkv3[:, :, 0 * HIDDEN:1 * HIDDEN]).astype(bf16)    # (HB, SEQ, D)
        k = merge_heads(qkv3[:, :, 1 * HIDDEN:2 * HIDDEN]).astype(bf16)
        v = merge_heads(qkv3[:, :, 2 * HIDDEN:3 * HIDDEN]).astype(bf16)

        # head+batch batched scores / context: single dot_generals, batch dim = HEADS*B
        s = jax.lax.dot_general(q, k, (((2,), (2,)), ((0,), (0,))),
                                preferred_element_type=jnp.float32) * SCALE  # (HB,S,S)
        s = s - jnp.max(s, axis=-1, keepdims=True)
        p = jnp.exp(s)
        p = p * pl.reciprocal(jnp.sum(p, axis=-1, keepdims=True), approx=True)
        ctx_hb = jax.lax.dot_general(p.astype(bf16), v, (((2,), (1,)), ((0,), (0,))),
                                     preferred_element_type=jnp.float32)     # (HB,S,D)

        # concatenate heads back on the lane axis, then ONE (B*SEQ,H)x(H,H) matmul
        ctx = jnp.concatenate([ctx_hb[i * B:(i + 1) * B] for i in range(HEADS)],
                              axis=-1)                                       # (B,SEQ,H)
        ctx = ctx.reshape(B * SEQ, HIDDEN).astype(bf16)
        x = x + jnp.dot(ctx, w_o_ref[l],
                        preferred_element_type=jnp.float32) + b_o_ref[l]

        # --- MLP block ---
        h2 = _layer_norm(x, ln2_g_ref[l], ln2_b_ref[l]).astype(bf16)
        m = jnp.dot(h2, w_mlp1_ref[l],
                    preferred_element_type=jnp.float32) + b_mlp1_ref[l]
        # TODO(synk): torch nn.GELU default is exact erf; tanh approximation used here.
        m = jax.nn.gelu(m, approximate=True).astype(bf16)
        x = x + jnp.dot(m, w_mlp2_ref[l],
                        preferred_element_type=jnp.float32) + b_mlp2_ref[l]

    # ---- final LN + pooler (tanh(dense(CLS))) + fc head ----
    xf = _layer_norm(x, lnf_g_ref[...], lnf_b_ref[...])
    cls_tok = xf.reshape(B, SEQ, HIDDEN)[:, 0, :].astype(bf16)               # (B, H)
    pooled = jnp.tanh(jnp.dot(cls_tok, w_pool_ref[...],
                              preferred_element_type=jnp.float32) + b_pool_ref[...])
    out_ref[...] = jnp.dot(pooled.astype(bf16), w_head_ref[...],
                           preferred_element_type=jnp.float32) + b_head_ref[...]


# ------------------------------ wrapper / glue --------------------------------
def extract_patches(x):
    # x: (B, C, H, W) NCHW -> (B, num_patches, C*P*P); patch vector order [c, ph, pw]
    b, c, h, w = x.shape
    x = x.reshape(b, c, h // PATCH, PATCH, w // PATCH, PATCH)
    x = x.transpose(0, 2, 4, 1, 3, 5)
    return x.reshape(b, (h // PATCH) * (w // PATCH), c * PATCH * PATCH)


@jax.jit
def hf_vit_forward(x, params):
    # flatten the patch-embed matmul over the whole batch; bf16 operand for the MXU
    patches = extract_patches(x).reshape(B * NUM_PATCHES, PATCH_DIM).astype(jnp.bfloat16)
    plist = [params[k] for k in PARAM_ORDER]

    # single kernel invocation (no grid): whole arrays live in VMEM, DMA'd once,
    # no double buffering. Total footprint is a few hundred KB -> fine on all chips.
    n_in = 1 + len(plist)
    out = pl.pallas_call(
        vit_kernel,
        out_shape=jax.ShapeDtypeStruct((B, OUT_DIM), jnp.float32),
        in_specs=[pl.BlockSpec(memory_space=pltpu.MemorySpace.VMEM)
                  for _ in range(n_in)],
        out_specs=pl.BlockSpec(memory_space=pltpu.MemorySpace.VMEM),
    )(patches, *plist)
    return out


# ------------------------------ parameter init --------------------------------
def init_params(key):
    keys = iter(jax.random.split(key, 64))

    def rnd(shape, dtype=jnp.float32, scale=0.02):
        return (scale * jax.random.normal(next(keys), shape, jnp.float32)).astype(dtype)

    bf16 = jnp.bfloat16
    return {
        # matmul weights in bf16 (MXU-native, half the DMA); everything else f32
        "patch_w": rnd((PATCH_DIM, HIDDEN), bf16),
        "patch_b": rnd((1, HIDDEN)),
        "cls": rnd((1, HIDDEN)),
        "pos": rnd((SEQ, HIDDEN)),
        "ln1_g": jnp.ones((LAYERS, 1, HIDDEN), jnp.float32),
        "ln1_b": jnp.zeros((LAYERS, 1, HIDDEN), jnp.float32),
        "w_qkv": rnd((LAYERS, HIDDEN, 3 * HIDDEN), bf16),
        "b_qkv": rnd((LAYERS, 1, 3 * HIDDEN)),
        "w_o": rnd((LAYERS, HIDDEN, HIDDEN), bf16),
        "b_o": rnd((LAYERS, 1, HIDDEN)),
        "ln2_g": jnp.ones((LAYERS, 1, HIDDEN), jnp.float32),
        "ln2_b": jnp.zeros((LAYERS, 1, HIDDEN), jnp.float32),
        "w_mlp1": rnd((LAYERS, HIDDEN, MLP), bf16),
        "b_mlp1": rnd((LAYERS, 1, MLP)),
        "w_mlp2": rnd((LAYERS, MLP, HIDDEN), bf16),
        "b_mlp2": rnd((LAYERS, 1, HIDDEN)),
        "lnf_g": jnp.ones((1, HIDDEN), jnp.float32),
        "lnf_b": jnp.zeros((1, HIDDEN), jnp.float32),
        "w_pool": rnd((HIDDEN, HIDDEN), bf16),
        "b_pool": rnd((1, HIDDEN)),
        "w_head": rnd((HIDDEN, OUT_DIM), bf16),
        "b_head": rnd((1, OUT_DIM)),
    }


# ------------------------------ pure-JAX reference ----------------------------
def reference_forward(x, params):
    # f32 math throughout (bf16 weights are upcast); kernel differs only by bf16
    # rounding of matmul activations + approx reciprocal in softmax.
    patches = extract_patches(x)
    emb = patches @ params["patch_w"] + params["patch_b"]
    cls = jnp.broadcast_to(params["cls"], (x.shape[0], 1, HIDDEN))
    h = jnp.concatenate([cls, emb], axis=1) + params["pos"][None]

    def ln(z, g, b):
        mu = z.mean(-1, keepdims=True)
        var = ((z - mu) ** 2).mean(-1, keepdims=True)
        return (z - mu) / jnp.sqrt(var + EPS) * g + b

    for l in range(LAYERS):
        hn = ln(h, params["ln1_g"][l], params["ln1_b"][l])
        qkv = hn @ params["w_qkv"][l] + params["b_qkv"][l]
        q, k, v = jnp.split(qkv, 3, axis=-1)

        def heads(t):
            return t.reshape(t.shape[0], SEQ, HEADS, HEAD_DIM).transpose(0, 2, 1, 3)

        qh, kh, vh = heads(q), heads(k), heads(v)
        s = jnp.einsum("bhqd,bhkd->bhqk", qh, kh) * SCALE
        p = jax.nn.softmax(s, axis=-1)
        ctx = jnp.einsum("bhqk,bhkd->bhqd", p, vh)
        ctx = ctx.transpose(0, 2, 1, 3).reshape(x.shape[0], SEQ, HIDDEN)
        h = h + ctx @ params["w_o"][l] + params["b_o"][l]

        hn2 = ln(h, params["ln2_g"][l], params["ln2_b"][l])
        m = jax.nn.gelu(hn2 @ params["w_mlp1"][l] + params["b_mlp1"][l],
                        approximate=True)
        h = h + m @ params["w_mlp2"][l] + params["b_mlp2"][l]

    h = ln(h, params["lnf_g"], params["lnf_b"])
    pooled = jnp.tanh(h[:, 0, :] @ params["w_pool"] + params["b_pool"])
    return pooled @ params["w_head"] + params["b_head"]


# ----------------------------------- main --------------------------------------
if __name__ == "__main__":
    key = jax.random.PRNGKey(0)
    kx, kp = jax.random.split(key)
    x = jax.random.normal(kx, (B, C, IMG, IMG), jnp.float32)   # NCHW, like PyTorch
    params = init_params(kp)

    out = jax.block_until_ready(hf_vit_forward(x, params))
    assert out.shape == (B, OUT_DIM), out.shape

    ref = reference_forward(x, params)
    # tolerance accounts for bf16 matmul operands + approx reciprocal in the kernel
    if not jnp.allclose(out, ref, atol=2e-3, rtol=2e-2):
        err = float(jnp.max(jnp.abs(out - ref)))
        raise AssertionError(f"Pallas kernel mismatch vs JAX reference (max abs err {err})")

    print("KERNEL_OK")
</pallas_src>

<mosaic_0001>
module attributes {stable_mosaic.version = 11 : i64} {
  func.func @vit_kernel(%arg0: memref<8x192xbf16, #tpu.memory_space<vmem>>, %arg1: memref<192x32xbf16, #tpu.memory_space<vmem>>, %arg2: memref<1x32xf32, #tpu.memory_space<vmem>>, %arg3: memref<1x32xf32, #tpu.memory_space<vmem>>, %arg4: memref<5x32xf32, #tpu.memory_space<vmem>>, %arg5: memref<2x1x32xf32, #tpu.memory_space<vmem>>, %arg6: memref<2x1x32xf32, #tpu.memory_space<vmem>>, %arg7: memref<2x32x96xbf16, #tpu.memory_space<vmem>>, %arg8: memref<2x1x96xf32, #tpu.memory_space<vmem>>, %arg9: memref<2x32x32xbf16, #tpu.memory_space<vmem>>, %arg10: memref<2x1x32xf32, #tpu.memory_space<vmem>>, %arg11: memref<2x1x32xf32, #tpu.memory_space<vmem>>, %arg12: memref<2x1x32xf32, #tpu.memory_space<vmem>>, %arg13: memref<2x32x128xbf16, #tpu.memory_space<vmem>>, %arg14: memref<2x1x128xf32, #tpu.memory_space<vmem>>, %arg15: memref<2x128x32xbf16, #tpu.memory_space<vmem>>, %arg16: memref<2x1x32xf32, #tpu.memory_space<vmem>>, %arg17: memref<1x32xf32, #tpu.memory_space<vmem>>, %arg18: memref<1x32xf32, #tpu.memory_space<vmem>>, %arg19: memref<32x32xbf16, #tpu.memory_space<vmem>>, %arg20: memref<1x32xf32, #tpu.memory_space<vmem>>, %arg21: memref<32x384xbf16, #tpu.memory_space<vmem>>, %arg22: memref<1x384xf32, #tpu.memory_space<vmem>>, %arg23: memref<2x384xf32, #tpu.memory_space<vmem>>) attributes {dimension_semantics = [], scalar_prefetch = 0 : i64, scratch_operands = 0 : i64, tpu.core_type = #tpu.core_type<tc>} {
    %c0 = arith.constant 0 : index
    %c0_0 = arith.constant 0 : index
    %0 = vector.load %arg0[%c0, %c0_0] : memref<8x192xbf16, #tpu.memory_space<vmem>>, vector<8x192xbf16>
    %c0_1 = arith.constant 0 : index
    %c0_2 = arith.constant 0 : index
    %1 = vector.load %arg1[%c0_1, %c0_2] : memref<192x32xbf16, #tpu.memory_space<vmem>>, vector<192x32xbf16>
    %cst = arith.constant dense<0.000000e+00> : vector<8x32xf32>
    %2 = tpu.matmul %0, %1, %cst {dimension_numbers = #tpu.dot_dimension_numbers<[1], [0], [0], [1], [0, 0, 1, 1], [], []>} : vector<8x192xbf16>, vector<192x32xbf16>, vector<8x32xf32> -> vector<8x32xf32>
    %c0_3 = arith.constant 0 : index
    %c0_4 = arith.constant 0 : index
    %3 = vector.load %arg2[%c0_3, %c0_4] : memref<1x32xf32, #tpu.memory_space<vmem>>, vector<1x32xf32>
    %4 = vector.broadcast %3 : vector<1x32xf32> to vector<8x32xf32>
    %5 = arith.addf %2, %4 : vector<8x32xf32>
    %6 = vector.shape_cast %5 : vector<8x32xf32> to vector<2x4x32xf32>
    %c0_5 = arith.constant 0 : index
    %c0_6 = arith.constant 0 : index
    %7 = vector.load %arg3[%c0_5, %c0_6] : memref<1x32xf32, #tpu.memory_space<vmem>>, vector<1x32xf32>
    %8 = vector.shape_cast %7 : vector<1x32xf32> to vector<1x1x32xf32>
    %9 = vector.shape_cast %8 : vector<1x1x32xf32> to vector<1x1x32xf32>
    %10 = vector.broadcast %9 : vector<1x1x32xf32> to vector<2x1x32xf32>
    %11 = tpu.concatenate %10, %6 in 1 : vector<2x1x32xf32>, vector<2x4x32xf32> -> vector<2x5x32xf32>
    %c0_7 = arith.constant 0 : index
    %c0_8 = arith.constant 0 : index
    %12 = vector.load %arg4[%c0_7, %c0_8] : memref<5x32xf32, #tpu.memory_space<vmem>>, vector<5x32xf32>
    %13 = vector.shape_cast %12 : vector<5x32xf32> to vector<1x5x32xf32>
    %14 = vector.broadcast %13 : vector<1x5x32xf32> to vector<2x5x32xf32>
    %15 = arith.addf %11, %14 : vector<2x5x32xf32>
    %16 = vector.shape_cast %15 : vector<2x5x32xf32> to vector<10x32xf32>
    %c0_9 = arith.constant 0 : index
    %c0_10 = arith.constant 0 : index
    %c0_11 = arith.constant 0 : index
    %17 = vector.load %arg5[%c0_9, %c0_10, %c0_11] : memref<2x1x32xf32, #tpu.memory_space<vmem>>, vector<1x1x32xf32>
    %18 = vector.shape_cast %17 : vector<1x1x32xf32> to vector<1x32xf32>
    %c0_12 = arith.constant 0 : index
    %c0_13 = arith.constant 0 : index
    %c0_14 = arith.constant 0 : index
    %19 = vector.load %arg6[%c0_12, %c0_13, %c0_14] : memref<2x1x32xf32, #tpu.memory_space<vmem>>, vector<1x1x32xf32>
    %20 = vector.shape_cast %19 : vector<1x1x32xf32> to vector<1x32xf32>
    %cst_15 = arith.constant dense<0.000000e+00> : vector<10xf32>
    %21 = vector.multi_reduction <add>, %16, %cst_15 [1] : vector<10x32xf32> to vector<10xf32>
    %22 = vector.shape_cast %21 : vector<10xf32> to vector<10x1xf32>
    %cst_16 = arith.constant 3.200000e+01 : f32
    %23 = vector.broadcast %cst_16 : f32 to vector<10x1xf32>
    %24 = arith.divf %22, %23 : vector<10x1xf32>
    %25 = vector.broadcast %24 : vector<10x1xf32> to vector<10x32xf32>
    %26 = arith.subf %16, %25 : vector<10x32xf32>
    %27 = arith.mulf %26, %26 : vector<10x32xf32>
    %cst_17 = arith.constant dense<0.000000e+00> : vector<10xf32>
    %28 = vector.multi_reduction <add>, %27, %cst_17 [1] : vector<10x32xf32> to vector<10xf32>
    %29 = vector.shape_cast %28 : vector<10xf32> to vector<10x1xf32>
    %cst_18 = arith.constant 3.200000e+01 : f32
    %30 = vector.broadcast %cst_18 : f32 to vector<10x1xf32>
    %31 = arith.divf %29, %30 : vector<10x1xf32>
    %32 = vector.broadcast %24 : vector<10x1xf32> to vector<10x32xf32>
    %33 = arith.subf %16, %32 : vector<10x32xf32>
    %cst_19 = arith.constant 9.99999996E-13 : f32
    %34 = vector.broadcast %cst_19 : f32 to vector<10x1xf32>
    %35 = arith.addf %31, %34 : vector<10x1xf32>
    %36 = math.rsqrt %35 : vector<10x1xf32>
    %37 = vector.broadcast %36 : vector<10x1xf32> to vector<10x32xf32>
    %38 = arith.mulf %33, %37 : vector<10x32xf32>
    %39 = vector.broadcast %18 : vector<1x32xf32> to vector<10x32xf32>
    %40 = arith.mulf %38, %39 : vector<10x32xf32>
    %41 = vector.broadcast %20 : vector<1x32xf32> to vector<10x32xf32>
    %42 = arith.addf %40, %41 : vector<10x32xf32>
    %43 = arith.truncf %42 : vector<10x32xf32> to vector<10x32xbf16>
    %c0_20 = arith.constant 0 : index
    %c0_21 = arith.constant 0 : index
    %c0_22 = arith.constant 0 : index
    %44 = vector.load %arg7[%c0_20, %c0_21, %c0_22] : memref<2x32x96xbf16, #tpu.memory_space<vmem>>, vector<1x32x96xbf16>
    %45 = vector.shape_cast %44 : vector<1x32x96xbf16> to vector<32x96xbf16>
    %cst_23 = arith.constant dense<0.000000e+00> : vector<10x96xf32>
    %46 = tpu.matmul %43, %45, %cst_23 {dimension_numbers = #tpu.dot_dimension_numbers<[1], [0], [0], [1], [0, 0, 1, 1], [], []>} : vector<10x32xbf16>, vector<32x96xbf16>, vector<10x96xf32> -> vector<10x96xf32>
    %c0_24 = arith.constant 0 : index
    %c0_25 = arith.constant 0 : index
    %c0_26 = arith.constant 0 : index
    %47 = vector.load %arg8[%c0_24, %c0_25, %c0_26] : memref<2x1x96xf32, #tpu.memory_space<vmem>>, vector<1x1x96xf32>
    %48 = vector.shape_cast %47 : vector<1x1x96xf32> to vector<1x96xf32>
    %49 = vector.broadcast %48 : vector<1x96xf32> to vector<10x96xf32>
    %50 = arith.addf %46, %49 : vector<10x96xf32>
    %51 = vector.shape_cast %50 : vector<10x96xf32> to vector<2x5x96xf32>
    %52 = vector.extract_strided_slice %51 {offsets = [0, 0, 0], sizes = [2, 5, 32], strides = [1, 1, 1]} : vector<2x5x96xf32> to vector<2x5x32xf32>
    %53 = vector.extract_strided_slice %52 {offsets = [0, 0, 0], sizes = [2, 5, 8], strides = [1, 1, 1]} : vector<2x5x32xf32> to vector<2x5x8xf32>
    %54 = vector.extract_strided_slice %52 {offsets = [0, 0, 8], sizes = [2, 5, 8], strides = [1, 1, 1]} : vector<2x5x32xf32> to vector<2x5x8xf32>
    %55 = vector.extract_strided_slice %52 {offsets = [0, 0, 16], sizes = [2, 5, 8], strides = [1, 1, 1]} : vector<2x5x32xf32> to vector<2x5x8xf32>
    %56 = vector.extract_strided_slice %52 {offsets = [0, 0, 24], sizes = [2, 5, 8], strides = [1, 1, 1]} : vector<2x5x32xf32> to vector<2x5x8xf32>
    %57 = tpu.concatenate %53, %54, %55, %56 in 0 : vector<2x5x8xf32>, vector<2x5x8xf32>, vector<2x5x8xf32>, vector<2x5x8xf32> -> vector<8x5x8xf32>
    %58 = arith.truncf %57 : vector<8x5x8xf32> to vector<8x5x8xbf16>
    %59 = vector.extract_strided_slice %51 {offsets = [0, 0, 32], sizes = [2, 5, 32], strides = [1, 1, 1]} : vector<2x5x96xf32> to vector<2x5x32xf32>
    %60 = vector.extract_strided_slice %59 {offsets = [0, 0, 0], sizes = [2, 5, 8], strides = [1, 1, 1]} : vector<2x5x32xf32> to vector<2x5x8xf32>
    %61 = vector.extract_strided_slice %59 {offsets = [0, 0, 8], sizes = [2, 5, 8], strides = [1, 1, 1]} : vector<2x5x32xf32> to vector<2x5x8xf32>
    %62 = vector.extract_strided_slice %59 {offsets = [0, 0, 16], sizes = [2, 5, 8], strides = [1, 1, 1]} : vector<2x5x32xf32> to vector<2x5x8xf32>
    %63 = vector.extract_strided_slice %59 {offsets = [0, 0, 24], sizes = [2, 5, 8], strides = [1, 1, 1]} : vector<2x5x32xf32> to vector<2x5x8xf32>
    %64 = tpu.concatenate %60, %61, %62, %63 in 0 : vector<2x5x8xf32>, vector<2x5x8xf32>, vector<2x5x8xf32>, vector<2x5x8xf32> -> vector<8x5x8xf32>
    %65 = arith.truncf %64 : vector<8x5x8xf32> to vector<8x5x8xbf16>
    %66 = vector.extract_strided_slice %51 {offsets = [0, 0, 64], sizes = [2, 5, 32], strides = [1, 1, 1]} : vector<2x5x96xf32> to vector<2x5x32xf32>
    %67 = vector.extract_strided_slice %66 {offsets = [0, 0, 0], sizes = [2, 5, 8], strides = [1, 1, 1]} : vector<2x5x32xf32> to vector<2x5x8xf32>
    %68 = vector.extract_strided_slice %66 {offsets = [0, 0, 8], sizes = [2, 5, 8], strides = [1, 1, 1]} : vector<2x5x32xf32> to vector<2x5x8xf32>
    %69 = vector.extract_strided_slice %66 {offsets = [0, 0, 16], sizes = [2, 5, 8], strides = [1, 1, 1]} : vector<2x5x32xf32> to vector<2x5x8xf32>
    %70 = vector.extract_strided_slice %66 {offsets = [0, 0, 24], sizes = [2, 5, 8], strides = [1, 1, 1]} : vector<2x5x32xf32> to vector<2x5x8xf32>
    %71 = tpu.concatenate %67, %68, %69, %70 in 0 : vector<2x5x8xf32>, vector<2x5x8xf32>, vector<2x5x8xf32>, vector<2x5x8xf32> -> vector<8x5x8xf32>
    %72 = arith.truncf %71 : vector<8x5x8xf32> to vector<8x5x8xbf16>
    %cst_27 = arith.constant dense<0.000000e+00> : vector<8x5x5xf32>
    %73 = tpu.matmul %58, %65, %cst_27 {dimension_numbers = #tpu.dot_dimension_numbers<[2], [2], [1], [1], [0, 0, 0, 1, 1, 1], [0], [0]>} : vector<8x5x8xbf16>, vector<8x5x8xbf16>, vector<8x5x5xf32> -> vector<8x5x5xf32>
    %cst_28 = arith.constant 0.353553385 : f32
    %74 = vector.broadcast %cst_28 : f32 to vector<8x5x5xf32>
    %75 = arith.mulf %73, %74 : vector<8x5x5xf32>
    %cst_29 = arith.constant dense<0xFF800000> : vector<8x5xf32>
    %76 = vector.multi_reduction <maximumf>, %75, %cst_29 [2] : vector<8x5x5xf32> to vector<8x5xf32>
    %77 = vector.shape_cast %76 : vector<8x5xf32> to vector<8x5x1xf32>
    %78 = vector.broadcast %77 : vector<8x5x1xf32> to vector<8x5x5xf32>
    %79 = arith.subf %75, %78 : vector<8x5x5xf32>
    %80 = math.exp %79 : vector<8x5x5xf32>
    %cst_30 = arith.constant dense<0.000000e+00> : vector<8x5xf32>
    %81 = vector.multi_reduction <add>, %80, %cst_30 [2] : vector<8x5x5xf32> to vector<8x5xf32>
    %82 = vector.shape_cast %81 : vector<8x5xf32> to vector<8x5x1xf32>
    %83 = tpu.reciprocal %82 {approx = true} : vector<8x5x1xf32> -> vector<8x5x1xf32>
    %84 = vector.broadcast %83 : vector<8x5x1xf32> to vector<8x5x5xf32>
    %85 = arith.mulf %80, %84 : vector<8x5x5xf32>
    %86 = arith.truncf %85 : vector<8x5x5xf32> to vector<8x5x5xbf16>
    %cst_31 = arith.constant dense<0.000000e+00> : vector<8x5x8xf32>
    %87 = tpu.matmul %86, %72, %cst_31 {dimension_numbers = #tpu.dot_dimension_numbers<[2], [1], [1], [2], [0, 0, 0, 1, 1, 2], [0], [0]>} : vector<8x5x5xbf16>, vector<8x5x8xbf16>, vector<8x5x8xf32> -> vector<8x5x8xf32>
    %88 = vector.extract_strided_slice %87 {offsets = [0, 0, 0], sizes = [2, 5, 8], strides = [1, 1, 1]} : vector<8x5x8xf32> to vector<2x5x8xf32>
    %89 = vector.extract_strided_slice %87 {offsets = [2, 0, 0], sizes = [2, 5, 8], strides = [1, 1, 1]} : vector<8x5x8xf32> to vector<2x5x8xf32>
    %90 = vector.extract_strided_slice %87 {offsets = [4, 0, 0], sizes = [2, 5, 8], strides = [1, 1, 1]} : vector<8x5x8xf32> to vector<2x5x8xf32>
    %91 = vector.extract_strided_slice %87 {offsets = [6, 0, 0], sizes = [2, 5, 8], strides = [1, 1, 1]} : vector<8x5x8xf32> to vector<2x5x8xf32>
    %92 = tpu.concatenate %88, %89, %90, %91 in 2 : vector<2x5x8xf32>, vector<2x5x8xf32>, vector<2x5x8xf32>, vector<2x5x8xf32> -> vector<2x5x32xf32>
    %93 = vector.shape_cast %92 : vector<2x5x32xf32> to vector<10x32xf32>
    %94 = arith.truncf %93 : vector<10x32xf32> to vector<10x32xbf16>
    %c0_32 = arith.constant 0 : index
    %c0_33 = arith.constant 0 : index
    %c0_34 = arith.constant 0 : index
    %95 = vector.load %arg9[%c0_32, %c0_33, %c0_34] : memref<2x32x32xbf16, #tpu.memory_space<vmem>>, vector<1x32x32xbf16>
    %96 = vector.shape_cast %95 : vector<1x32x32xbf16> to vector<32x32xbf16>
    %cst_35 = arith.constant dense<0.000000e+00> : vector<10x32xf32>
    %97 = tpu.matmul %94, %96, %cst_35 {dimension_numbers = #tpu.dot_dimension_numbers<[1], [0], [0], [1], [0, 0, 1, 1], [], []>} : vector<10x32xbf16>, vector<32x32xbf16>, vector<10x32xf32> -> vector<10x32xf32>
    %98 = arith.addf %16, %97 : vector<10x32xf32>
    %c0_36 = arith.constant 0 : index
    %c0_37 = arith.constant 0 : index
    %c0_38 = arith.constant 0 : index
    %99 = vector.load %arg10[%c0_36, %c0_37, %c0_38] : memref<2x1x32xf32, #tpu.memory_space<vmem>>, vector<1x1x32xf32>
    %100 = vector.shape_cast %99 : vector<1x1x32xf32> to vector<1x32xf32>
    %101 = vector.broadcast %100 : vector<1x32xf32> to vector<10x32xf32>
    %102 = arith.addf %98, %101 : vector<10x32xf32>
    %c0_39 = arith.constant 0 : index
    %c0_40 = arith.constant 0 : index
    %c0_41 = arith.constant 0 : index
    %103 = vector.load %arg11[%c0_39, %c0_40, %c0_41] : memref<2x1x32xf32, #tpu.memory_space<vmem>>, vector<1x1x32xf32>
    %104 = vector.shape_cast %103 : vector<1x1x32xf32> to vector<1x32xf32>
    %c0_42 = arith.constant 0 : index
    %c0_43 = arith.constant 0 : index
    %c0_44 = arith.constant 0 : index
    %105 = vector.load %arg12[%c0_42, %c0_43, %c0_44] : memref<2x1x32xf32, #tpu.memory_space<vmem>>, vector<1x1x32xf32>
    %106 = vector.shape_cast %105 : vector<1x1x32xf32> to vector<1x32xf32>
    %cst_45 = arith.constant dense<0.000000e+00> : vector<10xf32>
    %107 = vector.multi_reduction <add>, %102, %cst_45 [1] : vector<10x32xf32> to vector<10xf32>
    %108 = vector.shape_cast %107 : vector<10xf32> to vector<10x1xf32>
    %cst_46 = arith.constant 3.200000e+01 : f32
    %109 = vector.broadcast %cst_46 : f32 to vector<10x1xf32>
    %110 = arith.divf %108, %109 : vector<10x1xf32>
    %111 = vector.broadcast %110 : vector<10x1xf32> to vector<10x32xf32>
    %112 = arith.subf %102, %111 : vector<10x32xf32>
    %113 = arith.mulf %112, %112 : vector<10x32xf32>
    %cst_47 = arith.constant dense<0.000000e+00> : vector<10xf32>
    %114 = vector.multi_reduction <add>, %113, %cst_47 [1] : vector<10x32xf32> to vector<10xf32>
    %115 = vector.shape_cast %114 : vector<10xf32> to vector<10x1xf32>
    %cst_48 = arith.constant 3.200000e+01 : f32
    %116 = vector.broadcast %cst_48 : f32 to vector<10x1xf32>
    %117 = arith.divf %115, %116 : vector<10x1xf32>
    %118 = vector.broadcast %110 : vector<10x1xf32> to vector<10x32xf32>
    %119 = arith.subf %102, %118 : vector<10x32xf32>
    %cst_49 = arith.constant 9.99999996E-13 : f32
    %120 = vector.broadcast %cst_49 : f32 to vector<10x1xf32>
    %121 = arith.addf %117, %120 : vector<10x1xf32>
    %122 = math.rsqrt %121 : vector<10x1xf32>
    %123 = vector.broadcast %122 : vector<10x1xf32> to vector<10x32xf32>
    %124 = arith.mulf %119, %123 : vector<10x32xf32>
    %125 = vector.broadcast %104 : vector<1x32xf32> to vector<10x32xf32>
    %126 = arith.mulf %124, %125 : vector<10x32xf32>
    %127 = vector.broadcast %106 : vector<1x32xf32> to vector<10x32xf32>
    %128 = arith.addf %126, %127 : vector<10x32xf32>
    %129 = arith.truncf %128 : vector<10x32xf32> to vector<10x32xbf16>
    %c0_50 = arith.constant 0 : index
    %c0_51 = arith.constant 0 : index
    %c0_52 = arith.constant 0 : index
    %130 = vector.load %arg13[%c0_50, %c0_51, %c0_52] : memref<2x32x128xbf16, #tpu.memory_space<vmem>>, vector<1x32x128xbf16>
    %131 = vector.shape_cast %130 : vector<1x32x128xbf16> to vector<32x128xbf16>
    %cst_53 = arith.constant dense<0.000000e+00> : vector<10x128xf32>
    %132 = tpu.matmul %129, %131, %cst_53 {dimension_numbers = #tpu.dot_dimension_numbers<[1], [0], [0], [1], [0, 0, 1, 1], [], []>} : vector<10x32xbf16>, vector<32x128xbf16>, vector<10x128xf32> -> vector<10x128xf32>
    %c0_54 = arith.constant 0 : index
    %c0_55 = arith.constant 0 : index
    %c0_56 = arith.constant 0 : index
    %133 = vector.load %arg14[%c0_54, %c0_55, %c0_56] : memref<2x1x128xf32, #tpu.memory_space<vmem>>, vector<1x1x128xf32>
    %134 = vector.shape_cast %133 : vector<1x1x128xf32> to vector<1x128xf32>
    %135 = vector.broadcast %134 : vector<1x128xf32> to vector<10x128xf32>
    %136 = arith.addf %132, %135 : vector<10x128xf32>
    %137 = arith.mulf %136, %136 : vector<10x128xf32>
    %138 = arith.mulf %136, %137 : vector<10x128xf32>
    %cst_57 = arith.constant 4.471500e-02 : f32
    %139 = vector.broadcast %cst_57 : f32 to vector<10x128xf32>
    %140 = arith.mulf %139, %138 : vector<10x128xf32>
    %141 = arith.addf %136, %140 : vector<10x128xf32>
    %cst_58 = arith.constant 0.797884583 : f32
    %142 = vector.broadcast %cst_58 : f32 to vector<10x128xf32>
    %143 = arith.mulf %142, %141 : vector<10x128xf32>
    %144 = math.tanh %143 : vector<10x128xf32>
    %cst_59 = arith.constant 1.000000e+00 : f32
    %145 = vector.broadcast %cst_59 : f32 to vector<10x128xf32>
    %146 = arith.addf %145, %144 : vector<10x128xf32>
    %cst_60 = arith.constant 5.000000e-01 : f32
    %147 = vector.broadcast %cst_60 : f32 to vector<10x128xf32>
    %148 = arith.mulf %147, %146 : vector<10x128xf32>
    %149 = arith.mulf %136, %148 : vector<10x128xf32>
    %150 = arith.truncf %149 : vector<10x128xf32> to vector<10x128xbf16>
    %c0_61 = arith.constant 0 : index
    %c0_62 = arith.constant 0 : index
    %c0_63 = arith.constant 0 : index
    %151 = vector.load %arg15[%c0_61, %c0_62, %c0_63] : memref<2x128x32xbf16, #tpu.memory_space<vmem>>, vector<1x128x32xbf16>
    %152 = vector.shape_cast %151 : vector<1x128x32xbf16> to vector<128x32xbf16>
    %cst_64 = arith.constant dense<0.000000e+00> : vector<10x32xf32>
    %153 = tpu.matmul %150, %152, %cst_64 {dimension_numbers = #tpu.dot_dimension_numbers<[1], [0], [0], [1], [0, 0, 1, 1], [], []>} : vector<10x128xbf16>, vector<128x32xbf16>, vector<10x32xf32> -> vector<10x32xf32>
    %154 = arith.addf %102, %153 : vector<10x32xf32>
    %c0_65 = arith.constant 0 : index
    %c0_66 = arith.constant 0 : index
    %c0_67 = arith.constant 0 : index
    %155 = vector.load %arg16[%c0_65, %c0_66, %c0_67] : memref<2x1x32xf32, #tpu.memory_space<vmem>>, vector<1x1x32xf32>
    %156 = vector.shape_cast %155 : vector<1x1x32xf32> to vector<1x32xf32>
    %157 = vector.broadcast %156 : vector<1x32xf32> to vector<10x32xf32>
    %158 = arith.addf %154, %157 : vector<10x32xf32>
    %c1 = arith.constant 1 : index
    %c0_68 = arith.constant 0 : index
    %c0_69 = arith.constant 0 : index
    %159 = vector.load %arg5[%c1, %c0_68, %c0_69] : memref<2x1x32xf32, #tpu.memory_space<vmem>>, vector<1x1x32xf32>
    %160 = vector.shape_cast %159 : vector<1x1x32xf32> to vector<1x32xf32>
    %c1_70 = arith.constant 1 : index
    %c0_71 = arith.constant 0 : index
    %c0_72 = arith.constant 0 : index
    %161 = vector.load %arg6[%c1_70, %c0_71, %c0_72] : memref<2x1x32xf32, #tpu.memory_space<vmem>>, vector<1x1x32xf32>
    %162 = vector.shape_cast %161 : vector<1x1x32xf32> to vector<1x32xf32>
    %cst_73 = arith.constant dense<0.000000e+00> : vector<10xf32>
    %163 = vector.multi_reduction <add>, %158, %cst_73 [1] : vector<10x32xf32> to vector<10xf32>
    %164 = vector.shape_cast %163 : vector<10xf32> to vector<10x1xf32>
    %cst_74 = arith.constant 3.200000e+01 : f32
    %165 = vector.broadcast %cst_74 : f32 to vector<10x1xf32>
    %166 = arith.divf %164, %165 : vector<10x1xf32>
    %167 = vector.broadcast %166 : vector<10x1xf32> to vector<10x32xf32>
    %168 = arith.subf %158, %167 : vector<10x32xf32>
    %169 = arith.mulf %168, %168 : vector<10x32xf32>
    %cst_75 = arith.constant dense<0.000000e+00> : vector<10xf32>
    %170 = vector.multi_reduction <add>, %169, %cst_75 [1] : vector<10x32xf32> to vector<10xf32>
    %171 = vector.shape_cast %170 : vector<10xf32> to vector<10x1xf32>
    %cst_76 = arith.constant 3.200000e+01 : f32
    %172 = vector.broadcast %cst_76 : f32 to vector<10x1xf32>
    %173 = arith.divf %171, %172 : vector<10x1xf32>
    %174 = vector.broadcast %166 : vector<10x1xf32> to vector<10x32xf32>
    %175 = arith.subf %158, %174 : vector<10x32xf32>
    %cst_77 = arith.constant 9.99999996E-13 : f32
    %176 = vector.broadcast %cst_77 : f32 to vector<10x1xf32>
    %177 = arith.addf %173, %176 : vector<10x1xf32>
    %178 = math.rsqrt %177 : vector<10x1xf32>
    %179 = vector.broadcast %178 : vector<10x1xf32> to vector<10x32xf32>
    %180 = arith.mulf %175, %179 : vector<10x32xf32>
    %181 = vector.broadcast %160 : vector<1x32xf32> to vector<10x32xf32>
    %182 = arith.mulf %180, %181 : vector<10x32xf32>
    %183 = vector.broadcast %162 : vector<1x32xf32> to vector<10x32xf32>
    %184 = arith.addf %182, %183 : vector<10x32xf32>
    %185 = arith.truncf %184 : vector<10x32xf32> to vector<10x32xbf16>
    %c1_78 = arith.constant 1 : index
    %c0_79 = arith.constant 0 : index
    %c0_80 = arith.constant 0 : index
    %186 = vector.load %arg7[%c1_78, %c0_79, %c0_80] : memref<2x32x96xbf16, #tpu.memory_space<vmem>>, vector<1x32x96xbf16>
    %187 = vector.shape_cast %186 : vector<1x32x96xbf16> to vector<32x96xbf16>
    %cst_81 = arith.constant dense<0.000000e+00> : vector<10x96xf32>
    %188 = tpu.matmul %185, %187, %cst_81 {dimension_numbers = #tpu.dot_dimension_numbers<[1], [0], [0], [1], [0, 0, 1, 1], [], []>} : vector<10x32xbf16>, vector<32x96xbf16>, vector<10x96xf32> -> vector<10x96xf32>
    %c1_82 = arith.constant 1 : index
    %c0_83 = arith.constant 0 : index
    %c0_84 = arith.constant 0 : index
    %189 = vector.load %arg8[%c1_82, %c0_83, %c0_84] : memref<2x1x96xf32, #tpu.memory_space<vmem>>, vector<1x1x96xf32>
    %190 = vector.shape_cast %189 : vector<1x1x96xf32> to vector<1x96xf32>
    %191 = vector.broadcast %190 : vector<1x96xf32> to vector<10x96xf32>
    %192 = arith.addf %188, %191 : vector<10x96xf32>
    %193 = vector.shape_cast %192 : vector<10x96xf32> to vector<2x5x96xf32>
    %194 = vector.extract_strided_slice %193 {offsets = [0, 0, 0], sizes = [2, 5, 32], strides = [1, 1, 1]} : vector<2x5x96xf32> to vector<2x5x32xf32>
    %195 = vector.extract_strided_slice %194 {offsets = [0, 0, 0], sizes = [2, 5, 8], strides = [1, 1, 1]} : vector<2x5x32xf32> to vector<2x5x8xf32>
    %196 = vector.extract_strided_slice %194 {offsets = [0, 0, 8], sizes = [2, 5, 8], strides = [1, 1, 1]} : vector<2x5x32xf32> to vector<2x5x8xf32>
    %197 = vector.extract_strided_slice %194 {offsets = [0, 0, 16], sizes = [2, 5, 8], strides = [1, 1, 1]} : vector<2x5x32xf32> to vector<2x5x8xf32>
    %198 = vector.extract_strided_slice %194 {offsets = [0, 0, 24], sizes = [2, 5, 8], strides = [1, 1, 1]} : vector<2x5x32xf32> to vector<2x5x8xf32>
    %199 = tpu.concatenate %195, %196, %197, %198 in 0 : vector<2x5x8xf32>, vector<2x5x8xf32>, vector<2x5x8xf32>, vector<2x5x8xf32> -> vector<8x5x8xf32>
    %200 = arith.truncf %199 : vector<8x5x8xf32> to vector<8x5x8xbf16>
    %201 = vector.extract_strided_slice %193 {offsets = [0, 0, 32], sizes = [2, 5, 32], strides = [1, 1, 1]} : vector<2x5x96xf32> to vector<2x5x32xf32>
    %202 = vector.extract_strided_slice %201 {offsets = [0, 0, 0], sizes = [2, 5, 8], strides = [1, 1, 1]} : vector<2x5x32xf32> to vector<2x5x8xf32>
    %203 = vector.extract_strided_slice %201 {offsets = [0, 0, 8], sizes = [2, 5, 8], strides = [1, 1, 1]} : vector<2x5x32xf32> to vector<2x5x8xf32>
    %204 = vector.extract_strided_slice %201 {offsets = [0, 0, 16], sizes = [2, 5, 8], strides = [1, 1, 1]} : vector<2x5x32xf32> to vector<2x5x8xf32>
    %205 = vector.extract_strided_slice %201 {offsets = [0, 0, 24], sizes = [2, 5, 8], strides = [1, 1, 1]} : vector<2x5x32xf32> to vector<2x5x8xf32>
    %206 = tpu.concatenate %202, %203, %204, %205 in 0 : vector<2x5x8xf32>, vector<2x5x8xf32>, vector<2x5x8xf32>, vector<2x5x8xf32> -> vector<8x5x8xf32>
    %207 = arith.truncf %206 : vector<8x5x8xf32> to vector<8x5x8xbf16>
    %208 = vector.extract_strided_slice %193 {offsets = [0, 0, 64], sizes = [2, 5, 32], strides = [1, 1, 1]} : vector<2x5x96xf32> to vector<2x5x32xf32>
    %209 = vector.extract_strided_slice %208 {offsets = [0, 0, 0], sizes = [2, 5, 8], strides = [1, 1, 1]} : vector<2x5x32xf32> to vector<2x5x8xf32>
    %210 = vector.extract_strided_slice %208 {offsets = [0, 0, 8], sizes = [2, 5, 8], strides = [1, 1, 1]} : vector<2x5x32xf32> to vector<2x5x8xf32>
    %211 = vector.extract_strided_slice %208 {offsets = [0, 0, 16], sizes = [2, 5, 8], strides = [1, 1, 1]} : vector<2x5x32xf32> to vector<2x5x8xf32>
    %212 = vector.extract_strided_slice %208 {offsets = [0, 0, 24], sizes = [2, 5, 8], strides = [1, 1, 1]} : vector<2x5x32xf32> to vector<2x5x8xf32>
    %213 = tpu.concatenate %209, %210, %211, %212 in 0 : vector<2x5x8xf32>, vector<2x5x8xf32>, vector<2x5x8xf32>, vector<2x5x8xf32> -> vector<8x5x8xf32>
    %214 = arith.truncf %213 : vector<8x5x8xf32> to vector<8x5x8xbf16>
    %cst_85 = arith.constant dense<0.000000e+00> : vector<8x5x5xf32>
    %215 = tpu.matmul %200, %207, %cst_85 {dimension_numbers = #tpu.dot_dimension_numbers<[2], [2], [1], [1], [0, 0, 0, 1, 1, 1], [0], [0]>} : vector<8x5x8xbf16>, vector<8x5x8xbf16>, vector<8x5x5xf32> -> vector<8x5x5xf32>
    %cst_86 = arith.constant 0.353553385 : f32
    %216 = vector.broadcast %cst_86 : f32 to vector<8x5x5xf32>
    %217 = arith.mulf %215, %216 : vector<8x5x5xf32>
    %cst_87 = arith.constant dense<0xFF800000> : vector<8x5xf32>
    %218 = vector.multi_reduction <maximumf>, %217, %cst_87 [2] : vector<8x5x5xf32> to vector<8x5xf32>
    %219 = vector.shape_cast %218 : vector<8x5xf32> to vector<8x5x1xf32>
    %220 = vector.broadcast %219 : vector<8x5x1xf32> to vector<8x5x5xf32>
    %221 = arith.subf %217, %220 : vector<8x5x5xf32>
    %222 = math.exp %221 : vector<8x5x5xf32>
    %cst_88 = arith.constant dense<0.000000e+00> : vector<8x5xf32>
    %223 = vector.multi_reduction <add>, %222, %cst_88 [2] : vector<8x5x5xf32> to vector<8x5xf32>
    %224 = vector.shape_cast %223 : vector<8x5xf32> to vector<8x5x1xf32>
    %225 = tpu.reciprocal %224 {approx = true} : vector<8x5x1xf32> -> vector<8x5x1xf32>
    %226 = vector.broadcast %225 : vector<8x5x1xf32> to vector<8x5x5xf32>
    %227 = arith.mulf %222, %226 : vector<8x5x5xf32>
    %228 = arith.truncf %227 : vector<8x5x5xf32> to vector<8x5x5xbf16>
    %cst_89 = arith.constant dense<0.000000e+00> : vector<8x5x8xf32>
    %229 = tpu.matmul %228, %214, %cst_89 {dimension_numbers = #tpu.dot_dimension_numbers<[2], [1], [1], [2], [0, 0, 0, 1, 1, 2], [0], [0]>} : vector<8x5x5xbf16>, vector<8x5x8xbf16>, vector<8x5x8xf32> -> vector<8x5x8xf32>
    %230 = vector.extract_strided_slice %229 {offsets = [0, 0, 0], sizes = [2, 5, 8], strides = [1, 1, 1]} : vector<8x5x8xf32> to vector<2x5x8xf32>
    %231 = vector.extract_strided_slice %229 {offsets = [2, 0, 0], sizes = [2, 5, 8], strides = [1, 1, 1]} : vector<8x5x8xf32> to vector<2x5x8xf32>
    %232 = vector.extract_strided_slice %229 {offsets = [4, 0, 0], sizes = [2, 5, 8], strides = [1, 1, 1]} : vector<8x5x8xf32> to vector<2x5x8xf32>
    %233 = vector.extract_strided_slice %229 {offsets = [6, 0, 0], sizes = [2, 5, 8], strides = [1, 1, 1]} : vector<8x5x8xf32> to vector<2x5x8xf32>
    %234 = tpu.concatenate %230, %231, %232, %233 in 2 : vector<2x5x8xf32>, vector<2x5x8xf32>, vector<2x5x8xf32>, vector<2x5x8xf32> -> vector<2x5x32xf32>
    %235 = vector.shape_cast %234 : vector<2x5x32xf32> to vector<10x32xf32>
    %236 = arith.truncf %235 : vector<10x32xf32> to vector<10x32xbf16>
    %c1_90 = arith.constant 1 : index
    %c0_91 = arith.constant 0 : index
    %c0_92 = arith.constant 0 : index
    %237 = vector.load %arg9[%c1_90, %c0_91, %c0_92] : memref<2x32x32xbf16, #tpu.memory_space<vmem>>, vector<1x32x32xbf16>
    %238 = vector.shape_cast %237 : vector<1x32x32xbf16> to vector<32x32xbf16>
    %cst_93 = arith.constant dense<0.000000e+00> : vector<10x32xf32>
    %239 = tpu.matmul %236, %238, %cst_93 {dimension_numbers = #tpu.dot_dimension_numbers<[1], [0], [0], [1], [0, 0, 1, 1], [], []>} : vector<10x32xbf16>, vector<32x32xbf16>, vector<10x32xf32> -> vector<10x32xf32>
    %240 = arith.addf %158, %239 : vector<10x32xf32>
    %c1_94 = arith.constant 1 : index
    %c0_95 = arith.constant 0 : index
    %c0_96 = arith.constant 0 : index
    %241 = vector.load %arg10[%c1_94, %c0_95, %c0_96] : memref<2x1x32xf32, #tpu.memory_space<vmem>>, vector<1x1x32xf32>
    %242 = vector.shape_cast %241 : vector<1x1x32xf32> to vector<1x32xf32>
    %243 = vector.broadcast %242 : vector<1x32xf32> to vector<10x32xf32>
    %244 = arith.addf %240, %243 : vector<10x32xf32>
    %c1_97 = arith.constant 1 : index
    %c0_98 = arith.constant 0 : index
    %c0_99 = arith.constant 0 : index
    %245 = vector.load %arg11[%c1_97, %c0_98, %c0_99] : memref<2x1x32xf32, #tpu.memory_space<vmem>>, vector<1x1x32xf32>
    %246 = vector.shape_cast %245 : vector<1x1x32xf32> to vector<1x32xf32>
    %c1_100 = arith.constant 1 : index
    %c0_101 = arith.constant 0 : index
    %c0_102 = arith.constant 0 : index
    %247 = vector.load %arg12[%c1_100, %c0_101, %c0_102] : memref<2x1x32xf32, #tpu.memory_space<vmem>>, vector<1x1x32xf32>
    %248 = vector.shape_cast %247 : vector<1x1x32xf32> to vector<1x32xf32>
    %cst_103 = arith.constant dense<0.000000e+00> : vector<10xf32>
    %249 = vector.multi_reduction <add>, %244, %cst_103 [1] : vector<10x32xf32> to vector<10xf32>
    %250 = vector.shape_cast %249 : vector<10xf32> to vector<10x1xf32>
    %cst_104 = arith.constant 3.200000e+01 : f32
    %251 = vector.broadcast %cst_104 : f32 to vector<10x1xf32>
    %252 = arith.divf %250, %251 : vector<10x1xf32>
    %253 = vector.broadcast %252 : vector<10x1xf32> to vector<10x32xf32>
    %254 = arith.subf %244, %253 : vector<10x32xf32>
    %255 = arith.mulf %254, %254 : vector<10x32xf32>
    %cst_105 = arith.constant dense<0.000000e+00> : vector<10xf32>
    %256 = vector.multi_reduction <add>, %255, %cst_105 [1] : vector<10x32xf32> to vector<10xf32>
    %257 = vector.shape_cast %256 : vector<10xf32> to vector<10x1xf32>
    %cst_106 = arith.constant 3.200000e+01 : f32
    %258 = vector.broadcast %cst_106 : f32 to vector<10x1xf32>
    %259 = arith.divf %257, %258 : vector<10x1xf32>
    %260 = vector.broadcast %252 : vector<10x1xf32> to vector<10x32xf32>
    %261 = arith.subf %244, %260 : vector<10x32xf32>
    %cst_107 = arith.constant 9.99999996E-13 : f32
    %262 = vector.broadcast %cst_107 : f32 to vector<10x1xf32>
    %263 = arith.addf %259, %262 : vector<10x1xf32>
    %264 = math.rsqrt %263 : vector<10x1xf32>
    %265 = vector.broadcast %264 : vector<10x1xf32> to vector<10x32xf32>
    %266 = arith.mulf %261, %265 : vector<10x32xf32>
    %267 = vector.broadcast %246 : vector<1x32xf32> to vector<10x32xf32>
    %268 = arith.mulf %266, %267 : vector<10x32xf32>
    %269 = vector.broadcast %248 : vector<1x32xf32> to vector<10x32xf32>
    %270 = arith.addf %268, %269 : vector<10x32xf32>
    %271 = arith.truncf %270 : vector<10x32xf32> to vector<10x32xbf16>
    %c1_108 = arith.constant 1 : index
    %c0_109 = arith.constant 0 : index
    %c0_110 = arith.constant 0 : index
    %272 = vector.load %arg13[%c1_108, %c0_109, %c0_110] : memref<2x32x128xbf16, #tpu.memory_space<vmem>>, vector<1x32x128xbf16>
    %273 = vector.shape_cast %272 : vector<1x32x128xbf16> to vector<32x128xbf16>
    %cst_111 = arith.constant dense<0.000000e+00> : vector<10x128xf32>
    %274 = tpu.matmul %271, %273, %cst_111 {dimension_numbers = #tpu.dot_dimension_numbers<[1], [0], [0], [1], [0, 0, 1, 1], [], []>} : vector<10x32xbf16>, vector<32x128xbf16>, vector<10x128xf32> -> vector<10x128xf32>
    %c1_112 = arith.constant 1 : index
    %c0_113 = arith.constant 0 : index
    %c0_114 = arith.constant 0 : index
    %275 = vector.load %arg14[%c1_112, %c0_113, %c0_114] : memref<2x1x128xf32, #tpu.memory_space<vmem>>, vector<1x1x128xf32>
    %276 = vector.shape_cast %275 : vector<1x1x128xf32> to vector<1x128xf32>
    %277 = vector.broadcast %276 : vector<1x128xf32> to vector<10x128xf32>
    %278 = arith.addf %274, %277 : vector<10x128xf32>
    %279 = arith.mulf %278, %278 : vector<10x128xf32>
    %280 = arith.mulf %278, %279 : vector<10x128xf32>
    %cst_115 = arith.constant 4.471500e-02 : f32
    %281 = vector.broadcast %cst_115 : f32 to vector<10x128xf32>
    %282 = arith.mulf %281, %280 : vector<10x128xf32>
    %283 = arith.addf %278, %282 : vector<10x128xf32>
    %cst_116 = arith.constant 0.797884583 : f32
    %284 = vector.broadcast %cst_116 : f32 to vector<10x128xf32>
    %285 = arith.mulf %284, %283 : vector<10x128xf32>
    %286 = math.tanh %285 : vector<10x128xf32>
    %cst_117 = arith.constant 1.000000e+00 : f32
    %287 = vector.broadcast %cst_117 : f32 to vector<10x128xf32>
    %288 = arith.addf %287, %286 : vector<10x128xf32>
    %cst_118 = arith.constant 5.000000e-01 : f32
    %289 = vector.broadcast %cst_118 : f32 to vector<10x128xf32>
    %290 = arith.mulf %289, %288 : vector<10x128xf32>
    %291 = arith.mulf %278, %290 : vector<10x128xf32>
    %292 = arith.truncf %291 : vector<10x128xf32> to vector<10x128xbf16>
    %c1_119 = arith.constant 1 : index
    %c0_120 = arith.constant 0 : index
    %c0_121 = arith.constant 0 : index
    %293 = vector.load %arg15[%c1_119, %c0_120, %c0_121] : memref<2x128x32xbf16, #tpu.memory_space<vmem>>, vector<1x128x32xbf16>
    %294 = vector.shape_cast %293 : vector<1x128x32xbf16> to vector<128x32xbf16>
    %cst_122 = arith.constant dense<0.000000e+00> : vector<10x32xf32>
    %295 = tpu.matmul %292, %294, %cst_122 {dimension_numbers = #tpu.dot_dimension_numbers<[1], [0], [0], [1], [0, 0, 1, 1], [], []>} : vector<10x128xbf16>, vector<128x32xbf16>, vector<10x32xf32> -> vector<10x32xf32>
    %296 = arith.addf %244, %295 : vector<10x32xf32>
    %c1_123 = arith.constant 1 : index
    %c0_124 = arith.constant 0 : index
    %c0_125 = arith.constant 0 : index
    %297 = vector.load %arg16[%c1_123, %c0_124, %c0_125] : memref<2x1x32xf32, #tpu.memory_space<vmem>>, vector<1x1x32xf32>
    %298 = vector.shape_cast %297 : vector<1x1x32xf32> to vector<1x32xf32>
    %299 = vector.broadcast %298 : vector<1x32xf32> to vector<10x32xf32>
    %300 = arith.addf %296, %299 : vector<10x32xf32>
    %c0_126 = arith.constant 0 : index
    %c0_127 = arith.constant 0 : index
    %301 = vector.load %arg17[%c0_126, %c0_127] : memref<1x32xf32, #tpu.memory_space<vmem>>, vector<1x32xf32>
    %c0_128 = arith.constant 0 : index
    %c0_129 = arith.constant 0 : index
    %302 = vector.load %arg18[%c0_128, %c0_129] : memref<1x32xf32, #tpu.memory_space<vmem>>, vector<1x32xf32>
    %cst_130 = arith.constant dense<0.000000e+00> : vector<10xf32>
    %303 = vector.multi_reduction <add>, %300, %cst_130 [1] : vector<10x32xf32> to vector<10xf32>
    %304 = vector.shape_cast %303 : vector<10xf32> to vector<10x1xf32>
    %cst_131 = arith.constant 3.200000e+01 : f32
    %305 = vector.broadcast %cst_131 : f32 to vector<10x1xf32>
    %306 = arith.divf %304, %305 : vector<10x1xf32>
    %307 = vector.broadcast %306 : vector<10x1xf32> to vector<10x32xf32>
    %308 = arith.subf %300, %307 : vector<10x32xf32>
    %309 = arith.mulf %308, %308 : vector<10x32xf32>
    %cst_132 = arith.constant dense<0.000000e+00> : vector<10xf32>
    %310 = vector.multi_reduction <add>, %309, %cst_132 [1] : vector<10x32xf32> to vector<10xf32>
    %311 = vector.shape_cast %310 : vector<10xf32> to vector<10x1xf32>
    %cst_133 = arith.constant 3.200000e+01 : f32
    %312 = vector.broadcast %cst_133 : f32 to vector<10x1xf32>
    %313 = arith.divf %311, %312 : vector<10x1xf32>
    %314 = vector.broadcast %306 : vector<10x1xf32> to vector<10x32xf32>
    %315 = arith.subf %300, %314 : vector<10x32xf32>
    %cst_134 = arith.constant 9.99999996E-13 : f32
    %316 = vector.broadcast %cst_134 : f32 to vector<10x1xf32>
    %317 = arith.addf %313, %316 : vector<10x1xf32>
    %318 = math.rsqrt %317 : vector<10x1xf32>
    %319 = vector.broadcast %318 : vector<10x1xf32> to vector<10x32xf32>
    %320 = arith.mulf %315, %319 : vector<10x32xf32>
    %321 = vector.broadcast %301 : vector<1x32xf32> to vector<10x32xf32>
    %322 = arith.mulf %320, %321 : vector<10x32xf32>
    %323 = vector.broadcast %302 : vector<1x32xf32> to vector<10x32xf32>
    %324 = arith.addf %322, %323 : vector<10x32xf32>
    %325 = vector.shape_cast %324 : vector<10x32xf32> to vector<2x5x32xf32>
    %326 = vector.extract_strided_slice %325 {offsets = [0, 0, 0], sizes = [2, 1, 32], strides = [1, 1, 1]} : vector<2x5x32xf32> to vector<2x1x32xf32>
    %327 = vector.shape_cast %326 : vector<2x1x32xf32> to vector<2x32xf32>
    %328 = arith.truncf %327 : vector<2x32xf32> to vector<2x32xbf16>
    %c0_135 = arith.constant 0 : index
    %c0_136 = arith.constant 0 : index
    %329 = vector.load %arg19[%c0_135, %c0_136] : memref<32x32xbf16, #tpu.memory_space<vmem>>, vector<32x32xbf16>
    %cst_137 = arith.constant dense<0.000000e+00> : vector<2x32xf32>
    %330 = tpu.matmul %328, %329, %cst_137 {dimension_numbers = #tpu.dot_dimension_numbers<[1], [0], [0], [1], [0, 0, 1, 1], [], []>} : vector<2x32xbf16>, vector<32x32xbf16>, vector<2x32xf32> -> vector<2x32xf32>
    %c0_138 = arith.constant 0 : index
    %c0_139 = arith.constant 0 : index
    %331 = vector.load %arg20[%c0_138, %c0_139] : memref<1x32xf32, #tpu.memory_space<vmem>>, vector<1x32xf32>
    %332 = vector.broadcast %331 : vector<1x32xf32> to vector<2x32xf32>
    %333 = arith.addf %330, %332 : vector<2x32xf32>
    %334 = math.tanh %333 : vector<2x32xf32>
    %335 = arith.truncf %334 : vector<2x32xf32> to vector<2x32xbf16>
    %c0_140 = arith.constant 0 : index
    %c0_141 = arith.constant 0 : index
    %336 = vector.load %arg21[%c0_140, %c0_141] : memref<32x384xbf16, #tpu.memory_space<vmem>>, vector<32x384xbf16>
    %cst_142 = arith.constant dense<0.000000e+00> : vector<2x384xf32>
    %337 = tpu.matmul %335, %336, %cst_142 {dimension_numbers = #tpu.dot_dimension_numbers<[1], [0], [0], [1], [0, 0, 1, 1], [], []>} : vector<2x32xbf16>, vector<32x384xbf16>, vector<2x384xf32> -> vector<2x384xf32>
    %c0_143 = arith.constant 0 : index
    %c0_144 = arith.constant 0 : index
    %338 = vector.load %arg22[%c0_143, %c0_144] : memref<1x384xf32, #tpu.memory_space<vmem>>, vector<1x384xf32>
    %339 = vector.broadcast %338 : vector<1x384xf32> to vector<2x384xf32>
    %340 = arith.addf %337, %339 : vector<2x384xf32>
    %c0_145 = arith.constant 0 : index
    %c0_146 = arith.constant 0 : index
    %341 = vector.load %arg23[%c0_145, %c0_146] : memref<2x384xf32, #tpu.memory_space<vmem>>, vector<2x384xf32>
    tpu.vector_store %arg23[%c0_145, %c0_146], %340 {strides = array<i32>} : memref<2x384xf32, #tpu.memory_space<vmem>>, vector<2x384xf32>,
    return
  }
}

</mosaic_0001>

<llo_original>
// kernel: hf_vit_forward.1
$region0: #{hf_vit_forward.1}
  #allocation0 [shape = 'u32[]', space=smem, size = 0x4, offset = 0x4, fixed_abs, tag = 'smem constant byte address 0x4 - core index']
  #allocation1 [shape = 'u32[144,128]{1,0:T(1,128)}', space=vmem, size = 0x12000, scoped, tag = 'internal scratch']
  %s0 = inlined_call_operand.vmem [shape: bf16[8,192], index: 0, kind: input, shape index: {}]
  %s1 = inlined_call_operand.vmem [shape: bf16[192,32], index: 1, kind: input, shape index: {}]
  %s2 = inlined_call_operand.vmem [shape: f32[1,32], index: 2, kind: input, shape index: {}]
  %s3 = inlined_call_operand.vmem [shape: f32[1,32], index: 3, kind: input, shape index: {}]
  %s4 = inlined_call_operand.vmem [shape: f32[5,32], index: 4, kind: input, shape index: {}]
  %s5 = inlined_call_operand.vmem [shape: f32[2,1,32], index: 5, kind: input, shape index: {}]
  %s6 = inlined_call_operand.vmem [shape: f32[2,1,32], index: 6, kind: input, shape index: {}]
  %s7 = inlined_call_operand.vmem [shape: bf16[2,32,96], index: 7, kind: input, shape index: {}]
  %s8 = inlined_call_operand.vmem [shape: f32[2,1,96], index: 8, kind: input, shape index: {}]
  %s9 = inlined_call_operand.vmem [shape: bf16[2,32,32], index: 9, kind: input, shape index: {}]
  %s10 = inlined_call_operand.vmem [shape: f32[2,1,32], index: 10, kind: input, shape index: {}]
  %s11 = inlined_call_operand.vmem [shape: f32[2,1,32], index: 11, kind: input, shape index: {}]
  %s12 = inlined_call_operand.vmem [shape: f32[2,1,32], index: 12, kind: input, shape index: {}]
  %s13 = inlined_call_operand.vmem [shape: bf16[2,32,128], index: 13, kind: input, shape index: {}]
  %s14 = inlined_call_operand.vmem [shape: f32[2,1,128], index: 14, kind: input, shape index: {}]
  %s15 = inlined_call_operand.vmem [shape: bf16[2,128,32], index: 15, kind: input, shape index: {}]
  %s16 = inlined_call_operand.vmem [shape: f32[2,1,32], index: 16, kind: input, shape index: {}]
  %s17 = inlined_call_operand.vmem [shape: f32[1,32], index: 17, kind: input, shape index: {}]
  %s18 = inlined_call_operand.vmem [shape: f32[1,32], index: 18, kind: input, shape index: {}]
  %s19 = inlined_call_operand.vmem [shape: bf16[32,32], index: 19, kind: input, shape index: {}]
  %s20 = inlined_call_operand.vmem [shape: f32[1,32], index: 20, kind: input, shape index: {}]
  %s21 = inlined_call_operand.vmem [shape: bf16[32,384], index: 21, kind: input, shape index: {}]
  %s22 = inlined_call_operand.vmem [shape: f32[1,384], index: 22, kind: input, shape index: {}]
  %s23 = inlined_call_operand.hbm [shape: f32[2,384], index: 23, kind: output, shape index: {}]
  %s24 = sld [smem:[#allocation0]]
  $region102: #{hf_vit_forward.1} parent=0
    _
  %s26 = ssub.s32 1, %s24
  %s27 = scalar_select 0, %s26, %s24
  $region1: #{hf_vit_forward.1} parent=0
    #allocation2 [shape = 'u8[3072]{0}', space=vmem, size = 0xc00, scoped, tag = 'output window, operand 0, single buffered']
    #allocation3 [shape = 's32[1]{0}', space=sflag, size = 0x4, scoped, tag = 'scoped memory for hf_vit_forward.1']
    %28 = vsyncpa [#allocation3], 0
    // Predicated region
    $region2: #{hf_vit_forward.1} parent=1 // pred_check
      _
    $region3: #{hf_vit_forward.1} parent=1 // pred_check_branch
      %30 = sbr.rel (0) target = $region5
    $region4: #{hf_vit_forward.1} parent=1 // pred_region
      _
    $region5: #{hf_vit_forward.1} parent=1 // pred_fallthru
      _
    // Predicated region
    $region6: #{hf_vit_forward.1} parent=1 // pred_check
      _
    $region7: #{hf_vit_forward.1} parent=1 // pred_check_branch
      %32 = sbr.rel (0) target = $region9
    $region8: #{hf_vit_forward.1} parent=1 // pred_region
      _
    $region9: #{hf_vit_forward.1} parent=1 // pred_fallthru
      _
    // Predicated region
    $region10: #{hf_vit_forward.1} parent=1 // pred_check
      _
    $region11: #{hf_vit_forward.1} parent=1 // pred_check_branch
      %34 = sbr.rel (0) target = $region13
    $region12: #{hf_vit_forward.1} parent=1 // pred_region
      _
    $region13: #{hf_vit_forward.1} parent=1 // pred_fallthru
      _
    // Predicated region
    $region14: #{hf_vit_forward.1} parent=1 // pred_check
      _
    $region15: #{hf_vit_forward.1} parent=1 // pred_check_branch
      %36 = sbr.rel (0) target = $region17
    $region16: #{hf_vit_forward.1} parent=1 // pred_region
      _
    $region17: #{hf_vit_forward.1} parent=1 // pred_fallthru
      _
    // Predicated region
    $region18: #{hf_vit_forward.1} parent=1 // pred_check
      _
    $region19: #{hf_vit_forward.1} parent=1 // pred_check_branch
      %38 = sbr.rel (0) target = $region21
    $region20: #{hf_vit_forward.1} parent=1 // pred_region
      _
    $region21: #{hf_vit_forward.1} parent=1 // pred_fallthru
      _
    // Predicated region
    $region22: #{hf_vit_forward.1} parent=1 // pred_check
      _
    $region23: #{hf_vit_forward.1} parent=1 // pred_check_branch
      %40 = sbr.rel (0) target = $region25
    $region24: #{hf_vit_forward.1} parent=1 // pred_region
      _
    $region25: #{hf_vit_forward.1} parent=1 // pred_fallthru
      _
    // Predicated region
    $region26: #{hf_vit_forward.1} parent=1 // pred_check
      _
    $region27: #{hf_vit_forward.1} parent=1 // pred_check_branch
      %42 = sbr.rel (0) target = $region29
    $region28: #{hf_vit_forward.1} parent=1 // pred_region
      _
    $region29: #{hf_vit_forward.1} parent=1 // pred_fallthru
      _
    // Predicated region
    $region30: #{hf_vit_forward.1} parent=1 // pred_check
      _
    $region31: #{hf_vit_forward.1} parent=1 // pred_check_branch
      %44 = sbr.rel (0) target = $region33
    $region32: #{hf_vit_forward.1} parent=1 // pred_region
      _
    $region33: #{hf_vit_forward.1} parent=1 // pred_fallthru
      _
    // Predicated region
    $region34: #{hf_vit_forward.1} parent=1 // pred_check
      _
    $region35: #{hf_vit_forward.1} parent=1 // pred_check_branch
      %46 = sbr.rel (0) target = $region37
    $region36: #{hf_vit_forward.1} parent=1 // pred_region
      _
    $region37: #{hf_vit_forward.1} parent=1 // pred_fallthru
      _
    // Predicated region
    $region38: #{hf_vit_forward.1} parent=1 // pred_check
      _
    $region39: #{hf_vit_forward.1} parent=1 // pred_check_branch
      %48 = sbr.rel (0) target = $region41
    $region40: #{hf_vit_forward.1} parent=1 // pred_region
      _
    $region41: #{hf_vit_forward.1} parent=1 // pred_fallthru
      _
    // Predicated region
    $region42: #{hf_vit_forward.1} parent=1 // pred_check
      _
    $region43: #{hf_vit_forward.1} parent=1 // pred_check_branch
      %50 = sbr.rel (0) target = $region45
    $region44: #{hf_vit_forward.1} parent=1 // pred_region
      _
    $region45: #{hf_vit_forward.1} parent=1 // pred_fallthru
      _
    // Predicated region
    $region46: #{hf_vit_forward.1} parent=1 // pred_check
      _
    $region47: #{hf_vit_forward.1} parent=1 // pred_check_branch
      %52 = sbr.rel (0) target = $region49
    $region48: #{hf_vit_forward.1} parent=1 // pred_region
      _
    $region49: #{hf_vit_forward.1} parent=1 // pred_fallthru
      _
    // Predicated region
    $region50: #{hf_vit_forward.1} parent=1 // pred_check
      _
    $region51: #{hf_vit_forward.1} parent=1 // pred_check_branch
      %54 = sbr.rel (0) target = $region53
    $region52: #{hf_vit_forward.1} parent=1 // pred_region
      _
    $region53: #{hf_vit_forward.1} parent=1 // pred_fallthru
      _
    // Predicated region
    $region54: #{hf_vit_forward.1} parent=1 // pred_check
      _
    $region55: #{hf_vit_forward.1} parent=1 // pred_check_branch
      %56 = sbr.rel (0) target = $region57
    $region56: #{hf_vit_forward.1} parent=1 // pred_region
      _
    $region57: #{hf_vit_forward.1} parent=1 // pred_fallthru
      _
    // Predicated region
    $region58: #{hf_vit_forward.1} parent=1 // pred_check
      _
    $region59: #{hf_vit_forward.1} parent=1 // pred_check_branch
      %58 = sbr.rel (0) target = $region61
    $region60: #{hf_vit_forward.1} parent=1 // pred_region
      _
    $region61: #{hf_vit_forward.1} parent=1 // pred_fallthru
      _
    // Predicated region
    $region62: #{hf_vit_forward.1} parent=1 // pred_check
      _
    $region63: #{hf_vit_forward.1} parent=1 // pred_check_branch
      %60 = sbr.rel (0) target = $region65
    $region64: #{hf_vit_forward.1} parent=1 // pred_region
      _
    $region65: #{hf_vit_forward.1} parent=1 // pred_fallthru
      _
    // Predicated region
    $region66: #{hf_vit_forward.1} parent=1 // pred_check
      _
    $region67: #{hf_vit_forward.1} parent=1 // pred_check_branch
      %62 = sbr.rel (0) target = $region69
    $region68: #{hf_vit_forward.1} parent=1 // pred_region
      _
    $region69: #{hf_vit_forward.1} parent=1 // pred_fallthru
      _
    // Predicated region
    $region70: #{hf_vit_forward.1} parent=1 // pred_check
      _
    $region71: #{hf_vit_forward.1} parent=1 // pred_check_branch
      %64 = sbr.rel (0) target = $region73
    $region72: #{hf_vit_forward.1} parent=1 // pred_region
      _
    $region73: #{hf_vit_forward.1} parent=1 // pred_fallthru
      _
    // Predicated region
    $region74: #{hf_vit_forward.1} parent=1 // pred_check
      _
    $region75: #{hf_vit_forward.1} parent=1 // pred_check_branch
      %66 = sbr.rel (0) target = $region77
    $region76: #{hf_vit_forward.1} parent=1 // pred_region
      _
    $region77: #{hf_vit_forward.1} parent=1 // pred_fallthru
      _
    // Predicated region
    $region78: #{hf_vit_forward.1} parent=1 // pred_check
      _
    $region79: #{hf_vit_forward.1} parent=1 // pred_check_branch
      %68 = sbr.rel (0) target = $region81
    $region80: #{hf_vit_forward.1} parent=1 // pred_region
      _
    $region81: #{hf_vit_forward.1} parent=1 // pred_fallthru
      _
    // Predicated region
    $region82: #{hf_vit_forward.1} parent=1 // pred_check
      _
    $region83: #{hf_vit_forward.1} parent=1 // pred_check_branch
      %70 = sbr.rel (0) target = $region85
    $region84: #{hf_vit_forward.1} parent=1 // pred_region
      _
    $region85: #{hf_vit_forward.1} parent=1 // pred_fallthru
      _
    // Predicated region
    $region86: #{hf_vit_forward.1} parent=1 // pred_check
      _
    $region87: #{hf_vit_forward.1} parent=1 // pred_check_branch
      %72 = sbr.rel (0) target = $region89
    $region88: #{hf_vit_forward.1} parent=1 // pred_region
      _
    $region89: #{hf_vit_forward.1} parent=1 // pred_fallthru
      _
    // Predicated region
    $region90: #{hf_vit_forward.1} parent=1 // pred_check
      _
    $region91: #{hf_vit_forward.1} parent=1 // pred_check_branch
      %74 = sbr.rel (0) target = $region93
    $region92: #{hf_vit_forward.1} parent=1 // pred_region
      _
    $region93: #{hf_vit_forward.1} parent=1 // pred_fallthru
      _
    %v76 = vld [vmem:[%s0] sm:$0xff]
    %v77 = vld [vmem:[%s1] sm:$0xf]
    %v78 = vld [vmem:[%s1 + $0x4] sm:$0xf]
    %v79 = vld [vmem:[%s1 + $0x8] sm:$0xf]
    %v80 = vld [vmem:[%s1 + $0xc] sm:$0xf]
    %v81 = vld [vmem:[%s1 + $0x10] sm:$0xf]
    %v82 = vld [vmem:[%s1 + $0x14] sm:$0xf]
    %v83 = vld [vmem:[%s1 + $0x18] sm:$0xf]
    %v84 = vld [vmem:[%s1 + $0x1c] sm:$0xf]
    %v85 = vld [vmem:[%s1 + $0x20] sm:$0xf]
    %v86 = vld [vmem:[%s1 + $0x24] sm:$0xf]
    %v87 = vld [vmem:[%s1 + $0x28] sm:$0xf]
    %v88 = vld [vmem:[%s1 + $0x2c] sm:$0xf]
    %v89 = vld [vmem:[%s1 + $0x30] sm:$0xf]
    %v90 = vld [vmem:[%s1 + $0x34] sm:$0xf]
    %v91 = vld [vmem:[%s1 + $0x38] sm:$0xf]
    %v92 = vld [vmem:[%s1 + $0x3c] sm:$0xf]
    %v93 = vld [vmem:[%s1 + $0x40] sm:$0xf]
    %v94 = vld [vmem:[%s1 + $0x44] sm:$0xf]
    %v95 = vld [vmem:[%s1 + $0x48] sm:$0xf]
    %v96 = vld [vmem:[%s1 + $0x4c] sm:$0xf]
    %v97 = vld [vmem:[%s1 + $0x50] sm:$0xf]
    %v98 = vld [vmem:[%s1 + $0x54] sm:$0xf]
    %v99 = vld [vmem:[%s1 + $0x58] sm:$0xf]
    %v100 = vld [vmem:[%s1 + $0x5c] sm:$0xf]
    %v101 = vld [vmem:[%s2] sm:$0x1]
    %v103 = vlaneseq
    %v104 = vshrl.u32 %v103, 7
    %v105 = vsub.s32 0, %v104
    %v106 = vrot.slane %v101, %v105
    %v109 = vunpack.c.l.b16 %v76
    %v110 = vunpack.c.h.b16 %v76
    %v111 = vpack.c.b16 %v109, %v109
    %v112 = vpack.c.b16 %v110, %v110
    %v138 = vunpack.c.l.b16 %v77
    %v139 = vunpack.c.l.b16 %v78
    %v140 = vunpack.c.l.b16 %v79
    %v141 = vunpack.c.l.b16 %v80
    %v142 = vunpack.c.l.b16 %v81
    %v143 = vunpack.c.l.b16 %v82
    %v144 = vunpack.c.l.b16 %v83
    %v145 = vunpack.c.l.b16 %v84
    %v146 = vunpack.c.l.b16 %v85
    %v147 = vunpack.c.l.b16 %v86
    %v148 = vunpack.c.l.b16 %v87
    %v149 = vunpack.c.l.b16 %v88
    %v150 = vunpack.c.l.b16 %v89
    %v151 = vunpack.c.l.b16 %v90
    %v152 = vunpack.c.l.b16 %v91
    %v153 = vunpack.c.l.b16 %v92
    %v154 = vunpack.c.l.b16 %v93
    %v155 = vunpack.c.l.b16 %v94
    %v156 = vunpack.c.l.b16 %v95
    %v157 = vunpack.c.l.b16 %v96
    %v158 = vunpack.c.l.b16 %v97
    %v159 = vunpack.c.l.b16 %v98
    %v160 = vunpack.c.l.b16 %v99
    %v161 = vunpack.c.l.b16 %v100
    %v162 = vpack.c.b16 %v139, %v138
    %v163 = vpack.c.b16 %v141, %v140
    %v164 = vpack.c.b16 %v143, %v142
    %v165 = vpack.c.b16 %v145, %v144
    %v166 = vpack.c.b16 %v147, %v146
    %v167 = vpack.c.b16 %v149, %v148
    %v168 = vpack.c.b16 %v151, %v150
    %v169 = vpack.c.b16 %v153, %v152
    %v170 = vpack.c.b16 %v155, %v154
    %v171 = vpack.c.b16 %v157, %v156
    %v172 = vpack.c.b16 %v159, %v158
    %v173 = vpack.c.b16 %v161, %v160
    %vm186 = vcmask 523264
    %v188 = vsel %vm186, %v112, 0
    %190 = vmatprep.subr.bf16.mxu0 0
    %191 = vmatpush1.bf16.msra.mxu0 %v162
    %192 = vmatprep.subr.bf16.mxu0 0
    %193 = vmatpush1.bf16.msra.mxu0 %v163
    %194 = vmatprep.subr.bf16.mxu0 0
    %195 = vmatpush1.bf16.msra.mxu0 %v164
    %196 = vmatprep.subr.bf16.mxu0 0
    %197 = vmatpush1.bf16.msra.mxu0 %v165
    %198 = vmatprep.subr.bf16.mxu0 0
    %199 = vmatpush1.bf16.msra.mxu0 %v166
    %200 = vmatprep.subr.bf16.mxu0 0
    %201 = vmatpush1.bf16.msra.mxu0 %v167
    %202 = vmatprep.subr.bf16.mxu0 0
    %203 = vmatpush1.bf16.msra.mxu0 %v168
    %204 = vmatprep.subr.bf16.mxu0 0
    %205 = vmatpush1.bf16.msra.mxu0 %v169
    %206 = vmatprep.subr.bf16.mxu0 0
    %207 = vmatpush1.bf16.msra.mxu0 %v170
    %208 = vmatprep.subr.bf16.mxu0 0
    %209 = vmatpush1.bf16.msra.mxu0 %v171
    %210 = vmatprep.subr.bf16.mxu0 0
    %211 = vmatpush1.bf16.msra.mxu0 %v172
    %212 = vmatprep.subr.bf16.mxu0 0
    %213 = vmatpush1.bf16.msra.mxu0 %v173
    %214 = vmatprep.subr.bf16.mxu0 0
    %215 = vmatpush1.bf16.msra.mxu0 0
    %216 = vmatprep.subr.bf16.mxu0 0
    %217 = vmatpush1.bf16.msra.mxu0 0
    %218 = vmatprep.subr.bf16.mxu0 0
    %219 = vmatpush1.bf16.msra.mxu0 0
    %220 = vmatprep.subr.bf16.mxu0 0
    %221 = vmatpush1.bf16.msra.mxu0 0
    %222 = vmatprep.mubr.bf16.mxu0 %v188
    %223 = vmatmul.mubr.bf16.gmra.mrb[0].mxu0 %v111
    %v224 = vpop.f32.mrb[0].mxu0
    %v225 = vadd.f32 %v106, %v224
    %v226 = vpop.f32.mrb[0].mxu0
    %v227 = vpop.f32.mrb[0].mxu0
    %v228 = vpop.f32.mrb[0].mxu0
    %229 = vdwg.mxu0
    %v231 = vcombine.high %v225, %v225
    %v232 = vld [vmem:[%s3] sm:$0x1]
    %v233 = vrot.slane %v225, 7
    %v234 = vrot.slane %v231, 7
    %vm237 = vcmask 1040384
    %v238 = vsel %vm237, %v232, %v233
    %v239 = vsel %vm237, %v232, %v234
    %v240 = vld [vmem:[%s4] sm:$0x1f]
    %v241 = vadd.f32 %v238, %v240
    %v242 = vadd.f32 %v239, %v240
    %v245 = vcombine.high %v241, %v241
    %v247 = vunpack.c.l.s4 1966171168
    %v248 = vunpack.c.0.s8 %v247
    %v249 = vlaneseq
    %v250 = vshrl.u32 %v249, 7
    %v251 = vsub.s32 %v248, %v250
    %v252 = vrot.slane %v241, %v251
    %v254 = vunpack.c.l.s4 1966171168
    %v255 = vunpack.c.0.s8 %v254
    %v256 = vlaneseq
    %v257 = vshrl.u32 %v256, 7
    %v258 = vsub.s32 %v255, %v257
    %v259 = vrot.slane %v245, %v258
    %v260 = vcombine.high %v252, %v252
    %v262 = vunpack.c.l.s4 1966171168
    %v263 = vunpack.c.0.s8 %v262
    %v264 = vlaneseq
    %v265 = vshrl.u32 %v264, 7
    %v266 = vsub.s32 %v263, %v265
    %v267 = vrot.slane %v252, %v266
    %v269 = vunpack.c.l.s4 1966171168
    %v270 = vunpack.c.0.s8 %v269
    %v271 = vlaneseq
    %v272 = vshrl.u32 %v271, 7
    %v273 = vsub.s32 %v270, %v272
    %v274 = vrot.slane %v259, %v273
    %v276 = vunpack.c.l.s4 1966171168
    %v277 = vunpack.c.0.s8 %v276
    %v278 = vlaneseq
    %v279 = vshrl.u32 %v278, 7
    %v280 = vsub.s32 %v277, %v279
    %v281 = vrot.slane %v260, %v280
    %v282 = vcombine.high %v267, %v267
    %v283 = vcombine.high %v281, %v281
    %v284 = vcombine.high %v242, %v242
    %v286 = vunpack.c.l.s4 1966171168
    %v287 = vunpack.c.0.s8 %v286
    %v288 = vlaneseq
    %v289 = vshrl.u32 %v288, 7
    %v290 = vsub.s32 %v287, %v289
    %v291 = vrot.slane %v242, %v290
    %v293 = vunpack.c.l.s4 1966171168
    %v294 = vunpack.c.0.s8 %v293
    %v295 = vlaneseq
    %v296 = vshrl.u32 %v295, 7
    %v297 = vsub.s32 %v294, %v296
    %v298 = vrot.slane %v284, %v297
    %v299 = vcombine.high %v291, %v291
    %v301 = vunpack.c.l.s4 1966171168
    %v302 = vunpack.c.0.s8 %v301
    %v303 = vlaneseq
    %v304 = vshrl.u32 %v303, 7
    %v305 = vsub.s32 %v302, %v304
    %v306 = vrot.slane %v291, %v305
    %v308 = vunpack.c.l.s4 1966171168
    %v309 = vunpack.c.0.s8 %v308
    %v310 = vlaneseq
    %v311 = vshrl.u32 %v310, 7
    %v312 = vsub.s32 %v309, %v311
    %v313 = vrot.slane %v298, %v312
    %v315 = vunpack.c.l.s4 1966171168
    %v316 = vunpack.c.0.s8 %v315
    %v317 = vlaneseq
    %v318 = vshrl.u32 %v317, 7
    %v319 = vsub.s32 %v316, %v318
    %v320 = vrot.slane %v299, %v319
    %v321 = vcombine.high %v306, %v306
    %v322 = vcombine.high %v320, %v320
    %v333 = vld [vmem:[%s5] sm:$0x1]
    %v334 = vld [vmem:[%s6] sm:$0x1]
    %v335 = vcombine.low %v267, %v281
    %v336 = vcombine.low %v282, %v283
    %v337 = vcombine.low %v274, %v306
    %v338 = vcombine.low %v320, %v321
    %v340 = vunpack.c.l.s4 1966171168
    %v341 = vunpack.c.0.s8 %v340
    %v342 = vlaneseq
    %v343 = vshrl.u32 %v342, 7
    %v344 = vsub.s32 %v341, %v343
    %v345 = vrot.slane %v335, %v344
    %v347 = vunpack.c.l.s4 1966171168
    %v348 = vunpack.c.0.s8 %v347
    %v349 = vlaneseq
    %v350 = vshrl.u32 %v349, 7
    %v351 = vsub.s32 %v348, %v350
    %v352 = vrot.slane %v336, %v351
    %v354 = vunpack.c.l.s4 1966171168
    %v355 = vunpack.c.0.s8 %v354
    %v356 = vlaneseq
    %v357 = vshrl.u32 %v356, 7
    %v358 = vsub.s32 %v355, %v357
    %v359 = vrot.slane %v337, %v358
    %v361 = vunpack.c.l.s4 1966171168
    %v362 = vunpack.c.0.s8 %v361
    %v363 = vlaneseq
    %v364 = vshrl.u32 %v363, 7
    %v365 = vsub.s32 %v362, %v364
    %v366 = vrot.slane %v338, %v365
    %v367 = vcombine.low %v345, %v352
    %v368 = vcombine.low %v359, %v366
    %v370 = vunpack.c.l.s4 1966171168
    %v371 = vunpack.c.0.s8 %v370
    %v372 = vlaneseq
    %v373 = vshrl.u32 %v372, 7
    %v374 = vsub.s32 %v371, %v373
    %v375 = vrot.slane %v367, %v374
    %v377 = vunpack.c.l.s4 1966171168
    %v378 = vunpack.c.0.s8 %v377
    %v379 = vlaneseq
    %v380 = vshrl.u32 %v379, 7
    %v381 = vsub.s32 %v378, %v380
    %v382 = vrot.slane %v368, %v381
    %v383 = vcombine.low %v375, %v382
    %v384 = vcombine.low %v322, %v313
    %v386 = vunpack.c.l.s4 1966171168
    %v387 = vunpack.c.0.s8 %v386
    %v388 = vlaneseq
    %v389 = vshrl.u32 %v388, 7
    %v390 = vsub.s32 %v387, %v389
    %v391 = vrot.slane %v384, %v390
    %v393 = vunpack.c.l.s4 1966171168
    %v394 = vunpack.c.0.s8 %v393
    %v395 = vlaneseq
    %v396 = vshrl.u32 %v395, 7
    %v397 = vsub.s32 %v394, %v396
    %v398 = vrot.slane %v391, %v397
    %vm401 = vcmask 261120
    %v402 = vsel %vm401, %v383, 0.0
    %403 = vadd.xlane.f32.xlu0 %v402
    %v404 = vpop.xlane.xlu0 %403
    %vm405 = vcmask 254976
    %v406 = vsel %vm405, %v398, 0.0
    %407 = vadd.xlane.f32.xlu0 %v406
    %v408 = vpop.xlane.xlu0 %407
    %v409 = vrcp.pop 32.0
    %v410 = vmul.f32 %v404, %v409
    %v411 = vmul.f32 %v408, %v409
    %v414 = vlaneseq
    %v415 = vshrl.u32 %v414, 7
    %v416 = vsub.s32 0, %v415
    %v417 = vrot.slane %v410, %v416
    %v418 = vlaneseq
    %v419 = vshrl.u32 %v418, 7
    %v420 = vsub.s32 1, %v419
    %v421 = vrot.slane %v410, %v420
    %v422 = vlaneseq
    %v423 = vshrl.u32 %v422, 7
    %v424 = vsub.s32 2, %v423
    %v425 = vrot.slane %v410, %v424
    %v426 = vlaneseq
    %v427 = vshrl.u32 %v426, 7
    %v428 = vsub.s32 3, %v427
    %v429 = vrot.slane %v410, %v428
    %v430 = vlaneseq
    %v431 = vshrl.u32 %v430, 7
    %v432 = vsub.s32 4, %v431
    %v433 = vrot.slane %v410, %v432
    %v434 = vlaneseq
    %v435 = vshrl.u32 %v434, 7
    %v436 = vsub.s32 5, %v435
    %v437 = vrot.slane %v410, %v436
    %v438 = vlaneseq
    %v439 = vshrl.u32 %v438, 7
    %v440 = vsub.s32 6, %v439
    %v441 = vrot.slane %v410, %v440
    %v442 = vlaneseq
    %v443 = vshrl.u32 %v442, 7
    %v444 = vsub.s32 7, %v443
    %v445 = vrot.slane %v410, %v444
    %v446 = vlaneseq
    %v447 = vshrl.u32 %v446, 7
    %v448 = vsub.s32 0, %v447
    %v449 = vrot.slane %v411, %v448
    %v450 = vlaneseq
    %v451 = vshrl.u32 %v450, 7
    %v452 = vsub.s32 1, %v451
    %v453 = vrot.slane %v411, %v452
    %v464 = vsub.f32 %v267, %v417
    %v465 = vsub.f32 %v281, %v421
    %v466 = vsub.f32 %v282, %v425
    %v467 = vsub.f32 %v283, %v429
    %v468 = vsub.f32 %v274, %v433
    %v469 = vsub.f32 %v306, %v437
    %v470 = vsub.f32 %v320, %v441
    %v471 = vsub.f32 %v321, %v445
    %v472 = vsub.f32 %v322, %v449
    %v473 = vsub.f32 %v313, %v453
    %v474 = vmul.f32 %v464, %v464
    %v475 = vmul.f32 %v465, %v465
    %v476 = vmul.f32 %v466, %v466
    %v477 = vmul.f32 %v467, %v467
    %v478 = vmul.f32 %v468, %v468
    %v479 = vmul.f32 %v469, %v469
    %v480 = vmul.f32 %v470, %v470
    %v481 = vmul.f32 %v471, %v471
    %v482 = vmul.f32 %v472, %v472
    %v483 = vmul.f32 %v473, %v473
    %v494 = vcombine.low %v474, %v475
    %v495 = vcombine.low %v476, %v477
    %v496 = vcombine.low %v478, %v479
    %v497 = vcombine.low %v480, %v481
    %v499 = vunpack.c.l.s4 1966171168
    %v500 = vunpack.c.0.s8 %v499
    %v501 = vlaneseq
    %v502 = vshrl.u32 %v501, 7
    %v503 = vsub.s32 %v500, %v502
    %v504 = vrot.slane %v494, %v503
    %v506 = vunpack.c.l.s4 1966171168
    %v507 = vunpack.c.0.s8 %v506
    %v508 = vlaneseq
    %v509 = vshrl.u32 %v508, 7
    %v510 = vsub.s32 %v507, %v509
    %v511 = vrot.slane %v495, %v510
    %v513 = vunpack.c.l.s4 1966171168
    %v514 = vunpack.c.0.s8 %v513
    %v515 = vlaneseq
    %v516 = vshrl.u32 %v515, 7
    %v517 = vsub.s32 %v514, %v516
    %v518 = vrot.slane %v496, %v517
    %v520 = vunpack.c.l.s4 1966171168
    %v521 = vunpack.c.0.s8 %v520
    %v522 = vlaneseq
    %v523 = vshrl.u32 %v522, 7
    %v524 = vsub.s32 %v521, %v523
    %v525 = vrot.slane %v497, %v524
    %v526 = vcombine.low %v504, %v511
    %v527 = vcombine.low %v518, %v525
    %v529 = vunpack.c.l.s4 1966171168
    %v530 = vunpack.c.0.s8 %v529
    %v531 = vlaneseq
    %v532 = vshrl.u32 %v531, 7
    %v533 = vsub.s32 %v530, %v532
    %v534 = vrot.slane %v526, %v533
    %v536 = vunpack.c.l.s4 1966171168
    %v537 = vunpack.c.0.s8 %v536
    %v538 = vlaneseq
    %v539 = vshrl.u32 %v538, 7
    %v540 = vsub.s32 %v537, %v539
    %v541 = vrot.slane %v527, %v540
    %v542 = vcombine.low %v534, %v541
    %v543 = vcombine.low %v482, %v483
    %v545 = vunpack.c.l.s4 1966171168
    %v546 = vunpack.c.0.s8 %v545
    %v547 = vlaneseq
    %v548 = vshrl.u32 %v547, 7
    %v549 = vsub.s32 %v546, %v548
    %v550 = vrot.slane %v543, %v549
    %v552 = vunpack.c.l.s4 1966171168
    %v553 = vunpack.c.0.s8 %v552
    %v554 = vlaneseq
    %v555 = vshrl.u32 %v554, 7
    %v556 = vsub.s32 %v553, %v555
    %v557 = vrot.slane %v550, %v556
    %v560 = vsel %vm401, %v542, 0.0
    %561 = vadd.xlane.f32.xlu0 %v560
    %v562 = vpop.xlane.xlu0 %561
    %v563 = vsel %vm405, %v557, 0.0
    %564 = vadd.xlane.f32.xlu0 %v563
    %v565 = vpop.xlane.xlu0 %564
    %v566 = vmul.f32 %v562, %v409
    %v567 = vmul.f32 %v565, %v409
    %v568 = vadd.f32 %v566, 1e-12
    %v569 = vadd.f32 %v567, 1e-12
    %v570 = vrsqrt.pop %v568
    %v571 = vrsqrt.pop %v569
    %v574 = vlaneseq
    %v575 = vshrl.u32 %v574, 7
    %v576 = vsub.s32 0, %v575
    %v577 = vrot.slane %v570, %v576
    %v578 = vlaneseq
    %v579 = vshrl.u32 %v578, 7
    %v580 = vsub.s32 1, %v579
    %v581 = vrot.slane %v570, %v580
    %v582 = vlaneseq
    %v583 = vshrl.u32 %v582, 7
    %v584 = vsub.s32 2, %v583
    %v585 = vrot.slane %v570, %v584
    %v586 = vlaneseq
    %v587 = vshrl.u32 %v586, 7
    %v588 = vsub.s32 3, %v587
    %v589 = vrot.slane %v570, %v588
    %v590 = vlaneseq
    %v591 = vshrl.u32 %v590, 7
    %v592 = vsub.s32 4, %v591
    %v593 = vrot.slane %v570, %v592
    %v594 = vlaneseq
    %v595 = vshrl.u32 %v594, 7
    %v596 = vsub.s32 5, %v595
    %v597 = vrot.slane %v570, %v596
    %v598 = vlaneseq
    %v599 = vshrl.u32 %v598, 7
    %v600 = vsub.s32 6, %v599
    %v601 = vrot.slane %v570, %v600
    %v602 = vlaneseq
    %v603 = vshrl.u32 %v602, 7
    %v604 = vsub.s32 7, %v603
    %v605 = vrot.slane %v570, %v604
    %v606 = vlaneseq
    %v607 = vshrl.u32 %v606, 7
    %v608 = vsub.s32 0, %v607
    %v609 = vrot.slane %v571, %v608
    %v610 = vlaneseq
    %v611 = vshrl.u32 %v610, 7
    %v612 = vsub.s32 1, %v611
    %v613 = vrot.slane %v571, %v612
    %v624 = vmul.f32 %v464, %v577
    %v625 = vmul.f32 %v465, %v581
    %v626 = vmul.f32 %v466, %v585
    %v627 = vmul.f32 %v467, %v589
    %v628 = vmul.f32 %v468, %v593
    %v629 = vmul.f32 %v469, %v597
    %v630 = vmul.f32 %v470, %v601
    %v631 = vmul.f32 %v471, %v605
    %v632 = vmul.f32 %v472, %v609
    %v633 = vmul.f32 %v473, %v613
    %v635 = vlaneseq
    %v636 = vshrl.u32 %v635, 7
    %v637 = vsub.s32 0, %v636
    %v638 = vrot.slane %v333, %v637
    %v639 = vcombine.high %v638, %v638
    %v641 = vunpack.c.l.s4 1966171168
    %v642 = vunpack.c.0.s8 %v641
    %v643 = vlaneseq
    %v644 = vshrl.u32 %v643, 7
    %v645 = vsub.s32 %v642, %v644
    %v646 = vrot.slane %v638, %v645
    %v648 = vunpack.c.l.s4 1966171168
    %v649 = vunpack.c.0.s8 %v648
    %v650 = vlaneseq
    %v651 = vshrl.u32 %v650, 7
    %v652 = vsub.s32 %v649, %v651
    %v653 = vrot.slane %v639, %v652
    %v654 = vcombine.high %v646, %v646
    %v655 = vcombine.high %v653, %v653
    %v657 = vunpack.c.l.s4 1966171168
    %v658 = vunpack.c.0.s8 %v657
    %v659 = vlaneseq
    %v660 = vshrl.u32 %v659, 7
    %v661 = vsub.s32 %v658, %v660
    %v662 = vrot.slane %v646, %v661
    %v664 = vunpack.c.l.s4 1966171168
    %v665 = vunpack.c.0.s8 %v664
    %v666 = vlaneseq
    %v667 = vshrl.u32 %v666, 7
    %v668 = vsub.s32 %v665, %v667
    %v669 = vrot.slane %v653, %v668
    %v671 = vunpack.c.l.s4 1966171168
    %v672 = vunpack.c.0.s8 %v671
    %v673 = vlaneseq
    %v674 = vshrl.u32 %v673, 7
    %v675 = vsub.s32 %v672, %v674
    %v676 = vrot.slane %v654, %v675
    %v678 = vunpack.c.l.s4 1966171168
    %v679 = vunpack.c.0.s8 %v678
    %v680 = vlaneseq
    %v681 = vshrl.u32 %v680, 7
    %v682 = vsub.s32 %v679, %v681
    %v683 = vrot.slane %v655, %v682
    %v684 = vcombine.high %v662, %v662
    %v685 = vcombine.high %v669, %v669
    %v686 = vcombine.high %v676, %v676
    %v687 = vcombine.high %v683, %v683
    %v696 = vmul.f32 %v624, %v662
    %v697 = vmul.f32 %v625, %v676
    %v698 = vmul.f32 %v626, %v684
    %v699 = vmul.f32 %v627, %v686
    %v700 = vmul.f32 %v628, %v669
    %v701 = vmul.f32 %v629, %v683
    %v702 = vmul.f32 %v630, %v685
    %v703 = vmul.f32 %v631, %v687
    %v704 = vmul.f32 %v632, %v662
    %v705 = vmul.f32 %v633, %v676
    %v707 = vlaneseq
    %v708 = vshrl.u32 %v707, 7
    %v709 = vsub.s32 0, %v708
    %v710 = vrot.slane %v334, %v709
    %v711 = vcombine.high %v710, %v710
    %v713 = vunpack.c.l.s4 1966171168
    %v714 = vunpack.c.0.s8 %v713
    %v715 = vlaneseq
    %v716 = vshrl.u32 %v715, 7
    %v717 = vsub.s32 %v714, %v716
    %v718 = vrot.slane %v710, %v717
    %v720 = vunpack.c.l.s4 1966171168
    %v721 = vunpack.c.0.s8 %v720
    %v722 = vlaneseq
    %v723 = vshrl.u32 %v722, 7
    %v724 = vsub.s32 %v721, %v723
    %v725 = vrot.slane %v711, %v724
    %v726 = vcombine.high %v718, %v718
    %v727 = vcombine.high %v725, %v725
    %v729 = vunpack.c.l.s4 1966171168
    %v730 = vunpack.c.0.s8 %v729
    %v731 = vlaneseq
    %v732 = vshrl.u32 %v731, 7
    %v733 = vsub.s32 %v730, %v732
    %v734 = vrot.slane %v718, %v733
    %v736 = vunpack.c.l.s4 1966171168
    %v737 = vunpack.c.0.s8 %v736
    %v738 = vlaneseq
    %v739 = vshrl.u32 %v738, 7
    %v740 = vsub.s32 %v737, %v739
    %v741 = vrot.slane %v725, %v740
    %v743 = vunpack.c.l.s4 1966171168
    %v744 = vunpack.c.0.s8 %v743
    %v745 = vlaneseq
    %v746 = vshrl.u32 %v745, 7
    %v747 = vsub.s32 %v744, %v746
    %v748 = vrot.slane %v726, %v747
    %v750 = vunpack.c.l.s4 1966171168
    %v751 = vunpack.c.0.s8 %v750
    %v752 = vlaneseq
    %v753 = vshrl.u32 %v752, 7
    %v754 = vsub.s32 %v751, %v753
    %v755 = vrot.slane %v727, %v754
    %v756 = vcombine.high %v734, %v734
    %v757 = vcombine.high %v741, %v741
    %v758 = vcombine.high %v748, %v748
    %v759 = vcombine.high %v755, %v755
    %v768 = vadd.f32 %v696, %v734
    %v769 = vadd.f32 %v697, %v748
    %v770 = vadd.f32 %v698, %v756
    %v771 = vadd.f32 %v699, %v758
    %v772 = vadd.f32 %v700, %v741
    %v773 = vadd.f32 %v701, %v755
    %v774 = vadd.f32 %v702, %v757
    %v775 = vadd.f32 %v703, %v759
    %v776 = vadd.f32 %v704, %v734
    %v777 = vadd.f32 %v705, %v748
    %v788 = vcombine.low %v768, %v769
    %v789 = vcombine.low %v770, %v771
    %v790 = vcombine.low %v772, %v773
    %v791 = vcombine.low %v774, %v775
    %v793 = vunpack.c.l.s4 1966171168
    %v794 = vunpack.c.0.s8 %v793
    %v795 = vlaneseq
    %v796 = vshrl.u32 %v795, 7
    %v797 = vsub.s32 %v794, %v796
    %v798 = vrot.slane %v788, %v797
    %v800 = vunpack.c.l.s4 1966171168
    %v801 = vunpack.c.0.s8 %v800
    %v802 = vlaneseq
    %v803 = vshrl.u32 %v802, 7
    %v804 = vsub.s32 %v801, %v803
    %v805 = vrot.slane %v789, %v804
    %v807 = vunpack.c.l.s4 1966171168
    %v808 = vunpack.c.0.s8 %v807
    %v809 = vlaneseq
    %v810 = vshrl.u32 %v809, 7
    %v811 = vsub.s32 %v808, %v810
    %v812 = vrot.slane %v790, %v811
    %v814 = vunpack.c.l.s4 1966171168
    %v815 = vunpack.c.0.s8 %v814
    %v816 = vlaneseq
    %v817 = vshrl.u32 %v816, 7
    %v818 = vsub.s32 %v815, %v817
    %v819 = vrot.slane %v791, %v818
    %v820 = vcombine.low %v798, %v805
    %v821 = vcombine.low %v812, %v819
    %v823 = vunpack.c.l.s4 1966171168
    %v824 = vunpack.c.0.s8 %v823
    %v825 = vlaneseq
    %v826 = vshrl.u32 %v825, 7
    %v827 = vsub.s32 %v824, %v826
    %v828 = vrot.slane %v820, %v827
    %v830 = vunpack.c.l.s4 1966171168
    %v831 = vunpack.c.0.s8 %v830
    %v832 = vlaneseq
    %v833 = vshrl.u32 %v832, 7
    %v834 = vsub.s32 %v831, %v833
    %v835 = vrot.slane %v821, %v834
    %v836 = vcombine.low %v828, %v835
    %v837 = vcombine.low %v776, %v777
    %v839 = vunpack.c.l.s4 1966171168
    %v840 = vunpack.c.0.s8 %v839
    %v841 = vlaneseq
    %v842 = vshrl.u32 %v841, 7
    %v843 = vsub.s32 %v840, %v842
    %v844 = vrot.slane %v837, %v843
    %v846 = vunpack.c.l.s4 1966171168
    %v847 = vunpack.c.0.s8 %v846
    %v848 = vlaneseq
    %v849 = vshrl.u32 %v848, 7
    %v850 = vsub.s32 %v847, %v849
    %v851 = vrot.slane %v844, %v850
    %v854 = vpack.c.bf16 %v851, %v836
    %v855 = vld [vmem:[%s7] sm:$0xf]
    %v856 = vld [vmem:[%s7 + $0x4] sm:$0xf]
    %v857 = vld [vmem:[%s7 + $0x8] sm:$0xf]
    %v858 = vld [vmem:[%s7 + $0xc] sm:$0xf]
    %v859 = vld [vmem:[%s8] sm:$0x1]
    %v861 = vlaneseq
    %v862 = vshrl.u32 %v861, 7
    %v863 = vsub.s32 0, %v862
    %v864 = vrot.slane %v859, %v863
    %v870 = vunpack.c.l.b16 %v855
    %v871 = vunpack.c.l.b16 %v856
    %v872 = vunpack.c.l.b16 %v857
    %v873 = vunpack.c.l.b16 %v858
    %v874 = vpack.c.b16 %v871, %v870
    %v875 = vpack.c.b16 %v873, %v872
    %v879 = vsel %vm401, %v854, 0
    %881 = vmatprep.subr.bf16.mxu0 0
    %882 = vmatpush1.bf16.msra.mxu0 %v874
    %883 = vmatprep.subr.bf16.mxu0 0
    %884 = vmatpush1.bf16.msra.mxu0 %v875
    %885 = vmatprep.subr.bf16.mxu0 0
    %886 = vmatpush1.bf16.msra.mxu0 0
    %887 = vmatprep.subr.bf16.mxu0 0
    %888 = vmatpush1.bf16.msra.mxu0 0
    %889 = vmatprep.subr.bf16.mxu0 0
    %890 = vmatpush1.bf16.msra.mxu0 0
    %891 = vmatprep.subr.bf16.mxu0 0
    %892 = vmatpush1.bf16.msra.mxu0 0
    %893 = vmatprep.subr.bf16.mxu0 0
    %894 = vmatpush1.bf16.msra.mxu0 0
    %895 = vmatprep.subr.bf16.mxu0 0
    %896 = vmatpush1.bf16.msra.mxu0 0
    %897 = vmatprep.subr.bf16.mxu0 0
    %898 = vmatpush1.bf16.msra.mxu0 0
    %899 = vmatprep.subr.bf16.mxu0 0
    %900 = vmatpush1.bf16.msra.mxu0 0
    %901 = vmatprep.subr.bf16.mxu0 0
    %902 = vmatpush1.bf16.msra.mxu0 0
    %903 = vmatprep.subr.bf16.mxu0 0
    %904 = vmatpush1.bf16.msra.mxu0 0
    %905 = vmatprep.subr.bf16.mxu0 0
    %906 = vmatpush1.bf16.msra.mxu0 0
    %907 = vmatprep.subr.bf16.mxu0 0
    %908 = vmatpush1.bf16.msra.mxu0 0
    %909 = vmatprep.subr.bf16.mxu0 0
    %910 = vmatpush1.bf16.msra.mxu0 0
    %911 = vmatprep.subr.bf16.mxu0 0
    %912 = vmatpush1.bf16.msra.mxu0 0
    %913 = vmatprep.mubr.bf16.mxu0 0
    %914 = vmatmul.mubr.bf16.gmra.mrb[0].mxu0 %v879
    %v915 = vpop.f32.mrb[0].mxu0
    %v916 = vadd.f32 %v864, %v915
    %v917 = vpop.f32.mrb[0].mxu0
    %v918 = vpop.f32.mrb[0].mxu0
    %v919 = vadd.f32 %v864, %v918
    %v920 = vpop.f32.mrb[0].mxu0
    %921 = vdwg.mxu0
    %v924 = vcombine.high %v916, %v916
    %v926 = vunpack.c.l.s4 1966171168
    %v927 = vunpack.c.0.s8 %v926
    %v928 = vlaneseq
    %v929 = vshrl.u32 %v928, 7
    %v930 = vsub.s32 %v927, %v929
    %v931 = vrot.slane %v916, %v930
    %v933 = vunpack.c.l.s4 1966171168
    %v934 = vunpack.c.0.s8 %v933
    %v935 = vlaneseq
    %v936 = vshrl.u32 %v935, 7
    %v937 = vsub.s32 %v934, %v936
    %v938 = vrot.slane %v924, %v937
    %v939 = vcombine.high %v931, %v931
    %v940 = vcombine.high %v938, %v938
    %v942 = vunpack.c.l.s4 1966171168
    %v943 = vunpack.c.0.s8 %v942
    %v944 = vlaneseq
    %v945 = vshrl.u32 %v944, 7
    %v946 = vsub.s32 %v943, %v945
    %v947 = vrot.slane %v931, %v946
    %v949 = vunpack.c.l.s4 1966171168
    %v950 = vunpack.c.0.s8 %v949
    %v951 = vlaneseq
    %v952 = vshrl.u32 %v951, 7
    %v953 = vsub.s32 %v950, %v952
    %v954 = vrot.slane %v938, %v953
    %v956 = vunpack.c.l.s4 1966171168
    %v957 = vunpack.c.0.s8 %v956
    %v958 = vlaneseq
    %v959 = vshrl.u32 %v958, 7
    %v960 = vsub.s32 %v957, %v959
    %v961 = vrot.slane %v939, %v960
    %v963 = vunpack.c.l.s4 1966171168
    %v964 = vunpack.c.0.s8 %v963
    %v965 = vlaneseq
    %v966 = vshrl.u32 %v965, 7
    %v967 = vsub.s32 %v964, %v966
    %v968 = vrot.slane %v940, %v967
    %v969 = vcombine.high %v947, %v947
    %v970 = vcombine.high %v954, %v954
    %v971 = vcombine.high %v961, %v961
    %v972 = vcombine.high %v968, %v968
    %v974 = vunpack.c.l.s4 1966171168
    %v975 = vunpack.c.0.s8 %v974
    %v976 = vlaneseq
    %v977 = vshrl.u32 %v976, 7
    %v978 = vsub.s32 %v975, %v977
    %v979 = vrot.slane %v919, %v978
    %v980 = vcombine.high %v979, %v979
    %v982 = vunpack.c.l.s4 1966171168
    %v983 = vunpack.c.0.s8 %v982
    %v984 = vlaneseq
    %v985 = vshrl.u32 %v984, 7
    %v986 = vsub.s32 %v983, %v985
    %v987 = vrot.slane %v979, %v986
    %v989 = vunpack.c.l.s4 1966171168
    %v990 = vunpack.c.0.s8 %v989
    %v991 = vlaneseq
    %v992 = vshrl.u32 %v991, 7
    %v993 = vsub.s32 %v990, %v992
    %v994 = vrot.slane %v980, %v993
    %995 = vrot.lane.b32.xlu0 %v947, 120
    %v996 = vpop.permute.xlu0 %995
    %997 = vrot.lane.b32.xlu0 %v961, 120
    %v998 = vpop.permute.xlu0 %997
    %999 = vrot.lane.b32.xlu0 %v969, 120
    %v1000 = vpop.permute.xlu0 %999
    %1001 = vrot.lane.b32.xlu0 %v971, 120
    %v1002 = vpop.permute.xlu0 %1001
    %1003 = vrot.lane.b32.xlu0 %v954, 120
    %v1004 = vpop.permute.xlu0 %1003
    %1005 = vrot.lane.b32.xlu0 %v968, 120
    %v1006 = vpop.permute.xlu0 %1005
    %1007 = vrot.lane.b32.xlu0 %v970, 120
    %v1008 = vpop.permute.xlu0 %1007
    %1009 = vrot.lane.b32.xlu0 %v972, 120
    %v1010 = vpop.permute.xlu0 %1009
    %1011 = vrot.lane.b32.xlu0 %v987, 120
    %v1012 = vpop.permute.xlu0 %1011
    %1013 = vrot.lane.b32.xlu0 %v994, 120
    %v1014 = vpop.permute.xlu0 %1013
    %1015 = vrot.lane.b32.xlu0 %v947, 112
    %v1016 = vpop.permute.xlu0 %1015
    %1017 = vrot.lane.b32.xlu0 %v961, 112
    %v1018 = vpop.permute.xlu0 %1017
    %1019 = vrot.lane.b32.xlu0 %v969, 112
    %v1020 = vpop.permute.xlu0 %1019
    %1021 = vrot.lane.b32.xlu0 %v971, 112
    %v1022 = vpop.permute.xlu0 %1021
    %1023 = vrot.lane.b32.xlu0 %v954, 112
    %v1024 = vpop.permute.xlu0 %1023
    %1025 = vrot.lane.b32.xlu0 %v968, 112
    %v1026 = vpop.permute.xlu0 %1025
    %1027 = vrot.lane.b32.xlu0 %v970, 112
    %v1028 = vpop.permute.xlu0 %1027
    %1029 = vrot.lane.b32.xlu0 %v972, 112
    %v1030 = vpop.permute.xlu0 %1029
    %1031 = vrot.lane.b32.xlu0 %v987, 112
    %v1032 = vpop.permute.xlu0 %1031
    %1033 = vrot.lane.b32.xlu0 %v994, 112
    %v1034 = vpop.permute.xlu0 %1033
    %1035 = vrot.lane.b32.xlu0 %v947, 104
    %v1036 = vpop.permute.xlu0 %1035
    %1037 = vrot.lane.b32.xlu0 %v961, 104
    %v1038 = vpop.permute.xlu0 %1037
    %1039 = vrot.lane.b32.xlu0 %v969, 104
    %v1040 = vpop.permute.xlu0 %1039
    %1041 = vrot.lane.b32.xlu0 %v971, 104
    %v1042 = vpop.permute.xlu0 %1041
    %1043 = vrot.lane.b32.xlu0 %v954, 104
    %v1044 = vpop.permute.xlu0 %1043
    %1045 = vrot.lane.b32.xlu0 %v968, 104
    %v1046 = vpop.permute.xlu0 %1045
    %1047 = vrot.lane.b32.xlu0 %v970, 104
    %v1048 = vpop.permute.xlu0 %1047
    %1049 = vrot.lane.b32.xlu0 %v972, 104
    %v1050 = vpop.permute.xlu0 %1049
    %1051 = vrot.lane.b32.xlu0 %v987, 104
    %v1052 = vpop.permute.xlu0 %1051
    %1053 = vrot.lane.b32.xlu0 %v994, 104
    %v1054 = vpop.permute.xlu0 %1053
    %v1055 = vcombine.low %v947, %v961
    %v1056 = vcombine.low %v969, %v971
    %v1058 = vunpack.c.l.s4 1966171168
    %v1059 = vunpack.c.0.s8 %v1058
    %v1060 = vlaneseq
    %v1061 = vshrl.u32 %v1060, 7
    %v1062 = vsub.s32 %v1059, %v1061
    %v1063 = vrot.slane %v1055, %v1062
    %v1065 = vunpack.c.l.s4 1966171168
    %v1066 = vunpack.c.0.s8 %v1065
    %v1067 = vlaneseq
    %v1068 = vshrl.u32 %v1067, 7
    %v1069 = vsub.s32 %v1066, %v1068
    %v1070 = vrot.slane %v1056, %v1069
    %v1072 = vunpack.c.l.s4 1966171168
    %v1073 = vunpack.c.0.s8 %v1072
    %v1074 = vlaneseq
    %v1075 = vshrl.u32 %v1074, 7
    %v1076 = vsub.s32 %v1073, %v1075
    %v1077 = vrot.slane %v954, %v1076
    %v1078 = vcombine.low %v1063, %v1070
    %v1080 = vunpack.c.l.s4 1966171168
    %v1081 = vunpack.c.0.s8 %v1080
    %v1082 = vlaneseq
    %v1083 = vshrl.u32 %v1082, 7
    %v1084 = vsub.s32 %v1081, %v1083
    %v1085 = vrot.slane %v1078, %v1084
    %v1087 = vunpack.c.l.s4 1966171168
    %v1088 = vunpack.c.0.s8 %v1087
    %v1089 = vlaneseq
    %v1090 = vshrl.u32 %v1089, 7
    %v1091 = vsub.s32 %v1088, %v1090
    %v1092 = vrot.slane %v1077, %v1091
    %v1093 = vcombine.low %v1085, %v1092
    %v1094 = vcombine.low %v968, %v970
    %v1095 = vcombine.low %v972, %v987
    %v1097 = vunpack.c.l.s4 1966171168
    %v1098 = vunpack.c.0.s8 %v1097
    %v1099 = vlaneseq
    %v1100 = vshrl.u32 %v1099, 7
    %v1101 = vsub.s32 %v1098, %v1100
    %v1102 = vrot.slane %v1094, %v1101
    %v1104 = vunpack.c.l.s4 1966171168
    %v1105 = vunpack.c.0.s8 %v1104
    %v1106 = vlaneseq
    %v1107 = vshrl.u32 %v1106, 7
    %v1108 = vsub.s32 %v1105, %v1107
    %v1109 = vrot.slane %v1095, %v1108
    %v1111 = vunpack.c.l.s4 1966171168
    %v1112 = vunpack.c.0.s8 %v1111
    %v1113 = vlaneseq
    %v1114 = vshrl.u32 %v1113, 7
    %v1115 = vsub.s32 %v1112, %v1114
    %v1116 = vrot.slane %v994, %v1115
    %v1117 = vcombine.low %v1102, %v1109
    %v1119 = vunpack.c.l.s4 1966171168
    %v1120 = vunpack.c.0.s8 %v1119
    %v1121 = vlaneseq
    %v1122 = vshrl.u32 %v1121, 7
    %v1123 = vsub.s32 %v1120, %v1122
    %v1124 = vrot.slane %v1117, %v1123
    %v1126 = vunpack.c.l.s4 1966171168
    %v1127 = vunpack.c.0.s8 %v1126
    %v1128 = vlaneseq
    %v1129 = vshrl.u32 %v1128, 7
    %v1130 = vsub.s32 %v1127, %v1129
    %v1131 = vrot.slane %v1116, %v1130
    %v1132 = vcombine.low %v1124, %v1131
    %v1133 = vcombine.low %v996, %v998
    %v1134 = vcombine.low %v1000, %v1002
    %v1136 = vunpack.c.l.s4 1966171168
    %v1137 = vunpack.c.0.s8 %v1136
    %v1138 = vlaneseq
    %v1139 = vshrl.u32 %v1138, 7
    %v1140 = vsub.s32 %v1137, %v1139
    %v1141 = vrot.slane %v1133, %v1140
    %v1143 = vunpack.c.l.s4 1966171168
    %v1144 = vunpack.c.0.s8 %v1143
    %v1145 = vlaneseq
    %v1146 = vshrl.u32 %v1145, 7
    %v1147 = vsub.s32 %v1144, %v1146
    %v1148 = vrot.slane %v1134, %v1147
    %v1150 = vunpack.c.l.s4 1966171168
    %v1151 = vunpack.c.0.s8 %v1150
    %v1152 = vlaneseq
    %v1153 = vshrl.u32 %v1152, 7
    %v1154 = vsub.s32 %v1151, %v1153
    %v1155 = vrot.slane %v1004, %v1154
    %v1156 = vcombine.low %v1141, %v1148
    %v1158 = vunpack.c.l.s4 1966171168
    %v1159 = vunpack.c.0.s8 %v1158
    %v1160 = vlaneseq
    %v1161 = vshrl.u32 %v1160, 7
    %v1162 = vsub.s32 %v1159, %v1161
    %v1163 = vrot.slane %v1156, %v1162
    %v1165 = vunpack.c.l.s4 1966171168
    %v1166 = vunpack.c.0.s8 %v1165
    %v1167 = vlaneseq
    %v1168 = vshrl.u32 %v1167, 7
    %v1169 = vsub.s32 %v1166, %v1168
    %v1170 = vrot.slane %v1155, %v1169
    %v1171 = vcombine.low %v1163, %v1170
    %v1172 = vcombine.low %v1006, %v1008
    %v1173 = vcombine.low %v1010, %v1012
    %v1175 = vunpack.c.l.s4 1966171168
    %v1176 = vunpack.c.0.s8 %v1175
    %v1177 = vlaneseq
    %v1178 = vshrl.u32 %v1177, 7
    %v1179 = vsub.s32 %v1176, %v1178
    %v1180 = vrot.slane %v1172, %v1179
    %v1182 = vunpack.c.l.s4 1966171168
    %v1183 = vunpack.c.0.s8 %v1182
    %v1184 = vlaneseq
    %v1185 = vshrl.u32 %v1184, 7
    %v1186 = vsub.s32 %v1183, %v1185
    %v1187 = vrot.slane %v1173, %v1186
    %v1189 = vunpack.c.l.s4 1966171168
    %v1190 = vunpack.c.0.s8 %v1189
    %v1191 = vlaneseq
    %v1192 = vshrl.u32 %v1191, 7
    %v1193 = vsub.s32 %v1190, %v1192
    %v1194 = vrot.slane %v1014, %v1193
    %v1195 = vcombine.low %v1180, %v1187
    %v1197 = vunpack.c.l.s4 1966171168
    %v1198 = vunpack.c.0.s8 %v1197
    %v1199 = vlaneseq
    %v1200 = vshrl.u32 %v1199, 7
    %v1201 = vsub.s32 %v1198, %v1200
    %v1202 = vrot.slane %v1195, %v1201
    %v1204 = vunpack.c.l.s4 1966171168
    %v1205 = vunpack.c.0.s8 %v1204
    %v1206 = vlaneseq
    %v1207 = vshrl.u32 %v1206, 7
    %v1208 = vsub.s32 %v1205, %v1207
    %v1209 = vrot.slane %v1194, %v1208
    %v1210 = vcombine.low %v1202, %v1209
    %v1211 = vcombine.low %v1016, %v1018
    %v1212 = vcombine.low %v1020, %v1022
    %v1214 = vunpack.c.l.s4 1966171168
    %v1215 = vunpack.c.0.s8 %v1214
    %v1216 = vlaneseq
    %v1217 = vshrl.u32 %v1216, 7
    %v1218 = vsub.s32 %v1215, %v1217
    %v1219 = vrot.slane %v1211, %v1218
    %v1221 = vunpack.c.l.s4 1966171168
    %v1222 = vunpack.c.0.s8 %v1221
    %v1223 = vlaneseq
    %v1224 = vshrl.u32 %v1223, 7
    %v1225 = vsub.s32 %v1222, %v1224
    %v1226 = vrot.slane %v1212, %v1225
    %v1228 = vunpack.c.l.s4 1966171168
    %v1229 = vunpack.c.0.s8 %v1228
    %v1230 = vlaneseq
    %v1231 = vshrl.u32 %v1230, 7
    %v1232 = vsub.s32 %v1229, %v1231
    %v1233 = vrot.slane %v1024, %v1232
    %v1234 = vcombine.low %v1219, %v1226
    %v1236 = vunpack.c.l.s4 1966171168
    %v1237 = vunpack.c.0.s8 %v1236
    %v1238 = vlaneseq
    %v1239 = vshrl.u32 %v1238, 7
    %v1240 = vsub.s32 %v1237, %v1239
    %v1241 = vrot.slane %v1234, %v1240
    %v1243 = vunpack.c.l.s4 1966171168
    %v1244 = vunpack.c.0.s8 %v1243
    %v1245 = vlaneseq
    %v1246 = vshrl.u32 %v1245, 7
    %v1247 = vsub.s32 %v1244, %v1246
    %v1248 = vrot.slane %v1233, %v1247
    %v1249 = vcombine.low %v1241, %v1248
    %v1250 = vcombine.low %v1026, %v1028
    %v1251 = vcombine.low %v1030, %v1032
    %v1253 = vunpack.c.l.s4 1966171168
    %v1254 = vunpack.c.0.s8 %v1253
    %v1255 = vlaneseq
    %v1256 = vshrl.u32 %v1255, 7
    %v1257 = vsub.s32 %v1254, %v1256
    %v1258 = vrot.slane %v1250, %v1257
    %v1260 = vunpack.c.l.s4 1966171168
    %v1261 = vunpack.c.0.s8 %v1260
    %v1262 = vlaneseq
    %v1263 = vshrl.u32 %v1262, 7
    %v1264 = vsub.s32 %v1261, %v1263
    %v1265 = vrot.slane %v1251, %v1264
    %v1267 = vunpack.c.l.s4 1966171168
    %v1268 = vunpack.c.0.s8 %v1267
    %v1269 = vlaneseq
    %v1270 = vshrl.u32 %v1269, 7
    %v1271 = vsub.s32 %v1268, %v1270
    %v1272 = vrot.slane %v1034, %v1271
    %v1273 = vcombine.low %v1258, %v1265
    %v1275 = vunpack.c.l.s4 1966171168
    %v1276 = vunpack.c.0.s8 %v1275
    %v1277 = vlaneseq
    %v1278 = vshrl.u32 %v1277, 7
    %v1279 = vsub.s32 %v1276, %v1278
    %v1280 = vrot.slane %v1273, %v1279
    %v1282 = vunpack.c.l.s4 1966171168
    %v1283 = vunpack.c.0.s8 %v1282
    %v1284 = vlaneseq
    %v1285 = vshrl.u32 %v1284, 7
    %v1286 = vsub.s32 %v1283, %v1285
    %v1287 = vrot.slane %v1272, %v1286
    %v1288 = vcombine.low %v1280, %v1287
    %v1289 = vcombine.low %v1036, %v1038
    %v1290 = vcombine.low %v1040, %v1042
    %v1292 = vunpack.c.l.s4 1966171168
    %v1293 = vunpack.c.0.s8 %v1292
    %v1294 = vlaneseq
    %v1295 = vshrl.u32 %v1294, 7
    %v1296 = vsub.s32 %v1293, %v1295
    %v1297 = vrot.slane %v1289, %v1296
    %v1299 = vunpack.c.l.s4 1966171168
    %v1300 = vunpack.c.0.s8 %v1299
    %v1301 = vlaneseq
    %v1302 = vshrl.u32 %v1301, 7
    %v1303 = vsub.s32 %v1300, %v1302
    %v1304 = vrot.slane %v1290, %v1303
    %v1306 = vunpack.c.l.s4 1966171168
    %v1307 = vunpack.c.0.s8 %v1306
    %v1308 = vlaneseq
    %v1309 = vshrl.u32 %v1308, 7
    %v1310 = vsub.s32 %v1307, %v1309
    %v1311 = vrot.slane %v1044, %v1310
    %v1312 = vcombine.low %v1297, %v1304
    %v1314 = vunpack.c.l.s4 1966171168
    %v1315 = vunpack.c.0.s8 %v1314
    %v1316 = vlaneseq
    %v1317 = vshrl.u32 %v1316, 7
    %v1318 = vsub.s32 %v1315, %v1317
    %v1319 = vrot.slane %v1312, %v1318
    %v1321 = vunpack.c.l.s4 1966171168
    %v1322 = vunpack.c.0.s8 %v1321
    %v1323 = vlaneseq
    %v1324 = vshrl.u32 %v1323, 7
    %v1325 = vsub.s32 %v1322, %v1324
    %v1326 = vrot.slane %v1311, %v1325
    %v1327 = vcombine.low %v1319, %v1326
    %v1328 = vcombine.low %v1046, %v1048
    %v1329 = vcombine.low %v1050, %v1052
    %v1331 = vunpack.c.l.s4 1966171168
    %v1332 = vunpack.c.0.s8 %v1331
    %v1333 = vlaneseq
    %v1334 = vshrl.u32 %v1333, 7
    %v1335 = vsub.s32 %v1332, %v1334
    %v1336 = vrot.slane %v1328, %v1335
    %v1338 = vunpack.c.l.s4 1966171168
    %v1339 = vunpack.c.0.s8 %v1338
    %v1340 = vlaneseq
    %v1341 = vshrl.u32 %v1340, 7
    %v1342 = vsub.s32 %v1339, %v1341
    %v1343 = vrot.slane %v1329, %v1342
    %v1345 = vunpack.c.l.s4 1966171168
    %v1346 = vunpack.c.0.s8 %v1345
    %v1347 = vlaneseq
    %v1348 = vshrl.u32 %v1347, 7
    %v1349 = vsub.s32 %v1346, %v1348
    %v1350 = vrot.slane %v1054, %v1349
    %v1351 = vcombine.low %v1336, %v1343
    %v1353 = vunpack.c.l.s4 1966171168
    %v1354 = vunpack.c.0.s8 %v1353
    %v1355 = vlaneseq
    %v1356 = vshrl.u32 %v1355, 7
    %v1357 = vsub.s32 %v1354, %v1356
    %v1358 = vrot.slane %v1351, %v1357
    %v1360 = vunpack.c.l.s4 1966171168
    %v1361 = vunpack.c.0.s8 %v1360
    %v1362 = vlaneseq
    %v1363 = vshrl.u32 %v1362, 7
    %v1364 = vsub.s32 %v1361, %v1363
    %v1365 = vrot.slane %v1350, %v1364
    %v1366 = vcombine.low %v1358, %v1365
    %v1375 = vpack.c.bf16 %v1093, %v1093
    %v1376 = vpack.c.bf16 %v1132, %v1132
    %v1377 = vpack.c.bf16 %v1171, %v1171
    %v1378 = vpack.c.bf16 %v1210, %v1210
    %v1379 = vpack.c.bf16 %v1249, %v1249
    %v1380 = vpack.c.bf16 %v1288, %v1288
    %v1381 = vpack.c.bf16 %v1327, %v1327
    %v1382 = vpack.c.bf16 %v1366, %v1366
    %1384 = vrot.lane.b32.xlu0 %v1375, 96
    %v1385 = vpop.permute.xlu0 %1384
    %vm1386 = vcmask 64512
    %v1388 = vsel %vm1386, %v1375, 0
    %v1391 = vsel %vm1386, %v1385, 0
    %1393 = vmatprep.subr.bf16.mxu0 0
    %1394 = vmatpush1.bf16.xpose.msra.mxu0 %v1391
    %1395 = vmatprep.subr.bf16.mxu0 0
    %1396 = vmatpush1.bf16.xpose.msra.mxu0 0
    %1397 = vmatprep.subr.bf16.mxu0 0
    %1398 = vmatpush1.bf16.xpose.msra.mxu0 0
    %1399 = vmatprep.subr.bf16.mxu0 0
    %1400 = vmatpush1.bf16.xpose.msra.mxu0 0
    %1401 = vmatprep.subr.bf16.mxu0 0
    %1402 = vmatpush1.bf16.xpose.msra.mxu0 0
    %1403 = vmatprep.subr.bf16.mxu0 0
    %1404 = vmatpush1.bf16.xpose.msra.mxu0 0
    %1405 = vmatprep.subr.bf16.mxu0 0
    %1406 = vmatpush1.bf16.xpose.msra.mxu0 0
    %1407 = vmatprep.subr.bf16.mxu0 0
    %1408 = vmatpush1.bf16.xpose.msra.mxu0 0
    %1409 = vmatprep.subr.bf16.mxu0 0
    %1410 = vmatpush1.bf16.xpose.msra.mxu0 0
    %1411 = vmatprep.subr.bf16.mxu0 0
    %1412 = vmatpush1.bf16.xpose.msra.mxu0 0
    %1413 = vmatprep.subr.bf16.mxu0 0
    %1414 = vmatpush1.bf16.xpose.msra.mxu0 0
    %1415 = vmatprep.subr.bf16.mxu0 0
    %1416 = vmatpush1.bf16.xpose.msra.mxu0 0
    %1417 = vmatprep.subr.bf16.mxu0 0
    %1418 = vmatpush1.bf16.xpose.msra.mxu0 0
    %1419 = vmatprep.subr.bf16.mxu0 0
    %1420 = vmatpush1.bf16.xpose.msra.mxu0 0
    %1421 = vmatprep.subr.bf16.mxu0 0
    %1422 = vmatpush1.bf16.xpose.msra.mxu0 0
    %1423 = vmatprep.subr.bf16.mxu0 0
    %1424 = vmatpush1.bf16.xpose.msra.mxu0 0
    %1425 = vmatprep.mubr.bf16.mxu0 0
    %1426 = vmatmul.mubr.bf16.gmra.mrb[0].mxu0 %v1388
    %v1427 = vpop.f32.mrb[0].mxu0
    %v1428 = vadd.f32 0.0, %v1427
    %v1429 = vpop.f32.mrb[0].mxu0
    %v1430 = vpop.f32.mrb[0].mxu0
    %v1431 = vpop.f32.mrb[0].mxu0
    %1432 = vdwg.mxu0
    %1434 = vrot.lane.b32.xlu0 %v1376, 96
    %v1435 = vpop.permute.xlu0 %1434
    %v1437 = vsel %vm1386, %v1376, 0
    %v1440 = vsel %vm1386, %v1435, 0
    %1442 = vmatprep.subr.bf16.mxu0 0
    %1443 = vmatpush1.bf16.xpose.msra.mxu0 %v1440
    %1444 = vmatprep.subr.bf16.mxu0 0
    %1445 = vmatpush1.bf16.xpose.msra.mxu0 0
    %1446 = vmatprep.subr.bf16.mxu0 0
    %1447 = vmatpush1.bf16.xpose.msra.mxu0 0
    %1448 = vmatprep.subr.bf16.mxu0 0
    %1449 = vmatpush1.bf16.xpose.msra.mxu0 0
    %1450 = vmatprep.subr.bf16.mxu0 0
    %1451 = vmatpush1.bf16.xpose.msra.mxu0 0
    %1452 = vmatprep.subr.bf16.mxu0 0
    %1453 = vmatpush1.bf16.xpose.msra.mxu0 0
    %1454 = vmatprep.subr.bf16.mxu0 0
    %1455 = vmatpush1.bf16.xpose.msra.mxu0 0
    %1456 = vmatprep.subr.bf16.mxu0 0
    %1457 = vmatpush1.bf16.xpose.msra.mxu0 0
    %1458 = vmatprep.subr.bf16.mxu0 0
    %1459 = vmatpush1.bf16.xpose.msra.mxu0 0
    %1460 = vmatprep.subr.bf16.mxu0 0
    %1461 = vmatpush1.bf16.xpose.msra.mxu0 0
    %1462 = vmatprep.subr.bf16.mxu0 0
    %1463 = vmatpush1.bf16.xpose.msra.mxu0 0
    %1464 = vmatprep.subr.bf16.mxu0 0
    %1465 = vmatpush1.bf16.xpose.msra.mxu0 0
    %1466 = vmatprep.subr.bf16.mxu0 0
    %1467 = vmatpush1.bf16.xpose.msra.mxu0 0
    %1468 = vmatprep.subr.bf16.mxu0 0
    %1469 = vmatpush1.bf16.xpose.msra.mxu0 0
    %1470 = vmatprep.subr.bf16.mxu0 0
    %1471 = vmatpush1.bf16.xpose.msra.mxu0 0
    %1472 = vmatprep.subr.bf16.mxu0 0
    %1473 = vmatpush1.bf16.xpose.msra.mxu0 0
    %1474 = vmatprep.mubr.bf16.mxu0 0
    %1475 = vmatmul.mubr.bf16.gmra.mrb[0].mxu0 %v1437
    %v1476 = vpop.f32.mrb[0].mxu0
    %v1477 = vadd.f32 0.0, %v1476
    %v1478 = vpop.f32.mrb[0].mxu0
    %v1479 = vpop.f32.mrb[0].mxu0
    %v1480 = vpop.f32.mrb[0].mxu0
    %1481 = vdwg.mxu0
    %1483 = vrot.lane.b32.xlu0 %v1377, 96
    %v1484 = vpop.permute.xlu0 %1483
    %v1486 = vsel %vm1386, %v1377, 0
    %v1489 = vsel %vm1386, %v1484, 0
    %1491 = vmatprep.subr.bf16.mxu0 0
    %1492 = vmatpush1.bf16.xpose.msra.mxu0 %v1489
    %1493 = vmatprep.subr.bf16.mxu0 0
    %1494 = vmatpush1.bf16.xpose.msra.mxu0 0
    %1495 = vmatprep.subr.bf16.mxu0 0
    %1496 = vmatpush1.bf16.xpose.msra.mxu0 0
    %1497 = vmatprep.subr.bf16.mxu0 0
    %1498 = vmatpush1.bf16.xpose.msra.mxu0 0
    %1499 = vmatprep.subr.bf16.mxu0 0
    %1500 = vmatpush1.bf16.xpose.msra.mxu0 0
    %1501 = vmatprep.subr.bf16.mxu0 0
    %1502 = vmatpush1.bf16.xpose.msra.mxu0 0
    %1503 = vmatprep.subr.bf16.mxu0 0
    %1504 = vmatpush1.bf16.xpose.msra.mxu0 0
    %1505 = vmatprep.subr.bf16.mxu0 0
    %1506 = vmatpush1.bf16.xpose.msra.mxu0 0
    %1507 = vmatprep.subr.bf16.mxu0 0
    %1508 = vmatpush1.bf16.xpose.msra.mxu0 0
    %1509 = vmatprep.subr.bf16.mxu0 0
    %1510 = vmatpush1.bf16.xpose.msra.mxu0 0
    %1511 = vmatprep.subr.bf16.mxu0 0
    %1512 = vmatpush1.bf16.xpose.msra.mxu0 0
    %1513 = vmatprep.subr.bf16.mxu0 0
    %1514 = vmatpush1.bf16.xpose.msra.mxu0 0
    %1515 = vmatprep.subr.bf16.mxu0 0
    %1516 = vmatpush1.bf16.xpose.msra.mxu0 0
    %1517 = vmatprep.subr.bf16.mxu0 0
    %1518 = vmatpush1.bf16.xpose.msra.mxu0 0
    %1519 = vmatprep.subr.bf16.mxu0 0
    %1520 = vmatpush1.bf16.xpose.msra.mxu0 0
    %1521 = vmatprep.subr.bf16.mxu0 0
    %1522 = vmatpush1.bf16.xpose.msra.mxu0 0
    %1523 = vmatprep.mubr.bf16.mxu0 0
    %1524 = vmatmul.mubr.bf16.gmra.mrb[0].mxu0 %v1486
    %v1525 = vpop.f32.mrb[0].mxu0
    %v1526 = vadd.f32 0.0, %v1525
    %v1527 = vpop.f32.mrb[0].mxu0
    %v1528 = vpop.f32.mrb[0].mxu0
    %v1529 = vpop.f32.mrb[0].mxu0
    %1530 = vdwg.mxu0
    %1532 = vrot.lane.b32.xlu0 %v1378, 96
    %v1533 = vpop.permute.xlu0 %1532
    %v1535 = vsel %vm1386, %v1378, 0
    %v1538 = vsel %vm1386, %v1533, 0
    %1540 = vmatprep.subr.bf16.mxu0 0
    %1541 = vmatpush1.bf16.xpose.msra.mxu0 %v1538
    %1542 = vmatprep.subr.bf16.mxu0 0
    %1543 = vmatpush1.bf16.xpose.msra.mxu0 0
    %1544 = vmatprep.subr.bf16.mxu0 0
    %1545 = vmatpush1.bf16.xpose.msra.mxu0 0
    %1546 = vmatprep.subr.bf16.mxu0 0
    %1547 = vmatpush1.bf16.xpose.msra.mxu0 0
    %1548 = vmatprep.subr.bf16.mxu0 0
    %1549 = vmatpush1.bf16.xpose.msra.mxu0 0
    %1550 = vmatprep.subr.bf16.mxu0 0
    %1551 = vmatpush1.bf16.xpose.msra.mxu0 0
    %1552 = vmatprep.subr.bf16.mxu0 0
    %1553 = vmatpush1.bf16.xpose.msra.mxu0 0
    %1554 = vmatprep.subr.bf16.mxu0 0
    %1555 = vmatpush1.bf16.xpose.msra.mxu0 0
    %1556 = vmatprep.subr.bf16.mxu0 0
    %1557 = vmatpush1.bf16.xpose.msra.mxu0 0
    %1558 = vmatprep.subr.bf16.mxu0 0
    %1559 = vmatpush1.bf16.xpose.msra.mxu0 0
    %1560 = vmatprep.subr.bf16.mxu0 0
    %1561 = vmatpush1.bf16.xpose.msra.mxu0 0
    %1562 = vmatprep.subr.bf16.mxu0 0
    %1563 = vmatpush1.bf16.xpose.msra.mxu0 0
    %1564 = vmatprep.subr.bf16.mxu0 0
    %1565 = vmatpush1.bf16.xpose.msra.mxu0 0
    %1566 = vmatprep.subr.bf16.mxu0 0
    %1567 = vmatpush1.bf16.xpose.msra.mxu0 0
    %1568 = vmatprep.subr.bf16.mxu0 0
    %1569 = vmatpush1.bf16.xpose.msra.mxu0 0
    %1570 = vmatprep.subr.bf16.mxu0 0
    %1571 = vmatpush1.bf16.xpose.msra.mxu0 0
    %1572 = vmatprep.mubr.bf16.mxu0 0
    %1573 = vmatmul.mubr.bf16.gmra.mrb[0].mxu0 %v1535
    %v1574 = vpop.f32.mrb[0].mxu0
    %v1575 = vadd.f32 0.0, %v1574
    %v1576 = vpop.f32.mrb[0].mxu0
    %v1577 = vpop.f32.mrb[0].mxu0
    %v1578 = vpop.f32.mrb[0].mxu0
    %1579 = vdwg.mxu0
    %1581 = vrot.lane.b32.xlu0 %v1379, 96
    %v1582 = vpop.permute.xlu0 %1581
    %v1584 = vsel %vm1386, %v1379, 0
    %v1587 = vsel %vm1386, %v1582, 0
    %1589 = vmatprep.subr.bf16.mxu0 0
    %1590 = vmatpush1.bf16.xpose.msra.mxu0 %v1587
    %1591 = vmatprep.subr.bf16.mxu0 0
    %1592 = vmatpush1.bf16.xpose.msra.mxu0 0
    %1593 = vmatprep.subr.bf16.mxu0 0
    %1594 = vmatpush1.bf16.xpose.msra.mxu0 0
    %1595 = vmatprep.subr.bf16.mxu0 0
    %1596 = vmatpush1.bf16.xpose.msra.mxu0 0
    %1597 = vmatprep.subr.bf16.mxu0 0
    %1598 = vmatpush1.bf16.xpose.msra.mxu0 0
    %1599 = vmatprep.subr.bf16.mxu0 0
    %1600 = vmatpush1.bf16.xpose.msra.mxu0 0
    %1601 = vmatprep.subr.bf16.mxu0 0
    %1602 = vmatpush1.bf16.xpose.msra.mxu0 0
    %1603 = vmatprep.subr.bf16.mxu0 0
    %1604 = vmatpush1.bf16.xpose.msra.mxu0 0
    %1605 = vmatprep.subr.bf16.mxu0 0
    %1606 = vmatpush1.bf16.xpose.msra.mxu0 0
    %1607 = vmatprep.subr.bf16.mxu0 0
    %1608 = vmatpush1.bf16.xpose.msra.mxu0 0
    %1609 = vmatprep.subr.bf16.mxu0 0
    %1610 = vmatpush1.bf16.xpose.msra.mxu0 0
    %1611 = vmatprep.subr.bf16.mxu0 0
    %1612 = vmatpush1.bf16.xpose.msra.mxu0 0
    %1613 = vmatprep.subr.bf16.mxu0 0
    %1614 = vmatpush1.bf16.xpose.msra.mxu0 0
    %1615 = vmatprep.subr.bf16.mxu0 0
    %1616 = vmatpush1.bf16.xpose.msra.mxu0 0
    %1617 = vmatprep.subr.bf16.mxu0 0
    %1618 = vmatpush1.bf16.xpose.msra.mxu0 0
    %1619 = vmatprep.subr.bf16.mxu0 0
    %1620 = vmatpush1.bf16.xpose.msra.mxu0 0
    %1621 = vmatprep.mubr.bf16.mxu0 0
    %1622 = vmatmul.mubr.bf16.gmra.mrb[0].mxu0 %v1584
    %v1623 = vpop.f32.mrb[0].mxu0
    %v1624 = vadd.f32 0.0, %v1623
    %v1625 = vpop.f32.mrb[0].mxu0
    %v1626 = vpop.f32.mrb[0].mxu0
    %v1627 = vpop.f32.mrb[0].mxu0
    %1628 = vdwg.mxu0
    %1630 = vrot.lane.b32.xlu0 %v1380, 96
    %v1631 = vpop.permute.xlu0 %1630
    %v1633 = vsel %vm1386, %v1380, 0
    %v1636 = vsel %vm1386, %v1631, 0
    %1638 = vmatprep.subr.bf16.mxu0 0
    %1639 = vmatpush1.bf16.xpose.msra.mxu0 %v1636
    %1640 = vmatprep.subr.bf16.mxu0 0
    %1641 = vmatpush1.bf16.xpose.msra.mxu0 0
    %1642 = vmatprep.subr.bf16.mxu0 0
    %1643 = vmatpush1.bf16.xpose.msra.mxu0 0
    %1644 = vmatprep.subr.bf16.mxu0 0
    %1645 = vmatpush1.bf16.xpose.msra.mxu0 0
    %1646 = vmatprep.subr.bf16.mxu0 0
    %1647 = vmatpush1.bf16.xpose.msra.mxu0 0
    %1648 = vmatprep.subr.bf16.mxu0 0
    %1649 = vmatpush1.bf16.xpose.msra.mxu0 0
    %1650 = vmatprep.subr.bf16.mxu0 0
    %1651 = vmatpush1.bf16.xpose.msra.mxu0 0
    %1652 = vmatprep.subr.bf16.mxu0 0
    %1653 = vmatpush1.bf16.xpose.msra.mxu0 0
    %1654 = vmatprep.subr.bf16.mxu0 0
    %1655 = vmatpush1.bf16.xpose.msra.mxu0 0
    %1656 = vmatprep.subr.bf16.mxu0 0
    %1657 = vmatpush1.bf16.xpose.msra.mxu0 0
    %1658 = vmatprep.subr.bf16.mxu0 0
    %1659 = vmatpush1.bf16.xpose.msra.mxu0 0
    %1660 = vmatprep.subr.bf16.mxu0 0
    %1661 = vmatpush1.bf16.xpose.msra.mxu0 0
    %1662 = vmatprep.subr.bf16.mxu0 0
    %1663 = vmatpush1.bf16.xpose.msra.mxu0 0
    %1664 = vmatprep.subr.bf16.mxu0 0
    %1665 = vmatpush1.bf16.xpose.msra.mxu0 0
    %1666 = vmatprep.subr.bf16.mxu0 0
    %1667 = vmatpush1.bf16.xpose.msra.mxu0 0
    %1668 = vmatprep.subr.bf16.mxu0 0
    %1669 = vmatpush1.bf16.xpose.msra.mxu0 0
    %1670 = vmatprep.mubr.bf16.mxu0 0
    %1671 = vmatmul.mubr.bf16.gmra.mrb[0].mxu0 %v1633
    %v1672 = vpop.f32.mrb[0].mxu0
    %v1673 = vadd.f32 0.0, %v1672
    %v1674 = vpop.f32.mrb[0].mxu0
    %v1675 = vpop.f32.mrb[0].mxu0
    %v1676 = vpop.f32.mrb[0].mxu0
    %1677 = vdwg.mxu0
    %1679 = vrot.lane.b32.xlu0 %v1381, 96
    %v1680 = vpop.permute.xlu0 %1679
    %v1682 = vsel %vm1386, %v1381, 0
    %v1685 = vsel %vm1386, %v1680, 0
    %1687 = vmatprep.subr.bf16.mxu0 0
    %1688 = vmatpush1.bf16.xpose.msra.mxu0 %v1685
    %1689 = vmatprep.subr.bf16.mxu0 0
    %1690 = vmatpush1.bf16.xpose.msra.mxu0 0
    %1691 = vmatprep.subr.bf16.mxu0 0
    %1692 = vmatpush1.bf16.xpose.msra.mxu0 0
    %1693 = vmatprep.subr.bf16.mxu0 0
    %1694 = vmatpush1.bf16.xpose.msra.mxu0 0
    %1695 = vmatprep.subr.bf16.mxu0 0
    %1696 = vmatpush1.bf16.xpose.msra.mxu0 0
    %1697 = vmatprep.subr.bf16.mxu0 0
    %1698 = vmatpush1.bf16.xpose.msra.mxu0 0
    %1699 = vmatprep.subr.bf16.mxu0 0
    %1700 = vmatpush1.bf16.xpose.msra.mxu0 0
    %1701 = vmatprep.subr.bf16.mxu0 0
    %1702 = vmatpush1.bf16.xpose.msra.mxu0 0
    %1703 = vmatprep.subr.bf16.mxu0 0
    %1704 = vmatpush1.bf16.xpose.msra.mxu0 0
    %1705 = vmatprep.subr.bf16.mxu0 0
    %1706 = vmatpush1.bf16.xpose.msra.mxu0 0
    %1707 = vmatprep.subr.bf16.mxu0 0
    %1708 = vmatpush1.bf16.xpose.msra.mxu0 0
    %1709 = vmatprep.subr.bf16.mxu0 0
    %1710 = vmatpush1.bf16.xpose.msra.mxu0 0
    %1711 = vmatprep.subr.bf16.mxu0 0
    %1712 = vmatpush1.bf16.xpose.msra.mxu0 0
    %1713 = vmatprep.subr.bf16.mxu0 0
    %1714 = vmatpush1.bf16.xpose.msra.mxu0 0
    %1715 = vmatprep.subr.bf16.mxu0 0
    %1716 = vmatpush1.bf16.xpose.msra.mxu0 0
    %1717 = vmatprep.subr.bf16.mxu0 0
    %1718 = vmatpush1.bf16.xpose.msra.mxu0 0
    %1719 = vmatprep.mubr.bf16.mxu0 0
    %1720 = vmatmul.mubr.bf16.gmra.mrb[0].mxu0 %v1682
    %v1721 = vpop.f32.mrb[0].mxu0
    %v1722 = vadd.f32 0.0, %v1721
    %v1723 = vpop.f32.mrb[0].mxu0
    %v1724 = vpop.f32.mrb[0].mxu0
    %v1725 = vpop.f32.mrb[0].mxu0
    %1726 = vdwg.mxu0
    %1728 = vrot.lane.b32.xlu0 %v1382, 96
    %v1729 = vpop.permute.xlu0 %1728
    %v1731 = vsel %vm1386, %v1382, 0
    %v1734 = vsel %vm1386, %v1729, 0
    %1736 = vmatprep.subr.bf16.mxu0 0
    %1737 = vmatpush1.bf16.xpose.msra.mxu0 %v1734
    %1738 = vmatprep.subr.bf16.mxu0 0
    %1739 = vmatpush1.bf16.xpose.msra.mxu0 0
    %1740 = vmatprep.subr.bf16.mxu0 0
    %1741 = vmatpush1.bf16.xpose.msra.mxu0 0
    %1742 = vmatprep.subr.bf16.mxu0 0
    %1743 = vmatpush1.bf16.xpose.msra.mxu0 0
    %1744 = vmatprep.subr.bf16.mxu0 0
    %1745 = vmatpush1.bf16.xpose.msra.mxu0 0
    %1746 = vmatprep.subr.bf16.mxu0 0
    %1747 = vmatpush1.bf16.xpose.msra.mxu0 0
    %1748 = vmatprep.subr.bf16.mxu0 0
    %1749 = vmatpush1.bf16.xpose.msra.mxu0 0
    %1750 = vmatprep.subr.bf16.mxu0 0
    %1751 = vmatpush1.bf16.xpose.msra.mxu0 0
    %1752 = vmatprep.subr.bf16.mxu0 0
    %1753 = vmatpush1.bf16.xpose.msra.mxu0 0
    %1754 = vmatprep.subr.bf16.mxu0 0
    %1755 = vmatpush1.bf16.xpose.msra.mxu0 0
    %1756 = vmatprep.subr.bf16.mxu0 0
    %1757 = vmatpush1.bf16.xpose.msra.mxu0 0
    %1758 = vmatprep.subr.bf16.mxu0 0
    %1759 = vmatpush1.bf16.xpose.msra.mxu0 0
    %1760 = vmatprep.subr.bf16.mxu0 0
    %1761 = vmatpush1.bf16.xpose.msra.mxu0 0
    %1762 = vmatprep.subr.bf16.mxu0 0
    %1763 = vmatpush1.bf16.xpose.msra.mxu0 0
    %1764 = vmatprep.subr.bf16.mxu0 0
    %1765 = vmatpush1.bf16.xpose.msra.mxu0 0
    %1766 = vmatprep.subr.bf16.mxu0 0
    %1767 = vmatpush1.bf16.xpose.msra.mxu0 0
    %1768 = vmatprep.mubr.bf16.mxu0 0
    %1769 = vmatmul.mubr.bf16.gmra.mrb[0].mxu0 %v1731
    %v1770 = vpop.f32.mrb[0].mxu0
    %v1771 = vadd.f32 0.0, %v1770
    %v1772 = vpop.f32.mrb[0].mxu0
    %v1773 = vpop.f32.mrb[0].mxu0
    %v1774 = vpop.f32.mrb[0].mxu0
    %1775 = vdwg.mxu0
    %v1776 = vmul.f32 %v1428, 0.35355338
    %v1777 = vmul.f32 %v1477, 0.35355338
    %v1778 = vmul.f32 %v1526, 0.35355338
    %v1779 = vmul.f32 %v1575, 0.35355338
    %v1780 = vmul.f32 %v1624, 0.35355338
    %v1781 = vmul.f32 %v1673, 0.35355338
    %v1782 = vmul.f32 %v1722, 0.35355338
    %v1783 = vmul.f32 %v1771, 0.35355338
    %vm1784 = vcmask 36864
    %v1785 = vsel %vm1784, %v1776, -inf
    %1786 = vmax.xlane.f32.xlu0 %v1785
    %v1787 = vpop.xlane.xlu0 %1786
    %v1788 = vsel %vm1784, %v1777, -inf
    %1789 = vmax.xlane.f32.xlu0 %v1788
    %v1790 = vpop.xlane.xlu0 %1789
    %v1791 = vsel %vm1784, %v1778, -inf
    %1792 = vmax.xlane.f32.xlu0 %v1791
    %v1793 = vpop.xlane.xlu0 %1792
    %v1794 = vsel %vm1784, %v1779, -inf
    %1795 = vmax.xlane.f32.xlu0 %v1794
    %v1796 = vpop.xlane.xlu0 %1795
    %v1797 = vsel %vm1784, %v1780, -inf
    %1798 = vmax.xlane.f32.xlu0 %v1797
    %v1799 = vpop.xlane.xlu0 %1798
    %v1800 = vsel %vm1784, %v1781, -inf
    %1801 = vmax.xlane.f32.xlu0 %v1800
    %v1802 = vpop.xlane.xlu0 %1801
    %v1803 = vsel %vm1784, %v1782, -inf
    %1804 = vmax.xlane.f32.xlu0 %v1803
    %v1805 = vpop.xlane.xlu0 %1804
    %v1806 = vsel %vm1784, %v1783, -inf
    %1807 = vmax.xlane.f32.xlu0 %v1806
    %v1808 = vpop.xlane.xlu0 %1807
    %v1809 = vsub.f32 %v1776, %v1787
    %v1810 = vsub.f32 %v1777, %v1790
    %v1811 = vsub.f32 %v1778, %v1793
    %v1812 = vsub.f32 %v1779, %v1796
    %v1813 = vsub.f32 %v1780, %v1799
    %v1814 = vsub.f32 %v1781, %v1802
    %v1815 = vsub.f32 %v1782, %v1805
    %v1816 = vsub.f32 %v1783, %v1808
    %v1817 = vmul.f32 %v1809, 1.442695
    %v1818 = vpow.pop %v1817
    %v1819 = vmul.f32 %v1810, 1.442695
    %v1820 = vpow.pop %v1819
    %v1821 = vmul.f32 %v1811, 1.442695
    %v1822 = vpow.pop %v1821
    %v1823 = vmul.f32 %v1812, 1.442695
    %v1824 = vpow.pop %v1823
    %v1825 = vmul.f32 %v1813, 1.442695
    %v1826 = vpow.pop %v1825
    %v1827 = vmul.f32 %v1814, 1.442695
    %v1828 = vpow.pop %v1827
    %v1829 = vmul.f32 %v1815, 1.442695
    %v1830 = vpow.pop %v1829
    %v1831 = vmul.f32 %v1816, 1.442695
    %v1832 = vpow.pop %v1831
    %v1833 = vsel %vm1784, %v1818, 0.0
    %1834 = vadd.xlane.f32.xlu0 %v1833
    %v1835 = vpop.xlane.xlu0 %1834
    %v1836 = vsel %vm1784, %v1820, 0.0
    %1837 = vadd.xlane.f32.xlu0 %v1836
    %v1838 = vpop.xlane.xlu0 %1837
    %v1839 = vsel %vm1784, %v1822, 0.0
    %1840 = vadd.xlane.f32.xlu0 %v1839
    %v1841 = vpop.xlane.xlu0 %1840
    %v1842 = vsel %vm1784, %v1824, 0.0
    %1843 = vadd.xlane.f32.xlu0 %v1842
    %v1844 = vpop.xlane.xlu0 %1843
    %v1845 = vsel %vm1784, %v1826, 0.0
    %1846 = vadd.xlane.f32.xlu0 %v1845
    %v1847 = vpop.xlane.xlu0 %1846
    %v1848 = vsel %vm1784, %v1828, 0.0
    %1849 = vadd.xlane.f32.xlu0 %v1848
    %v1850 = vpop.xlane.xlu0 %1849
    %v1851 = vsel %vm1784, %v1830, 0.0
    %1852 = vadd.xlane.f32.xlu0 %v1851
    %v1853 = vpop.xlane.xlu0 %1852
    %v1854 = vsel %vm1784, %v1832, 0.0
    %1855 = vadd.xlane.f32.xlu0 %v1854
    %v1856 = vpop.xlane.xlu0 %1855
    %v1857 = vrcp.pop %v1835
    %v1858 = vrcp.pop %v1838
    %v1859 = vrcp.pop %v1841
    %v1860 = vrcp.pop %v1844
    %v1861 = vrcp.pop %v1847
    %v1862 = vrcp.pop %v1850
    %v1863 = vrcp.pop %v1853
    %v1864 = vrcp.pop %v1856
    %v1865 = vmul.f32 %v1818, %v1857
    %v1866 = vmul.f32 %v1820, %v1858
    %v1867 = vmul.f32 %v1822, %v1859
    %v1868 = vmul.f32 %v1824, %v1860
    %v1869 = vmul.f32 %v1826, %v1861
    %v1870 = vmul.f32 %v1828, %v1862
    %v1871 = vmul.f32 %v1830, %v1863
    %v1872 = vmul.f32 %v1832, %v1864
    %v1873 = vpack.c.bf16 %v1865, %v1865
    %v1874 = vpack.c.bf16 %v1866, %v1866
    %v1875 = vpack.c.bf16 %v1867, %v1867
    %v1876 = vpack.c.bf16 %v1868, %v1868
    %v1877 = vpack.c.bf16 %v1869, %v1869
    %v1878 = vpack.c.bf16 %v1870, %v1870
    %v1879 = vpack.c.bf16 %v1871, %v1871
    %v1880 = vpack.c.bf16 %v1872, %v1872
    %1881 = vrot.lane.b32.xlu0 %v1375, 64
    %v1882 = vpop.permute.xlu0 %1881
    %vm1883 = vcmask 39936
    %v1885 = vsel %vm1883, %v1873, 0
    %vm1887 = vcmask 1041408
    %vm1888 = vcmask 1042432
    %v1889 = vsel %vm1887, 4294967295, 65535
    %v1890 = vsel %vm1888, %v1889, 0
    %v1892 = vand.u32 %v1882, %v1890
    %1894 = vmatprep.subr.bf16.mxu0 0
    %1895 = vmatpush1.bf16.msra.mxu0 %v1892
    %1896 = vmatprep.subr.bf16.mxu0 0
    %1897 = vmatpush1.bf16.msra.mxu0 0
    %1898 = vmatprep.subr.bf16.mxu0 0
    %1899 = vmatpush1.bf16.msra.mxu0 0
    %1900 = vmatprep.subr.bf16.mxu0 0
    %1901 = vmatpush1.bf16.msra.mxu0 0
    %1902 = vmatprep.subr.bf16.mxu0 0
    %1903 = vmatpush1.bf16.msra.mxu0 0
    %1904 = vmatprep.subr.bf16.mxu0 0
    %1905 = vmatpush1.bf16.msra.mxu0 0
    %1906 = vmatprep.subr.bf16.mxu0 0
    %1907 = vmatpush1.bf16.msra.mxu0 0
    %1908 = vmatprep.subr.bf16.mxu0 0
    %1909 = vmatpush1.bf16.msra.mxu0 0
    %1910 = vmatprep.subr.bf16.mxu0 0
    %1911 = vmatpush1.bf16.msra.mxu0 0
    %1912 = vmatprep.subr.bf16.mxu0 0
    %1913 = vmatpush1.bf16.msra.mxu0 0
    %1914 = vmatprep.subr.bf16.mxu0 0
    %1915 = vmatpush1.bf16.msra.mxu0 0
    %1916 = vmatprep.subr.bf16.mxu0 0
    %1917 = vmatpush1.bf16.msra.mxu0 0
    %1918 = vmatprep.subr.bf16.mxu0 0
    %1919 = vmatpush1.bf16.msra.mxu0 0
    %1920 = vmatprep.subr.bf16.mxu0 0
    %1921 = vmatpush1.bf16.msra.mxu0 0
    %1922 = vmatprep.subr.bf16.mxu0 0
    %1923 = vmatpush1.bf16.msra.mxu0 0
    %1924 = vmatprep.subr.bf16.mxu0 0
    %1925 = vmatpush1.bf16.msra.mxu0 0
    %1926 = vmatprep.mubr.bf16.mxu0 0
    %1927 = vmatmul.mubr.bf16.gmra.mrb[0].mxu0 %v1885
    %v1928 = vpop.f32.mrb[0].mxu0
    %v1929 = vadd.f32 0.0, %v1928
    %v1930 = vpop.f32.mrb[0].mxu0
    %v1931 = vpop.f32.mrb[0].mxu0
    %v1932 = vpop.f32.mrb[0].mxu0
    %1933 = vdwg.mxu0
    %1934 = vrot.lane.b32.xlu0 %v1376, 64
    %v1935 = vpop.permute.xlu0 %1934
    %v1937 = vsel %vm1883, %v1874, 0
    %v1940 = vand.u32 %v1935, %v1890
    %1942 = vmatprep.subr.bf16.mxu0 0
    %1943 = vmatpush1.bf16.msra.mxu0 %v1940
    %1944 = vmatprep.subr.bf16.mxu0 0
    %1945 = vmatpush1.bf16.msra.mxu0 0
    %1946 = vmatprep.subr.bf16.mxu0 0
    %1947 = vmatpush1.bf16.msra.mxu0 0
    %1948 = vmatprep.subr.bf16.mxu0 0
    %1949 = vmatpush1.bf16.msra.mxu0 0
    %1950 = vmatprep.subr.bf16.mxu0 0
    %1951 = vmatpush1.bf16.msra.mxu0 0
    %1952 = vmatprep.subr.bf16.mxu0 0
    %1953 = vmatpush1.bf16.msra.mxu0 0
    %1954 = vmatprep.subr.bf16.mxu0 0
    %1955 = vmatpush1.bf16.msra.mxu0 0
    %1956 = vmatprep.subr.bf16.mxu0 0
    %1957 = vmatpush1.bf16.msra.mxu0 0
    %1958 = vmatprep.subr.bf16.mxu0 0
    %1959 = vmatpush1.bf16.msra.mxu0 0
    %1960 = vmatprep.subr.bf16.mxu0 0
    %1961 = vmatpush1.bf16.msra.mxu0 0
    %1962 = vmatprep.subr.bf16.mxu0 0
    %1963 = vmatpush1.bf16.msra.mxu0 0
    %1964 = vmatprep.subr.bf16.mxu0 0
    %1965 = vmatpush1.bf16.msra.mxu0 0
    %1966 = vmatprep.subr.bf16.mxu0 0
    %1967 = vmatpush1.bf16.msra.mxu0 0
    %1968 = vmatprep.subr.bf16.mxu0 0
    %1969 = vmatpush1.bf16.msra.mxu0 0
    %1970 = vmatprep.subr.bf16.mxu0 0
    %1971 = vmatpush1.bf16.msra.mxu0 0
    %1972 = vmatprep.subr.bf16.mxu0 0
    %1973 = vmatpush1.bf16.msra.mxu0 0
    %1974 = vmatprep.mubr.bf16.mxu0 0
    %1975 = vmatmul.mubr.bf16.gmra.mrb[0].mxu0 %v1937
    %v1976 = vpop.f32.mrb[0].mxu0
    %v1977 = vadd.f32 0.0, %v1976
    %v1978 = vpop.f32.mrb[0].mxu0
    %v1979 = vpop.f32.mrb[0].mxu0
    %v1980 = vpop.f32.mrb[0].mxu0
    %1981 = vdwg.mxu0
    %1982 = vrot.lane.b32.xlu0 %v1377, 64
    %v1983 = vpop.permute.xlu0 %1982
    %v1985 = vsel %vm1883, %v1875, 0
    %v1988 = vand.u32 %v1983, %v1890
    %1990 = vmatprep.subr.bf16.mxu0 0
    %1991 = vmatpush1.bf16.msra.mxu0 %v1988
    %1992 = vmatprep.subr.bf16.mxu0 0
    %1993 = vmatpush1.bf16.msra.mxu0 0
    %1994 = vmatprep.subr.bf16.mxu0 0
    %1995 = vmatpush1.bf16.msra.mxu0 0
    %1996 = vmatprep.subr.bf16.mxu0 0
    %1997 = vmatpush1.bf16.msra.mxu0 0
    %1998 = vmatprep.subr.bf16.mxu0 0
    %1999 = vmatpush1.bf16.msra.mxu0 0
    %2000 = vmatprep.subr.bf16.mxu0 0
    %2001 = vmatpush1.bf16.msra.mxu0 0
    %2002 = vmatprep.subr.bf16.mxu0 0
    %2003 = vmatpush1.bf16.msra.mxu0 0
    %2004 = vmatprep.subr.bf16.mxu0 0
    %2005 = vmatpush1.bf16.msra.mxu0 0
    %2006 = vmatprep.subr.bf16.mxu0 0
    %2007 = vmatpush1.bf16.msra.mxu0 0
    %2008 = vmatprep.subr.bf16.mxu0 0
    %2009 = vmatpush1.bf16.msra.mxu0 0
    %2010 = vmatprep.subr.bf16.mxu0 0
    %2011 = vmatpush1.bf16.msra.mxu0 0
    %2012 = vmatprep.subr.bf16.mxu0 0
    %2013 = vmatpush1.bf16.msra.mxu0 0
    %2014 = vmatprep.subr.bf16.mxu0 0
    %2015 = vmatpush1.bf16.msra.mxu0 0
    %2016 = vmatprep.subr.bf16.mxu0 0
    %2017 = vmatpush1.bf16.msra.mxu0 0
    %2018 = vmatprep.subr.bf16.mxu0 0
    %2019 = vmatpush1.bf16.msra.mxu0 0
    %2020 = vmatprep.subr.bf16.mxu0 0
    %2021 = vmatpush1.bf16.msra.mxu0 0
    %2022 = vmatprep.mubr.bf16.mxu0 0
    %2023 = vmatmul.mubr.bf16.gmra.mrb[0].mxu0 %v1985
    %v2024 = vpop.f32.mrb[0].mxu0
    %v2025 = vadd.f32 0.0, %v2024
    %v2026 = vpop.f32.mrb[0].mxu0
    %v2027 = vpop.f32.mrb[0].mxu0
    %v2028 = vpop.f32.mrb[0].mxu0
    %2029 = vdwg.mxu0
    %2030 = vrot.lane.b32.xlu0 %v1378, 64
    %v2031 = vpop.permute.xlu0 %2030
    %v2033 = vsel %vm1883, %v1876, 0
    %v2036 = vand.u32 %v2031, %v1890
    %2038 = vmatprep.subr.bf16.mxu0 0
    %2039 = vmatpush1.bf16.msra.mxu0 %v2036
    %2040 = vmatprep.subr.bf16.mxu0 0
    %2041 = vmatpush1.bf16.msra.mxu0 0
    %2042 = vmatprep.subr.bf16.mxu0 0
    %2043 = vmatpush1.bf16.msra.mxu0 0
    %2044 = vmatprep.subr.bf16.mxu0 0
    %2045 = vmatpush1.bf16.msra.mxu0 0
    %2046 = vmatprep.subr.bf16.mxu0 0
    %2047 = vmatpush1.bf16.msra.mxu0 0
    %2048 = vmatprep.subr.bf16.mxu0 0
    %2049 = vmatpush1.bf16.msra.mxu0 0
    %2050 = vmatprep.subr.bf16.mxu0 0
    %2051 = vmatpush1.bf16.msra.mxu0 0
    %2052 = vmatprep.subr.bf16.mxu0 0
    %2053 = vmatpush1.bf16.msra.mxu0 0
    %2054 = vmatprep.subr.bf16.mxu0 0
    %2055 = vmatpush1.bf16.msra.mxu0 0
    %2056 = vmatprep.subr.bf16.mxu0 0
    %2057 = vmatpush1.bf16.msra.mxu0 0
    %2058 = vmatprep.subr.bf16.mxu0 0
    %2059 = vmatpush1.bf16.msra.mxu0 0
    %2060 = vmatprep.subr.bf16.mxu0 0
    %2061 = vmatpush1.bf16.msra.mxu0 0
    %2062 = vmatprep.subr.bf16.mxu0 0
    %2063 = vmatpush1.bf16.msra.mxu0 0
    %2064 = vmatprep.subr.bf16.mxu0 0
    %2065 = vmatpush1.bf16.msra.mxu0 0
    %2066 = vmatprep.subr.bf16.mxu0 0
    %2067 = vmatpush1.bf16.msra.mxu0 0
    %2068 = vmatprep.subr.bf16.mxu0 0
    %2069 = vmatpush1.bf16.msra.mxu0 0
    %2070 = vmatprep.mubr.bf16.mxu0 0
    %2071 = vmatmul.mubr.bf16.gmra.mrb[0].mxu0 %v2033
    %v2072 = vpop.f32.mrb[0].mxu0
    %v2073 = vadd.f32 0.0, %v2072
    %v2074 = vpop.f32.mrb[0].mxu0
    %v2075 = vpop.f32.mrb[0].mxu0
    %v2076 = vpop.f32.mrb[0].mxu0
    %2077 = vdwg.mxu0
    %2078 = vrot.lane.b32.xlu0 %v1379, 64
    %v2079 = vpop.permute.xlu0 %2078
    %v2081 = vsel %vm1883, %v1877, 0
    %v2084 = vand.u32 %v2079, %v1890
    %2086 = vmatprep.subr.bf16.mxu0 0
    %2087 = vmatpush1.bf16.msra.mxu0 %v2084
    %2088 = vmatprep.subr.bf16.mxu0 0
    %2089 = vmatpush1.bf16.msra.mxu0 0
    %2090 = vmatprep.subr.bf16.mxu0 0
    %2091 = vmatpush1.bf16.msra.mxu0 0
    %2092 = vmatprep.subr.bf16.mxu0 0
    %2093 = vmatpush1.bf16.msra.mxu0 0
    %2094 = vmatprep.subr.bf16.mxu0 0
    %2095 = vmatpush1.bf16.msra.mxu0 0
    %2096 = vmatprep.subr.bf16.mxu0 0
    %2097 = vmatpush1.bf16.msra.mxu0 0
    %2098 = vmatprep.subr.bf16.mxu0 0
    %2099 = vmatpush1.bf16.msra.mxu0 0
    %2100 = vmatprep.subr.bf16.mxu0 0
    %2101 = vmatpush1.bf16.msra.mxu0 0
    %2102 = vmatprep.subr.bf16.mxu0 0
    %2103 = vmatpush1.bf16.msra.mxu0 0
    %2104 = vmatprep.subr.bf16.mxu0 0
    %2105 = vmatpush1.bf16.msra.mxu0 0
    %2106 = vmatprep.subr.bf16.mxu0 0
    %2107 = vmatpush1.bf16.msra.mxu0 0
    %2108 = vmatprep.subr.bf16.mxu0 0
    %2109 = vmatpush1.bf16.msra.mxu0 0
    %2110 = vmatprep.subr.bf16.mxu0 0
    %2111 = vmatpush1.bf16.msra.mxu0 0
    %2112 = vmatprep.subr.bf16.mxu0 0
    %2113 = vmatpush1.bf16.msra.mxu0 0
    %2114 = vmatprep.subr.bf16.mxu0 0
    %2115 = vmatpush1.bf16.msra.mxu0 0
    %2116 = vmatprep.subr.bf16.mxu0 0
    %2117 = vmatpush1.bf16.msra.mxu0 0
    %2118 = vmatprep.mubr.bf16.mxu0 0
    %2119 = vmatmul.mubr.bf16.gmra.mrb[0].mxu0 %v2081
    %v2120 = vpop.f32.mrb[0].mxu0
    %v2121 = vadd.f32 0.0, %v2120
    %v2122 = vpop.f32.mrb[0].mxu0
    %v2123 = vpop.f32.mrb[0].mxu0
    %v2124 = vpop.f32.mrb[0].mxu0
    %2125 = vdwg.mxu0
    %2126 = vrot.lane.b32.xlu0 %v1380, 64
    %v2127 = vpop.permute.xlu0 %2126
    %v2129 = vsel %vm1883, %v1878, 0
    %v2132 = vand.u32 %v2127, %v1890
    %2134 = vmatprep.subr.bf16.mxu0 0
    %2135 = vmatpush1.bf16.msra.mxu0 %v2132
    %2136 = vmatprep.subr.bf16.mxu0 0
    %2137 = vmatpush1.bf16.msra.mxu0 0
    %2138 = vmatprep.subr.bf16.mxu0 0
    %2139 = vmatpush1.bf16.msra.mxu0 0
    %2140 = vmatprep.subr.bf16.mxu0 0
    %2141 = vmatpush1.bf16.msra.mxu0 0
    %2142 = vmatprep.subr.bf16.mxu0 0
    %2143 = vmatpush1.bf16.msra.mxu0 0
    %2144 = vmatprep.subr.bf16.mxu0 0
    %2145 = vmatpush1.bf16.msra.mxu0 0
    %2146 = vmatprep.subr.bf16.mxu0 0
    %2147 = vmatpush1.bf16.msra.mxu0 0
    %2148 = vmatprep.subr.bf16.mxu0 0
    %2149 = vmatpush1.bf16.msra.mxu0 0
    %2150 = vmatprep.subr.bf16.mxu0 0
    %2151 = vmatpush1.bf16.msra.mxu0 0
    %2152 = vmatprep.subr.bf16.mxu0 0
    %2153 = vmatpush1.bf16.msra.mxu0 0
    %2154 = vmatprep.subr.bf16.mxu0 0
    %2155 = vmatpush1.bf16.msra.mxu0 0
    %2156 = vmatprep.subr.bf16.mxu0 0
    %2157 = vmatpush1.bf16.msra.mxu0 0
    %2158 = vmatprep.subr.bf16.mxu0 0
    %2159 = vmatpush1.bf16.msra.mxu0 0
    %2160 = vmatprep.subr.bf16.mxu0 0
    %2161 = vmatpush1.bf16.msra.mxu0 0
    %2162 = vmatprep.subr.bf16.mxu0 0
    %2163 = vmatpush1.bf16.msra.mxu0 0
    %2164 = vmatprep.subr.bf16.mxu0 0
    %2165 = vmatpush1.bf16.msra.mxu0 0
    %2166 = vmatprep.mubr.bf16.mxu0 0
    %2167 = vmatmul.mubr.bf16.gmra.mrb[0].mxu0 %v2129
    %v2168 = vpop.f32.mrb[0].mxu0
    %v2169 = vadd.f32 0.0, %v2168
    %v2170 = vpop.f32.mrb[0].mxu0
    %v2171 = vpop.f32.mrb[0].mxu0
    %v2172 = vpop.f32.mrb[0].mxu0
    %2173 = vdwg.mxu0
    %2174 = vrot.lane.b32.xlu0 %v1381, 64
    %v2175 = vpop.permute.xlu0 %2174
    %v2177 = vsel %vm1883, %v1879, 0
    %v2180 = vand.u32 %v2175, %v1890
    %2182 = vmatprep.subr.bf16.mxu0 0
    %2183 = vmatpush1.bf16.msra.mxu0 %v2180
    %2184 = vmatprep.subr.bf16.mxu0 0
    %2185 = vmatpush1.bf16.msra.mxu0 0
    %2186 = vmatprep.subr.bf16.mxu0 0
    %2187 = vmatpush1.bf16.msra.mxu0 0
    %2188 = vmatprep.subr.bf16.mxu0 0
    %2189 = vmatpush1.bf16.msra.mxu0 0
    %2190 = vmatprep.subr.bf16.mxu0 0
    %2191 = vmatpush1.bf16.msra.mxu0 0
    %2192 = vmatprep.subr.bf16.mxu0 0
    %2193 = vmatpush1.bf16.msra.mxu0 0
    %2194 = vmatprep.subr.bf16.mxu0 0
    %2195 = vmatpush1.bf16.msra.mxu0 0
    %2196 = vmatprep.subr.bf16.mxu0 0
    %2197 = vmatpush1.bf16.msra.mxu0 0
    %2198 = vmatprep.subr.bf16.mxu0 0
    %2199 = vmatpush1.bf16.msra.mxu0 0
    %2200 = vmatprep.subr.bf16.mxu0 0
    %2201 = vmatpush1.bf16.msra.mxu0 0
    %2202 = vmatprep.subr.bf16.mxu0 0
    %2203 = vmatpush1.bf16.msra.mxu0 0
    %2204 = vmatprep.subr.bf16.mxu0 0
    %2205 = vmatpush1.bf16.msra.mxu0 0
    %2206 = vmatprep.subr.bf16.mxu0 0
    %2207 = vmatpush1.bf16.msra.mxu0 0
    %2208 = vmatprep.subr.bf16.mxu0 0
    %2209 = vmatpush1.bf16.msra.mxu0 0
    %2210 = vmatprep.subr.bf16.mxu0 0
    %2211 = vmatpush1.bf16.msra.mxu0 0
    %2212 = vmatprep.subr.bf16.mxu0 0
    %2213 = vmatpush1.bf16.msra.mxu0 0
    %2214 = vmatprep.mubr.bf16.mxu0 0
    %2215 = vmatmul.mubr.bf16.gmra.mrb[0].mxu0 %v2177
    %v2216 = vpop.f32.mrb[0].mxu0
    %v2217 = vadd.f32 0.0, %v2216
    %v2218 = vpop.f32.mrb[0].mxu0
    %v2219 = vpop.f32.mrb[0].mxu0
    %v2220 = vpop.f32.mrb[0].mxu0
    %2221 = vdwg.mxu0
    %2222 = vrot.lane.b32.xlu0 %v1382, 64
    %v2223 = vpop.permute.xlu0 %2222
    %v2225 = vsel %vm1883, %v1880, 0
    %v2228 = vand.u32 %v2223, %v1890
    %2230 = vmatprep.subr.bf16.mxu0 0
    %2231 = vmatpush1.bf16.msra.mxu0 %v2228
    %2232 = vmatprep.subr.bf16.mxu0 0
    %2233 = vmatpush1.bf16.msra.mxu0 0
    %2234 = vmatprep.subr.bf16.mxu0 0
    %2235 = vmatpush1.bf16.msra.mxu0 0
    %2236 = vmatprep.subr.bf16.mxu0 0
    %2237 = vmatpush1.bf16.msra.mxu0 0
    %2238 = vmatprep.subr.bf16.mxu0 0
    %2239 = vmatpush1.bf16.msra.mxu0 0
    %2240 = vmatprep.subr.bf16.mxu0 0
    %2241 = vmatpush1.bf16.msra.mxu0 0
    %2242 = vmatprep.subr.bf16.mxu0 0
    %2243 = vmatpush1.bf16.msra.mxu0 0
    %2244 = vmatprep.subr.bf16.mxu0 0
    %2245 = vmatpush1.bf16.msra.mxu0 0
    %2246 = vmatprep.subr.bf16.mxu0 0
    %2247 = vmatpush1.bf16.msra.mxu0 0
    %2248 = vmatprep.subr.bf16.mxu0 0
    %2249 = vmatpush1.bf16.msra.mxu0 0
    %2250 = vmatprep.subr.bf16.mxu0 0
    %2251 = vmatpush1.bf16.msra.mxu0 0
    %2252 = vmatprep.subr.bf16.mxu0 0
    %2253 = vmatpush1.bf16.msra.mxu0 0
    %2254 = vmatprep.subr.bf16.mxu0 0
    %2255 = vmatpush1.bf16.msra.mxu0 0
    %2256 = vmatprep.subr.bf16.mxu0 0
    %2257 = vmatpush1.bf16.msra.mxu0 0
    %2258 = vmatprep.subr.bf16.mxu0 0
    %2259 = vmatpush1.bf16.msra.mxu0 0
    %2260 = vmatprep.subr.bf16.mxu0 0
    %2261 = vmatpush1.bf16.msra.mxu0 0
    %2262 = vmatprep.mubr.bf16.mxu0 0
    %2263 = vmatmul.mubr.bf16.gmra.mrb[0].mxu0 %v2225
    %v2264 = vpop.f32.mrb[0].mxu0
    %v2265 = vadd.f32 0.0, %v2264
    %v2266 = vpop.f32.mrb[0].mxu0
    %v2267 = vpop.f32.mrb[0].mxu0
    %v2268 = vpop.f32.mrb[0].mxu0
    %2269 = vdwg.mxu0
    %2272 = vrot.lane.b32.xlu0 %v2025, 8
    %v2273 = vpop.permute.xlu0 %2272
    %2274 = vrot.lane.b32.xlu0 %v2073, 8
    %v2275 = vpop.permute.xlu0 %2274
    %2280 = vrot.lane.b32.xlu0 %v2121, 16
    %v2281 = vpop.permute.xlu0 %2280
    %2282 = vrot.lane.b32.xlu0 %v2169, 16
    %v2283 = vpop.permute.xlu0 %2282
    %2288 = vrot.lane.b32.xlu0 %v2217, 24
    %v2289 = vpop.permute.xlu0 %2288
    %2290 = vrot.lane.b32.xlu0 %v2265, 24
    %v2291 = vpop.permute.xlu0 %2290
    %v2294 = vsel %vm1386, %v1929, %v2273
    %v2295 = vsel %vm1386, %v1977, %v2275
    %vm2296 = vcmask 130048
    %v2297 = vsel %vm2296, %v2294, %v2281
    %v2298 = vsel %vm2296, %v2295, %v2283
    %vm2299 = vcmask 195584
    %v2300 = vsel %vm2299, %v2297, %v2289
    %v2301 = vsel %vm2299, %v2298, %v2291
    %v2304 = vcombine.high %v2300, %v2300
    %v2306 = vunpack.c.l.s4 1966171168
    %v2307 = vunpack.c.0.s8 %v2306
    %v2308 = vlaneseq
    %v2309 = vshrl.u32 %v2308, 7
    %v2310 = vsub.s32 %v2307, %v2309
    %v2311 = vrot.slane %v2300, %v2310
    %v2313 = vunpack.c.l.s4 1966171168
    %v2314 = vunpack.c.0.s8 %v2313
    %v2315 = vlaneseq
    %v2316 = vshrl.u32 %v2315, 7
    %v2317 = vsub.s32 %v2314, %v2316
    %v2318 = vrot.slane %v2304, %v2317
    %v2319 = vcombine.high %v2311, %v2311
    %v2321 = vunpack.c.l.s4 1966171168
    %v2322 = vunpack.c.0.s8 %v2321
    %v2323 = vlaneseq
    %v2324 = vshrl.u32 %v2323, 7
    %v2325 = vsub.s32 %v2322, %v2324
    %v2326 = vrot.slane %v2311, %v2325
    %v2328 = vunpack.c.l.s4 1966171168
    %v2329 = vunpack.c.0.s8 %v2328
    %v2330 = vlaneseq
    %v2331 = vshrl.u32 %v2330, 7
    %v2332 = vsub.s32 %v2329, %v2331
    %v2333 = vrot.slane %v2318, %v2332
    %v2335 = vunpack.c.l.s4 1966171168
    %v2336 = vunpack.c.0.s8 %v2335
    %v2337 = vlaneseq
    %v2338 = vshrl.u32 %v2337, 7
    %v2339 = vsub.s32 %v2336, %v2338
    %v2340 = vrot.slane %v2319, %v2339
    %v2341 = vcombine.high %v2326, %v2326
    %v2342 = vcombine.high %v2340, %v2340
    %v2343 = vcombine.high %v2301, %v2301
    %v2345 = vunpack.c.l.s4 1966171168
    %v2346 = vunpack.c.0.s8 %v2345
    %v2347 = vlaneseq
    %v2348 = vshrl.u32 %v2347, 7
    %v2349 = vsub.s32 %v2346, %v2348
    %v2350 = vrot.slane %v2301, %v2349
    %v2352 = vunpack.c.l.s4 1966171168
    %v2353 = vunpack.c.0.s8 %v2352
    %v2354 = vlaneseq
    %v2355 = vshrl.u32 %v2354, 7
    %v2356 = vsub.s32 %v2353, %v2355
    %v2357 = vrot.slane %v2343, %v2356
    %v2358 = vcombine.high %v2350, %v2350
    %v2360 = vunpack.c.l.s4 1966171168
    %v2361 = vunpack.c.0.s8 %v2360
    %v2362 = vlaneseq
    %v2363 = vshrl.u32 %v2362, 7
    %v2364 = vsub.s32 %v2361, %v2363
    %v2365 = vrot.slane %v2350, %v2364
    %v2367 = vunpack.c.l.s4 1966171168
    %v2368 = vunpack.c.0.s8 %v2367
    %v2369 = vlaneseq
    %v2370 = vshrl.u32 %v2369, 7
    %v2371 = vsub.s32 %v2368, %v2370
    %v2372 = vrot.slane %v2357, %v2371
    %v2374 = vunpack.c.l.s4 1966171168
    %v2375 = vunpack.c.0.s8 %v2374
    %v2376 = vlaneseq
    %v2377 = vshrl.u32 %v2376, 7
    %v2378 = vsub.s32 %v2375, %v2377
    %v2379 = vrot.slane %v2358, %v2378
    %v2380 = vcombine.high %v2365, %v2365
    %v2381 = vcombine.high %v2379, %v2379
    %v2382 = vcombine.low %v2326, %v2340
    %v2383 = vcombine.low %v2341, %v2342
    %v2384 = vcombine.low %v2333, %v2365
    %v2385 = vcombine.low %v2379, %v2380
    %v2387 = vunpack.c.l.s4 1966171168
    %v2388 = vunpack.c.0.s8 %v2387
    %v2389 = vlaneseq
    %v2390 = vshrl.u32 %v2389, 7
    %v2391 = vsub.s32 %v2388, %v2390
    %v2392 = vrot.slane %v2382, %v2391
    %v2394 = vunpack.c.l.s4 1966171168
    %v2395 = vunpack.c.0.s8 %v2394
    %v2396 = vlaneseq
    %v2397 = vshrl.u32 %v2396, 7
    %v2398 = vsub.s32 %v2395, %v2397
    %v2399 = vrot.slane %v2383, %v2398
    %v2401 = vunpack.c.l.s4 1966171168
    %v2402 = vunpack.c.0.s8 %v2401
    %v2403 = vlaneseq
    %v2404 = vshrl.u32 %v2403, 7
    %v2405 = vsub.s32 %v2402, %v2404
    %v2406 = vrot.slane %v2384, %v2405
    %v2408 = vunpack.c.l.s4 1966171168
    %v2409 = vunpack.c.0.s8 %v2408
    %v2410 = vlaneseq
    %v2411 = vshrl.u32 %v2410, 7
    %v2412 = vsub.s32 %v2409, %v2411
    %v2413 = vrot.slane %v2385, %v2412
    %v2414 = vcombine.low %v2392, %v2399
    %v2415 = vcombine.low %v2406, %v2413
    %v2417 = vunpack.c.l.s4 1966171168
    %v2418 = vunpack.c.0.s8 %v2417
    %v2419 = vlaneseq
    %v2420 = vshrl.u32 %v2419, 7
    %v2421 = vsub.s32 %v2418, %v2420
    %v2422 = vrot.slane %v2414, %v2421
    %v2424 = vunpack.c.l.s4 1966171168
    %v2425 = vunpack.c.0.s8 %v2424
    %v2426 = vlaneseq
    %v2427 = vshrl.u32 %v2426, 7
    %v2428 = vsub.s32 %v2425, %v2427
    %v2429 = vrot.slane %v2415, %v2428
    %v2430 = vcombine.low %v2422, %v2429
    %v2431 = vcombine.low %v2381, %v2372
    %v2433 = vunpack.c.l.s4 1966171168
    %v2434 = vunpack.c.0.s8 %v2433
    %v2435 = vlaneseq
    %v2436 = vshrl.u32 %v2435, 7
    %v2437 = vsub.s32 %v2434, %v2436
    %v2438 = vrot.slane %v2431, %v2437
    %v2440 = vunpack.c.l.s4 1966171168
    %v2441 = vunpack.c.0.s8 %v2440
    %v2442 = vlaneseq
    %v2443 = vshrl.u32 %v2442, 7
    %v2444 = vsub.s32 %v2441, %v2443
    %v2445 = vrot.slane %v2438, %v2444
    %v2448 = vpack.c.bf16 %v2445, %v2430
    %v2449 = vld [vmem:[%s9] sm:$0xf]
    %v2450 = vld [vmem:[%s9 + $0x4] sm:$0xf]
    %v2451 = vld [vmem:[%s9 + $0x8] sm:$0xf]
    %v2452 = vld [vmem:[%s9 + $0xc] sm:$0xf]
    %v2457 = vunpack.c.l.b16 %v2449
    %v2458 = vunpack.c.l.b16 %v2450
    %v2459 = vunpack.c.l.b16 %v2451
    %v2460 = vunpack.c.l.b16 %v2452
    %v2461 = vpack.c.b16 %v2458, %v2457
    %v2462 = vpack.c.b16 %v2460, %v2459
    %v2466 = vsel %vm401, %v2448, 0
    %2468 = vmatprep.subr.bf16.mxu0 0
    %2469 = vmatpush1.bf16.msra.mxu0 %v2461
    %2470 = vmatprep.subr.bf16.mxu0 0
    %2471 = vmatpush1.bf16.msra.mxu0 %v2462
    %2472 = vmatprep.subr.bf16.mxu0 0
    %2473 = vmatpush1.bf16.msra.mxu0 0
    %2474 = vmatprep.subr.bf16.mxu0 0
    %2475 = vmatpush1.bf16.msra.mxu0 0
    %2476 = vmatprep.subr.bf16.mxu0 0
    %2477 = vmatpush1.bf16.msra.mxu0 0
    %2478 = vmatprep.subr.bf16.mxu0 0
    %2479 = vmatpush1.bf16.msra.mxu0 0
    %2480 = vmatprep.subr.bf16.mxu0 0
    %2481 = vmatpush1.bf16.msra.mxu0 0
    %2482 = vmatprep.subr.bf16.mxu0 0
    %2483 = vmatpush1.bf16.msra.mxu0 0
    %2484 = vmatprep.subr.bf16.mxu0 0
    %2485 = vmatpush1.bf16.msra.mxu0 0
    %2486 = vmatprep.subr.bf16.mxu0 0
    %2487 = vmatpush1.bf16.msra.mxu0 0
    %2488 = vmatprep.subr.bf16.mxu0 0
    %2489 = vmatpush1.bf16.msra.mxu0 0
    %2490 = vmatprep.subr.bf16.mxu0 0
    %2491 = vmatpush1.bf16.msra.mxu0 0
    %2492 = vmatprep.subr.bf16.mxu0 0
    %2493 = vmatpush1.bf16.msra.mxu0 0
    %2494 = vmatprep.subr.bf16.mxu0 0
    %2495 = vmatpush1.bf16.msra.mxu0 0
    %2496 = vmatprep.subr.bf16.mxu0 0
    %2497 = vmatpush1.bf16.msra.mxu0 0
    %2498 = vmatprep.subr.bf16.mxu0 0
    %2499 = vmatpush1.bf16.msra.mxu0 0
    %2500 = vmatprep.mubr.bf16.mxu0 0
    %2501 = vmatmul.mubr.bf16.gmra.mrb[0].mxu0 %v2466
    %v2502 = vpop.f32.mrb[0].mxu0
    %v2503 = vadd.f32 0.0, %v2502
    %v2504 = vpop.f32.mrb[0].mxu0
    %v2505 = vpop.f32.mrb[0].mxu0
    %v2506 = vadd.f32 0.0, %v2505
    %v2507 = vpop.f32.mrb[0].mxu0
    %2508 = vdwg.mxu0
    %v2511 = vcombine.high %v2503, %v2503
    %v2513 = vunpack.c.l.s4 1966171168
    %v2514 = vunpack.c.0.s8 %v2513
    %v2515 = vlaneseq
    %v2516 = vshrl.u32 %v2515, 7
    %v2517 = vsub.s32 %v2514, %v2516
    %v2518 = vrot.slane %v2503, %v2517
    %v2520 = vunpack.c.l.s4 1966171168
    %v2521 = vunpack.c.0.s8 %v2520
    %v2522 = vlaneseq
    %v2523 = vshrl.u32 %v2522, 7
    %v2524 = vsub.s32 %v2521, %v2523
    %v2525 = vrot.slane %v2511, %v2524
    %v2526 = vcombine.high %v2518, %v2518
    %v2527 = vcombine.high %v2525, %v2525
    %v2529 = vunpack.c.l.s4 1966171168
    %v2530 = vunpack.c.0.s8 %v2529
    %v2531 = vlaneseq
    %v2532 = vshrl.u32 %v2531, 7
    %v2533 = vsub.s32 %v2530, %v2532
    %v2534 = vrot.slane %v2518, %v2533
    %v2536 = vunpack.c.l.s4 1966171168
    %v2537 = vunpack.c.0.s8 %v2536
    %v2538 = vlaneseq
    %v2539 = vshrl.u32 %v2538, 7
    %v2540 = vsub.s32 %v2537, %v2539
    %v2541 = vrot.slane %v2525, %v2540
    %v2543 = vunpack.c.l.s4 1966171168
    %v2544 = vunpack.c.0.s8 %v2543
    %v2545 = vlaneseq
    %v2546 = vshrl.u32 %v2545, 7
    %v2547 = vsub.s32 %v2544, %v2546
    %v2548 = vrot.slane %v2526, %v2547
    %v2550 = vunpack.c.l.s4 1966171168
    %v2551 = vunpack.c.0.s8 %v2550
    %v2552 = vlaneseq
    %v2553 = vshrl.u32 %v2552, 7
    %v2554 = vsub.s32 %v2551, %v2553
    %v2555 = vrot.slane %v2527, %v2554
    %v2556 = vcombine.high %v2534, %v2534
    %v2557 = vcombine.high %v2541, %v2541
    %v2558 = vcombine.high %v2548, %v2548
    %v2559 = vcombine.high %v2555, %v2555
    %v2561 = vunpack.c.l.s4 1966171168
    %v2562 = vunpack.c.0.s8 %v2561
    %v2563 = vlaneseq
    %v2564 = vshrl.u32 %v2563, 7
    %v2565 = vsub.s32 %v2562, %v2564
    %v2566 = vrot.slane %v2506, %v2565
    %v2567 = vcombine.high %v2566, %v2566
    %v2569 = vunpack.c.l.s4 1966171168
    %v2570 = vunpack.c.0.s8 %v2569
    %v2571 = vlaneseq
    %v2572 = vshrl.u32 %v2571, 7
    %v2573 = vsub.s32 %v2570, %v2572
    %v2574 = vrot.slane %v2566, %v2573
    %v2576 = vunpack.c.l.s4 1966171168
    %v2577 = vunpack.c.0.s8 %v2576
    %v2578 = vlaneseq
    %v2579 = vshrl.u32 %v2578, 7
    %v2580 = vsub.s32 %v2577, %v2579
    %v2581 = vrot.slane %v2567, %v2580
    %v2592 = vadd.f32 %v267, %v2534
    %v2593 = vadd.f32 %v281, %v2548
    %v2594 = vadd.f32 %v282, %v2556
    %v2595 = vadd.f32 %v283, %v2558
    %v2596 = vadd.f32 %v274, %v2541
    %v2597 = vadd.f32 %v306, %v2555
    %v2598 = vadd.f32 %v320, %v2557
    %v2599 = vadd.f32 %v321, %v2559
    %v2600 = vadd.f32 %v322, %v2574
    %v2601 = vadd.f32 %v313, %v2581
    %v2602 = vld [vmem:[%s10] sm:$0x1]
    %v2604 = vlaneseq
    %v2605 = vshrl.u32 %v2604, 7
    %v2606 = vsub.s32 0, %v2605
    %v2607 = vrot.slane %v2602, %v2606
    %v2608 = vcombine.high %v2607, %v2607
    %v2610 = vunpack.c.l.s4 1966171168
    %v2611 = vunpack.c.0.s8 %v2610
    %v2612 = vlaneseq
    %v2613 = vshrl.u32 %v2612, 7
    %v2614 = vsub.s32 %v2611, %v2613
    %v2615 = vrot.slane %v2607, %v2614
    %v2617 = vunpack.c.l.s4 1966171168
    %v2618 = vunpack.c.0.s8 %v2617
    %v2619 = vlaneseq
    %v2620 = vshrl.u32 %v2619, 7
    %v2621 = vsub.s32 %v2618, %v2620
    %v2622 = vrot.slane %v2608, %v2621
    %v2623 = vcombine.high %v2615, %v2615
    %v2624 = vcombine.high %v2622, %v2622
    %v2626 = vunpack.c.l.s4 1966171168
    %v2627 = vunpack.c.0.s8 %v2626
    %v2628 = vlaneseq
    %v2629 = vshrl.u32 %v2628, 7
    %v2630 = vsub.s32 %v2627, %v2629
    %v2631 = vrot.slane %v2615, %v2630
    %v2633 = vunpack.c.l.s4 1966171168
    %v2634 = vunpack.c.0.s8 %v2633
    %v2635 = vlaneseq
    %v2636 = vshrl.u32 %v2635, 7
    %v2637 = vsub.s32 %v2634, %v2636
    %v2638 = vrot.slane %v2622, %v2637
    %v2640 = vunpack.c.l.s4 1966171168
    %v2641 = vunpack.c.0.s8 %v2640
    %v2642 = vlaneseq
    %v2643 = vshrl.u32 %v2642, 7
    %v2644 = vsub.s32 %v2641, %v2643
    %v2645 = vrot.slane %v2623, %v2644
    %v2647 = vunpack.c.l.s4 1966171168
    %v2648 = vunpack.c.0.s8 %v2647
    %v2649 = vlaneseq
    %v2650 = vshrl.u32 %v2649, 7
    %v2651 = vsub.s32 %v2648, %v2650
    %v2652 = vrot.slane %v2624, %v2651
    %v2653 = vcombine.high %v2631, %v2631
    %v2654 = vcombine.high %v2638, %v2638
    %v2655 = vcombine.high %v2645, %v2645
    %v2656 = vcombine.high %v2652, %v2652
    %v2665 = vadd.f32 %v2592, %v2631
    %v2666 = vadd.f32 %v2593, %v2645
    %v2667 = vadd.f32 %v2594, %v2653
    %v2668 = vadd.f32 %v2595, %v2655
    %v2669 = vadd.f32 %v2596, %v2638
    %v2670 = vadd.f32 %v2597, %v2652
    %v2671 = vadd.f32 %v2598, %v2654
    %v2672 = vadd.f32 %v2599, %v2656
    %v2673 = vadd.f32 %v2600, %v2631
    %v2674 = vadd.f32 %v2601, %v2645
    %v2675 = vld [vmem:[%s11] sm:$0x1]
    %v2676 = vld [vmem:[%s12] sm:$0x1]
    %v2687 = vcombine.low %v2665, %v2666
    %v2688 = vcombine.low %v2667, %v2668
    %v2689 = vcombine.low %v2669, %v2670
    %v2690 = vcombine.low %v2671, %v2672
    %v2692 = vunpack.c.l.s4 1966171168
    %v2693 = vunpack.c.0.s8 %v2692
    %v2694 = vlaneseq
    %v2695 = vshrl.u32 %v2694, 7
    %v2696 = vsub.s32 %v2693, %v2695
    %v2697 = vrot.slane %v2687, %v2696
    %v2699 = vunpack.c.l.s4 1966171168
    %v2700 = vunpack.c.0.s8 %v2699
    %v2701 = vlaneseq
    %v2702 = vshrl.u32 %v2701, 7
    %v2703 = vsub.s32 %v2700, %v2702
    %v2704 = vrot.slane %v2688, %v2703
    %v2706 = vunpack.c.l.s4 1966171168
    %v2707 = vunpack.c.0.s8 %v2706
    %v2708 = vlaneseq
    %v2709 = vshrl.u32 %v2708, 7
    %v2710 = vsub.s32 %v2707, %v2709
    %v2711 = vrot.slane %v2689, %v2710
    %v2713 = vunpack.c.l.s4 1966171168
    %v2714 = vunpack.c.0.s8 %v2713
    %v2715 = vlaneseq
    %v2716 = vshrl.u32 %v2715, 7
    %v2717 = vsub.s32 %v2714, %v2716
    %v2718 = vrot.slane %v2690, %v2717
    %v2719 = vcombine.low %v2697, %v2704
    %v2720 = vcombine.low %v2711, %v2718
    %v2722 = vunpack.c.l.s4 1966171168
    %v2723 = vunpack.c.0.s8 %v2722
    %v2724 = vlaneseq
    %v2725 = vshrl.u32 %v2724, 7
    %v2726 = vsub.s32 %v2723, %v2725
    %v2727 = vrot.slane %v2719, %v2726
    %v2729 = vunpack.c.l.s4 1966171168
    %v2730 = vunpack.c.0.s8 %v2729
    %v2731 = vlaneseq
    %v2732 = vshrl.u32 %v2731, 7
    %v2733 = vsub.s32 %v2730, %v2732
    %v2734 = vrot.slane %v2720, %v2733
    %v2735 = vcombine.low %v2727, %v2734
    %v2736 = vcombine.low %v2673, %v2674
    %v2738 = vunpack.c.l.s4 1966171168
    %v2739 = vunpack.c.0.s8 %v2738
    %v2740 = vlaneseq
    %v2741 = vshrl.u32 %v2740, 7
    %v2742 = vsub.s32 %v2739, %v2741
    %v2743 = vrot.slane %v2736, %v2742
    %v2745 = vunpack.c.l.s4 1966171168
    %v2746 = vunpack.c.0.s8 %v2745
    %v2747 = vlaneseq
    %v2748 = vshrl.u32 %v2747, 7
    %v2749 = vsub.s32 %v2746, %v2748
    %v2750 = vrot.slane %v2743, %v2749
    %v2753 = vsel %vm401, %v2735, 0.0
    %2754 = vadd.xlane.f32.xlu0 %v2753
    %v2755 = vpop.xlane.xlu0 %2754
    %v2756 = vsel %vm405, %v2750, 0.0
    %2757 = vadd.xlane.f32.xlu0 %v2756
    %v2758 = vpop.xlane.xlu0 %2757
    %v2759 = vmul.f32 %v2755, %v409
    %v2760 = vmul.f32 %v2758, %v409
    %v2763 = vlaneseq
    %v2764 = vshrl.u32 %v2763, 7
    %v2765 = vsub.s32 0, %v2764
    %v2766 = vrot.slane %v2759, %v2765
    %v2767 = vlaneseq
    %v2768 = vshrl.u32 %v2767, 7
    %v2769 = vsub.s32 1, %v2768
    %v2770 = vrot.slane %v2759, %v2769
    %v2771 = vlaneseq
    %v2772 = vshrl.u32 %v2771, 7
    %v2773 = vsub.s32 2, %v2772
    %v2774 = vrot.slane %v2759, %v2773
    %v2775 = vlaneseq
    %v2776 = vshrl.u32 %v2775, 7
    %v2777 = vsub.s32 3, %v2776
    %v2778 = vrot.slane %v2759, %v2777
    %v2779 = vlaneseq
    %v2780 = vshrl.u32 %v2779, 7
    %v2781 = vsub.s32 4, %v2780
    %v2782 = vrot.slane %v2759, %v2781
    %v2783 = vlaneseq
    %v2784 = vshrl.u32 %v2783, 7
    %v2785 = vsub.s32 5, %v2784
    %v2786 = vrot.slane %v2759, %v2785
    %v2787 = vlaneseq
    %v2788 = vshrl.u32 %v2787, 7
    %v2789 = vsub.s32 6, %v2788
    %v2790 = vrot.slane %v2759, %v2789
    %v2791 = vlaneseq
    %v2792 = vshrl.u32 %v2791, 7
    %v2793 = vsub.s32 7, %v2792
    %v2794 = vrot.slane %v2759, %v2793
    %v2795 = vlaneseq
    %v2796 = vshrl.u32 %v2795, 7
    %v2797 = vsub.s32 0, %v2796
    %v2798 = vrot.slane %v2760, %v2797
    %v2799 = vlaneseq
    %v2800 = vshrl.u32 %v2799, 7
    %v2801 = vsub.s32 1, %v2800
    %v2802 = vrot.slane %v2760, %v2801
    %v2813 = vsub.f32 %v2665, %v2766
    %v2814 = vsub.f32 %v2666, %v2770
    %v2815 = vsub.f32 %v2667, %v2774
    %v2816 = vsub.f32 %v2668, %v2778
    %v2817 = vsub.f32 %v2669, %v2782
    %v2818 = vsub.f32 %v2670, %v2786
    %v2819 = vsub.f32 %v2671, %v2790
    %v2820 = vsub.f32 %v2672, %v2794
    %v2821 = vsub.f32 %v2673, %v2798
    %v2822 = vsub.f32 %v2674, %v2802
    %v2823 = vmul.f32 %v2813, %v2813
    %v2824 = vmul.f32 %v2814, %v2814
    %v2825 = vmul.f32 %v2815, %v2815
    %v2826 = vmul.f32 %v2816, %v2816
    %v2827 = vmul.f32 %v2817, %v2817
    %v2828 = vmul.f32 %v2818, %v2818
    %v2829 = vmul.f32 %v2819, %v2819
    %v2830 = vmul.f32 %v2820, %v2820
    %v2831 = vmul.f32 %v2821, %v2821
    %v2832 = vmul.f32 %v2822, %v2822
    %v2843 = vcombine.low %v2823, %v2824
    %v2844 = vcombine.low %v2825, %v2826
    %v2845 = vcombine.low %v2827, %v2828
    %v2846 = vcombine.low %v2829, %v2830
    %v2848 = vunpack.c.l.s4 1966171168
    %v2849 = vunpack.c.0.s8 %v2848
    %v2850 = vlaneseq
    %v2851 = vshrl.u32 %v2850, 7
    %v2852 = vsub.s32 %v2849, %v2851
    %v2853 = vrot.slane %v2843, %v2852
    %v2855 = vunpack.c.l.s4 1966171168
    %v2856 = vunpack.c.0.s8 %v2855
    %v2857 = vlaneseq
    %v2858 = vshrl.u32 %v2857, 7
    %v2859 = vsub.s32 %v2856, %v2858
    %v2860 = vrot.slane %v2844, %v2859
    %v2862 = vunpack.c.l.s4 1966171168
    %v2863 = vunpack.c.0.s8 %v2862
    %v2864 = vlaneseq
    %v2865 = vshrl.u32 %v2864, 7
    %v2866 = vsub.s32 %v2863, %v2865
    %v2867 = vrot.slane %v2845, %v2866
    %v2869 = vunpack.c.l.s4 1966171168
    %v2870 = vunpack.c.0.s8 %v2869
    %v2871 = vlaneseq
    %v2872 = vshrl.u32 %v2871, 7
    %v2873 = vsub.s32 %v2870, %v2872
    %v2874 = vrot.slane %v2846, %v2873
    %v2875 = vcombine.low %v2853, %v2860
    %v2876 = vcombine.low %v2867, %v2874
    %v2878 = vunpack.c.l.s4 1966171168
    %v2879 = vunpack.c.0.s8 %v2878
    %v2880 = vlaneseq
    %v2881 = vshrl.u32 %v2880, 7
    %v2882 = vsub.s32 %v2879, %v2881
    %v2883 = vrot.slane %v2875, %v2882
    %v2885 = vunpack.c.l.s4 1966171168
    %v2886 = vunpack.c.0.s8 %v2885
    %v2887 = vlaneseq
    %v2888 = vshrl.u32 %v2887, 7
    %v2889 = vsub.s32 %v2886, %v2888
    %v2890 = vrot.slane %v2876, %v2889
    %v2891 = vcombine.low %v2883, %v2890
    %v2892 = vcombine.low %v2831, %v2832
    %v2894 = vunpack.c.l.s4 1966171168
    %v2895 = vunpack.c.0.s8 %v2894
    %v2896 = vlaneseq
    %v2897 = vshrl.u32 %v2896, 7
    %v2898 = vsub.s32 %v2895, %v2897
    %v2899 = vrot.slane %v2892, %v2898
    %v2901 = vunpack.c.l.s4 1966171168
    %v2902 = vunpack.c.0.s8 %v2901
    %v2903 = vlaneseq
    %v2904 = vshrl.u32 %v2903, 7
    %v2905 = vsub.s32 %v2902, %v2904
    %v2906 = vrot.slane %v2899, %v2905
    %v2909 = vsel %vm401, %v2891, 0.0
    %2910 = vadd.xlane.f32.xlu0 %v2909
    %v2911 = vpop.xlane.xlu0 %2910
    %v2912 = vsel %vm405, %v2906, 0.0
    %2913 = vadd.xlane.f32.xlu0 %v2912
    %v2914 = vpop.xlane.xlu0 %2913
    %v2915 = vmul.f32 %v2911, %v409
    %v2916 = vmul.f32 %v2914, %v409
    %v2917 = vadd.f32 %v2915, 1e-12
    %v2918 = vadd.f32 %v2916, 1e-12
    %v2919 = vrsqrt.pop %v2917
    %v2920 = vrsqrt.pop %v2918
    %v2923 = vlaneseq
    %v2924 = vshrl.u32 %v2923, 7
    %v2925 = vsub.s32 0, %v2924
    %v2926 = vrot.slane %v2919, %v2925
    %v2927 = vlaneseq
    %v2928 = vshrl.u32 %v2927, 7
    %v2929 = vsub.s32 1, %v2928
    %v2930 = vrot.slane %v2919, %v2929
    %v2931 = vlaneseq
    %v2932 = vshrl.u32 %v2931, 7
    %v2933 = vsub.s32 2, %v2932
    %v2934 = vrot.slane %v2919, %v2933
    %v2935 = vlaneseq
    %v2936 = vshrl.u32 %v2935, 7
    %v2937 = vsub.s32 3, %v2936
    %v2938 = vrot.slane %v2919, %v2937
    %v2939 = vlaneseq
    %v2940 = vshrl.u32 %v2939, 7
    %v2941 = vsub.s32 4, %v2940
    %v2942 = vrot.slane %v2919, %v2941
    %v2943 = vlaneseq
    %v2944 = vshrl.u32 %v2943, 7
    %v2945 = vsub.s32 5, %v2944
    %v2946 = vrot.slane %v2919, %v2945
    %v2947 = vlaneseq
    %v2948 = vshrl.u32 %v2947, 7
    %v2949 = vsub.s32 6, %v2948
    %v2950 = vrot.slane %v2919, %v2949
    %v2951 = vlaneseq
    %v2952 = vshrl.u32 %v2951, 7
    %v2953 = vsub.s32 7, %v2952
    %v2954 = vrot.slane %v2919, %v2953
    %v2955 = vlaneseq
    %v2956 = vshrl.u32 %v2955, 7
    %v2957 = vsub.s32 0, %v2956
    %v2958 = vrot.slane %v2920, %v2957
    %v2959 = vlaneseq
    %v2960 = vshrl.u32 %v2959, 7
    %v2961 = vsub.s32 1, %v2960
    %v2962 = vrot.slane %v2920, %v2961
    %v2973 = vmul.f32 %v2813, %v2926
    %v2974 = vmul.f32 %v2814, %v2930
    %v2975 = vmul.f32 %v2815, %v2934
    %v2976 = vmul.f32 %v2816, %v2938
    %v2977 = vmul.f32 %v2817, %v2942
    %v2978 = vmul.f32 %v2818, %v2946
    %v2979 = vmul.f32 %v2819, %v2950
    %v2980 = vmul.f32 %v2820, %v2954
    %v2981 = vmul.f32 %v2821, %v2958
    %v2982 = vmul.f32 %v2822, %v2962
    %v2984 = vlaneseq
    %v2985 = vshrl.u32 %v2984, 7
    %v2986 = vsub.s32 0, %v2985
    %v2987 = vrot.slane %v2675, %v2986
    %v2988 = vcombine.high %v2987, %v2987
    %v2990 = vunpack.c.l.s4 1966171168
    %v2991 = vunpack.c.0.s8 %v2990
    %v2992 = vlaneseq
    %v2993 = vshrl.u32 %v2992, 7
    %v2994 = vsub.s32 %v2991, %v2993
    %v2995 = vrot.slane %v2987, %v2994
    %v2997 = vunpack.c.l.s4 1966171168
    %v2998 = vunpack.c.0.s8 %v2997
    %v2999 = vlaneseq
    %v3000 = vshrl.u32 %v2999, 7
    %v3001 = vsub.s32 %v2998, %v3000
    %v3002 = vrot.slane %v2988, %v3001
    %v3003 = vcombine.high %v2995, %v2995
    %v3004 = vcombine.high %v3002, %v3002
    %v3006 = vunpack.c.l.s4 1966171168
    %v3007 = vunpack.c.0.s8 %v3006
    %v3008 = vlaneseq
    %v3009 = vshrl.u32 %v3008, 7
    %v3010 = vsub.s32 %v3007, %v3009
    %v3011 = vrot.slane %v2995, %v3010
    %v3013 = vunpack.c.l.s4 1966171168
    %v3014 = vunpack.c.0.s8 %v3013
    %v3015 = vlaneseq
    %v3016 = vshrl.u32 %v3015, 7
    %v3017 = vsub.s32 %v3014, %v3016
    %v3018 = vrot.slane %v3002, %v3017
    %v3020 = vunpack.c.l.s4 1966171168
    %v3021 = vunpack.c.0.s8 %v3020
    %v3022 = vlaneseq
    %v3023 = vshrl.u32 %v3022, 7
    %v3024 = vsub.s32 %v3021, %v3023
    %v3025 = vrot.slane %v3003, %v3024
    %v3027 = vunpack.c.l.s4 1966171168
    %v3028 = vunpack.c.0.s8 %v3027
    %v3029 = vlaneseq
    %v3030 = vshrl.u32 %v3029, 7
    %v3031 = vsub.s32 %v3028, %v3030
    %v3032 = vrot.slane %v3004, %v3031
    %v3033 = vcombine.high %v3011, %v3011
    %v3034 = vcombine.high %v3018, %v3018
    %v3035 = vcombine.high %v3025, %v3025
    %v3036 = vcombine.high %v3032, %v3032
    %v3045 = vmul.f32 %v2973, %v3011
    %v3046 = vmul.f32 %v2974, %v3025
    %v3047 = vmul.f32 %v2975, %v3033
    %v3048 = vmul.f32 %v2976, %v3035
    %v3049 = vmul.f32 %v2977, %v3018
    %v3050 = vmul.f32 %v2978, %v3032
    %v3051 = vmul.f32 %v2979, %v3034
    %v3052 = vmul.f32 %v2980, %v3036
    %v3053 = vmul.f32 %v2981, %v3011
    %v3054 = vmul.f32 %v2982, %v3025
    %v3056 = vlaneseq
    %v3057 = vshrl.u32 %v3056, 7
    %v3058 = vsub.s32 0, %v3057
    %v3059 = vrot.slane %v2676, %v3058
    %v3060 = vcombine.high %v3059, %v3059
    %v3062 = vunpack.c.l.s4 1966171168
    %v3063 = vunpack.c.0.s8 %v3062
    %v3064 = vlaneseq
    %v3065 = vshrl.u32 %v3064, 7
    %v3066 = vsub.s32 %v3063, %v3065
    %v3067 = vrot.slane %v3059, %v3066
    %v3069 = vunpack.c.l.s4 1966171168
    %v3070 = vunpack.c.0.s8 %v3069
    %v3071 = vlaneseq
    %v3072 = vshrl.u32 %v3071, 7
    %v3073 = vsub.s32 %v3070, %v3072
    %v3074 = vrot.slane %v3060, %v3073
    %v3075 = vcombine.high %v3067, %v3067
    %v3076 = vcombine.high %v3074, %v3074
    %v3078 = vunpack.c.l.s4 1966171168
    %v3079 = vunpack.c.0.s8 %v3078
    %v3080 = vlaneseq
    %v3081 = vshrl.u32 %v3080, 7
    %v3082 = vsub.s32 %v3079, %v3081
    %v3083 = vrot.slane %v3067, %v3082
    %v3085 = vunpack.c.l.s4 1966171168
    %v3086 = vunpack.c.0.s8 %v3085
    %v3087 = vlaneseq
    %v3088 = vshrl.u32 %v3087, 7
    %v3089 = vsub.s32 %v3086, %v3088
    %v3090 = vrot.slane %v3074, %v3089
    %v3092 = vunpack.c.l.s4 1966171168
    %v3093 = vunpack.c.0.s8 %v3092
    %v3094 = vlaneseq
    %v3095 = vshrl.u32 %v3094, 7
    %v3096 = vsub.s32 %v3093, %v3095
    %v3097 = vrot.slane %v3075, %v3096
    %v3099 = vunpack.c.l.s4 1966171168
    %v3100 = vunpack.c.0.s8 %v3099
    %v3101 = vlaneseq
    %v3102 = vshrl.u32 %v3101, 7
    %v3103 = vsub.s32 %v3100, %v3102
    %v3104 = vrot.slane %v3076, %v3103
    %v3105 = vcombine.high %v3083, %v3083
    %v3106 = vcombine.high %v3090, %v3090
    %v3107 = vcombine.high %v3097, %v3097
    %v3108 = vcombine.high %v3104, %v3104
    %v3117 = vadd.f32 %v3045, %v3083
    %v3118 = vadd.f32 %v3046, %v3097
    %v3119 = vadd.f32 %v3047, %v3105
    %v3120 = vadd.f32 %v3048, %v3107
    %v3121 = vadd.f32 %v3049, %v3090
    %v3122 = vadd.f32 %v3050, %v3104
    %v3123 = vadd.f32 %v3051, %v3106
    %v3124 = vadd.f32 %v3052, %v3108
    %v3125 = vadd.f32 %v3053, %v3083
    %v3126 = vadd.f32 %v3054, %v3097
    %v3137 = vcombine.low %v3117, %v3118
    %v3138 = vcombine.low %v3119, %v3120
    %v3139 = vcombine.low %v3121, %v3122
    %v3140 = vcombine.low %v3123, %v3124
    %v3142 = vunpack.c.l.s4 1966171168
    %v3143 = vunpack.c.0.s8 %v3142
    %v3144 = vlaneseq
    %v3145 = vshrl.u32 %v3144, 7
    %v3146 = vsub.s32 %v3143, %v3145
    %v3147 = vrot.slane %v3137, %v3146
    %v3149 = vunpack.c.l.s4 1966171168
    %v3150 = vunpack.c.0.s8 %v3149
    %v3151 = vlaneseq
    %v3152 = vshrl.u32 %v3151, 7
    %v3153 = vsub.s32 %v3150, %v3152
    %v3154 = vrot.slane %v3138, %v3153
    %v3156 = vunpack.c.l.s4 1966171168
    %v3157 = vunpack.c.0.s8 %v3156
    %v3158 = vlaneseq
    %v3159 = vshrl.u32 %v3158, 7
    %v3160 = vsub.s32 %v3157, %v3159
    %v3161 = vrot.slane %v3139, %v3160
    %v3163 = vunpack.c.l.s4 1966171168
    %v3164 = vunpack.c.0.s8 %v3163
    %v3165 = vlaneseq
    %v3166 = vshrl.u32 %v3165, 7
    %v3167 = vsub.s32 %v3164, %v3166
    %v3168 = vrot.slane %v3140, %v3167
    %v3169 = vcombine.low %v3147, %v3154
    %v3170 = vcombine.low %v3161, %v3168
    %v3172 = vunpack.c.l.s4 1966171168
    %v3173 = vunpack.c.0.s8 %v3172
    %v3174 = vlaneseq
    %v3175 = vshrl.u32 %v3174, 7
    %v3176 = vsub.s32 %v3173, %v3175
    %v3177 = vrot.slane %v3169, %v3176
    %v3179 = vunpack.c.l.s4 1966171168
    %v3180 = vunpack.c.0.s8 %v3179
    %v3181 = vlaneseq
    %v3182 = vshrl.u32 %v3181, 7
    %v3183 = vsub.s32 %v3180, %v3182
    %v3184 = vrot.slane %v3170, %v3183
    %v3185 = vcombine.low %v3177, %v3184
    %v3186 = vcombine.low %v3125, %v3126
    %v3188 = vunpack.c.l.s4 1966171168
    %v3189 = vunpack.c.0.s8 %v3188
    %v3190 = vlaneseq
    %v3191 = vshrl.u32 %v3190, 7
    %v3192 = vsub.s32 %v3189, %v3191
    %v3193 = vrot.slane %v3186, %v3192
    %v3195 = vunpack.c.l.s4 1966171168
    %v3196 = vunpack.c.0.s8 %v3195
    %v3197 = vlaneseq
    %v3198 = vshrl.u32 %v3197, 7
    %v3199 = vsub.s32 %v3196, %v3198
    %v3200 = vrot.slane %v3193, %v3199
    %v3203 = vpack.c.bf16 %v3200, %v3185
    %v3204 = vld [vmem:[%s13] sm:$0xf]
    %v3205 = vld [vmem:[%s13 + $0x4] sm:$0xf]
    %v3206 = vld [vmem:[%s13 + $0x8] sm:$0xf]
    %v3207 = vld [vmem:[%s13 + $0xc] sm:$0xf]
    %v3208 = vld [vmem:[%s14] sm:$0x1]
    %v3210 = vlaneseq
    %v3211 = vshrl.u32 %v3210, 7
    %v3212 = vsub.s32 0, %v3211
    %v3213 = vrot.slane %v3208, %v3212
    %v3219 = vunpack.c.l.b16 %v3204
    %v3220 = vunpack.c.l.b16 %v3205
    %v3221 = vunpack.c.l.b16 %v3206
    %v3222 = vunpack.c.l.b16 %v3207
    %v3223 = vpack.c.b16 %v3220, %v3219
    %v3224 = vpack.c.b16 %v3222, %v3221
    %v3228 = vsel %vm401, %v3203, 0
    %3230 = vmatprep.subr.bf16.mxu0 0
    %3231 = vmatpush1.bf16.msra.mxu0 %v3223
    %3232 = vmatprep.subr.bf16.mxu0 0
    %3233 = vmatpush1.bf16.msra.mxu0 %v3224
    %3234 = vmatprep.subr.bf16.mxu0 0
    %3235 = vmatpush1.bf16.msra.mxu0 0
    %3236 = vmatprep.subr.bf16.mxu0 0
    %3237 = vmatpush1.bf16.msra.mxu0 0
    %3238 = vmatprep.subr.bf16.mxu0 0
    %3239 = vmatpush1.bf16.msra.mxu0 0
    %3240 = vmatprep.subr.bf16.mxu0 0
    %3241 = vmatpush1.bf16.msra.mxu0 0
    %3242 = vmatprep.subr.bf16.mxu0 0
    %3243 = vmatpush1.bf16.msra.mxu0 0
    %3244 = vmatprep.subr.bf16.mxu0 0
    %3245 = vmatpush1.bf16.msra.mxu0 0
    %3246 = vmatprep.subr.bf16.mxu0 0
    %3247 = vmatpush1.bf16.msra.mxu0 0
    %3248 = vmatprep.subr.bf16.mxu0 0
    %3249 = vmatpush1.bf16.msra.mxu0 0
    %3250 = vmatprep.subr.bf16.mxu0 0
    %3251 = vmatpush1.bf16.msra.mxu0 0
    %3252 = vmatprep.subr.bf16.mxu0 0
    %3253 = vmatpush1.bf16.msra.mxu0 0
    %3254 = vmatprep.subr.bf16.mxu0 0
    %3255 = vmatpush1.bf16.msra.mxu0 0
    %3256 = vmatprep.subr.bf16.mxu0 0
    %3257 = vmatpush1.bf16.msra.mxu0 0
    %3258 = vmatprep.subr.bf16.mxu0 0
    %3259 = vmatpush1.bf16.msra.mxu0 0
    %3260 = vmatprep.subr.bf16.mxu0 0
    %3261 = vmatpush1.bf16.msra.mxu0 0
    %3262 = vmatprep.mubr.bf16.mxu0 0
    %3263 = vmatmul.mubr.bf16.gmra.mrb[0].mxu0 %v3228
    %v3264 = vpop.f32.mrb[0].mxu0
    %v3265 = vadd.f32 %v3213, %v3264
    %v3266 = vpop.f32.mrb[0].mxu0
    %v3267 = vpop.f32.mrb[0].mxu0
    %v3268 = vadd.f32 %v3213, %v3267
    %v3269 = vpop.f32.mrb[0].mxu0
    %3270 = vdwg.mxu0
    %v3271 = vmul.f32 %v3265, %v3265
    %v3272 = vmul.f32 %v3268, %v3268
    %v3273 = vmul.f32 %v3265, %v3271
    %v3274 = vmul.f32 %v3268, %v3272
    %v3275 = vmul.f32 %v3273, 0.044715
    %v3276 = vmul.f32 %v3274, 0.044715
    %v3277 = vadd.f32 %v3265, %v3275
    %v3278 = vadd.f32 %v3268, %v3276
    %v3279 = vmul.f32 %v3277, 0.7978846
    %v3280 = vmul.f32 %v3278, 0.7978846
    %v3281 = vtanh.pop %v3279
    %v3282 = vtanh.pop %v3280
    %v3283 = vadd.f32 %v3281, 1.0
    %v3284 = vadd.f32 %v3282, 1.0
    %v3285 = vmul.f32 %v3283, 0.5
    %v3286 = vmul.f32 %v3284, 0.5
    %v3287 = vmul.f32 %v3265, %v3285
    %v3288 = vmul.f32 %v3268, %v3286
    %v3289 = vpack.c.bf16 %v3288, %v3287
    %v3290 = vld [vmem:[%s15] sm:$0xf]
    %v3291 = vld [vmem:[%s15 + $0x4] sm:$0xf]
    %v3292 = vld [vmem:[%s15 + $0x8] sm:$0xf]
    %v3293 = vld [vmem:[%s15 + $0xc] sm:$0xf]
    %v3294 = vld [vmem:[%s15 + $0x10] sm:$0xf]
    %v3295 = vld [vmem:[%s15 + $0x14] sm:$0xf]
    %v3296 = vld [vmem:[%s15 + $0x18] sm:$0xf]
    %v3297 = vld [vmem:[%s15 + $0x1c] sm:$0xf]
    %v3298 = vld [vmem:[%s15 + $0x20] sm:$0xf]
    %v3299 = vld [vmem:[%s15 + $0x24] sm:$0xf]
    %v3300 = vld [vmem:[%s15 + $0x28] sm:$0xf]
    %v3301 = vld [vmem:[%s15 + $0x2c] sm:$0xf]
    %v3302 = vld [vmem:[%s15 + $0x30] sm:$0xf]
    %v3303 = vld [vmem:[%s15 + $0x34] sm:$0xf]
    %v3304 = vld [vmem:[%s15 + $0x38] sm:$0xf]
    %v3305 = vld [vmem:[%s15 + $0x3c] sm:$0xf]
    %v3322 = vunpack.c.l.b16 %v3290
    %v3323 = vunpack.c.l.b16 %v3291
    %v3324 = vunpack.c.l.b16 %v3292
    %v3325 = vunpack.c.l.b16 %v3293
    %v3326 = vunpack.c.l.b16 %v3294
    %v3327 = vunpack.c.l.b16 %v3295
    %v3328 = vunpack.c.l.b16 %v3296
    %v3329 = vunpack.c.l.b16 %v3297
    %v3330 = vunpack.c.l.b16 %v3298
    %v3331 = vunpack.c.l.b16 %v3299
    %v3332 = vunpack.c.l.b16 %v3300
    %v3333 = vunpack.c.l.b16 %v3301
    %v3334 = vunpack.c.l.b16 %v3302
    %v3335 = vunpack.c.l.b16 %v3303
    %v3336 = vunpack.c.l.b16 %v3304
    %v3337 = vunpack.c.l.b16 %v3305
    %v3338 = vpack.c.b16 %v3323, %v3322
    %v3339 = vpack.c.b16 %v3325, %v3324
    %v3340 = vpack.c.b16 %v3327, %v3326
    %v3341 = vpack.c.b16 %v3329, %v3328
    %v3342 = vpack.c.b16 %v3331, %v3330
    %v3343 = vpack.c.b16 %v3333, %v3332
    %v3344 = vpack.c.b16 %v3335, %v3334
    %v3345 = vpack.c.b16 %v3337, %v3336
    %3354 = vmatprep.subr.bf16.mxu0 0
    %3355 = vmatpush1.bf16.msra.mxu0 %v3338
    %3356 = vmatprep.subr.bf16.mxu0 0
    %3357 = vmatpush1.bf16.msra.mxu0 %v3339
    %3358 = vmatprep.subr.bf16.mxu0 0
    %3359 = vmatpush1.bf16.msra.mxu0 %v3340
    %3360 = vmatprep.subr.bf16.mxu0 0
    %3361 = vmatpush1.bf16.msra.mxu0 %v3341
    %3362 = vmatprep.subr.bf16.mxu0 0
    %3363 = vmatpush1.bf16.msra.mxu0 %v3342
    %3364 = vmatprep.subr.bf16.mxu0 0
    %3365 = vmatpush1.bf16.msra.mxu0 %v3343
    %3366 = vmatprep.subr.bf16.mxu0 0
    %3367 = vmatpush1.bf16.msra.mxu0 %v3344
    %3368 = vmatprep.subr.bf16.mxu0 0
    %3369 = vmatpush1.bf16.msra.mxu0 %v3345
    %3370 = vmatprep.subr.bf16.mxu0 0
    %3371 = vmatpush1.bf16.msra.mxu0 0
    %3372 = vmatprep.subr.bf16.mxu0 0
    %3373 = vmatpush1.bf16.msra.mxu0 0
    %3374 = vmatprep.subr.bf16.mxu0 0
    %3375 = vmatpush1.bf16.msra.mxu0 0
    %3376 = vmatprep.subr.bf16.mxu0 0
    %3377 = vmatpush1.bf16.msra.mxu0 0
    %3378 = vmatprep.subr.bf16.mxu0 0
    %3379 = vmatpush1.bf16.msra.mxu0 0
    %3380 = vmatprep.subr.bf16.mxu0 0
    %3381 = vmatpush1.bf16.msra.mxu0 0
    %3382 = vmatprep.subr.bf16.mxu0 0
    %3383 = vmatpush1.bf16.msra.mxu0 0
    %3384 = vmatprep.subr.bf16.mxu0 0
    %3385 = vmatpush1.bf16.msra.mxu0 0
    %3386 = vmatprep.mubr.bf16.mxu0 0
    %3387 = vmatmul.mubr.bf16.gmra.mrb[0].mxu0 %v3289
    %v3388 = vpop.f32.mrb[0].mxu0
    %v3389 = vadd.f32 0.0, %v3388
    %v3390 = vpop.f32.mrb[0].mxu0
    %v3391 = vpop.f32.mrb[0].mxu0
    %v3392 = vadd.f32 0.0, %v3391
    %v3393 = vpop.f32.mrb[0].mxu0
    %3394 = vdwg.mxu0
    %v3397 = vcombine.high %v3389, %v3389
    %v3399 = vunpack.c.l.s4 1966171168
    %v3400 = vunpack.c.0.s8 %v3399
    %v3401 = vlaneseq
    %v3402 = vshrl.u32 %v3401, 7
    %v3403 = vsub.s32 %v3400, %v3402
    %v3404 = vrot.slane %v3389, %v3403
    %v3406 = vunpack.c.l.s4 1966171168
    %v3407 = vunpack.c.0.s8 %v3406
    %v3408 = vlaneseq
    %v3409 = vshrl.u32 %v3408, 7
    %v3410 = vsub.s32 %v3407, %v3409
    %v3411 = vrot.slane %v3397, %v3410
    %v3412 = vcombine.high %v3404, %v3404
    %v3413 = vcombine.high %v3411, %v3411
    %v3415 = vunpack.c.l.s4 1966171168
    %v3416 = vunpack.c.0.s8 %v3415
    %v3417 = vlaneseq
    %v3418 = vshrl.u32 %v3417, 7
    %v3419 = vsub.s32 %v3416, %v3418
    %v3420 = vrot.slane %v3404, %v3419
    %v3422 = vunpack.c.l.s4 1966171168
    %v3423 = vunpack.c.0.s8 %v3422
    %v3424 = vlaneseq
    %v3425 = vshrl.u32 %v3424, 7
    %v3426 = vsub.s32 %v3423, %v3425
    %v3427 = vrot.slane %v3411, %v3426
    %v3429 = vunpack.c.l.s4 1966171168
    %v3430 = vunpack.c.0.s8 %v3429
    %v3431 = vlaneseq
    %v3432 = vshrl.u32 %v3431, 7
    %v3433 = vsub.s32 %v3430, %v3432
    %v3434 = vrot.slane %v3412, %v3433
    %v3436 = vunpack.c.l.s4 1966171168
    %v3437 = vunpack.c.0.s8 %v3436
    %v3438 = vlaneseq
    %v3439 = vshrl.u32 %v3438, 7
    %v3440 = vsub.s32 %v3437, %v3439
    %v3441 = vrot.slane %v3413, %v3440
    %v3442 = vcombine.high %v3420, %v3420
    %v3443 = vcombine.high %v3427, %v3427
    %v3444 = vcombine.high %v3434, %v3434
    %v3445 = vcombine.high %v3441, %v3441
    %v3447 = vunpack.c.l.s4 1966171168
    %v3448 = vunpack.c.0.s8 %v3447
    %v3449 = vlaneseq
    %v3450 = vshrl.u32 %v3449, 7
    %v3451 = vsub.s32 %v3448, %v3450
    %v3452 = vrot.slane %v3392, %v3451
    %v3453 = vcombine.high %v3452, %v3452
    %v3455 = vunpack.c.l.s4 1966171168
    %v3456 = vunpack.c.0.s8 %v3455
    %v3457 = vlaneseq
    %v3458 = vshrl.u32 %v3457, 7
    %v3459 = vsub.s32 %v3456, %v3458
    %v3460 = vrot.slane %v3452, %v3459
    %v3462 = vunpack.c.l.s4 1966171168
    %v3463 = vunpack.c.0.s8 %v3462
    %v3464 = vlaneseq
    %v3465 = vshrl.u32 %v3464, 7
    %v3466 = vsub.s32 %v3463, %v3465
    %v3467 = vrot.slane %v3453, %v3466
    %v3478 = vadd.f32 %v2665, %v3420
    %v3479 = vadd.f32 %v2666, %v3434
    %v3480 = vadd.f32 %v2667, %v3442
    %v3481 = vadd.f32 %v2668, %v3444
    %v3482 = vadd.f32 %v2669, %v3427
    %v3483 = vadd.f32 %v2670, %v3441
    %v3484 = vadd.f32 %v2671, %v3443
    %v3485 = vadd.f32 %v2672, %v3445
    %v3486 = vadd.f32 %v2673, %v3460
    %v3487 = vadd.f32 %v2674, %v3467
    %v3488 = vld [vmem:[%s16] sm:$0x1]
    %v3490 = vlaneseq
    %v3491 = vshrl.u32 %v3490, 7
    %v3492 = vsub.s32 0, %v3491
    %v3493 = vrot.slane %v3488, %v3492
    %v3494 = vcombine.high %v3493, %v3493
    %v3496 = vunpack.c.l.s4 1966171168
    %v3497 = vunpack.c.0.s8 %v3496
    %v3498 = vlaneseq
    %v3499 = vshrl.u32 %v3498, 7
    %v3500 = vsub.s32 %v3497, %v3499
    %v3501 = vrot.slane %v3493, %v3500
    %v3503 = vunpack.c.l.s4 1966171168
    %v3504 = vunpack.c.0.s8 %v3503
    %v3505 = vlaneseq
    %v3506 = vshrl.u32 %v3505, 7
    %v3507 = vsub.s32 %v3504, %v3506
    %v3508 = vrot.slane %v3494, %v3507
    %v3509 = vcombine.high %v3501, %v3501
    %v3510 = vcombine.high %v3508, %v3508
    %v3512 = vunpack.c.l.s4 1966171168
    %v3513 = vunpack.c.0.s8 %v3512
    %v3514 = vlaneseq
    %v3515 = vshrl.u32 %v3514, 7
    %v3516 = vsub.s32 %v3513, %v3515
    %v3517 = vrot.slane %v3501, %v3516
    %v3519 = vunpack.c.l.s4 1966171168
    %v3520 = vunpack.c.0.s8 %v3519
    %v3521 = vlaneseq
    %v3522 = vshrl.u32 %v3521, 7
    %v3523 = vsub.s32 %v3520, %v3522
    %v3524 = vrot.slane %v3508, %v3523
    %v3526 = vunpack.c.l.s4 1966171168
    %v3527 = vunpack.c.0.s8 %v3526
    %v3528 = vlaneseq
    %v3529 = vshrl.u32 %v3528, 7
    %v3530 = vsub.s32 %v3527, %v3529
    %v3531 = vrot.slane %v3509, %v3530
    %v3533 = vunpack.c.l.s4 1966171168
    %v3534 = vunpack.c.0.s8 %v3533
    %v3535 = vlaneseq
    %v3536 = vshrl.u32 %v3535, 7
    %v3537 = vsub.s32 %v3534, %v3536
    %v3538 = vrot.slane %v3510, %v3537
    %v3539 = vcombine.high %v3517, %v3517
    %v3540 = vcombine.high %v3524, %v3524
    %v3541 = vcombine.high %v3531, %v3531
    %v3542 = vcombine.high %v3538, %v3538
    %v3551 = vadd.f32 %v3478, %v3517
    %v3552 = vadd.f32 %v3479, %v3531
    %v3553 = vadd.f32 %v3480, %v3539
    %v3554 = vadd.f32 %v3481, %v3541
    %v3555 = vadd.f32 %v3482, %v3524
    %v3556 = vadd.f32 %v3483, %v3538
    %v3557 = vadd.f32 %v3484, %v3540
    %v3558 = vadd.f32 %v3485, %v3542
    %v3559 = vadd.f32 %v3486, %v3517
    %v3560 = vadd.f32 %v3487, %v3531
    %s3561 = scalar_lea.vmem %s5, 1
    %v3562 = vld [vmem:[%s3561] sm:$0x1]
    %s3563 = scalar_lea.vmem %s6, 1
    %v3564 = vld [vmem:[%s3563] sm:$0x1]
    %v3575 = vcombine.low %v3551, %v3552
    %v3576 = vcombine.low %v3553, %v3554
    %v3577 = vcombine.low %v3555, %v3556
    %v3578 = vcombine.low %v3557, %v3558
    %v3580 = vunpack.c.l.s4 1966171168
    %v3581 = vunpack.c.0.s8 %v3580
    %v3582 = vlaneseq
    %v3583 = vshrl.u32 %v3582, 7
    %v3584 = vsub.s32 %v3581, %v3583
    %v3585 = vrot.slane %v3575, %v3584
    %v3587 = vunpack.c.l.s4 1966171168
    %v3588 = vunpack.c.0.s8 %v3587
    %v3589 = vlaneseq
    %v3590 = vshrl.u32 %v3589, 7
    %v3591 = vsub.s32 %v3588, %v3590
    %v3592 = vrot.slane %v3576, %v3591
    %v3594 = vunpack.c.l.s4 1966171168
    %v3595 = vunpack.c.0.s8 %v3594
    %v3596 = vlaneseq
    %v3597 = vshrl.u32 %v3596, 7
    %v3598 = vsub.s32 %v3595, %v3597
    %v3599 = vrot.slane %v3577, %v3598
    %v3601 = vunpack.c.l.s4 1966171168
    %v3602 = vunpack.c.0.s8 %v3601
    %v3603 = vlaneseq
    %v3604 = vshrl.u32 %v3603, 7
    %v3605 = vsub.s32 %v3602, %v3604
    %v3606 = vrot.slane %v3578, %v3605
    %v3607 = vcombine.low %v3585, %v3592
    %v3608 = vcombine.low %v3599, %v3606
    %v3610 = vunpack.c.l.s4 1966171168
    %v3611 = vunpack.c.0.s8 %v3610
    %v3612 = vlaneseq
    %v3613 = vshrl.u32 %v3612, 7
    %v3614 = vsub.s32 %v3611, %v3613
    %v3615 = vrot.slane %v3607, %v3614
    %v3617 = vunpack.c.l.s4 1966171168
    %v3618 = vunpack.c.0.s8 %v3617
    %v3619 = vlaneseq
    %v3620 = vshrl.u32 %v3619, 7
    %v3621 = vsub.s32 %v3618, %v3620
    %v3622 = vrot.slane %v3608, %v3621
    %v3623 = vcombine.low %v3615, %v3622
    %v3624 = vcombine.low %v3559, %v3560
    %v3626 = vunpack.c.l.s4 1966171168
    %v3627 = vunpack.c.0.s8 %v3626
    %v3628 = vlaneseq
    %v3629 = vshrl.u32 %v3628, 7
    %v3630 = vsub.s32 %v3627, %v3629
    %v3631 = vrot.slane %v3624, %v3630
    %v3633 = vunpack.c.l.s4 1966171168
    %v3634 = vunpack.c.0.s8 %v3633
    %v3635 = vlaneseq
    %v3636 = vshrl.u32 %v3635, 7
    %v3637 = vsub.s32 %v3634, %v3636
    %v3638 = vrot.slane %v3631, %v3637
    %v3641 = vsel %vm401, %v3623, 0.0
    %3642 = vadd.xlane.f32.xlu0 %v3641
    %v3643 = vpop.xlane.xlu0 %3642
    %v3644 = vsel %vm405, %v3638, 0.0
    %3645 = vadd.xlane.f32.xlu0 %v3644
    %v3646 = vpop.xlane.xlu0 %3645
    %v3647 = vmul.f32 %v3643, %v409
    %v3648 = vmul.f32 %v3646, %v409
    %v3651 = vlaneseq
    %v3652 = vshrl.u32 %v3651, 7
    %v3653 = vsub.s32 0, %v3652
    %v3654 = vrot.slane %v3647, %v3653
    %v3655 = vlaneseq
    %v3656 = vshrl.u32 %v3655, 7
    %v3657 = vsub.s32 1, %v3656
    %v3658 = vrot.slane %v3647, %v3657
    %v3659 = vlaneseq
    %v3660 = vshrl.u32 %v3659, 7
    %v3661 = vsub.s32 2, %v3660
    %v3662 = vrot.slane %v3647, %v3661
    %v3663 = vlaneseq
    %v3664 = vshrl.u32 %v3663, 7
    %v3665 = vsub.s32 3, %v3664
    %v3666 = vrot.slane %v3647, %v3665
    %v3667 = vlaneseq
    %v3668 = vshrl.u32 %v3667, 7
    %v3669 = vsub.s32 4, %v3668
    %v3670 = vrot.slane %v3647, %v3669
    %v3671 = vlaneseq
    %v3672 = vshrl.u32 %v3671, 7
    %v3673 = vsub.s32 5, %v3672
    %v3674 = vrot.slane %v3647, %v3673
    %v3675 = vlaneseq
    %v3676 = vshrl.u32 %v3675, 7
    %v3677 = vsub.s32 6, %v3676
    %v3678 = vrot.slane %v3647, %v3677
    %v3679 = vlaneseq
    %v3680 = vshrl.u32 %v3679, 7
    %v3681 = vsub.s32 7, %v3680
    %v3682 = vrot.slane %v3647, %v3681
    %v3683 = vlaneseq
    %v3684 = vshrl.u32 %v3683, 7
    %v3685 = vsub.s32 0, %v3684
    %v3686 = vrot.slane %v3648, %v3685
    %v3687 = vlaneseq
    %v3688 = vshrl.u32 %v3687, 7
    %v3689 = vsub.s32 1, %v3688
    %v3690 = vrot.slane %v3648, %v3689
    %v3701 = vsub.f32 %v3551, %v3654
    %v3702 = vsub.f32 %v3552, %v3658
    %v3703 = vsub.f32 %v3553, %v3662
    %v3704 = vsub.f32 %v3554, %v3666
    %v3705 = vsub.f32 %v3555, %v3670
    %v3706 = vsub.f32 %v3556, %v3674
    %v3707 = vsub.f32 %v3557, %v3678
    %v3708 = vsub.f32 %v3558, %v3682
    %v3709 = vsub.f32 %v3559, %v3686
    %v3710 = vsub.f32 %v3560, %v3690
    %v3711 = vmul.f32 %v3701, %v3701
    %v3712 = vmul.f32 %v3702, %v3702
    %v3713 = vmul.f32 %v3703, %v3703
    %v3714 = vmul.f32 %v3704, %v3704
    %v3715 = vmul.f32 %v3705, %v3705
    %v3716 = vmul.f32 %v3706, %v3706
    %v3717 = vmul.f32 %v3707, %v3707
    %v3718 = vmul.f32 %v3708, %v3708
    %v3719 = vmul.f32 %v3709, %v3709
    %v3720 = vmul.f32 %v3710, %v3710
    %v3731 = vcombine.low %v3711, %v3712
    %v3732 = vcombine.low %v3713, %v3714
    %v3733 = vcombine.low %v3715, %v3716
    %v3734 = vcombine.low %v3717, %v3718
    %v3736 = vunpack.c.l.s4 1966171168
    %v3737 = vunpack.c.0.s8 %v3736
    %v3738 = vlaneseq
    %v3739 = vshrl.u32 %v3738, 7
    %v3740 = vsub.s32 %v3737, %v3739
    %v3741 = vrot.slane %v3731, %v3740
    %v3743 = vunpack.c.l.s4 1966171168
    %v3744 = vunpack.c.0.s8 %v3743
    %v3745 = vlaneseq
    %v3746 = vshrl.u32 %v3745, 7
    %v3747 = vsub.s32 %v3744, %v3746
    %v3748 = vrot.slane %v3732, %v3747
    %v3750 = vunpack.c.l.s4 1966171168
    %v3751 = vunpack.c.0.s8 %v3750
    %v3752 = vlaneseq
    %v3753 = vshrl.u32 %v3752, 7
    %v3754 = vsub.s32 %v3751, %v3753
    %v3755 = vrot.slane %v3733, %v3754
    %v3757 = vunpack.c.l.s4 1966171168
    %v3758 = vunpack.c.0.s8 %v3757
    %v3759 = vlaneseq
    %v3760 = vshrl.u32 %v3759, 7
    %v3761 = vsub.s32 %v3758, %v3760
    %v3762 = vrot.slane %v3734, %v3761
    %v3763 = vcombine.low %v3741, %v3748
    %v3764 = vcombine.low %v3755, %v3762
    %v3766 = vunpack.c.l.s4 1966171168
    %v3767 = vunpack.c.0.s8 %v3766
    %v3768 = vlaneseq
    %v3769 = vshrl.u32 %v3768, 7
    %v3770 = vsub.s32 %v3767, %v3769
    %v3771 = vrot.slane %v3763, %v3770
    %v3773 = vunpack.c.l.s4 1966171168
    %v3774 = vunpack.c.0.s8 %v3773
    %v3775 = vlaneseq
    %v3776 = vshrl.u32 %v3775, 7
    %v3777 = vsub.s32 %v3774, %v3776
    %v3778 = vrot.slane %v3764, %v3777
    %v3779 = vcombine.low %v3771, %v3778
    %v3780 = vcombine.low %v3719, %v3720
    %v3782 = vunpack.c.l.s4 1966171168
    %v3783 = vunpack.c.0.s8 %v3782
    %v3784 = vlaneseq
    %v3785 = vshrl.u32 %v3784, 7
    %v3786 = vsub.s32 %v3783, %v3785
    %v3787 = vrot.slane %v3780, %v3786
    %v3789 = vunpack.c.l.s4 1966171168
    %v3790 = vunpack.c.0.s8 %v3789
    %v3791 = vlaneseq
    %v3792 = vshrl.u32 %v3791, 7
    %v3793 = vsub.s32 %v3790, %v3792
    %v3794 = vrot.slane %v3787, %v3793
    %v3797 = vsel %vm401, %v3779, 0.0
    %3798 = vadd.xlane.f32.xlu0 %v3797
    %v3799 = vpop.xlane.xlu0 %3798
    %v3800 = vsel %vm405, %v3794, 0.0
    %3801 = vadd.xlane.f32.xlu0 %v3800
    %v3802 = vpop.xlane.xlu0 %3801
    %v3803 = vmul.f32 %v3799, %v409
    %v3804 = vmul.f32 %v3802, %v409
    %v3805 = vadd.f32 %v3803, 1e-12
    %v3806 = vadd.f32 %v3804, 1e-12
    %v3807 = vrsqrt.pop %v3805
    %v3808 = vrsqrt.pop %v3806
    %v3811 = vlaneseq
    %v3812 = vshrl.u32 %v3811, 7
    %v3813 = vsub.s32 0, %v3812
    %v3814 = vrot.slane %v3807, %v3813
    %v3815 = vlaneseq
    %v3816 = vshrl.u32 %v3815, 7
    %v3817 = vsub.s32 1, %v3816
    %v3818 = vrot.slane %v3807, %v3817
    %v3819 = vlaneseq
    %v3820 = vshrl.u32 %v3819, 7
    %v3821 = vsub.s32 2, %v3820
    %v3822 = vrot.slane %v3807, %v3821
    %v3823 = vlaneseq
    %v3824 = vshrl.u32 %v3823, 7
    %v3825 = vsub.s32 3, %v3824
    %v3826 = vrot.slane %v3807, %v3825
    %v3827 = vlaneseq
    %v3828 = vshrl.u32 %v3827, 7
    %v3829 = vsub.s32 4, %v3828
    %v3830 = vrot.slane %v3807, %v3829
    %v3831 = vlaneseq
    %v3832 = vshrl.u32 %v3831, 7
    %v3833 = vsub.s32 5, %v3832
    %v3834 = vrot.slane %v3807, %v3833
    %v3835 = vlaneseq
    %v3836 = vshrl.u32 %v3835, 7
    %v3837 = vsub.s32 6, %v3836
    %v3838 = vrot.slane %v3807, %v3837
    %v3839 = vlaneseq
    %v3840 = vshrl.u32 %v3839, 7
    %v3841 = vsub.s32 7, %v3840
    %v3842 = vrot.slane %v3807, %v3841
    %v3843 = vlaneseq
    %v3844 = vshrl.u32 %v3843, 7
    %v3845 = vsub.s32 0, %v3844
    %v3846 = vrot.slane %v3808, %v3845
    %v3847 = vlaneseq
    %v3848 = vshrl.u32 %v3847, 7
    %v3849 = vsub.s32 1, %v3848
    %v3850 = vrot.slane %v3808, %v3849
    %v3861 = vmul.f32 %v3701, %v3814
    %v3862 = vmul.f32 %v3702, %v3818
    %v3863 = vmul.f32 %v3703, %v3822
    %v3864 = vmul.f32 %v3704, %v3826
    %v3865 = vmul.f32 %v3705, %v3830
    %v3866 = vmul.f32 %v3706, %v3834
    %v3867 = vmul.f32 %v3707, %v3838
    %v3868 = vmul.f32 %v3708, %v3842
    %v3869 = vmul.f32 %v3709, %v3846
    %v3870 = vmul.f32 %v3710, %v3850
    %v3872 = vlaneseq
    %v3873 = vshrl.u32 %v3872, 7
    %v3874 = vsub.s32 0, %v3873
    %v3875 = vrot.slane %v3562, %v3874
    %v3876 = vcombine.high %v3875, %v3875
    %v3878 = vunpack.c.l.s4 1966171168
    %v3879 = vunpack.c.0.s8 %v3878
    %v3880 = vlaneseq
    %v3881 = vshrl.u32 %v3880, 7
    %v3882 = vsub.s32 %v3879, %v3881
    %v3883 = vrot.slane %v3875, %v3882
    %v3885 = vunpack.c.l.s4 1966171168
    %v3886 = vunpack.c.0.s8 %v3885
    %v3887 = vlaneseq
    %v3888 = vshrl.u32 %v3887, 7
    %v3889 = vsub.s32 %v3886, %v3888
    %v3890 = vrot.slane %v3876, %v3889
    %v3891 = vcombine.high %v3883, %v3883
    %v3892 = vcombine.high %v3890, %v3890
    %v3894 = vunpack.c.l.s4 1966171168
    %v3895 = vunpack.c.0.s8 %v3894
    %v3896 = vlaneseq
    %v3897 = vshrl.u32 %v3896, 7
    %v3898 = vsub.s32 %v3895, %v3897
    %v3899 = vrot.slane %v3883, %v3898
    %v3901 = vunpack.c.l.s4 1966171168
    %v3902 = vunpack.c.0.s8 %v3901
    %v3903 = vlaneseq
    %v3904 = vshrl.u32 %v3903, 7
    %v3905 = vsub.s32 %v3902, %v3904
    %v3906 = vrot.slane %v3890, %v3905
    %v3908 = vunpack.c.l.s4 1966171168
    %v3909 = vunpack.c.0.s8 %v3908
    %v3910 = vlaneseq
    %v3911 = vshrl.u32 %v3910, 7
    %v3912 = vsub.s32 %v3909, %v3911
    %v3913 = vrot.slane %v3891, %v3912
    %v3915 = vunpack.c.l.s4 1966171168
    %v3916 = vunpack.c.0.s8 %v3915
    %v3917 = vlaneseq
    %v3918 = vshrl.u32 %v3917, 7
    %v3919 = vsub.s32 %v3916, %v3918
    %v3920 = vrot.slane %v3892, %v3919
    %v3921 = vcombine.high %v3899, %v3899
    %v3922 = vcombine.high %v3906, %v3906
    %v3923 = vcombine.high %v3913, %v3913
    %v3924 = vcombine.high %v3920, %v3920
    %v3933 = vmul.f32 %v3861, %v3899
    %v3934 = vmul.f32 %v3862, %v3913
    %v3935 = vmul.f32 %v3863, %v3921
    %v3936 = vmul.f32 %v3864, %v3923
    %v3937 = vmul.f32 %v3865, %v3906
    %v3938 = vmul.f32 %v3866, %v3920
    %v3939 = vmul.f32 %v3867, %v3922
    %v3940 = vmul.f32 %v3868, %v3924
    %v3941 = vmul.f32 %v3869, %v3899
    %v3942 = vmul.f32 %v3870, %v3913
    %v3944 = vlaneseq
    %v3945 = vshrl.u32 %v3944, 7
    %v3946 = vsub.s32 0, %v3945
    %v3947 = vrot.slane %v3564, %v3946
    %v3948 = vcombine.high %v3947, %v3947
    %v3950 = vunpack.c.l.s4 1966171168
    %v3951 = vunpack.c.0.s8 %v3950
    %v3952 = vlaneseq
    %v3953 = vshrl.u32 %v3952, 7
    %v3954 = vsub.s32 %v3951, %v3953
    %v3955 = vrot.slane %v3947, %v3954
    %v3957 = vunpack.c.l.s4 1966171168
    %v3958 = vunpack.c.0.s8 %v3957
    %v3959 = vlaneseq
    %v3960 = vshrl.u32 %v3959, 7
    %v3961 = vsub.s32 %v3958, %v3960
    %v3962 = vrot.slane %v3948, %v3961
    %v3963 = vcombine.high %v3955, %v3955
    %v3964 = vcombine.high %v3962, %v3962
    %v3966 = vunpack.c.l.s4 1966171168
    %v3967 = vunpack.c.0.s8 %v3966
    %v3968 = vlaneseq
    %v3969 = vshrl.u32 %v3968, 7
    %v3970 = vsub.s32 %v3967, %v3969
    %v3971 = vrot.slane %v3955, %v3970
    %v3973 = vunpack.c.l.s4 1966171168
    %v3974 = vunpack.c.0.s8 %v3973
    %v3975 = vlaneseq
    %v3976 = vshrl.u32 %v3975, 7
    %v3977 = vsub.s32 %v3974, %v3976
    %v3978 = vrot.slane %v3962, %v3977
    %v3980 = vunpack.c.l.s4 1966171168
    %v3981 = vunpack.c.0.s8 %v3980
    %v3982 = vlaneseq
    %v3983 = vshrl.u32 %v3982, 7
    %v3984 = vsub.s32 %v3981, %v3983
    %v3985 = vrot.slane %v3963, %v3984
    %v3987 = vunpack.c.l.s4 1966171168
    %v3988 = vunpack.c.0.s8 %v3987
    %v3989 = vlaneseq
    %v3990 = vshrl.u32 %v3989, 7
    %v3991 = vsub.s32 %v3988, %v3990
    %v3992 = vrot.slane %v3964, %v3991
    %v3993 = vcombine.high %v3971, %v3971
    %v3994 = vcombine.high %v3978, %v3978
    %v3995 = vcombine.high %v3985, %v3985
    %v3996 = vcombine.high %v3992, %v3992
    %v4005 = vadd.f32 %v3933, %v3971
    %v4006 = vadd.f32 %v3934, %v3985
    %v4007 = vadd.f32 %v3935, %v3993
    %v4008 = vadd.f32 %v3936, %v3995
    %v4009 = vadd.f32 %v3937, %v3978
    %v4010 = vadd.f32 %v3938, %v3992
    %v4011 = vadd.f32 %v3939, %v3994
    %v4012 = vadd.f32 %v3940, %v3996
    %v4013 = vadd.f32 %v3941, %v3971
    %v4014 = vadd.f32 %v3942, %v3985
    %v4025 = vcombine.low %v4005, %v4006
    %v4026 = vcombine.low %v4007, %v4008
    %v4027 = vcombine.low %v4009, %v4010
    %v4028 = vcombine.low %v4011, %v4012
    %v4030 = vunpack.c.l.s4 1966171168
    %v4031 = vunpack.c.0.s8 %v4030
    %v4032 = vlaneseq
    %v4033 = vshrl.u32 %v4032, 7
    %v4034 = vsub.s32 %v4031, %v4033
    %v4035 = vrot.slane %v4025, %v4034
    %v4037 = vunpack.c.l.s4 1966171168
    %v4038 = vunpack.c.0.s8 %v4037
    %v4039 = vlaneseq
    %v4040 = vshrl.u32 %v4039, 7
    %v4041 = vsub.s32 %v4038, %v4040
    %v4042 = vrot.slane %v4026, %v4041
    %v4044 = vunpack.c.l.s4 1966171168
    %v4045 = vunpack.c.0.s8 %v4044
    %v4046 = vlaneseq
    %v4047 = vshrl.u32 %v4046, 7
    %v4048 = vsub.s32 %v4045, %v4047
    %v4049 = vrot.slane %v4027, %v4048
    %v4051 = vunpack.c.l.s4 1966171168
    %v4052 = vunpack.c.0.s8 %v4051
    %v4053 = vlaneseq
    %v4054 = vshrl.u32 %v4053, 7
    %v4055 = vsub.s32 %v4052, %v4054
    %v4056 = vrot.slane %v4028, %v4055
    %v4057 = vcombine.low %v4035, %v4042
    %v4058 = vcombine.low %v4049, %v4056
    %v4060 = vunpack.c.l.s4 1966171168
    %v4061 = vunpack.c.0.s8 %v4060
    %v4062 = vlaneseq
    %v4063 = vshrl.u32 %v4062, 7
    %v4064 = vsub.s32 %v4061, %v4063
    %v4065 = vrot.slane %v4057, %v4064
    %v4067 = vunpack.c.l.s4 1966171168
    %v4068 = vunpack.c.0.s8 %v4067
    %v4069 = vlaneseq
    %v4070 = vshrl.u32 %v4069, 7
    %v4071 = vsub.s32 %v4068, %v4070
    %v4072 = vrot.slane %v4058, %v4071
    %v4073 = vcombine.low %v4065, %v4072
    %v4074 = vcombine.low %v4013, %v4014
    %v4076 = vunpack.c.l.s4 1966171168
    %v4077 = vunpack.c.0.s8 %v4076
    %v4078 = vlaneseq
    %v4079 = vshrl.u32 %v4078, 7
    %v4080 = vsub.s32 %v4077, %v4079
    %v4081 = vrot.slane %v4074, %v4080
    %v4083 = vunpack.c.l.s4 1966171168
    %v4084 = vunpack.c.0.s8 %v4083
    %v4085 = vlaneseq
    %v4086 = vshrl.u32 %v4085, 7
    %v4087 = vsub.s32 %v4084, %v4086
    %v4088 = vrot.slane %v4081, %v4087
    %v4091 = vpack.c.bf16 %v4088, %v4073
    %s4092 = scalar_lea.vmem %s7, 16
    %v4093 = vld [vmem:[%s4092] sm:$0xf]
    %v4094 = vld [vmem:[%s4092 + $0x4] sm:$0xf]
    %v4095 = vld [vmem:[%s4092 + $0x8] sm:$0xf]
    %v4096 = vld [vmem:[%s4092 + $0xc] sm:$0xf]
    %s4097 = scalar_lea.vmem %s8, 1
    %v4098 = vld [vmem:[%s4097] sm:$0x1]
    %v4100 = vlaneseq
    %v4101 = vshrl.u32 %v4100, 7
    %v4102 = vsub.s32 0, %v4101
    %v4103 = vrot.slane %v4098, %v4102
    %v4109 = vunpack.c.l.b16 %v4093
    %v4110 = vunpack.c.l.b16 %v4094
    %v4111 = vunpack.c.l.b16 %v4095
    %v4112 = vunpack.c.l.b16 %v4096
    %v4113 = vpack.c.b16 %v4110, %v4109
    %v4114 = vpack.c.b16 %v4112, %v4111
    %v4118 = vsel %vm401, %v4091, 0
    %4120 = vmatprep.subr.bf16.mxu0 0
    %4121 = vmatpush1.bf16.msra.mxu0 %v4113
    %4122 = vmatprep.subr.bf16.mxu0 0
    %4123 = vmatpush1.bf16.msra.mxu0 %v4114
    %4124 = vmatprep.subr.bf16.mxu0 0
    %4125 = vmatpush1.bf16.msra.mxu0 0
    %4126 = vmatprep.subr.bf16.mxu0 0
    %4127 = vmatpush1.bf16.msra.mxu0 0
    %4128 = vmatprep.subr.bf16.mxu0 0
    %4129 = vmatpush1.bf16.msra.mxu0 0
    %4130 = vmatprep.subr.bf16.mxu0 0
    %4131 = vmatpush1.bf16.msra.mxu0 0
    %4132 = vmatprep.subr.bf16.mxu0 0
    %4133 = vmatpush1.bf16.msra.mxu0 0
    %4134 = vmatprep.subr.bf16.mxu0 0
    %4135 = vmatpush1.bf16.msra.mxu0 0
    %4136 = vmatprep.subr.bf16.mxu0 0
    %4137 = vmatpush1.bf16.msra.mxu0 0
    %4138 = vmatprep.subr.bf16.mxu0 0
    %4139 = vmatpush1.bf16.msra.mxu0 0
    %4140 = vmatprep.subr.bf16.mxu0 0
    %4141 = vmatpush1.bf16.msra.mxu0 0
    %4142 = vmatprep.subr.bf16.mxu0 0
    %4143 = vmatpush1.bf16.msra.mxu0 0
    %4144 = vmatprep.subr.bf16.mxu0 0
    %4145 = vmatpush1.bf16.msra.mxu0 0
    %4146 = vmatprep.subr.bf16.mxu0 0
    %4147 = vmatpush1.bf16.msra.mxu0 0
    %4148 = vmatprep.subr.bf16.mxu0 0
    %4149 = vmatpush1.bf16.msra.mxu0 0
    %4150 = vmatprep.subr.bf16.mxu0 0
    %4151 = vmatpush1.bf16.msra.mxu0 0
    %4152 = vmatprep.mubr.bf16.mxu0 0
    %4153 = vmatmul.mubr.bf16.gmra.mrb[0].mxu0 %v4118
    %v4154 = vpop.f32.mrb[0].mxu0
    %v4155 = vadd.f32 %v4103, %v4154
    %v4156 = vpop.f32.mrb[0].mxu0
    %v4157 = vpop.f32.mrb[0].mxu0
    %v4158 = vadd.f32 %v4103, %v4157
    %v4159 = vpop.f32.mrb[0].mxu0
    %4160 = vdwg.mxu0
    %v4163 = vcombine.high %v4155, %v4155
    %v4165 = vunpack.c.l.s4 1966171168
    %v4166 = vunpack.c.0.s8 %v4165
    %v4167 = vlaneseq
    %v4168 = vshrl.u32 %v4167, 7
    %v4169 = vsub.s32 %v4166, %v4168
    %v4170 = vrot.slane %v4155, %v4169
    %v4172 = vunpack.c.l.s4 1966171168
    %v4173 = vunpack.c.0.s8 %v4172
    %v4174 = vlaneseq
    %v4175 = vshrl.u32 %v4174, 7
    %v4176 = vsub.s32 %v4173, %v4175
    %v4177 = vrot.slane %v4163, %v4176
    %v4178 = vcombine.high %v4170, %v4170
    %v4179 = vcombine.high %v4177, %v4177
    %v4181 = vunpack.c.l.s4 1966171168
    %v4182 = vunpack.c.0.s8 %v4181
    %v4183 = vlaneseq
    %v4184 = vshrl.u32 %v4183, 7
    %v4185 = vsub.s32 %v4182, %v4184
    %v4186 = vrot.slane %v4170, %v4185
    %v4188 = vunpack.c.l.s4 1966171168
    %v4189 = vunpack.c.0.s8 %v4188
    %v4190 = vlaneseq
    %v4191 = vshrl.u32 %v4190, 7
    %v4192 = vsub.s32 %v4189, %v4191
    %v4193 = vrot.slane %v4177, %v4192
    %v4195 = vunpack.c.l.s4 1966171168
    %v4196 = vunpack.c.0.s8 %v4195
    %v4197 = vlaneseq
    %v4198 = vshrl.u32 %v4197, 7
    %v4199 = vsub.s32 %v4196, %v4198
    %v4200 = vrot.slane %v4178, %v4199
    %v4202 = vunpack.c.l.s4 1966171168
    %v4203 = vunpack.c.0.s8 %v4202
    %v4204 = vlaneseq
    %v4205 = vshrl.u32 %v4204, 7
    %v4206 = vsub.s32 %v4203, %v4205
    %v4207 = vrot.slane %v4179, %v4206
    %v4208 = vcombine.high %v4186, %v4186
    %v4209 = vcombine.high %v4193, %v4193
    %v4210 = vcombine.high %v4200, %v4200
    %v4211 = vcombine.high %v4207, %v4207
    %v4213 = vunpack.c.l.s4 1966171168
    %v4214 = vunpack.c.0.s8 %v4213
    %v4215 = vlaneseq
    %v4216 = vshrl.u32 %v4215, 7
    %v4217 = vsub.s32 %v4214, %v4216
    %v4218 = vrot.slane %v4158, %v4217
    %v4219 = vcombine.high %v4218, %v4218
    %v4221 = vunpack.c.l.s4 1966171168
    %v4222 = vunpack.c.0.s8 %v4221
    %v4223 = vlaneseq
    %v4224 = vshrl.u32 %v4223, 7
    %v4225 = vsub.s32 %v4222, %v4224
    %v4226 = vrot.slane %v4218, %v4225
    %v4228 = vunpack.c.l.s4 1966171168
    %v4229 = vunpack.c.0.s8 %v4228
    %v4230 = vlaneseq
    %v4231 = vshrl.u32 %v4230, 7
    %v4232 = vsub.s32 %v4229, %v4231
    %v4233 = vrot.slane %v4219, %v4232
    %4234 = vrot.lane.b32.xlu0 %v4186, 120
    %v4235 = vpop.permute.xlu0 %4234
    %4236 = vrot.lane.b32.xlu0 %v4200, 120
    %v4237 = vpop.permute.xlu0 %4236
    %4238 = vrot.lane.b32.xlu0 %v4208, 120
    %v4239 = vpop.permute.xlu0 %4238
    %4240 = vrot.lane.b32.xlu0 %v4210, 120
    %v4241 = vpop.permute.xlu0 %4240
    %4242 = vrot.lane.b32.xlu0 %v4193, 120
    %v4243 = vpop.permute.xlu0 %4242
    %4244 = vrot.lane.b32.xlu0 %v4207, 120
    %v4245 = vpop.permute.xlu0 %4244
    %4246 = vrot.lane.b32.xlu0 %v4209, 120
    %v4247 = vpop.permute.xlu0 %4246
    %4248 = vrot.lane.b32.xlu0 %v4211, 120
    %v4249 = vpop.permute.xlu0 %4248
    %4250 = vrot.lane.b32.xlu0 %v4226, 120
    %v4251 = vpop.permute.xlu0 %4250
    %4252 = vrot.lane.b32.xlu0 %v4233, 120
    %v4253 = vpop.permute.xlu0 %4252
    %4254 = vrot.lane.b32.xlu0 %v4186, 112
    %v4255 = vpop.permute.xlu0 %4254
    %4256 = vrot.lane.b32.xlu0 %v4200, 112
    %v4257 = vpop.permute.xlu0 %4256
    %4258 = vrot.lane.b32.xlu0 %v4208, 112
    %v4259 = vpop.permute.xlu0 %4258
    %4260 = vrot.lane.b32.xlu0 %v4210, 112
    %v4261 = vpop.permute.xlu0 %4260
    %4262 = vrot.lane.b32.xlu0 %v4193, 112
    %v4263 = vpop.permute.xlu0 %4262
    %4264 = vrot.lane.b32.xlu0 %v4207, 112
    %v4265 = vpop.permute.xlu0 %4264
    %4266 = vrot.lane.b32.xlu0 %v4209, 112
    %v4267 = vpop.permute.xlu0 %4266
    %4268 = vrot.lane.b32.xlu0 %v4211, 112
    %v4269 = vpop.permute.xlu0 %4268
    %4270 = vrot.lane.b32.xlu0 %v4226, 112
    %v4271 = vpop.permute.xlu0 %4270
    %4272 = vrot.lane.b32.xlu0 %v4233, 112
    %v4273 = vpop.permute.xlu0 %4272
    %4274 = vrot.lane.b32.xlu0 %v4186, 104
    %v4275 = vpop.permute.xlu0 %4274
    %4276 = vrot.lane.b32.xlu0 %v4200, 104
    %v4277 = vpop.permute.xlu0 %4276
    %4278 = vrot.lane.b32.xlu0 %v4208, 104
    %v4279 = vpop.permute.xlu0 %4278
    %4280 = vrot.lane.b32.xlu0 %v4210, 104
    %v4281 = vpop.permute.xlu0 %4280
    %4282 = vrot.lane.b32.xlu0 %v4193, 104
    %v4283 = vpop.permute.xlu0 %4282
    %4284 = vrot.lane.b32.xlu0 %v4207, 104
    %v4285 = vpop.permute.xlu0 %4284
    %4286 = vrot.lane.b32.xlu0 %v4209, 104
    %v4287 = vpop.permute.xlu0 %4286
    %4288 = vrot.lane.b32.xlu0 %v4211, 104
    %v4289 = vpop.permute.xlu0 %4288
    %4290 = vrot.lane.b32.xlu0 %v4226, 104
    %v4291 = vpop.permute.xlu0 %4290
    %4292 = vrot.lane.b32.xlu0 %v4233, 104
    %v4293 = vpop.permute.xlu0 %4292
    %v4294 = vcombine.low %v4186, %v4200
    %v4295 = vcombine.low %v4208, %v4210
    %v4297 = vunpack.c.l.s4 1966171168
    %v4298 = vunpack.c.0.s8 %v4297
    %v4299 = vlaneseq
    %v4300 = vshrl.u32 %v4299, 7
    %v4301 = vsub.s32 %v4298, %v4300
    %v4302 = vrot.slane %v4294, %v4301
    %v4304 = vunpack.c.l.s4 1966171168
    %v4305 = vunpack.c.0.s8 %v4304
    %v4306 = vlaneseq
    %v4307 = vshrl.u32 %v4306, 7
    %v4308 = vsub.s32 %v4305, %v4307
    %v4309 = vrot.slane %v4295, %v4308
    %v4311 = vunpack.c.l.s4 1966171168
    %v4312 = vunpack.c.0.s8 %v4311
    %v4313 = vlaneseq
    %v4314 = vshrl.u32 %v4313, 7
    %v4315 = vsub.s32 %v4312, %v4314
    %v4316 = vrot.slane %v4193, %v4315
    %v4317 = vcombine.low %v4302, %v4309
    %v4319 = vunpack.c.l.s4 1966171168
    %v4320 = vunpack.c.0.s8 %v4319
    %v4321 = vlaneseq
    %v4322 = vshrl.u32 %v4321, 7
    %v4323 = vsub.s32 %v4320, %v4322
    %v4324 = vrot.slane %v4317, %v4323
    %v4326 = vunpack.c.l.s4 1966171168
    %v4327 = vunpack.c.0.s8 %v4326
    %v4328 = vlaneseq
    %v4329 = vshrl.u32 %v4328, 7
    %v4330 = vsub.s32 %v4327, %v4329
    %v4331 = vrot.slane %v4316, %v4330
    %v4332 = vcombine.low %v4324, %v4331
    %v4333 = vcombine.low %v4207, %v4209
    %v4334 = vcombine.low %v4211, %v4226
    %v4336 = vunpack.c.l.s4 1966171168
    %v4337 = vunpack.c.0.s8 %v4336
    %v4338 = vlaneseq
    %v4339 = vshrl.u32 %v4338, 7
    %v4340 = vsub.s32 %v4337, %v4339
    %v4341 = vrot.slane %v4333, %v4340
    %v4343 = vunpack.c.l.s4 1966171168
    %v4344 = vunpack.c.0.s8 %v4343
    %v4345 = vlaneseq
    %v4346 = vshrl.u32 %v4345, 7
    %v4347 = vsub.s32 %v4344, %v4346
    %v4348 = vrot.slane %v4334, %v4347
    %v4350 = vunpack.c.l.s4 1966171168
    %v4351 = vunpack.c.0.s8 %v4350
    %v4352 = vlaneseq
    %v4353 = vshrl.u32 %v4352, 7
    %v4354 = vsub.s32 %v4351, %v4353
    %v4355 = vrot.slane %v4233, %v4354
    %v4356 = vcombine.low %v4341, %v4348
    %v4358 = vunpack.c.l.s4 1966171168
    %v4359 = vunpack.c.0.s8 %v4358
    %v4360 = vlaneseq
    %v4361 = vshrl.u32 %v4360, 7
    %v4362 = vsub.s32 %v4359, %v4361
    %v4363 = vrot.slane %v4356, %v4362
    %v4365 = vunpack.c.l.s4 1966171168
    %v4366 = vunpack.c.0.s8 %v4365
    %v4367 = vlaneseq
    %v4368 = vshrl.u32 %v4367, 7
    %v4369 = vsub.s32 %v4366, %v4368
    %v4370 = vrot.slane %v4355, %v4369
    %v4371 = vcombine.low %v4363, %v4370
    %v4372 = vcombine.low %v4235, %v4237
    %v4373 = vcombine.low %v4239, %v4241
    %v4375 = vunpack.c.l.s4 1966171168
    %v4376 = vunpack.c.0.s8 %v4375
    %v4377 = vlaneseq
    %v4378 = vshrl.u32 %v4377, 7
    %v4379 = vsub.s32 %v4376, %v4378
    %v4380 = vrot.slane %v4372, %v4379
    %v4382 = vunpack.c.l.s4 1966171168
    %v4383 = vunpack.c.0.s8 %v4382
    %v4384 = vlaneseq
    %v4385 = vshrl.u32 %v4384, 7
    %v4386 = vsub.s32 %v4383, %v4385
    %v4387 = vrot.slane %v4373, %v4386
    %v4389 = vunpack.c.l.s4 1966171168
    %v4390 = vunpack.c.0.s8 %v4389
    %v4391 = vlaneseq
    %v4392 = vshrl.u32 %v4391, 7
    %v4393 = vsub.s32 %v4390, %v4392
    %v4394 = vrot.slane %v4243, %v4393
    %v4395 = vcombine.low %v4380, %v4387
    %v4397 = vunpack.c.l.s4 1966171168
    %v4398 = vunpack.c.0.s8 %v4397
    %v4399 = vlaneseq
    %v4400 = vshrl.u32 %v4399, 7
    %v4401 = vsub.s32 %v4398, %v4400
    %v4402 = vrot.slane %v4395, %v4401
    %v4404 = vunpack.c.l.s4 1966171168
    %v4405 = vunpack.c.0.s8 %v4404
    %v4406 = vlaneseq
    %v4407 = vshrl.u32 %v4406, 7
    %v4408 = vsub.s32 %v4405, %v4407
    %v4409 = vrot.slane %v4394, %v4408
    %v4410 = vcombine.low %v4402, %v4409
    %v4411 = vcombine.low %v4245, %v4247
    %v4412 = vcombine.low %v4249, %v4251
    %v4414 = vunpack.c.l.s4 1966171168
    %v4415 = vunpack.c.0.s8 %v4414
    %v4416 = vlaneseq
    %v4417 = vshrl.u32 %v4416, 7
    %v4418 = vsub.s32 %v4415, %v4417
    %v4419 = vrot.slane %v4411, %v4418
    %v4421 = vunpack.c.l.s4 1966171168
    %v4422 = vunpack.c.0.s8 %v4421
    %v4423 = vlaneseq
    %v4424 = vshrl.u32 %v4423, 7
    %v4425 = vsub.s32 %v4422, %v4424
    %v4426 = vrot.slane %v4412, %v4425
    %v4428 = vunpack.c.l.s4 1966171168
    %v4429 = vunpack.c.0.s8 %v4428
    %v4430 = vlaneseq
    %v4431 = vshrl.u32 %v4430, 7
    %v4432 = vsub.s32 %v4429, %v4431
    %v4433 = vrot.slane %v4253, %v4432
    %v4434 = vcombine.low %v4419, %v4426
    %v4436 = vunpack.c.l.s4 1966171168
    %v4437 = vunpack.c.0.s8 %v4436
    %v4438 = vlaneseq
    %v4439 = vshrl.u32 %v4438, 7
    %v4440 = vsub.s32 %v4437, %v4439
    %v4441 = vrot.slane %v4434, %v4440
    %v4443 = vunpack.c.l.s4 1966171168
    %v4444 = vunpack.c.0.s8 %v4443
    %v4445 = vlaneseq
    %v4446 = vshrl.u32 %v4445, 7
    %v4447 = vsub.s32 %v4444, %v4446
    %v4448 = vrot.slane %v4433, %v4447
    %v4449 = vcombine.low %v4441, %v4448
    %v4450 = vcombine.low %v4255, %v4257
    %v4451 = vcombine.low %v4259, %v4261
    %v4453 = vunpack.c.l.s4 1966171168
    %v4454 = vunpack.c.0.s8 %v4453
    %v4455 = vlaneseq
    %v4456 = vshrl.u32 %v4455, 7
    %v4457 = vsub.s32 %v4454, %v4456
    %v4458 = vrot.slane %v4450, %v4457
    %v4460 = vunpack.c.l.s4 1966171168
    %v4461 = vunpack.c.0.s8 %v4460
    %v4462 = vlaneseq
    %v4463 = vshrl.u32 %v4462, 7
    %v4464 = vsub.s32 %v4461, %v4463
    %v4465 = vrot.slane %v4451, %v4464
    %v4467 = vunpack.c.l.s4 1966171168
    %v4468 = vunpack.c.0.s8 %v4467
    %v4469 = vlaneseq
    %v4470 = vshrl.u32 %v4469, 7
    %v4471 = vsub.s32 %v4468, %v4470
    %v4472 = vrot.slane %v4263, %v4471
    %v4473 = vcombine.low %v4458, %v4465
    %v4475 = vunpack.c.l.s4 1966171168
    %v4476 = vunpack.c.0.s8 %v4475
    %v4477 = vlaneseq
    %v4478 = vshrl.u32 %v4477, 7
    %v4479 = vsub.s32 %v4476, %v4478
    %v4480 = vrot.slane %v4473, %v4479
    %v4482 = vunpack.c.l.s4 1966171168
    %v4483 = vunpack.c.0.s8 %v4482
    %v4484 = vlaneseq
    %v4485 = vshrl.u32 %v4484, 7
    %v4486 = vsub.s32 %v4483, %v4485
    %v4487 = vrot.slane %v4472, %v4486
    %v4488 = vcombine.low %v4480, %v4487
    %v4489 = vcombine.low %v4265, %v4267
    %v4490 = vcombine.low %v4269, %v4271
    %v4492 = vunpack.c.l.s4 1966171168
    %v4493 = vunpack.c.0.s8 %v4492
    %v4494 = vlaneseq
    %v4495 = vshrl.u32 %v4494, 7
    %v4496 = vsub.s32 %v4493, %v4495
    %v4497 = vrot.slane %v4489, %v4496
    %v4499 = vunpack.c.l.s4 1966171168
    %v4500 = vunpack.c.0.s8 %v4499
    %v4501 = vlaneseq
    %v4502 = vshrl.u32 %v4501, 7
    %v4503 = vsub.s32 %v4500, %v4502
    %v4504 = vrot.slane %v4490, %v4503
    %v4506 = vunpack.c.l.s4 1966171168
    %v4507 = vunpack.c.0.s8 %v4506
    %v4508 = vlaneseq
    %v4509 = vshrl.u32 %v4508, 7
    %v4510 = vsub.s32 %v4507, %v4509
    %v4511 = vrot.slane %v4273, %v4510
    %v4512 = vcombine.low %v4497, %v4504
    %v4514 = vunpack.c.l.s4 1966171168
    %v4515 = vunpack.c.0.s8 %v4514
    %v4516 = vlaneseq
    %v4517 = vshrl.u32 %v4516, 7
    %v4518 = vsub.s32 %v4515, %v4517
    %v4519 = vrot.slane %v4512, %v4518
    %v4521 = vunpack.c.l.s4 1966171168
    %v4522 = vunpack.c.0.s8 %v4521
    %v4523 = vlaneseq
    %v4524 = vshrl.u32 %v4523, 7
    %v4525 = vsub.s32 %v4522, %v4524
    %v4526 = vrot.slane %v4511, %v4525
    %v4527 = vcombine.low %v4519, %v4526
    %v4528 = vcombine.low %v4275, %v4277
    %v4529 = vcombine.low %v4279, %v4281
    %v4531 = vunpack.c.l.s4 1966171168
    %v4532 = vunpack.c.0.s8 %v4531
    %v4533 = vlaneseq
    %v4534 = vshrl.u32 %v4533, 7
    %v4535 = vsub.s32 %v4532, %v4534
    %v4536 = vrot.slane %v4528, %v4535
    %v4538 = vunpack.c.l.s4 1966171168
    %v4539 = vunpack.c.0.s8 %v4538
    %v4540 = vlaneseq
    %v4541 = vshrl.u32 %v4540, 7
    %v4542 = vsub.s32 %v4539, %v4541
    %v4543 = vrot.slane %v4529, %v4542
    %v4545 = vunpack.c.l.s4 1966171168
    %v4546 = vunpack.c.0.s8 %v4545
    %v4547 = vlaneseq
    %v4548 = vshrl.u32 %v4547, 7
    %v4549 = vsub.s32 %v4546, %v4548
    %v4550 = vrot.slane %v4283, %v4549
    %v4551 = vcombine.low %v4536, %v4543
    %v4553 = vunpack.c.l.s4 1966171168
    %v4554 = vunpack.c.0.s8 %v4553
    %v4555 = vlaneseq
    %v4556 = vshrl.u32 %v4555, 7
    %v4557 = vsub.s32 %v4554, %v4556
    %v4558 = vrot.slane %v4551, %v4557
    %v4560 = vunpack.c.l.s4 1966171168
    %v4561 = vunpack.c.0.s8 %v4560
    %v4562 = vlaneseq
    %v4563 = vshrl.u32 %v4562, 7
    %v4564 = vsub.s32 %v4561, %v4563
    %v4565 = vrot.slane %v4550, %v4564
    %v4566 = vcombine.low %v4558, %v4565
    %v4567 = vcombine.low %v4285, %v4287
    %v4568 = vcombine.low %v4289, %v4291
    %v4570 = vunpack.c.l.s4 1966171168
    %v4571 = vunpack.c.0.s8 %v4570
    %v4572 = vlaneseq
    %v4573 = vshrl.u32 %v4572, 7
    %v4574 = vsub.s32 %v4571, %v4573
    %v4575 = vrot.slane %v4567, %v4574
    %v4577 = vunpack.c.l.s4 1966171168
    %v4578 = vunpack.c.0.s8 %v4577
    %v4579 = vlaneseq
    %v4580 = vshrl.u32 %v4579, 7
    %v4581 = vsub.s32 %v4578, %v4580
    %v4582 = vrot.slane %v4568, %v4581
    %v4584 = vunpack.c.l.s4 1966171168
    %v4585 = vunpack.c.0.s8 %v4584
    %v4586 = vlaneseq
    %v4587 = vshrl.u32 %v4586, 7
    %v4588 = vsub.s32 %v4585, %v4587
    %v4589 = vrot.slane %v4293, %v4588
    %v4590 = vcombine.low %v4575, %v4582
    %v4592 = vunpack.c.l.s4 1966171168
    %v4593 = vunpack.c.0.s8 %v4592
    %v4594 = vlaneseq
    %v4595 = vshrl.u32 %v4594, 7
    %v4596 = vsub.s32 %v4593, %v4595
    %v4597 = vrot.slane %v4590, %v4596
    %v4599 = vunpack.c.l.s4 1966171168
    %v4600 = vunpack.c.0.s8 %v4599
    %v4601 = vlaneseq
    %v4602 = vshrl.u32 %v4601, 7
    %v4603 = vsub.s32 %v4600, %v4602
    %v4604 = vrot.slane %v4589, %v4603
    %v4605 = vcombine.low %v4597, %v4604
    %v4614 = vpack.c.bf16 %v4332, %v4332
    %v4615 = vpack.c.bf16 %v4371, %v4371
    %v4616 = vpack.c.bf16 %v4410, %v4410
    %v4617 = vpack.c.bf16 %v4449, %v4449
    %v4618 = vpack.c.bf16 %v4488, %v4488
    %v4619 = vpack.c.bf16 %v4527, %v4527
    %v4620 = vpack.c.bf16 %v4566, %v4566
    %v4621 = vpack.c.bf16 %v4605, %v4605
    %4623 = vrot.lane.b32.xlu0 %v4614, 96
    %v4624 = vpop.permute.xlu0 %4623
    %v4626 = vsel %vm1386, %v4614, 0
    %v4629 = vsel %vm1386, %v4624, 0
    %4631 = vmatprep.subr.bf16.mxu0 0
    %4632 = vmatpush1.bf16.xpose.msra.mxu0 %v4629
    %4633 = vmatprep.subr.bf16.mxu0 0
    %4634 = vmatpush1.bf16.xpose.msra.mxu0 0
    %4635 = vmatprep.subr.bf16.mxu0 0
    %4636 = vmatpush1.bf16.xpose.msra.mxu0 0
    %4637 = vmatprep.subr.bf16.mxu0 0
    %4638 = vmatpush1.bf16.xpose.msra.mxu0 0
    %4639 = vmatprep.subr.bf16.mxu0 0
    %4640 = vmatpush1.bf16.xpose.msra.mxu0 0
    %4641 = vmatprep.subr.bf16.mxu0 0
    %4642 = vmatpush1.bf16.xpose.msra.mxu0 0
    %4643 = vmatprep.subr.bf16.mxu0 0
    %4644 = vmatpush1.bf16.xpose.msra.mxu0 0
    %4645 = vmatprep.subr.bf16.mxu0 0
    %4646 = vmatpush1.bf16.xpose.msra.mxu0 0
    %4647 = vmatprep.subr.bf16.mxu0 0
    %4648 = vmatpush1.bf16.xpose.msra.mxu0 0
    %4649 = vmatprep.subr.bf16.mxu0 0
    %4650 = vmatpush1.bf16.xpose.msra.mxu0 0
    %4651 = vmatprep.subr.bf16.mxu0 0
    %4652 = vmatpush1.bf16.xpose.msra.mxu0 0
    %4653 = vmatprep.subr.bf16.mxu0 0
    %4654 = vmatpush1.bf16.xpose.msra.mxu0 0
    %4655 = vmatprep.subr.bf16.mxu0 0
    %4656 = vmatpush1.bf16.xpose.msra.mxu0 0
    %4657 = vmatprep.subr.bf16.mxu0 0
    %4658 = vmatpush1.bf16.xpose.msra.mxu0 0
    %4659 = vmatprep.subr.bf16.mxu0 0
    %4660 = vmatpush1.bf16.xpose.msra.mxu0 0
    %4661 = vmatprep.subr.bf16.mxu0 0
    %4662 = vmatpush1.bf16.xpose.msra.mxu0 0
    %4663 = vmatprep.mubr.bf16.mxu0 0
    %4664 = vmatmul.mubr.bf16.gmra.mrb[0].mxu0 %v4626
    %v4665 = vpop.f32.mrb[0].mxu0
    %v4666 = vadd.f32 0.0, %v4665
    %v4667 = vpop.f32.mrb[0].mxu0
    %v4668 = vpop.f32.mrb[0].mxu0
    %v4669 = vpop.f32.mrb[0].mxu0
    %4670 = vdwg.mxu0
    %4672 = vrot.lane.b32.xlu0 %v4615, 96
    %v4673 = vpop.permute.xlu0 %4672
    %v4675 = vsel %vm1386, %v4615, 0
    %v4678 = vsel %vm1386, %v4673, 0
    %4680 = vmatprep.subr.bf16.mxu0 0
    %4681 = vmatpush1.bf16.xpose.msra.mxu0 %v4678
    %4682 = vmatprep.subr.bf16.mxu0 0
    %4683 = vmatpush1.bf16.xpose.msra.mxu0 0
    %4684 = vmatprep.subr.bf16.mxu0 0
    %4685 = vmatpush1.bf16.xpose.msra.mxu0 0
    %4686 = vmatprep.subr.bf16.mxu0 0
    %4687 = vmatpush1.bf16.xpose.msra.mxu0 0
    %4688 = vmatprep.subr.bf16.mxu0 0
    %4689 = vmatpush1.bf16.xpose.msra.mxu0 0
    %4690 = vmatprep.subr.bf16.mxu0 0
    %4691 = vmatpush1.bf16.xpose.msra.mxu0 0
    %4692 = vmatprep.subr.bf16.mxu0 0
    %4693 = vmatpush1.bf16.xpose.msra.mxu0 0
    %4694 = vmatprep.subr.bf16.mxu0 0
    %4695 = vmatpush1.bf16.xpose.msra.mxu0 0
    %4696 = vmatprep.subr.bf16.mxu0 0
    %4697 = vmatpush1.bf16.xpose.msra.mxu0 0
    %4698 = vmatprep.subr.bf16.mxu0 0
    %4699 = vmatpush1.bf16.xpose.msra.mxu0 0
    %4700 = vmatprep.subr.bf16.mxu0 0
    %4701 = vmatpush1.bf16.xpose.msra.mxu0 0
    %4702 = vmatprep.subr.bf16.mxu0 0
    %4703 = vmatpush1.bf16.xpose.msra.mxu0 0
    %4704 = vmatprep.subr.bf16.mxu0 0
    %4705 = vmatpush1.bf16.xpose.msra.mxu0 0
    %4706 = vmatprep.subr.bf16.mxu0 0
    %4707 = vmatpush1.bf16.xpose.msra.mxu0 0
    %4708 = vmatprep.subr.bf16.mxu0 0
    %4709 = vmatpush1.bf16.xpose.msra.mxu0 0
    %4710 = vmatprep.subr.bf16.mxu0 0
    %4711 = vmatpush1.bf16.xpose.msra.mxu0 0
    %4712 = vmatprep.mubr.bf16.mxu0 0
    %4713 = vmatmul.mubr.bf16.gmra.mrb[0].mxu0 %v4675
    %v4714 = vpop.f32.mrb[0].mxu0
    %v4715 = vadd.f32 0.0, %v4714
    %v4716 = vpop.f32.mrb[0].mxu0
    %v4717 = vpop.f32.mrb[0].mxu0
    %v4718 = vpop.f32.mrb[0].mxu0
    %4719 = vdwg.mxu0
    %4721 = vrot.lane.b32.xlu0 %v4616, 96
    %v4722 = vpop.permute.xlu0 %4721
    %v4724 = vsel %vm1386, %v4616, 0
    %v4727 = vsel %vm1386, %v4722, 0
    %4729 = vmatprep.subr.bf16.mxu0 0
    %4730 = vmatpush1.bf16.xpose.msra.mxu0 %v4727
    %4731 = vmatprep.subr.bf16.mxu0 0
    %4732 = vmatpush1.bf16.xpose.msra.mxu0 0
    %4733 = vmatprep.subr.bf16.mxu0 0
    %4734 = vmatpush1.bf16.xpose.msra.mxu0 0
    %4735 = vmatprep.subr.bf16.mxu0 0
    %4736 = vmatpush1.bf16.xpose.msra.mxu0 0
    %4737 = vmatprep.subr.bf16.mxu0 0
    %4738 = vmatpush1.bf16.xpose.msra.mxu0 0
    %4739 = vmatprep.subr.bf16.mxu0 0
    %4740 = vmatpush1.bf16.xpose.msra.mxu0 0
    %4741 = vmatprep.subr.bf16.mxu0 0
    %4742 = vmatpush1.bf16.xpose.msra.mxu0 0
    %4743 = vmatprep.subr.bf16.mxu0 0
    %4744 = vmatpush1.bf16.xpose.msra.mxu0 0
    %4745 = vmatprep.subr.bf16.mxu0 0
    %4746 = vmatpush1.bf16.xpose.msra.mxu0 0
    %4747 = vmatprep.subr.bf16.mxu0 0
    %4748 = vmatpush1.bf16.xpose.msra.mxu0 0
    %4749 = vmatprep.subr.bf16.mxu0 0
    %4750 = vmatpush1.bf16.xpose.msra.mxu0 0
    %4751 = vmatprep.subr.bf16.mxu0 0
    %4752 = vmatpush1.bf16.xpose.msra.mxu0 0
    %4753 = vmatprep.subr.bf16.mxu0 0
    %4754 = vmatpush1.bf16.xpose.msra.mxu0 0
    %4755 = vmatprep.subr.bf16.mxu0 0
    %4756 = vmatpush1.bf16.xpose.msra.mxu0 0
    %4757 = vmatprep.subr.bf16.mxu0 0
    %4758 = vmatpush1.bf16.xpose.msra.mxu0 0
    %4759 = vmatprep.subr.bf16.mxu0 0
    %4760 = vmatpush1.bf16.xpose.msra.mxu0 0
    %4761 = vmatprep.mubr.bf16.mxu0 0
    %4762 = vmatmul.mubr.bf16.gmra.mrb[0].mxu0 %v4724
    %v4763 = vpop.f32.mrb[0].mxu0
    %v4764 = vadd.f32 0.0, %v4763
    %v4765 = vpop.f32.mrb[0].mxu0
    %v4766 = vpop.f32.mrb[0].mxu0
    %v4767 = vpop.f32.mrb[0].mxu0
    %4768 = vdwg.mxu0
    %4770 = vrot.lane.b32.xlu0 %v4617, 96
    %v4771 = vpop.permute.xlu0 %4770
    %v4773 = vsel %vm1386, %v4617, 0
    %v4776 = vsel %vm1386, %v4771, 0
    %4778 = vmatprep.subr.bf16.mxu0 0
    %4779 = vmatpush1.bf16.xpose.msra.mxu0 %v4776
    %4780 = vmatprep.subr.bf16.mxu0 0
    %4781 = vmatpush1.bf16.xpose.msra.mxu0 0
    %4782 = vmatprep.subr.bf16.mxu0 0
    %4783 = vmatpush1.bf16.xpose.msra.mxu0 0
    %4784 = vmatprep.subr.bf16.mxu0 0
    %4785 = vmatpush1.bf16.xpose.msra.mxu0 0
    %4786 = vmatprep.subr.bf16.mxu0 0
    %4787 = vmatpush1.bf16.xpose.msra.mxu0 0
    %4788 = vmatprep.subr.bf16.mxu0 0
    %4789 = vmatpush1.bf16.xpose.msra.mxu0 0
    %4790 = vmatprep.subr.bf16.mxu0 0
    %4791 = vmatpush1.bf16.xpose.msra.mxu0 0
    %4792 = vmatprep.subr.bf16.mxu0 0
    %4793 = vmatpush1.bf16.xpose.msra.mxu0 0
    %4794 = vmatprep.subr.bf16.mxu0 0
    %4795 = vmatpush1.bf16.xpose.msra.mxu0 0
    %4796 = vmatprep.subr.bf16.mxu0 0
    %4797 = vmatpush1.bf16.xpose.msra.mxu0 0
    %4798 = vmatprep.subr.bf16.mxu0 0
    %4799 = vmatpush1.bf16.xpose.msra.mxu0 0
    %4800 = vmatprep.subr.bf16.mxu0 0
    %4801 = vmatpush1.bf16.xpose.msra.mxu0 0
    %4802 = vmatprep.subr.bf16.mxu0 0
    %4803 = vmatpush1.bf16.xpose.msra.mxu0 0
    %4804 = vmatprep.subr.bf16.mxu0 0
    %4805 = vmatpush1.bf16.xpose.msra.mxu0 0
    %4806 = vmatprep.subr.bf16.mxu0 0
    %4807 = vmatpush1.bf16.xpose.msra.mxu0 0
    %4808 = vmatprep.subr.bf16.mxu0 0
    %4809 = vmatpush1.bf16.xpose.msra.mxu0 0
    %4810 = vmatprep.mubr.bf16.mxu0 0
    %4811 = vmatmul.mubr.bf16.gmra.mrb[0].mxu0 %v4773
    %v4812 = vpop.f32.mrb[0].mxu0
    %v4813 = vadd.f32 0.0, %v4812
    %v4814 = vpop.f32.mrb[0].mxu0
    %v4815 = vpop.f32.mrb[0].mxu0
    %v4816 = vpop.f32.mrb[0].mxu0
    %4817 = vdwg.mxu0
    %4819 = vrot.lane.b32.xlu0 %v4618, 96
    %v4820 = vpop.permute.xlu0 %4819
    %v4822 = vsel %vm1386, %v4618, 0
    %v4825 = vsel %vm1386, %v4820, 0
    %4827 = vmatprep.subr.bf16.mxu0 0
    %4828 = vmatpush1.bf16.xpose.msra.mxu0 %v4825
    %4829 = vmatprep.subr.bf16.mxu0 0
    %4830 = vmatpush1.bf16.xpose.msra.mxu0 0
    %4831 = vmatprep.subr.bf16.mxu0 0
    %4832 = vmatpush1.bf16.xpose.msra.mxu0 0
    %4833 = vmatprep.subr.bf16.mxu0 0
    %4834 = vmatpush1.bf16.xpose.msra.mxu0 0
    %4835 = vmatprep.subr.bf16.mxu0 0
    %4836 = vmatpush1.bf16.xpose.msra.mxu0 0
    %4837 = vmatprep.subr.bf16.mxu0 0
    %4838 = vmatpush1.bf16.xpose.msra.mxu0 0
    %4839 = vmatprep.subr.bf16.mxu0 0
    %4840 = vmatpush1.bf16.xpose.msra.mxu0 0
    %4841 = vmatprep.subr.bf16.mxu0 0
    %4842 = vmatpush1.bf16.xpose.msra.mxu0 0
    %4843 = vmatprep.subr.bf16.mxu0 0
    %4844 = vmatpush1.bf16.xpose.msra.mxu0 0
    %4845 = vmatprep.subr.bf16.mxu0 0
    %4846 = vmatpush1.bf16.xpose.msra.mxu0 0
    %4847 = vmatprep.subr.bf16.mxu0 0
    %4848 = vmatpush1.bf16.xpose.msra.mxu0 0
    %4849 = vmatprep.subr.bf16.mxu0 0
    %4850 = vmatpush1.bf16.xpose.msra.mxu0 0
    %4851 = vmatprep.subr.bf16.mxu0 0
    %4852 = vmatpush1.bf16.xpose.msra.mxu0 0
    %4853 = vmatprep.subr.bf16.mxu0 0
    %4854 = vmatpush1.bf16.xpose.msra.mxu0 0
    %4855 = vmatprep.subr.bf16.mxu0 0
    %4856 = vmatpush1.bf16.xpose.msra.mxu0 0
    %4857 = vmatprep.subr.bf16.mxu0 0
    %4858 = vmatpush1.bf16.xpose.msra.mxu0 0
    %4859 = vmatprep.mubr.bf16.mxu0 0
    %4860 = vmatmul.mubr.bf16.gmra.mrb[0].mxu0 %v4822
    %v4861 = vpop.f32.mrb[0].mxu0
    %v4862 = vadd.f32 0.0, %v4861
    %v4863 = vpop.f32.mrb[0].mxu0
    %v4864 = vpop.f32.mrb[0].mxu0
    %v4865 = vpop.f32.mrb[0].mxu0
    %4866 = vdwg.mxu0
    %4868 = vrot.lane.b32.xlu0 %v4619, 96
    %v4869 = vpop.permute.xlu0 %4868
    %v4871 = vsel %vm1386, %v4619, 0
    %v4874 = vsel %vm1386, %v4869, 0
    %4876 = vmatprep.subr.bf16.mxu0 0
    %4877 = vmatpush1.bf16.xpose.msra.mxu0 %v4874
    %4878 = vmatprep.subr.bf16.mxu0 0
    %4879 = vmatpush1.bf16.xpose.msra.mxu0 0
    %4880 = vmatprep.subr.bf16.mxu0 0
    %4881 = vmatpush1.bf16.xpose.msra.mxu0 0
    %4882 = vmatprep.subr.bf16.mxu0 0
    %4883 = vmatpush1.bf16.xpose.msra.mxu0 0
    %4884 = vmatprep.subr.bf16.mxu0 0
    %4885 = vmatpush1.bf16.xpose.msra.mxu0 0
    %4886 = vmatprep.subr.bf16.mxu0 0
    %4887 = vmatpush1.bf16.xpose.msra.mxu0 0
    %4888 = vmatprep.subr.bf16.mxu0 0
    %4889 = vmatpush1.bf16.xpose.msra.mxu0 0
    %4890 = vmatprep.subr.bf16.mxu0 0
    %4891 = vmatpush1.bf16.xpose.msra.mxu0 0
    %4892 = vmatprep.subr.bf16.mxu0 0
    %4893 = vmatpush1.bf16.xpose.msra.mxu0 0
    %4894 = vmatprep.subr.bf16.mxu0 0
    %4895 = vmatpush1.bf16.xpose.msra.mxu0 0
    %4896 = vmatprep.subr.bf16.mxu0 0
    %4897 = vmatpush1.bf16.xpose.msra.mxu0 0
    %4898 = vmatprep.subr.bf16.mxu0 0
    %4899 = vmatpush1.bf16.xpose.msra.mxu0 0
    %4900 = vmatprep.subr.bf16.mxu0 0
    %4901 = vmatpush1.bf16.xpose.msra.mxu0 0
    %4902 = vmatprep.subr.bf16.mxu0 0
    %4903 = vmatpush1.bf16.xpose.msra.mxu0 0
    %4904 = vmatprep.subr.bf16.mxu0 0
    %4905 = vmatpush1.bf16.xpose.msra.mxu0 0
    %4906 = vmatprep.subr.bf16.mxu0 0
    %4907 = vmatpush1.bf16.xpose.msra.mxu0 0
    %4908 = vmatprep.mubr.bf16.mxu0 0
    %4909 = vmatmul.mubr.bf16.gmra.mrb[0].mxu0 %v4871
    %v4910 = vpop.f32.mrb[0].mxu0
    %v4911 = vadd.f32 0.0, %v4910
    %v4912 = vpop.f32.mrb[0].mxu0
    %v4913 = vpop.f32.mrb[0].mxu0
    %v4914 = vpop.f32.mrb[0].mxu0
    %4915 = vdwg.mxu0
    %4917 = vrot.lane.b32.xlu0 %v4620, 96
    %v4918 = vpop.permute.xlu0 %4917
    %v4920 = vsel %vm1386, %v4620, 0
    %v4923 = vsel %vm1386, %v4918, 0
    %4925 = vmatprep.subr.bf16.mxu0 0
    %4926 = vmatpush1.bf16.xpose.msra.mxu0 %v4923
    %4927 = vmatprep.subr.bf16.mxu0 0
    %4928 = vmatpush1.bf16.xpose.msra.mxu0 0
    %4929 = vmatprep.subr.bf16.mxu0 0
    %4930 = vmatpush1.bf16.xpose.msra.mxu0 0
    %4931 = vmatprep.subr.bf16.mxu0 0
    %4932 = vmatpush1.bf16.xpose.msra.mxu0 0
    %4933 = vmatprep.subr.bf16.mxu0 0
    %4934 = vmatpush1.bf16.xpose.msra.mxu0 0
    %4935 = vmatprep.subr.bf16.mxu0 0
    %4936 = vmatpush1.bf16.xpose.msra.mxu0 0
    %4937 = vmatprep.subr.bf16.mxu0 0
    %4938 = vmatpush1.bf16.xpose.msra.mxu0 0
    %4939 = vmatprep.subr.bf16.mxu0 0
    %4940 = vmatpush1.bf16.xpose.msra.mxu0 0
    %4941 = vmatprep.subr.bf16.mxu0 0
    %4942 = vmatpush1.bf16.xpose.msra.mxu0 0
    %4943 = vmatprep.subr.bf16.mxu0 0
    %4944 = vmatpush1.bf16.xpose.msra.mxu0 0
    %4945 = vmatprep.subr.bf16.mxu0 0
    %4946 = vmatpush1.bf16.xpose.msra.mxu0 0
    %4947 = vmatprep.subr.bf16.mxu0 0
    %4948 = vmatpush1.bf16.xpose.msra.mxu0 0
    %4949 = vmatprep.subr.bf16.mxu0 0
    %4950 = vmatpush1.bf16.xpose.msra.mxu0 0
    %4951 = vmatprep.subr.bf16.mxu0 0
    %4952 = vmatpush1.bf16.xpose.msra.mxu0 0
    %4953 = vmatprep.subr.bf16.mxu0 0
    %4954 = vmatpush1.bf16.xpose.msra.mxu0 0
    %4955 = vmatprep.subr.bf16.mxu0 0
    %4956 = vmatpush1.bf16.xpose.msra.mxu0 0
    %4957 = vmatprep.mubr.bf16.mxu0 0
    %4958 = vmatmul.mubr.bf16.gmra.mrb[0].mxu0 %v4920
    %v4959 = vpop.f32.mrb[0].mxu0
    %v4960 = vadd.f32 0.0, %v4959
    %v4961 = vpop.f32.mrb[0].mxu0
    %v4962 = vpop.f32.mrb[0].mxu0
    %v4963 = vpop.f32.mrb[0].mxu0
    %4964 = vdwg.mxu0
    %4966 = vrot.lane.b32.xlu0 %v4621, 96
    %v4967 = vpop.permute.xlu0 %4966
    %v4969 = vsel %vm1386, %v4621, 0
    %v4972 = vsel %vm1386, %v4967, 0
    %4974 = vmatprep.subr.bf16.mxu0 0
    %4975 = vmatpush1.bf16.xpose.msra.mxu0 %v4972
    %4976 = vmatprep.subr.bf16.mxu0 0
    %4977 = vmatpush1.bf16.xpose.msra.mxu0 0
    %4978 = vmatprep.subr.bf16.mxu0 0
    %4979 = vmatpush1.bf16.xpose.msra.mxu0 0
    %4980 = vmatprep.subr.bf16.mxu0 0
    %4981 = vmatpush1.bf16.xpose.msra.mxu0 0
    %4982 = vmatprep.subr.bf16.mxu0 0
    %4983 = vmatpush1.bf16.xpose.msra.mxu0 0
    %4984 = vmatprep.subr.bf16.mxu0 0
    %4985 = vmatpush1.bf16.xpose.msra.mxu0 0
    %4986 = vmatprep.subr.bf16.mxu0 0
    %4987 = vmatpush1.bf16.xpose.msra.mxu0 0
    %4988 = vmatprep.subr.bf16.mxu0 0
    %4989 = vmatpush1.bf16.xpose.msra.mxu0 0
    %4990 = vmatprep.subr.bf16.mxu0 0
    %4991 = vmatpush1.bf16.xpose.msra.mxu0 0
    %4992 = vmatprep.subr.bf16.mxu0 0
    %4993 = vmatpush1.bf16.xpose.msra.mxu0 0
    %4994 = vmatprep.subr.bf16.mxu0 0
    %4995 = vmatpush1.bf16.xpose.msra.mxu0 0
    %4996 = vmatprep.subr.bf16.mxu0 0
    %4997 = vmatpush1.bf16.xpose.msra.mxu0 0
    %4998 = vmatprep.subr.bf16.mxu0 0
    %4999 = vmatpush1.bf16.xpose.msra.mxu0 0
    %5000 = vmatprep.subr.bf16.mxu0 0
    %5001 = vmatpush1.bf16.xpose.msra.mxu0 0
    %5002 = vmatprep.subr.bf16.mxu0 0
    %5003 = vmatpush1.bf16.xpose.msra.mxu0 0
    %5004 = vmatprep.subr.bf16.mxu0 0
    %5005 = vmatpush1.bf16.xpose.msra.mxu0 0
    %5006 = vmatprep.mubr.bf16.mxu0 0
    %5007 = vmatmul.mubr.bf16.gmra.mrb[0].mxu0 %v4969
    %v5008 = vpop.f32.mrb[0].mxu0
    %v5009 = vadd.f32 0.0, %v5008
    %v5010 = vpop.f32.mrb[0].mxu0
    %v5011 = vpop.f32.mrb[0].mxu0
    %v5012 = vpop.f32.mrb[0].mxu0
    %5013 = vdwg.mxu0
    %v5014 = vmul.f32 %v4666, 0.35355338
    %v5015 = vmul.f32 %v4715, 0.35355338
    %v5016 = vmul.f32 %v4764, 0.35355338
    %v5017 = vmul.f32 %v4813, 0.35355338
    %v5018 = vmul.f32 %v4862, 0.35355338
    %v5019 = vmul.f32 %v4911, 0.35355338
    %v5020 = vmul.f32 %v4960, 0.35355338
    %v5021 = vmul.f32 %v5009, 0.35355338
    %v5022 = vsel %vm1784, %v5014, -inf
    %5023 = vmax.xlane.f32.xlu0 %v5022
    %v5024 = vpop.xlane.xlu0 %5023
    %v5025 = vsel %vm1784, %v5015, -inf
    %5026 = vmax.xlane.f32.xlu0 %v5025
    %v5027 = vpop.xlane.xlu0 %5026
    %v5028 = vsel %vm1784, %v5016, -inf
    %5029 = vmax.xlane.f32.xlu0 %v5028
    %v5030 = vpop.xlane.xlu0 %5029
    %v5031 = vsel %vm1784, %v5017, -inf
    %5032 = vmax.xlane.f32.xlu0 %v5031
    %v5033 = vpop.xlane.xlu0 %5032
    %v5034 = vsel %vm1784, %v5018, -inf
    %5035 = vmax.xlane.f32.xlu0 %v5034
    %v5036 = vpop.xlane.xlu0 %5035
    %v5037 = vsel %vm1784, %v5019, -inf
    %5038 = vmax.xlane.f32.xlu0 %v5037
    %v5039 = vpop.xlane.xlu0 %5038
    %v5040 = vsel %vm1784, %v5020, -inf
    %5041 = vmax.xlane.f32.xlu0 %v5040
    %v5042 = vpop.xlane.xlu0 %5041
    %v5043 = vsel %vm1784, %v5021, -inf
    %5044 = vmax.xlane.f32.xlu0 %v5043
    %v5045 = vpop.xlane.xlu0 %5044
    %v5046 = vsub.f32 %v5014, %v5024
    %v5047 = vsub.f32 %v5015, %v5027
    %v5048 = vsub.f32 %v5016, %v5030
    %v5049 = vsub.f32 %v5017, %v5033
    %v5050 = vsub.f32 %v5018, %v5036
    %v5051 = vsub.f32 %v5019, %v5039
    %v5052 = vsub.f32 %v5020, %v5042
    %v5053 = vsub.f32 %v5021, %v5045
    %v5054 = vmul.f32 %v5046, 1.442695
    %v5055 = vpow.pop %v5054
    %v5056 = vmul.f32 %v5047, 1.442695
    %v5057 = vpow.pop %v5056
    %v5058 = vmul.f32 %v5048, 1.442695
    %v5059 = vpow.pop %v5058
    %v5060 = vmul.f32 %v5049, 1.442695
    %v5061 = vpow.pop %v5060
    %v5062 = vmul.f32 %v5050, 1.442695
    %v5063 = vpow.pop %v5062
    %v5064 = vmul.f32 %v5051, 1.442695
    %v5065 = vpow.pop %v5064
    %v5066 = vmul.f32 %v5052, 1.442695
    %v5067 = vpow.pop %v5066
    %v5068 = vmul.f32 %v5053, 1.442695
    %v5069 = vpow.pop %v5068
    %v5070 = vsel %vm1784, %v5055, 0.0
    %5071 = vadd.xlane.f32.xlu0 %v5070
    %v5072 = vpop.xlane.xlu0 %5071
    %v5073 = vsel %vm1784, %v5057, 0.0
    %5074 = vadd.xlane.f32.xlu0 %v5073
    %v5075 = vpop.xlane.xlu0 %5074
    %v5076 = vsel %vm1784, %v5059, 0.0
    %5077 = vadd.xlane.f32.xlu0 %v5076
    %v5078 = vpop.xlane.xlu0 %5077
    %v5079 = vsel %vm1784, %v5061, 0.0
    %5080 = vadd.xlane.f32.xlu0 %v5079
    %v5081 = vpop.xlane.xlu0 %5080
    %v5082 = vsel %vm1784, %v5063, 0.0
    %5083 = vadd.xlane.f32.xlu0 %v5082
    %v5084 = vpop.xlane.xlu0 %5083
    %v5085 = vsel %vm1784, %v5065, 0.0
    %5086 = vadd.xlane.f32.xlu0 %v5085
    %v5087 = vpop.xlane.xlu0 %5086
    %v5088 = vsel %vm1784, %v5067, 0.0
    %5089 = vadd.xlane.f32.xlu0 %v5088
    %v5090 = vpop.xlane.xlu0 %5089
    %v5091 = vsel %vm1784, %v5069, 0.0
    %5092 = vadd.xlane.f32.xlu0 %v5091
    %v5093 = vpop.xlane.xlu0 %5092
    %v5094 = vrcp.pop %v5072
    %v5095 = vrcp.pop %v5075
    %v5096 = vrcp.pop %v5078
    %v5097 = vrcp.pop %v5081
    %v5098 = vrcp.pop %v5084
    %v5099 = vrcp.pop %v5087
    %v5100 = vrcp.pop %v5090
    %v5101 = vrcp.pop %v5093
    %v5102 = vmul.f32 %v5055, %v5094
    %v5103 = vmul.f32 %v5057, %v5095
    %v5104 = vmul.f32 %v5059, %v5096
    %v5105 = vmul.f32 %v5061, %v5097
    %v5106 = vmul.f32 %v5063, %v5098
    %v5107 = vmul.f32 %v5065, %v5099
    %v5108 = vmul.f32 %v5067, %v5100
    %v5109 = vmul.f32 %v5069, %v5101
    %v5110 = vpack.c.bf16 %v5102, %v5102
    %v5111 = vpack.c.bf16 %v5103, %v5103
    %v5112 = vpack.c.bf16 %v5104, %v5104
    %v5113 = vpack.c.bf16 %v5105, %v5105
    %v5114 = vpack.c.bf16 %v5106, %v5106
    %v5115 = vpack.c.bf16 %v5107, %v5107
    %v5116 = vpack.c.bf16 %v5108, %v5108
    %v5117 = vpack.c.bf16 %v5109, %v5109
    %5118 = vrot.lane.b32.xlu0 %v4614, 64
    %v5119 = vpop.permute.xlu0 %5118
    %v5121 = vsel %vm1883, %v5110, 0
    %v5124 = vand.u32 %v5119, %v1890
    %5126 = vmatprep.subr.bf16.mxu0 0
    %5127 = vmatpush1.bf16.msra.mxu0 %v5124
    %5128 = vmatprep.subr.bf16.mxu0 0
    %5129 = vmatpush1.bf16.msra.mxu0 0
    %5130 = vmatprep.subr.bf16.mxu0 0
    %5131 = vmatpush1.bf16.msra.mxu0 0
    %5132 = vmatprep.subr.bf16.mxu0 0
    %5133 = vmatpush1.bf16.msra.mxu0 0
    %5134 = vmatprep.subr.bf16.mxu0 0
    %5135 = vmatpush1.bf16.msra.mxu0 0
    %5136 = vmatprep.subr.bf16.mxu0 0
    %5137 = vmatpush1.bf16.msra.mxu0 0
    %5138 = vmatprep.subr.bf16.mxu0 0
    %5139 = vmatpush1.bf16.msra.mxu0 0
    %5140 = vmatprep.subr.bf16.mxu0 0
    %5141 = vmatpush1.bf16.msra.mxu0 0
    %5142 = vmatprep.subr.bf16.mxu0 0
    %5143 = vmatpush1.bf16.msra.mxu0 0
    %5144 = vmatprep.subr.bf16.mxu0 0
    %5145 = vmatpush1.bf16.msra.mxu0 0
    %5146 = vmatprep.subr.bf16.mxu0 0
    %5147 = vmatpush1.bf16.msra.mxu0 0
    %5148 = vmatprep.subr.bf16.mxu0 0
    %5149 = vmatpush1.bf16.msra.mxu0 0
    %5150 = vmatprep.subr.bf16.mxu0 0
    %5151 = vmatpush1.bf16.msra.mxu0 0
    %5152 = vmatprep.subr.bf16.mxu0 0
    %5153 = vmatpush1.bf16.msra.mxu0 0
    %5154 = vmatprep.subr.bf16.mxu0 0
    %5155 = vmatpush1.bf16.msra.mxu0 0
    %5156 = vmatprep.subr.bf16.mxu0 0
    %5157 = vmatpush1.bf16.msra.mxu0 0
    %5158 = vmatprep.mubr.bf16.mxu0 0
    %5159 = vmatmul.mubr.bf16.gmra.mrb[0].mxu0 %v5121
    %v5160 = vpop.f32.mrb[0].mxu0
    %v5161 = vadd.f32 0.0, %v5160
    %v5162 = vpop.f32.mrb[0].mxu0
    %v5163 = vpop.f32.mrb[0].mxu0
    %v5164 = vpop.f32.mrb[0].mxu0
    %5165 = vdwg.mxu0
    %5166 = vrot.lane.b32.xlu0 %v4615, 64
    %v5167 = vpop.permute.xlu0 %5166
    %v5169 = vsel %vm1883, %v5111, 0
    %v5172 = vand.u32 %v5167, %v1890
    %5174 = vmatprep.subr.bf16.mxu0 0
    %5175 = vmatpush1.bf16.msra.mxu0 %v5172
    %5176 = vmatprep.subr.bf16.mxu0 0
    %5177 = vmatpush1.bf16.msra.mxu0 0
    %5178 = vmatprep.subr.bf16.mxu0 0
    %5179 = vmatpush1.bf16.msra.mxu0 0
    %5180 = vmatprep.subr.bf16.mxu0 0
    %5181 = vmatpush1.bf16.msra.mxu0 0
    %5182 = vmatprep.subr.bf16.mxu0 0
    %5183 = vmatpush1.bf16.msra.mxu0 0
    %5184 = vmatprep.subr.bf16.mxu0 0
    %5185 = vmatpush1.bf16.msra.mxu0 0
    %5186 = vmatprep.subr.bf16.mxu0 0
    %5187 = vmatpush1.bf16.msra.mxu0 0
    %5188 = vmatprep.subr.bf16.mxu0 0
    %5189 = vmatpush1.bf16.msra.mxu0 0
    %5190 = vmatprep.subr.bf16.mxu0 0
    %5191 = vmatpush1.bf16.msra.mxu0 0
    %5192 = vmatprep.subr.bf16.mxu0 0
    %5193 = vmatpush1.bf16.msra.mxu0 0
    %5194 = vmatprep.subr.bf16.mxu0 0
    %5195 = vmatpush1.bf16.msra.mxu0 0
    %5196 = vmatprep.subr.bf16.mxu0 0
    %5197 = vmatpush1.bf16.msra.mxu0 0
    %5198 = vmatprep.subr.bf16.mxu0 0
    %5199 = vmatpush1.bf16.msra.mxu0 0
    %5200 = vmatprep.subr.bf16.mxu0 0
    %5201 = vmatpush1.bf16.msra.mxu0 0
    %5202 = vmatprep.subr.bf16.mxu0 0
    %5203 = vmatpush1.bf16.msra.mxu0 0
    %5204 = vmatprep.subr.bf16.mxu0 0
    %5205 = vmatpush1.bf16.msra.mxu0 0
    %5206 = vmatprep.mubr.bf16.mxu0 0
    %5207 = vmatmul.mubr.bf16.gmra.mrb[0].mxu0 %v5169
    %v5208 = vpop.f32.mrb[0].mxu0
    %v5209 = vadd.f32 0.0, %v5208
    %v5210 = vpop.f32.mrb[0].mxu0
    %v5211 = vpop.f32.mrb[0].mxu0
    %v5212 = vpop.f32.mrb[0].mxu0
    %5213 = vdwg.mxu0
    %5214 = vrot.lane.b32.xlu0 %v4616, 64
    %v5215 = vpop.permute.xlu0 %5214
    %v5217 = vsel %vm1883, %v5112, 0
    %v5220 = vand.u32 %v5215, %v1890
    %5222 = vmatprep.subr.bf16.mxu0 0
    %5223 = vmatpush1.bf16.msra.mxu0 %v5220
    %5224 = vmatprep.subr.bf16.mxu0 0
    %5225 = vmatpush1.bf16.msra.mxu0 0
    %5226 = vmatprep.subr.bf16.mxu0 0
    %5227 = vmatpush1.bf16.msra.mxu0 0
    %5228 = vmatprep.subr.bf16.mxu0 0
    %5229 = vmatpush1.bf16.msra.mxu0 0
    %5230 = vmatprep.subr.bf16.mxu0 0
    %5231 = vmatpush1.bf16.msra.mxu0 0
    %5232 = vmatprep.subr.bf16.mxu0 0
    %5233 = vmatpush1.bf16.msra.mxu0 0
    %5234 = vmatprep.subr.bf16.mxu0 0
    %5235 = vmatpush1.bf16.msra.mxu0 0
    %5236 = vmatprep.subr.bf16.mxu0 0
    %5237 = vmatpush1.bf16.msra.mxu0 0
    %5238 = vmatprep.subr.bf16.mxu0 0
    %5239 = vmatpush1.bf16.msra.mxu0 0
    %5240 = vmatprep.subr.bf16.mxu0 0
    %5241 = vmatpush1.bf16.msra.mxu0 0
    %5242 = vmatprep.subr.bf16.mxu0 0
    %5243 = vmatpush1.bf16.msra.mxu0 0
    %5244 = vmatprep.subr.bf16.mxu0 0
    %5245 = vmatpush1.bf16.msra.mxu0 0
    %5246 = vmatprep.subr.bf16.mxu0 0
    %5247 = vmatpush1.bf16.msra.mxu0 0
    %5248 = vmatprep.subr.bf16.mxu0 0
    %5249 = vmatpush1.bf16.msra.mxu0 0
    %5250 = vmatprep.subr.bf16.mxu0 0
    %5251 = vmatpush1.bf16.msra.mxu0 0
    %5252 = vmatprep.subr.bf16.mxu0 0
    %5253 = vmatpush1.bf16.msra.mxu0 0
    %5254 = vmatprep.mubr.bf16.mxu0 0
    %5255 = vmatmul.mubr.bf16.gmra.mrb[0].mxu0 %v5217
    %v5256 = vpop.f32.mrb[0].mxu0
    %v5257 = vadd.f32 0.0, %v5256
    %v5258 = vpop.f32.mrb[0].mxu0
    %v5259 = vpop.f32.mrb[0].mxu0
    %v5260 = vpop.f32.mrb[0].mxu0
    %5261 = vdwg.mxu0
    %5262 = vrot.lane.b32.xlu0 %v4617, 64
    %v5263 = vpop.permute.xlu0 %5262
    %v5265 = vsel %vm1883, %v5113, 0
    %v5268 = vand.u32 %v5263, %v1890
    %5270 = vmatprep.subr.bf16.mxu0 0
    %5271 = vmatpush1.bf16.msra.mxu0 %v5268
    %5272 = vmatprep.subr.bf16.mxu0 0
    %5273 = vmatpush1.bf16.msra.mxu0 0
    %5274 = vmatprep.subr.bf16.mxu0 0
    %5275 = vmatpush1.bf16.msra.mxu0 0
    %5276 = vmatprep.subr.bf16.mxu0 0
    %5277 = vmatpush1.bf16.msra.mxu0 0
    %5278 = vmatprep.subr.bf16.mxu0 0
    %5279 = vmatpush1.bf16.msra.mxu0 0
    %5280 = vmatprep.subr.bf16.mxu0 0
    %5281 = vmatpush1.bf16.msra.mxu0 0
    %5282 = vmatprep.subr.bf16.mxu0 0
    %5283 = vmatpush1.bf16.msra.mxu0 0
    %5284 = vmatprep.subr.bf16.mxu0 0
    %5285 = vmatpush1.bf16.msra.mxu0 0
    %5286 = vmatprep.subr.bf16.mxu0 0
    %5287 = vmatpush1.bf16.msra.mxu0 0
    %5288 = vmatprep.subr.bf16.mxu0 0
    %5289 = vmatpush1.bf16.msra.mxu0 0
    %5290 = vmatprep.subr.bf16.mxu0 0
    %5291 = vmatpush1.bf16.msra.mxu0 0
    %5292 = vmatprep.subr.bf16.mxu0 0
    %5293 = vmatpush1.bf16.msra.mxu0 0
    %5294 = vmatprep.subr.bf16.mxu0 0
    %5295 = vmatpush1.bf16.msra.mxu0 0
    %5296 = vmatprep.subr.bf16.mxu0 0
    %5297 = vmatpush1.bf16.msra.mxu0 0
    %5298 = vmatprep.subr.bf16.mxu0 0
    %5299 = vmatpush1.bf16.msra.mxu0 0
    %5300 = vmatprep.subr.bf16.mxu0 0
    %5301 = vmatpush1.bf16.msra.mxu0 0
    %5302 = vmatprep.mubr.bf16.mxu0 0
    %5303 = vmatmul.mubr.bf16.gmra.mrb[0].mxu0 %v5265
    %v5304 = vpop.f32.mrb[0].mxu0
    %v5305 = vadd.f32 0.0, %v5304
    %v5306 = vpop.f32.mrb[0].mxu0
    %v5307 = vpop.f32.mrb[0].mxu0
    %v5308 = vpop.f32.mrb[0].mxu0
    %5309 = vdwg.mxu0
    %5310 = vrot.lane.b32.xlu0 %v4618, 64
    %v5311 = vpop.permute.xlu0 %5310
    %v5313 = vsel %vm1883, %v5114, 0
    %v5316 = vand.u32 %v5311, %v1890
    %5318 = vmatprep.subr.bf16.mxu0 0
    %5319 = vmatpush1.bf16.msra.mxu0 %v5316
    %5320 = vmatprep.subr.bf16.mxu0 0
    %5321 = vmatpush1.bf16.msra.mxu0 0
    %5322 = vmatprep.subr.bf16.mxu0 0
    %5323 = vmatpush1.bf16.msra.mxu0 0
    %5324 = vmatprep.subr.bf16.mxu0 0
    %5325 = vmatpush1.bf16.msra.mxu0 0
    %5326 = vmatprep.subr.bf16.mxu0 0
    %5327 = vmatpush1.bf16.msra.mxu0 0
    %5328 = vmatprep.subr.bf16.mxu0 0
    %5329 = vmatpush1.bf16.msra.mxu0 0
    %5330 = vmatprep.subr.bf16.mxu0 0
    %5331 = vmatpush1.bf16.msra.mxu0 0
    %5332 = vmatprep.subr.bf16.mxu0 0
    %5333 = vmatpush1.bf16.msra.mxu0 0
    %5334 = vmatprep.subr.bf16.mxu0 0
    %5335 = vmatpush1.bf16.msra.mxu0 0
    %5336 = vmatprep.subr.bf16.mxu0 0
    %5337 = vmatpush1.bf16.msra.mxu0 0
    %5338 = vmatprep.subr.bf16.mxu0 0
    %5339 = vmatpush1.bf16.msra.mxu0 0
    %5340 = vmatprep.subr.bf16.mxu0 0
    %5341 = vmatpush1.bf16.msra.mxu0 0
    %5342 = vmatprep.subr.bf16.mxu0 0
    %5343 = vmatpush1.bf16.msra.mxu0 0
    %5344 = vmatprep.subr.bf16.mxu0 0
    %5345 = vmatpush1.bf16.msra.mxu0 0
    %5346 = vmatprep.subr.bf16.mxu0 0
    %5347 = vmatpush1.bf16.msra.mxu0 0
    %5348 = vmatprep.subr.bf16.mxu0 0
    %5349 = vmatpush1.bf16.msra.mxu0 0
    %5350 = vmatprep.mubr.bf16.mxu0 0
    %5351 = vmatmul.mubr.bf16.gmra.mrb[0].mxu0 %v5313
    %v5352 = vpop.f32.mrb[0].mxu0
    %v5353 = vadd.f32 0.0, %v5352
    %v5354 = vpop.f32.mrb[0].mxu0
    %v5355 = vpop.f32.mrb[0].mxu0
    %v5356 = vpop.f32.mrb[0].mxu0
    %5357 = vdwg.mxu0
    %5358 = vrot.lane.b32.xlu0 %v4619, 64
    %v5359 = vpop.permute.xlu0 %5358
    %v5361 = vsel %vm1883, %v5115, 0
    %v5364 = vand.u32 %v5359, %v1890
    %5366 = vmatprep.subr.bf16.mxu0 0
    %5367 = vmatpush1.bf16.msra.mxu0 %v5364
    %5368 = vmatprep.subr.bf16.mxu0 0
    %5369 = vmatpush1.bf16.msra.mxu0 0
    %5370 = vmatprep.subr.bf16.mxu0 0
    %5371 = vmatpush1.bf16.msra.mxu0 0
    %5372 = vmatprep.subr.bf16.mxu0 0
    %5373 = vmatpush1.bf16.msra.mxu0 0
    %5374 = vmatprep.subr.bf16.mxu0 0
    %5375 = vmatpush1.bf16.msra.mxu0 0
    %5376 = vmatprep.subr.bf16.mxu0 0
    %5377 = vmatpush1.bf16.msra.mxu0 0
    %5378 = vmatprep.subr.bf16.mxu0 0
    %5379 = vmatpush1.bf16.msra.mxu0 0
    %5380 = vmatprep.subr.bf16.mxu0 0
    %5381 = vmatpush1.bf16.msra.mxu0 0
    %5382 = vmatprep.subr.bf16.mxu0 0
    %5383 = vmatpush1.bf16.msra.mxu0 0
    %5384 = vmatprep.subr.bf16.mxu0 0
    %5385 = vmatpush1.bf16.msra.mxu0 0
    %5386 = vmatprep.subr.bf16.mxu0 0
    %5387 = vmatpush1.bf16.msra.mxu0 0
    %5388 = vmatprep.subr.bf16.mxu0 0
    %5389 = vmatpush1.bf16.msra.mxu0 0
    %5390 = vmatprep.subr.bf16.mxu0 0
    %5391 = vmatpush1.bf16.msra.mxu0 0
    %5392 = vmatprep.subr.bf16.mxu0 0
    %5393 = vmatpush1.bf16.msra.mxu0 0
    %5394 = vmatprep.subr.bf16.mxu0 0
    %5395 = vmatpush1.bf16.msra.mxu0 0
    %5396 = vmatprep.subr.bf16.mxu0 0
    %5397 = vmatpush1.bf16.msra.mxu0 0
    %5398 = vmatprep.mubr.bf16.mxu0 0
    %5399 = vmatmul.mubr.bf16.gmra.mrb[0].mxu0 %v5361
    %v5400 = vpop.f32.mrb[0].mxu0
    %v5401 = vadd.f32 0.0, %v5400
    %v5402 = vpop.f32.mrb[0].mxu0
    %v5403 = vpop.f32.mrb[0].mxu0
    %v5404 = vpop.f32.mrb[0].mxu0
    %5405 = vdwg.mxu0
    %5406 = vrot.lane.b32.xlu0 %v4620, 64
    %v5407 = vpop.permute.xlu0 %5406
    %v5409 = vsel %vm1883, %v5116, 0
    %v5412 = vand.u32 %v5407, %v1890
    %5414 = vmatprep.subr.bf16.mxu0 0
    %5415 = vmatpush1.bf16.msra.mxu0 %v5412
    %5416 = vmatprep.subr.bf16.mxu0 0
    %5417 = vmatpush1.bf16.msra.mxu0 0
    %5418 = vmatprep.subr.bf16.mxu0 0
    %5419 = vmatpush1.bf16.msra.mxu0 0
    %5420 = vmatprep.subr.bf16.mxu0 0
    %5421 = vmatpush1.bf16.msra.mxu0 0
    %5422 = vmatprep.subr.bf16.mxu0 0
    %5423 = vmatpush1.bf16.msra.mxu0 0
    %5424 = vmatprep.subr.bf16.mxu0 0
    %5425 = vmatpush1.bf16.msra.mxu0 0
    %5426 = vmatprep.subr.bf16.mxu0 0
    %5427 = vmatpush1.bf16.msra.mxu0 0
    %5428 = vmatprep.subr.bf16.mxu0 0
    %5429 = vmatpush1.bf16.msra.mxu0 0
    %5430 = vmatprep.subr.bf16.mxu0 0
    %5431 = vmatpush1.bf16.msra.mxu0 0
    %5432 = vmatprep.subr.bf16.mxu0 0
    %5433 = vmatpush1.bf16.msra.mxu0 0
    %5434 = vmatprep.subr.bf16.mxu0 0
    %5435 = vmatpush1.bf16.msra.mxu0 0
    %5436 = vmatprep.subr.bf16.mxu0 0
    %5437 = vmatpush1.bf16.msra.mxu0 0
    %5438 = vmatprep.subr.bf16.mxu0 0
    %5439 = vmatpush1.bf16.msra.mxu0 0
    %5440 = vmatprep.subr.bf16.mxu0 0
    %5441 = vmatpush1.bf16.msra.mxu0 0
    %5442 = vmatprep.subr.bf16.mxu0 0
    %5443 = vmatpush1.bf16.msra.mxu0 0
    %5444 = vmatprep.subr.bf16.mxu0 0
    %5445 = vmatpush1.bf16.msra.mxu0 0
    %5446 = vmatprep.mubr.bf16.mxu0 0
    %5447 = vmatmul.mubr.bf16.gmra.mrb[0].mxu0 %v5409
    %v5448 = vpop.f32.mrb[0].mxu0
    %v5449 = vadd.f32 0.0, %v5448
    %v5450 = vpop.f32.mrb[0].mxu0
    %v5451 = vpop.f32.mrb[0].mxu0
    %v5452 = vpop.f32.mrb[0].mxu0
    %5453 = vdwg.mxu0
    %5454 = vrot.lane.b32.xlu0 %v4621, 64
    %v5455 = vpop.permute.xlu0 %5454
    %v5457 = vsel %vm1883, %v5117, 0
    %v5460 = vand.u32 %v5455, %v1890
    %5462 = vmatprep.subr.bf16.mxu0 0
    %5463 = vmatpush1.bf16.msra.mxu0 %v5460
    %5464 = vmatprep.subr.bf16.mxu0 0
    %5465 = vmatpush1.bf16.msra.mxu0 0
    %5466 = vmatprep.subr.bf16.mxu0 0
    %5467 = vmatpush1.bf16.msra.mxu0 0
    %5468 = vmatprep.subr.bf16.mxu0 0
    %5469 = vmatpush1.bf16.msra.mxu0 0
    %5470 = vmatprep.subr.bf16.mxu0 0
    %5471 = vmatpush1.bf16.msra.mxu0 0
    %5472 = vmatprep.subr.bf16.mxu0 0
    %5473 = vmatpush1.bf16.msra.mxu0 0
    %5474 = vmatprep.subr.bf16.mxu0 0
    %5475 = vmatpush1.bf16.msra.mxu0 0
    %5476 = vmatprep.subr.bf16.mxu0 0
    %5477 = vmatpush1.bf16.msra.mxu0 0
    %5478 = vmatprep.subr.bf16.mxu0 0
    %5479 = vmatpush1.bf16.msra.mxu0 0
    %5480 = vmatprep.subr.bf16.mxu0 0
    %5481 = vmatpush1.bf16.msra.mxu0 0
    %5482 = vmatprep.subr.bf16.mxu0 0
    %5483 = vmatpush1.bf16.msra.mxu0 0
    %5484 = vmatprep.subr.bf16.mxu0 0
    %5485 = vmatpush1.bf16.msra.mxu0 0
    %5486 = vmatprep.subr.bf16.mxu0 0
    %5487 = vmatpush1.bf16.msra.mxu0 0
    %5488 = vmatprep.subr.bf16.mxu0 0
    %5489 = vmatpush1.bf16.msra.mxu0 0
    %5490 = vmatprep.subr.bf16.mxu0 0
    %5491 = vmatpush1.bf16.msra.mxu0 0
    %5492 = vmatprep.subr.bf16.mxu0 0
    %5493 = vmatpush1.bf16.msra.mxu0 0
    %5494 = vmatprep.mubr.bf16.mxu0 0
    %5495 = vmatmul.mubr.bf16.gmra.mrb[0].mxu0 %v5457
    %v5496 = vpop.f32.mrb[0].mxu0
    %v5497 = vadd.f32 0.0, %v5496
    %v5498 = vpop.f32.mrb[0].mxu0
    %v5499 = vpop.f32.mrb[0].mxu0
    %v5500 = vpop.f32.mrb[0].mxu0
    %5501 = vdwg.mxu0
    %5504 = vrot.lane.b32.xlu0 %v5257, 8
    %v5505 = vpop.permute.xlu0 %5504
    %5506 = vrot.lane.b32.xlu0 %v5305, 8
    %v5507 = vpop.permute.xlu0 %5506
    %5512 = vrot.lane.b32.xlu0 %v5353, 16
    %v5513 = vpop.permute.xlu0 %5512
    %5514 = vrot.lane.b32.xlu0 %v5401, 16
    %v5515 = vpop.permute.xlu0 %5514
    %5520 = vrot.lane.b32.xlu0 %v5449, 24
    %v5521 = vpop.permute.xlu0 %5520
    %5522 = vrot.lane.b32.xlu0 %v5497, 24
    %v5523 = vpop.permute.xlu0 %5522
    %v5526 = vsel %vm1386, %v5161, %v5505
    %v5527 = vsel %vm1386, %v5209, %v5507
    %v5528 = vsel %vm2296, %v5526, %v5513
    %v5529 = vsel %vm2296, %v5527, %v5515
    %v5530 = vsel %vm2299, %v5528, %v5521
    %v5531 = vsel %vm2299, %v5529, %v5523
    %v5534 = vcombine.high %v5530, %v5530
    %v5536 = vunpack.c.l.s4 1966171168
    %v5537 = vunpack.c.0.s8 %v5536
    %v5538 = vlaneseq
    %v5539 = vshrl.u32 %v5538, 7
    %v5540 = vsub.s32 %v5537, %v5539
    %v5541 = vrot.slane %v5530, %v5540
    %v5543 = vunpack.c.l.s4 1966171168
    %v5544 = vunpack.c.0.s8 %v5543
    %v5545 = vlaneseq
    %v5546 = vshrl.u32 %v5545, 7
    %v5547 = vsub.s32 %v5544, %v5546
    %v5548 = vrot.slane %v5534, %v5547
    %v5549 = vcombine.high %v5541, %v5541
    %v5551 = vunpack.c.l.s4 1966171168
    %v5552 = vunpack.c.0.s8 %v5551
    %v5553 = vlaneseq
    %v5554 = vshrl.u32 %v5553, 7
    %v5555 = vsub.s32 %v5552, %v5554
    %v5556 = vrot.slane %v5541, %v5555
    %v5558 = vunpack.c.l.s4 1966171168
    %v5559 = vunpack.c.0.s8 %v5558
    %v5560 = vlaneseq
    %v5561 = vshrl.u32 %v5560, 7
    %v5562 = vsub.s32 %v5559, %v5561
    %v5563 = vrot.slane %v5548, %v5562
    %v5565 = vunpack.c.l.s4 1966171168
    %v5566 = vunpack.c.0.s8 %v5565
    %v5567 = vlaneseq
    %v5568 = vshrl.u32 %v5567, 7
    %v5569 = vsub.s32 %v5566, %v5568
    %v5570 = vrot.slane %v5549, %v5569
    %v5571 = vcombine.high %v5556, %v5556
    %v5572 = vcombine.high %v5570, %v5570
    %v5573 = vcombine.high %v5531, %v5531
    %v5575 = vunpack.c.l.s4 1966171168
    %v5576 = vunpack.c.0.s8 %v5575
    %v5577 = vlaneseq
    %v5578 = vshrl.u32 %v5577, 7
    %v5579 = vsub.s32 %v5576, %v5578
    %v5580 = vrot.slane %v5531, %v5579
    %v5582 = vunpack.c.l.s4 1966171168
    %v5583 = vunpack.c.0.s8 %v5582
    %v5584 = vlaneseq
    %v5585 = vshrl.u32 %v5584, 7
    %v5586 = vsub.s32 %v5583, %v5585
    %v5587 = vrot.slane %v5573, %v5586
    %v5588 = vcombine.high %v5580, %v5580
    %v5590 = vunpack.c.l.s4 1966171168
    %v5591 = vunpack.c.0.s8 %v5590
    %v5592 = vlaneseq
    %v5593 = vshrl.u32 %v5592, 7
    %v5594 = vsub.s32 %v5591, %v5593
    %v5595 = vrot.slane %v5580, %v5594
    %v5597 = vunpack.c.l.s4 1966171168
    %v5598 = vunpack.c.0.s8 %v5597
    %v5599 = vlaneseq
    %v5600 = vshrl.u32 %v5599, 7
    %v5601 = vsub.s32 %v5598, %v5600
    %v5602 = vrot.slane %v5587, %v5601
    %v5604 = vunpack.c.l.s4 1966171168
    %v5605 = vunpack.c.0.s8 %v5604
    %v5606 = vlaneseq
    %v5607 = vshrl.u32 %v5606, 7
    %v5608 = vsub.s32 %v5605, %v5607
    %v5609 = vrot.slane %v5588, %v5608
    %v5610 = vcombine.high %v5595, %v5595
    %v5611 = vcombine.high %v5609, %v5609
    %v5612 = vcombine.low %v5556, %v5570
    %v5613 = vcombine.low %v5571, %v5572
    %v5614 = vcombine.low %v5563, %v5595
    %v5615 = vcombine.low %v5609, %v5610
    %v5617 = vunpack.c.l.s4 1966171168
    %v5618 = vunpack.c.0.s8 %v5617
    %v5619 = vlaneseq
    %v5620 = vshrl.u32 %v5619, 7
    %v5621 = vsub.s32 %v5618, %v5620
    %v5622 = vrot.slane %v5612, %v5621
    %v5624 = vunpack.c.l.s4 1966171168
    %v5625 = vunpack.c.0.s8 %v5624
    %v5626 = vlaneseq
    %v5627 = vshrl.u32 %v5626, 7
    %v5628 = vsub.s32 %v5625, %v5627
    %v5629 = vrot.slane %v5613, %v5628
    %v5631 = vunpack.c.l.s4 1966171168
    %v5632 = vunpack.c.0.s8 %v5631
    %v5633 = vlaneseq
    %v5634 = vshrl.u32 %v5633, 7
    %v5635 = vsub.s32 %v5632, %v5634
    %v5636 = vrot.slane %v5614, %v5635
    %v5638 = vunpack.c.l.s4 1966171168
    %v5639 = vunpack.c.0.s8 %v5638
    %v5640 = vlaneseq
    %v5641 = vshrl.u32 %v5640, 7
    %v5642 = vsub.s32 %v5639, %v5641
    %v5643 = vrot.slane %v5615, %v5642
    %v5644 = vcombine.low %v5622, %v5629
    %v5645 = vcombine.low %v5636, %v5643
    %v5647 = vunpack.c.l.s4 1966171168
    %v5648 = vunpack.c.0.s8 %v5647
    %v5649 = vlaneseq
    %v5650 = vshrl.u32 %v5649, 7
    %v5651 = vsub.s32 %v5648, %v5650
    %v5652 = vrot.slane %v5644, %v5651
    %v5654 = vunpack.c.l.s4 1966171168
    %v5655 = vunpack.c.0.s8 %v5654
    %v5656 = vlaneseq
    %v5657 = vshrl.u32 %v5656, 7
    %v5658 = vsub.s32 %v5655, %v5657
    %v5659 = vrot.slane %v5645, %v5658
    %v5660 = vcombine.low %v5652, %v5659
    %v5661 = vcombine.low %v5611, %v5602
    %v5663 = vunpack.c.l.s4 1966171168
    %v5664 = vunpack.c.0.s8 %v5663
    %v5665 = vlaneseq
    %v5666 = vshrl.u32 %v5665, 7
    %v5667 = vsub.s32 %v5664, %v5666
    %v5668 = vrot.slane %v5661, %v5667
    %v5670 = vunpack.c.l.s4 1966171168
    %v5671 = vunpack.c.0.s8 %v5670
    %v5672 = vlaneseq
    %v5673 = vshrl.u32 %v5672, 7
    %v5674 = vsub.s32 %v5671, %v5673
    %v5675 = vrot.slane %v5668, %v5674
    %v5678 = vpack.c.bf16 %v5675, %v5660
    %s5679 = scalar_lea.vmem %s9, 16
    %v5680 = vld [vmem:[%s5679] sm:$0xf]
    %v5681 = vld [vmem:[%s5679 + $0x4] sm:$0xf]
    %v5682 = vld [vmem:[%s5679 + $0x8] sm:$0xf]
    %v5683 = vld [vmem:[%s5679 + $0xc] sm:$0xf]
    %v5688 = vunpack.c.l.b16 %v5680
    %v5689 = vunpack.c.l.b16 %v5681
    %v5690 = vunpack.c.l.b16 %v5682
    %v5691 = vunpack.c.l.b16 %v5683
    %v5692 = vpack.c.b16 %v5689, %v5688
    %v5693 = vpack.c.b16 %v5691, %v5690
    %v5697 = vsel %vm401, %v5678, 0
    %5699 = vmatprep.subr.bf16.mxu0 0
    %5700 = vmatpush1.bf16.msra.mxu0 %v5692
    %5701 = vmatprep.subr.bf16.mxu0 0
    %5702 = vmatpush1.bf16.msra.mxu0 %v5693
    %5703 = vmatprep.subr.bf16.mxu0 0
    %5704 = vmatpush1.bf16.msra.mxu0 0
    %5705 = vmatprep.subr.bf16.mxu0 0
    %5706 = vmatpush1.bf16.msra.mxu0 0
    %5707 = vmatprep.subr.bf16.mxu0 0
    %5708 = vmatpush1.bf16.msra.mxu0 0
    %5709 = vmatprep.subr.bf16.mxu0 0
    %5710 = vmatpush1.bf16.msra.mxu0 0
    %5711 = vmatprep.subr.bf16.mxu0 0
    %5712 = vmatpush1.bf16.msra.mxu0 0
    %5713 = vmatprep.subr.bf16.mxu0 0
    %5714 = vmatpush1.bf16.msra.mxu0 0
    %5715 = vmatprep.subr.bf16.mxu0 0
    %5716 = vmatpush1.bf16.msra.mxu0 0
    %5717 = vmatprep.subr.bf16.mxu0 0
    %5718 = vmatpush1.bf16.msra.mxu0 0
    %5719 = vmatprep.subr.bf16.mxu0 0
    %5720 = vmatpush1.bf16.msra.mxu0 0
    %5721 = vmatprep.subr.bf16.mxu0 0
    %5722 = vmatpush1.bf16.msra.mxu0 0
    %5723 = vmatprep.subr.bf16.mxu0 0
    %5724 = vmatpush1.bf16.msra.mxu0 0
    %5725 = vmatprep.subr.bf16.mxu0 0
    %5726 = vmatpush1.bf16.msra.mxu0 0
    %5727 = vmatprep.subr.bf16.mxu0 0
    %5728 = vmatpush1.bf16.msra.mxu0 0
    %5729 = vmatprep.subr.bf16.mxu0 0
    %5730 = vmatpush1.bf16.msra.mxu0 0
    %5731 = vmatprep.mubr.bf16.mxu0 0
    %5732 = vmatmul.mubr.bf16.gmra.mrb[0].mxu0 %v5697
    %v5733 = vpop.f32.mrb[0].mxu0
    %v5734 = vadd.f32 0.0, %v5733
    %v5735 = vpop.f32.mrb[0].mxu0
    %v5736 = vpop.f32.mrb[0].mxu0
    %v5737 = vadd.f32 0.0, %v5736
    %v5738 = vpop.f32.mrb[0].mxu0
    %5739 = vdwg.mxu0
    %v5742 = vcombine.high %v5734, %v5734
    %v5744 = vunpack.c.l.s4 1966171168
    %v5745 = vunpack.c.0.s8 %v5744
    %v5746 = vlaneseq
    %v5747 = vshrl.u32 %v5746, 7
    %v5748 = vsub.s32 %v5745, %v5747
    %v5749 = vrot.slane %v5734, %v5748
    %v5751 = vunpack.c.l.s4 1966171168
    %v5752 = vunpack.c.0.s8 %v5751
    %v5753 = vlaneseq
    %v5754 = vshrl.u32 %v5753, 7
    %v5755 = vsub.s32 %v5752, %v5754
    %v5756 = vrot.slane %v5742, %v5755
    %v5757 = vcombine.high %v5749, %v5749
    %v5758 = vcombine.high %v5756, %v5756
    %v5760 = vunpack.c.l.s4 1966171168
    %v5761 = vunpack.c.0.s8 %v5760
    %v5762 = vlaneseq
    %v5763 = vshrl.u32 %v5762, 7
    %v5764 = vsub.s32 %v5761, %v5763
    %v5765 = vrot.slane %v5749, %v5764
    %v5767 = vunpack.c.l.s4 1966171168
    %v5768 = vunpack.c.0.s8 %v5767
    %v5769 = vlaneseq
    %v5770 = vshrl.u32 %v5769, 7
    %v5771 = vsub.s32 %v5768, %v5770
    %v5772 = vrot.slane %v5756, %v5771
    %v5774 = vunpack.c.l.s4 1966171168
    %v5775 = vunpack.c.0.s8 %v5774
    %v5776 = vlaneseq
    %v5777 = vshrl.u32 %v5776, 7
    %v5778 = vsub.s32 %v5775, %v5777
    %v5779 = vrot.slane %v5757, %v5778
    %v5781 = vunpack.c.l.s4 1966171168
    %v5782 = vunpack.c.0.s8 %v5781
    %v5783 = vlaneseq
    %v5784 = vshrl.u32 %v5783, 7
    %v5785 = vsub.s32 %v5782, %v5784
    %v5786 = vrot.slane %v5758, %v5785
    %v5787 = vcombine.high %v5765, %v5765
    %v5788 = vcombine.high %v5772, %v5772
    %v5789 = vcombine.high %v5779, %v5779
    %v5790 = vcombine.high %v5786, %v5786
    %v5792 = vunpack.c.l.s4 1966171168
    %v5793 = vunpack.c.0.s8 %v5792
    %v5794 = vlaneseq
    %v5795 = vshrl.u32 %v5794, 7
    %v5796 = vsub.s32 %v5793, %v5795
    %v5797 = vrot.slane %v5737, %v5796
    %v5798 = vcombine.high %v5797, %v5797
    %v5800 = vunpack.c.l.s4 1966171168
    %v5801 = vunpack.c.0.s8 %v5800
    %v5802 = vlaneseq
    %v5803 = vshrl.u32 %v5802, 7
    %v5804 = vsub.s32 %v5801, %v5803
    %v5805 = vrot.slane %v5797, %v5804
    %v5807 = vunpack.c.l.s4 1966171168
    %v5808 = vunpack.c.0.s8 %v5807
    %v5809 = vlaneseq
    %v5810 = vshrl.u32 %v5809, 7
    %v5811 = vsub.s32 %v5808, %v5810
    %v5812 = vrot.slane %v5798, %v5811
    %v5823 = vadd.f32 %v3551, %v5765
    %v5824 = vadd.f32 %v3552, %v5779
    %v5825 = vadd.f32 %v3553, %v5787
    %v5826 = vadd.f32 %v3554, %v5789
    %v5827 = vadd.f32 %v3555, %v5772
    %v5828 = vadd.f32 %v3556, %v5786
    %v5829 = vadd.f32 %v3557, %v5788
    %v5830 = vadd.f32 %v3558, %v5790
    %v5831 = vadd.f32 %v3559, %v5805
    %v5832 = vadd.f32 %v3560, %v5812
    %s5833 = scalar_lea.vmem %s10, 1
    %v5834 = vld [vmem:[%s5833] sm:$0x1]
    %v5836 = vlaneseq
    %v5837 = vshrl.u32 %v5836, 7
    %v5838 = vsub.s32 0, %v5837
    %v5839 = vrot.slane %v5834, %v5838
    %v5840 = vcombine.high %v5839, %v5839
    %v5842 = vunpack.c.l.s4 1966171168
    %v5843 = vunpack.c.0.s8 %v5842
    %v5844 = vlaneseq
    %v5845 = vshrl.u32 %v5844, 7
    %v5846 = vsub.s32 %v5843, %v5845
    %v5847 = vrot.slane %v5839, %v5846
    %v5849 = vunpack.c.l.s4 1966171168
    %v5850 = vunpack.c.0.s8 %v5849
    %v5851 = vlaneseq
    %v5852 = vshrl.u32 %v5851, 7
    %v5853 = vsub.s32 %v5850, %v5852
    %v5854 = vrot.slane %v5840, %v5853
    %v5855 = vcombine.high %v5847, %v5847
    %v5856 = vcombine.high %v5854, %v5854
    %v5858 = vunpack.c.l.s4 1966171168
    %v5859 = vunpack.c.0.s8 %v5858
    %v5860 = vlaneseq
    %v5861 = vshrl.u32 %v5860, 7
    %v5862 = vsub.s32 %v5859, %v5861
    %v5863 = vrot.slane %v5847, %v5862
    %v5865 = vunpack.c.l.s4 1966171168
    %v5866 = vunpack.c.0.s8 %v5865
    %v5867 = vlaneseq
    %v5868 = vshrl.u32 %v5867, 7
    %v5869 = vsub.s32 %v5866, %v5868
    %v5870 = vrot.slane %v5854, %v5869
    %v5872 = vunpack.c.l.s4 1966171168
    %v5873 = vunpack.c.0.s8 %v5872
    %v5874 = vlaneseq
    %v5875 = vshrl.u32 %v5874, 7
    %v5876 = vsub.s32 %v5873, %v5875
    %v5877 = vrot.slane %v5855, %v5876
    %v5879 = vunpack.c.l.s4 1966171168
    %v5880 = vunpack.c.0.s8 %v5879
    %v5881 = vlaneseq
    %v5882 = vshrl.u32 %v5881, 7
    %v5883 = vsub.s32 %v5880, %v5882
    %v5884 = vrot.slane %v5856, %v5883
    %v5885 = vcombine.high %v5863, %v5863
    %v5886 = vcombine.high %v5870, %v5870
    %v5887 = vcombine.high %v5877, %v5877
    %v5888 = vcombine.high %v5884, %v5884
    %v5897 = vadd.f32 %v5823, %v5863
    %v5898 = vadd.f32 %v5824, %v5877
    %v5899 = vadd.f32 %v5825, %v5885
    %v5900 = vadd.f32 %v5826, %v5887
    %v5901 = vadd.f32 %v5827, %v5870
    %v5902 = vadd.f32 %v5828, %v5884
    %v5903 = vadd.f32 %v5829, %v5886
    %v5904 = vadd.f32 %v5830, %v5888
    %v5905 = vadd.f32 %v5831, %v5863
    %v5906 = vadd.f32 %v5832, %v5877
    %s5907 = scalar_lea.vmem %s11, 1
    %v5908 = vld [vmem:[%s5907] sm:$0x1]
    %s5909 = scalar_lea.vmem %s12, 1
    %v5910 = vld [vmem:[%s5909] sm:$0x1]
    %v5921 = vcombine.low %v5897, %v5898
    %v5922 = vcombine.low %v5899, %v5900
    %v5923 = vcombine.low %v5901, %v5902
    %v5924 = vcombine.low %v5903, %v5904
    %v5926 = vunpack.c.l.s4 1966171168
    %v5927 = vunpack.c.0.s8 %v5926
    %v5928 = vlaneseq
    %v5929 = vshrl.u32 %v5928, 7
    %v5930 = vsub.s32 %v5927, %v5929
    %v5931 = vrot.slane %v5921, %v5930
    %v5933 = vunpack.c.l.s4 1966171168
    %v5934 = vunpack.c.0.s8 %v5933
    %v5935 = vlaneseq
    %v5936 = vshrl.u32 %v5935, 7
    %v5937 = vsub.s32 %v5934, %v5936
    %v5938 = vrot.slane %v5922, %v5937
    %v5940 = vunpack.c.l.s4 1966171168
    %v5941 = vunpack.c.0.s8 %v5940
    %v5942 = vlaneseq
    %v5943 = vshrl.u32 %v5942, 7
    %v5944 = vsub.s32 %v5941, %v5943
    %v5945 = vrot.slane %v5923, %v5944
    %v5947 = vunpack.c.l.s4 1966171168
    %v5948 = vunpack.c.0.s8 %v5947
    %v5949 = vlaneseq
    %v5950 = vshrl.u32 %v5949, 7
    %v5951 = vsub.s32 %v5948, %v5950
    %v5952 = vrot.slane %v5924, %v5951
    %v5953 = vcombine.low %v5931, %v5938
    %v5954 = vcombine.low %v5945, %v5952
    %v5956 = vunpack.c.l.s4 1966171168
    %v5957 = vunpack.c.0.s8 %v5956
    %v5958 = vlaneseq
    %v5959 = vshrl.u32 %v5958, 7
    %v5960 = vsub.s32 %v5957, %v5959
    %v5961 = vrot.slane %v5953, %v5960
    %v5963 = vunpack.c.l.s4 1966171168
    %v5964 = vunpack.c.0.s8 %v5963
    %v5965 = vlaneseq
    %v5966 = vshrl.u32 %v5965, 7
    %v5967 = vsub.s32 %v5964, %v5966
    %v5968 = vrot.slane %v5954, %v5967
    %v5969 = vcombine.low %v5961, %v5968
    %v5970 = vcombine.low %v5905, %v5906
    %v5972 = vunpack.c.l.s4 1966171168
    %v5973 = vunpack.c.0.s8 %v5972
    %v5974 = vlaneseq
    %v5975 = vshrl.u32 %v5974, 7
    %v5976 = vsub.s32 %v5973, %v5975
    %v5977 = vrot.slane %v5970, %v5976
    %v5979 = vunpack.c.l.s4 1966171168
    %v5980 = vunpack.c.0.s8 %v5979
    %v5981 = vlaneseq
    %v5982 = vshrl.u32 %v5981, 7
    %v5983 = vsub.s32 %v5980, %v5982
    %v5984 = vrot.slane %v5977, %v5983
    %v5987 = vsel %vm401, %v5969, 0.0
    %5988 = vadd.xlane.f32.xlu0 %v5987
    %v5989 = vpop.xlane.xlu0 %5988
    %v5990 = vsel %vm405, %v5984, 0.0
    %5991 = vadd.xlane.f32.xlu0 %v5990
    %v5992 = vpop.xlane.xlu0 %5991
    %v5993 = vmul.f32 %v5989, %v409
    %v5994 = vmul.f32 %v5992, %v409
    %v5997 = vlaneseq
    %v5998 = vshrl.u32 %v5997, 7
    %v5999 = vsub.s32 0, %v5998
    %v6000 = vrot.slane %v5993, %v5999
    %v6001 = vlaneseq
    %v6002 = vshrl.u32 %v6001, 7
    %v6003 = vsub.s32 1, %v6002
    %v6004 = vrot.slane %v5993, %v6003
    %v6005 = vlaneseq
    %v6006 = vshrl.u32 %v6005, 7
    %v6007 = vsub.s32 2, %v6006
    %v6008 = vrot.slane %v5993, %v6007
    %v6009 = vlaneseq
    %v6010 = vshrl.u32 %v6009, 7
    %v6011 = vsub.s32 3, %v6010
    %v6012 = vrot.slane %v5993, %v6011
    %v6013 = vlaneseq
    %v6014 = vshrl.u32 %v6013, 7
    %v6015 = vsub.s32 4, %v6014
    %v6016 = vrot.slane %v5993, %v6015
    %v6017 = vlaneseq
    %v6018 = vshrl.u32 %v6017, 7
    %v6019 = vsub.s32 5, %v6018
    %v6020 = vrot.slane %v5993, %v6019
    %v6021 = vlaneseq
    %v6022 = vshrl.u32 %v6021, 7
    %v6023 = vsub.s32 6, %v6022
    %v6024 = vrot.slane %v5993, %v6023
    %v6025 = vlaneseq
    %v6026 = vshrl.u32 %v6025, 7
    %v6027 = vsub.s32 7, %v6026
    %v6028 = vrot.slane %v5993, %v6027
    %v6029 = vlaneseq
    %v6030 = vshrl.u32 %v6029, 7
    %v6031 = vsub.s32 0, %v6030
    %v6032 = vrot.slane %v5994, %v6031
    %v6033 = vlaneseq
    %v6034 = vshrl.u32 %v6033, 7
    %v6035 = vsub.s32 1, %v6034
    %v6036 = vrot.slane %v5994, %v6035
    %v6047 = vsub.f32 %v5897, %v6000
    %v6048 = vsub.f32 %v5898, %v6004
    %v6049 = vsub.f32 %v5899, %v6008
    %v6050 = vsub.f32 %v5900, %v6012
    %v6051 = vsub.f32 %v5901, %v6016
    %v6052 = vsub.f32 %v5902, %v6020
    %v6053 = vsub.f32 %v5903, %v6024
    %v6054 = vsub.f32 %v5904, %v6028
    %v6055 = vsub.f32 %v5905, %v6032
    %v6056 = vsub.f32 %v5906, %v6036
    %v6057 = vmul.f32 %v6047, %v6047
    %v6058 = vmul.f32 %v6048, %v6048
    %v6059 = vmul.f32 %v6049, %v6049
    %v6060 = vmul.f32 %v6050, %v6050
    %v6061 = vmul.f32 %v6051, %v6051
    %v6062 = vmul.f32 %v6052, %v6052
    %v6063 = vmul.f32 %v6053, %v6053
    %v6064 = vmul.f32 %v6054, %v6054
    %v6065 = vmul.f32 %v6055, %v6055
    %v6066 = vmul.f32 %v6056, %v6056
    %v6077 = vcombine.low %v6057, %v6058
    %v6078 = vcombine.low %v6059, %v6060
    %v6079 = vcombine.low %v6061, %v6062
    %v6080 = vcombine.low %v6063, %v6064
    %v6082 = vunpack.c.l.s4 1966171168
    %v6083 = vunpack.c.0.s8 %v6082
    %v6084 = vlaneseq
    %v6085 = vshrl.u32 %v6084, 7
    %v6086 = vsub.s32 %v6083, %v6085
    %v6087 = vrot.slane %v6077, %v6086
    %v6089 = vunpack.c.l.s4 1966171168
    %v6090 = vunpack.c.0.s8 %v6089
    %v6091 = vlaneseq
    %v6092 = vshrl.u32 %v6091, 7
    %v6093 = vsub.s32 %v6090, %v6092
    %v6094 = vrot.slane %v6078, %v6093
    %v6096 = vunpack.c.l.s4 1966171168
    %v6097 = vunpack.c.0.s8 %v6096
    %v6098 = vlaneseq
    %v6099 = vshrl.u32 %v6098, 7
    %v6100 = vsub.s32 %v6097, %v6099
    %v6101 = vrot.slane %v6079, %v6100
    %v6103 = vunpack.c.l.s4 1966171168
    %v6104 = vunpack.c.0.s8 %v6103
    %v6105 = vlaneseq
    %v6106 = vshrl.u32 %v6105, 7
    %v6107 = vsub.s32 %v6104, %v6106
    %v6108 = vrot.slane %v6080, %v6107
    %v6109 = vcombine.low %v6087, %v6094
    %v6110 = vcombine.low %v6101, %v6108
    %v6112 = vunpack.c.l.s4 1966171168
    %v6113 = vunpack.c.0.s8 %v6112
    %v6114 = vlaneseq
    %v6115 = vshrl.u32 %v6114, 7
    %v6116 = vsub.s32 %v6113, %v6115
    %v6117 = vrot.slane %v6109, %v6116
    %v6119 = vunpack.c.l.s4 1966171168
    %v6120 = vunpack.c.0.s8 %v6119
    %v6121 = vlaneseq
    %v6122 = vshrl.u32 %v6121, 7
    %v6123 = vsub.s32 %v6120, %v6122
    %v6124 = vrot.slane %v6110, %v6123
    %v6125 = vcombine.low %v6117, %v6124
    %v6126 = vcombine.low %v6065, %v6066
    %v6128 = vunpack.c.l.s4 1966171168
    %v6129 = vunpack.c.0.s8 %v6128
    %v6130 = vlaneseq
    %v6131 = vshrl.u32 %v6130, 7
    %v6132 = vsub.s32 %v6129, %v6131
    %v6133 = vrot.slane %v6126, %v6132
    %v6135 = vunpack.c.l.s4 1966171168
    %v6136 = vunpack.c.0.s8 %v6135
    %v6137 = vlaneseq
    %v6138 = vshrl.u32 %v6137, 7
    %v6139 = vsub.s32 %v6136, %v6138
    %v6140 = vrot.slane %v6133, %v6139
    %v6143 = vsel %vm401, %v6125, 0.0
    %6144 = vadd.xlane.f32.xlu0 %v6143
    %v6145 = vpop.xlane.xlu0 %6144
    %v6146 = vsel %vm405, %v6140, 0.0
    %6147 = vadd.xlane.f32.xlu0 %v6146
    %v6148 = vpop.xlane.xlu0 %6147
    %v6149 = vmul.f32 %v6145, %v409
    %v6150 = vmul.f32 %v6148, %v409
    %v6151 = vadd.f32 %v6149, 1e-12
    %v6152 = vadd.f32 %v6150, 1e-12
    %v6153 = vrsqrt.pop %v6151
    %v6154 = vrsqrt.pop %v6152
    %v6157 = vlaneseq
    %v6158 = vshrl.u32 %v6157, 7
    %v6159 = vsub.s32 0, %v6158
    %v6160 = vrot.slane %v6153, %v6159
    %v6161 = vlaneseq
    %v6162 = vshrl.u32 %v6161, 7
    %v6163 = vsub.s32 1, %v6162
    %v6164 = vrot.slane %v6153, %v6163
    %v6165 = vlaneseq
    %v6166 = vshrl.u32 %v6165, 7
    %v6167 = vsub.s32 2, %v6166
    %v6168 = vrot.slane %v6153, %v6167
    %v6169 = vlaneseq
    %v6170 = vshrl.u32 %v6169, 7
    %v6171 = vsub.s32 3, %v6170
    %v6172 = vrot.slane %v6153, %v6171
    %v6173 = vlaneseq
    %v6174 = vshrl.u32 %v6173, 7
    %v6175 = vsub.s32 4, %v6174
    %v6176 = vrot.slane %v6153, %v6175
    %v6177 = vlaneseq
    %v6178 = vshrl.u32 %v6177, 7
    %v6179 = vsub.s32 5, %v6178
    %v6180 = vrot.slane %v6153, %v6179
    %v6181 = vlaneseq
    %v6182 = vshrl.u32 %v6181, 7
    %v6183 = vsub.s32 6, %v6182
    %v6184 = vrot.slane %v6153, %v6183
    %v6185 = vlaneseq
    %v6186 = vshrl.u32 %v6185, 7
    %v6187 = vsub.s32 7, %v6186
    %v6188 = vrot.slane %v6153, %v6187
    %v6189 = vlaneseq
    %v6190 = vshrl.u32 %v6189, 7
    %v6191 = vsub.s32 0, %v6190
    %v6192 = vrot.slane %v6154, %v6191
    %v6193 = vlaneseq
    %v6194 = vshrl.u32 %v6193, 7
    %v6195 = vsub.s32 1, %v6194
    %v6196 = vrot.slane %v6154, %v6195
    %v6207 = vmul.f32 %v6047, %v6160
    %v6208 = vmul.f32 %v6048, %v6164
    %v6209 = vmul.f32 %v6049, %v6168
    %v6210 = vmul.f32 %v6050, %v6172
    %v6211 = vmul.f32 %v6051, %v6176
    %v6212 = vmul.f32 %v6052, %v6180
    %v6213 = vmul.f32 %v6053, %v6184
    %v6214 = vmul.f32 %v6054, %v6188
    %v6215 = vmul.f32 %v6055, %v6192
    %v6216 = vmul.f32 %v6056, %v6196
    %v6218 = vlaneseq
    %v6219 = vshrl.u32 %v6218, 7
    %v6220 = vsub.s32 0, %v6219
    %v6221 = vrot.slane %v5908, %v6220
    %v6222 = vcombine.high %v6221, %v6221
    %v6224 = vunpack.c.l.s4 1966171168
    %v6225 = vunpack.c.0.s8 %v6224
    %v6226 = vlaneseq
    %v6227 = vshrl.u32 %v6226, 7
    %v6228 = vsub.s32 %v6225, %v6227
    %v6229 = vrot.slane %v6221, %v6228
    %v6231 = vunpack.c.l.s4 1966171168
    %v6232 = vunpack.c.0.s8 %v6231
    %v6233 = vlaneseq
    %v6234 = vshrl.u32 %v6233, 7
    %v6235 = vsub.s32 %v6232, %v6234
    %v6236 = vrot.slane %v6222, %v6235
    %v6237 = vcombine.high %v6229, %v6229
    %v6238 = vcombine.high %v6236, %v6236
    %v6240 = vunpack.c.l.s4 1966171168
    %v6241 = vunpack.c.0.s8 %v6240
    %v6242 = vlaneseq
    %v6243 = vshrl.u32 %v6242, 7
    %v6244 = vsub.s32 %v6241, %v6243
    %v6245 = vrot.slane %v6229, %v6244
    %v6247 = vunpack.c.l.s4 1966171168
    %v6248 = vunpack.c.0.s8 %v6247
    %v6249 = vlaneseq
    %v6250 = vshrl.u32 %v6249, 7
    %v6251 = vsub.s32 %v6248, %v6250
    %v6252 = vrot.slane %v6236, %v6251
    %v6254 = vunpack.c.l.s4 1966171168
    %v6255 = vunpack.c.0.s8 %v6254
    %v6256 = vlaneseq
    %v6257 = vshrl.u32 %v6256, 7
    %v6258 = vsub.s32 %v6255, %v6257
    %v6259 = vrot.slane %v6237, %v6258
    %v6261 = vunpack.c.l.s4 1966171168
    %v6262 = vunpack.c.0.s8 %v6261
    %v6263 = vlaneseq
    %v6264 = vshrl.u32 %v6263, 7
    %v6265 = vsub.s32 %v6262, %v6264
    %v6266 = vrot.slane %v6238, %v6265
    %v6267 = vcombine.high %v6245, %v6245
    %v6268 = vcombine.high %v6252, %v6252
    %v6269 = vcombine.high %v6259, %v6259
    %v6270 = vcombine.high %v6266, %v6266
    %v6279 = vmul.f32 %v6207, %v6245
    %v6280 = vmul.f32 %v6208, %v6259
    %v6281 = vmul.f32 %v6209, %v6267
    %v6282 = vmul.f32 %v6210, %v6269
    %v6283 = vmul.f32 %v6211, %v6252
    %v6284 = vmul.f32 %v6212, %v6266
    %v6285 = vmul.f32 %v6213, %v6268
    %v6286 = vmul.f32 %v6214, %v6270
    %v6287 = vmul.f32 %v6215, %v6245
    %v6288 = vmul.f32 %v6216, %v6259
    %v6290 = vlaneseq
    %v6291 = vshrl.u32 %v6290, 7
    %v6292 = vsub.s32 0, %v6291
    %v6293 = vrot.slane %v5910, %v6292
    %v6294 = vcombine.high %v6293, %v6293
    %v6296 = vunpack.c.l.s4 1966171168
    %v6297 = vunpack.c.0.s8 %v6296
    %v6298 = vlaneseq
    %v6299 = vshrl.u32 %v6298, 7
    %v6300 = vsub.s32 %v6297, %v6299
    %v6301 = vrot.slane %v6293, %v6300
    %v6303 = vunpack.c.l.s4 1966171168
    %v6304 = vunpack.c.0.s8 %v6303
    %v6305 = vlaneseq
    %v6306 = vshrl.u32 %v6305, 7
    %v6307 = vsub.s32 %v6304, %v6306
    %v6308 = vrot.slane %v6294, %v6307
    %v6309 = vcombine.high %v6301, %v6301
    %v6310 = vcombine.high %v6308, %v6308
    %v6312 = vunpack.c.l.s4 1966171168
    %v6313 = vunpack.c.0.s8 %v6312
    %v6314 = vlaneseq
    %v6315 = vshrl.u32 %v6314, 7
    %v6316 = vsub.s32 %v6313, %v6315
    %v6317 = vrot.slane %v6301, %v6316
    %v6319 = vunpack.c.l.s4 1966171168
    %v6320 = vunpack.c.0.s8 %v6319
    %v6321 = vlaneseq
    %v6322 = vshrl.u32 %v6321, 7
    %v6323 = vsub.s32 %v6320, %v6322
    %v6324 = vrot.slane %v6308, %v6323
    %v6326 = vunpack.c.l.s4 1966171168
    %v6327 = vunpack.c.0.s8 %v6326
    %v6328 = vlaneseq
    %v6329 = vshrl.u32 %v6328, 7
    %v6330 = vsub.s32 %v6327, %v6329
    %v6331 = vrot.slane %v6309, %v6330
    %v6333 = vunpack.c.l.s4 1966171168
    %v6334 = vunpack.c.0.s8 %v6333
    %v6335 = vlaneseq
    %v6336 = vshrl.u32 %v6335, 7
    %v6337 = vsub.s32 %v6334, %v6336
    %v6338 = vrot.slane %v6310, %v6337
    %v6339 = vcombine.high %v6317, %v6317
    %v6340 = vcombine.high %v6324, %v6324
    %v6341 = vcombine.high %v6331, %v6331
    %v6342 = vcombine.high %v6338, %v6338
    %v6351 = vadd.f32 %v6279, %v6317
    %v6352 = vadd.f32 %v6280, %v6331
    %v6353 = vadd.f32 %v6281, %v6339
    %v6354 = vadd.f32 %v6282, %v6341
    %v6355 = vadd.f32 %v6283, %v6324
    %v6356 = vadd.f32 %v6284, %v6338
    %v6357 = vadd.f32 %v6285, %v6340
    %v6358 = vadd.f32 %v6286, %v6342
    %v6359 = vadd.f32 %v6287, %v6317
    %v6360 = vadd.f32 %v6288, %v6331
    %v6371 = vcombine.low %v6351, %v6352
    %v6372 = vcombine.low %v6353, %v6354
    %v6373 = vcombine.low %v6355, %v6356
    %v6374 = vcombine.low %v6357, %v6358
    %v6376 = vunpack.c.l.s4 1966171168
    %v6377 = vunpack.c.0.s8 %v6376
    %v6378 = vlaneseq
    %v6379 = vshrl.u32 %v6378, 7
    %v6380 = vsub.s32 %v6377, %v6379
    %v6381 = vrot.slane %v6371, %v6380
    %v6383 = vunpack.c.l.s4 1966171168
    %v6384 = vunpack.c.0.s8 %v6383
    %v6385 = vlaneseq
    %v6386 = vshrl.u32 %v6385, 7
    %v6387 = vsub.s32 %v6384, %v6386
    %v6388 = vrot.slane %v6372, %v6387
    %v6390 = vunpack.c.l.s4 1966171168
    %v6391 = vunpack.c.0.s8 %v6390
    %v6392 = vlaneseq
    %v6393 = vshrl.u32 %v6392, 7
    %v6394 = vsub.s32 %v6391, %v6393
    %v6395 = vrot.slane %v6373, %v6394
    %v6397 = vunpack.c.l.s4 1966171168
    %v6398 = vunpack.c.0.s8 %v6397
    %v6399 = vlaneseq
    %v6400 = vshrl.u32 %v6399, 7
    %v6401 = vsub.s32 %v6398, %v6400
    %v6402 = vrot.slane %v6374, %v6401
    %v6403 = vcombine.low %v6381, %v6388
    %v6404 = vcombine.low %v6395, %v6402
    %v6406 = vunpack.c.l.s4 1966171168
    %v6407 = vunpack.c.0.s8 %v6406
    %v6408 = vlaneseq
    %v6409 = vshrl.u32 %v6408, 7
    %v6410 = vsub.s32 %v6407, %v6409
    %v6411 = vrot.slane %v6403, %v6410
    %v6413 = vunpack.c.l.s4 1966171168
    %v6414 = vunpack.c.0.s8 %v6413
    %v6415 = vlaneseq
    %v6416 = vshrl.u32 %v6415, 7
    %v6417 = vsub.s32 %v6414, %v6416
    %v6418 = vrot.slane %v6404, %v6417
    %v6419 = vcombine.low %v6411, %v6418
    %v6420 = vcombine.low %v6359, %v6360
    %v6422 = vunpack.c.l.s4 1966171168
    %v6423 = vunpack.c.0.s8 %v6422
    %v6424 = vlaneseq
    %v6425 = vshrl.u32 %v6424, 7
    %v6426 = vsub.s32 %v6423, %v6425
    %v6427 = vrot.slane %v6420, %v6426
    %v6429 = vunpack.c.l.s4 1966171168
    %v6430 = vunpack.c.0.s8 %v6429
    %v6431 = vlaneseq
    %v6432 = vshrl.u32 %v6431, 7
    %v6433 = vsub.s32 %v6430, %v6432
    %v6434 = vrot.slane %v6427, %v6433
    %v6437 = vpack.c.bf16 %v6434, %v6419
    %s6438 = scalar_lea.vmem %s13, 16
    %v6439 = vld [vmem:[%s6438] sm:$0xf]
    %v6440 = vld [vmem:[%s6438 + $0x4] sm:$0xf]
    %v6441 = vld [vmem:[%s6438 + $0x8] sm:$0xf]
    %v6442 = vld [vmem:[%s6438 + $0xc] sm:$0xf]
    %s6443 = scalar_lea.vmem %s14, 1
    %v6444 = vld [vmem:[%s6443] sm:$0x1]
    %v6446 = vlaneseq
    %v6447 = vshrl.u32 %v6446, 7
    %v6448 = vsub.s32 0, %v6447
    %v6449 = vrot.slane %v6444, %v6448
    %v6455 = vunpack.c.l.b16 %v6439
    %v6456 = vunpack.c.l.b16 %v6440
    %v6457 = vunpack.c.l.b16 %v6441
    %v6458 = vunpack.c.l.b16 %v6442
    %v6459 = vpack.c.b16 %v6456, %v6455
    %v6460 = vpack.c.b16 %v6458, %v6457
    %v6464 = vsel %vm401, %v6437, 0
    %6466 = vmatprep.subr.bf16.mxu0 0
    %6467 = vmatpush1.bf16.msra.mxu0 %v6459
    %6468 = vmatprep.subr.bf16.mxu0 0
    %6469 = vmatpush1.bf16.msra.mxu0 %v6460
    %6470 = vmatprep.subr.bf16.mxu0 0
    %6471 = vmatpush1.bf16.msra.mxu0 0
    %6472 = vmatprep.subr.bf16.mxu0 0
    %6473 = vmatpush1.bf16.msra.mxu0 0
    %6474 = vmatprep.subr.bf16.mxu0 0
    %6475 = vmatpush1.bf16.msra.mxu0 0
    %6476 = vmatprep.subr.bf16.mxu0 0
    %6477 = vmatpush1.bf16.msra.mxu0 0
    %6478 = vmatprep.subr.bf16.mxu0 0
    %6479 = vmatpush1.bf16.msra.mxu0 0
    %6480 = vmatprep.subr.bf16.mxu0 0
    %6481 = vmatpush1.bf16.msra.mxu0 0
    %6482 = vmatprep.subr.bf16.mxu0 0
    %6483 = vmatpush1.bf16.msra.mxu0 0
    %6484 = vmatprep.subr.bf16.mxu0 0
    %6485 = vmatpush1.bf16.msra.mxu0 0
    %6486 = vmatprep.subr.bf16.mxu0 0
    %6487 = vmatpush1.bf16.msra.mxu0 0
    %6488 = vmatprep.subr.bf16.mxu0 0
    %6489 = vmatpush1.bf16.msra.mxu0 0
    %6490 = vmatprep.subr.bf16.mxu0 0
    %6491 = vmatpush1.bf16.msra.mxu0 0
    %6492 = vmatprep.subr.bf16.mxu0 0
    %6493 = vmatpush1.bf16.msra.mxu0 0
    %6494 = vmatprep.subr.bf16.mxu0 0
    %6495 = vmatpush1.bf16.msra.mxu0 0
    %6496 = vmatprep.subr.bf16.mxu0 0
    %6497 = vmatpush1.bf16.msra.mxu0 0
    %6498 = vmatprep.mubr.bf16.mxu0 0
    %6499 = vmatmul.mubr.bf16.gmra.mrb[0].mxu0 %v6464
    %v6500 = vpop.f32.mrb[0].mxu0
    %v6501 = vadd.f32 %v6449, %v6500
    %v6502 = vpop.f32.mrb[0].mxu0
    %v6503 = vpop.f32.mrb[0].mxu0
    %v6504 = vadd.f32 %v6449, %v6503
    %v6505 = vpop.f32.mrb[0].mxu0
    %6506 = vdwg.mxu0
    %v6507 = vmul.f32 %v6501, %v6501
    %v6508 = vmul.f32 %v6504, %v6504
    %v6509 = vmul.f32 %v6501, %v6507
    %v6510 = vmul.f32 %v6504, %v6508
    %v6511 = vmul.f32 %v6509, 0.044715
    %v6512 = vmul.f32 %v6510, 0.044715
    %v6513 = vadd.f32 %v6501, %v6511
    %v6514 = vadd.f32 %v6504, %v6512
    %v6515 = vmul.f32 %v6513, 0.7978846
    %v6516 = vmul.f32 %v6514, 0.7978846
    %v6517 = vtanh.pop %v6515
    %v6518 = vtanh.pop %v6516
    %v6519 = vadd.f32 %v6517, 1.0
    %v6520 = vadd.f32 %v6518, 1.0
    %v6521 = vmul.f32 %v6519, 0.5
    %v6522 = vmul.f32 %v6520, 0.5
    %v6523 = vmul.f32 %v6501, %v6521
    %v6524 = vmul.f32 %v6504, %v6522
    %v6525 = vpack.c.bf16 %v6524, %v6523
    %s6526 = scalar_lea.vmem %s15, 64
    %v6527 = vld [vmem:[%s6526] sm:$0xf]
    %v6528 = vld [vmem:[%s6526 + $0x4] sm:$0xf]
    %v6529 = vld [vmem:[%s6526 + $0x8] sm:$0xf]
    %v6530 = vld [vmem:[%s6526 + $0xc] sm:$0xf]
    %v6531 = vld [vmem:[%s6526 + $0x10] sm:$0xf]
    %v6532 = vld [vmem:[%s6526 + $0x14] sm:$0xf]
    %v6533 = vld [vmem:[%s6526 + $0x18] sm:$0xf]
    %v6534 = vld [vmem:[%s6526 + $0x1c] sm:$0xf]
    %v6535 = vld [vmem:[%s6526 + $0x20] sm:$0xf]
    %v6536 = vld [vmem:[%s6526 + $0x24] sm:$0xf]
    %v6537 = vld [vmem:[%s6526 + $0x28] sm:$0xf]
    %v6538 = vld [vmem:[%s6526 + $0x2c] sm:$0xf]
    %v6539 = vld [vmem:[%s6526 + $0x30] sm:$0xf]
    %v6540 = vld [vmem:[%s6526 + $0x34] sm:$0xf]
    %v6541 = vld [vmem:[%s6526 + $0x38] sm:$0xf]
    %v6542 = vld [vmem:[%s6526 + $0x3c] sm:$0xf]
    %v6559 = vunpack.c.l.b16 %v6527
    %v6560 = vunpack.c.l.b16 %v6528
    %v6561 = vunpack.c.l.b16 %v6529
    %v6562 = vunpack.c.l.b16 %v6530
    %v6563 = vunpack.c.l.b16 %v6531
    %v6564 = vunpack.c.l.b16 %v6532
    %v6565 = vunpack.c.l.b16 %v6533
    %v6566 = vunpack.c.l.b16 %v6534
    %v6567 = vunpack.c.l.b16 %v6535
    %v6568 = vunpack.c.l.b16 %v6536
    %v6569 = vunpack.c.l.b16 %v6537
    %v6570 = vunpack.c.l.b16 %v6538
    %v6571 = vunpack.c.l.b16 %v6539
    %v6572 = vunpack.c.l.b16 %v6540
    %v6573 = vunpack.c.l.b16 %v6541
    %v6574 = vunpack.c.l.b16 %v6542
    %v6575 = vpack.c.b16 %v6560, %v6559
    %v6576 = vpack.c.b16 %v6562, %v6561
    %v6577 = vpack.c.b16 %v6564, %v6563
    %v6578 = vpack.c.b16 %v6566, %v6565
    %v6579 = vpack.c.b16 %v6568, %v6567
    %v6580 = vpack.c.b16 %v6570, %v6569
    %v6581 = vpack.c.b16 %v6572, %v6571
    %v6582 = vpack.c.b16 %v6574, %v6573
    %6591 = vmatprep.subr.bf16.mxu0 0
    %6592 = vmatpush1.bf16.msra.mxu0 %v6575
    %6593 = vmatprep.subr.bf16.mxu0 0
    %6594 = vmatpush1.bf16.msra.mxu0 %v6576
    %6595 = vmatprep.subr.bf16.mxu0 0
    %6596 = vmatpush1.bf16.msra.mxu0 %v6577
    %6597 = vmatprep.subr.bf16.mxu0 0
    %6598 = vmatpush1.bf16.msra.mxu0 %v6578
    %6599 = vmatprep.subr.bf16.mxu0 0
    %6600 = vmatpush1.bf16.msra.mxu0 %v6579
    %6601 = vmatprep.subr.bf16.mxu0 0
    %6602 = vmatpush1.bf16.msra.mxu0 %v6580
    %6603 = vmatprep.subr.bf16.mxu0 0
    %6604 = vmatpush1.bf16.msra.mxu0 %v6581
    %6605 = vmatprep.subr.bf16.mxu0 0
    %6606 = vmatpush1.bf16.msra.mxu0 %v6582
    %6607 = vmatprep.subr.bf16.mxu0 0
    %6608 = vmatpush1.bf16.msra.mxu0 0
    %6609 = vmatprep.subr.bf16.mxu0 0
    %6610 = vmatpush1.bf16.msra.mxu0 0
    %6611 = vmatprep.subr.bf16.mxu0 0
    %6612 = vmatpush1.bf16.msra.mxu0 0
    %6613 = vmatprep.subr.bf16.mxu0 0
    %6614 = vmatpush1.bf16.msra.mxu0 0
    %6615 = vmatprep.subr.bf16.mxu0 0
    %6616 = vmatpush1.bf16.msra.mxu0 0
    %6617 = vmatprep.subr.bf16.mxu0 0
    %6618 = vmatpush1.bf16.msra.mxu0 0
    %6619 = vmatprep.subr.bf16.mxu0 0
    %6620 = vmatpush1.bf16.msra.mxu0 0
    %6621 = vmatprep.subr.bf16.mxu0 0
    %6622 = vmatpush1.bf16.msra.mxu0 0
    %6623 = vmatprep.mubr.bf16.mxu0 0
    %6624 = vmatmul.mubr.bf16.gmra.mrb[0].mxu0 %v6525
    %v6625 = vpop.f32.mrb[0].mxu0
    %v6626 = vadd.f32 0.0, %v6625
    %v6627 = vpop.f32.mrb[0].mxu0
    %v6628 = vpop.f32.mrb[0].mxu0
    %v6629 = vpop.f32.mrb[0].mxu0
    %6630 = vdwg.mxu0
    %v6632 = vcombine.high %v6626, %v6626
    %v6634 = vunpack.c.l.s4 1966171168
    %v6635 = vunpack.c.0.s8 %v6634
    %v6636 = vlaneseq
    %v6637 = vshrl.u32 %v6636, 7
    %v6638 = vsub.s32 %v6635, %v6637
    %v6639 = vrot.slane %v6626, %v6638
    %v6641 = vunpack.c.l.s4 1966171168
    %v6642 = vunpack.c.0.s8 %v6641
    %v6643 = vlaneseq
    %v6644 = vshrl.u32 %v6643, 7
    %v6645 = vsub.s32 %v6642, %v6644
    %v6646 = vrot.slane %v6632, %v6645
    %v6647 = vcombine.high %v6639, %v6639
    %v6648 = vcombine.high %v6646, %v6646
    %v6650 = vunpack.c.l.s4 1966171168
    %v6651 = vunpack.c.0.s8 %v6650
    %v6652 = vlaneseq
    %v6653 = vshrl.u32 %v6652, 7
    %v6654 = vsub.s32 %v6651, %v6653
    %v6655 = vrot.slane %v6639, %v6654
    %v6657 = vunpack.c.l.s4 1966171168
    %v6658 = vunpack.c.0.s8 %v6657
    %v6659 = vlaneseq
    %v6660 = vshrl.u32 %v6659, 7
    %v6661 = vsub.s32 %v6658, %v6660
    %v6662 = vrot.slane %v6646, %v6661
    %v6664 = vunpack.c.l.s4 1966171168
    %v6665 = vunpack.c.0.s8 %v6664
    %v6666 = vlaneseq
    %v6667 = vshrl.u32 %v6666, 7
    %v6668 = vsub.s32 %v6665, %v6667
    %v6669 = vrot.slane %v6647, %v6668
    %v6671 = vunpack.c.l.s4 1966171168
    %v6672 = vunpack.c.0.s8 %v6671
    %v6673 = vlaneseq
    %v6674 = vshrl.u32 %v6673, 7
    %v6675 = vsub.s32 %v6672, %v6674
    %v6676 = vrot.slane %v6648, %v6675
    %v6677 = vcombine.high %v6655, %v6655
    %v6678 = vcombine.high %v6662, %v6662
    %v6679 = vcombine.high %v6669, %v6669
    %v6680 = vcombine.high %v6676, %v6676
    %v6689 = vadd.f32 %v5897, %v6655
    %v6690 = vadd.f32 %v5898, %v6669
    %v6691 = vadd.f32 %v5899, %v6677
    %v6692 = vadd.f32 %v5900, %v6679
    %v6693 = vadd.f32 %v5901, %v6662
    %v6694 = vadd.f32 %v5902, %v6676
    %v6695 = vadd.f32 %v5903, %v6678
    %v6696 = vadd.f32 %v5904, %v6680
    %s6697 = scalar_lea.vmem %s16, 1
    %v6698 = vld [vmem:[%s6697] sm:$0x1]
    %v6700 = vlaneseq
    %v6701 = vshrl.u32 %v6700, 7
    %v6702 = vsub.s32 0, %v6701
    %v6703 = vrot.slane %v6698, %v6702
    %v6704 = vcombine.high %v6703, %v6703
    %v6706 = vunpack.c.l.s4 1966171168
    %v6707 = vunpack.c.0.s8 %v6706
    %v6708 = vlaneseq
    %v6709 = vshrl.u32 %v6708, 7
    %v6710 = vsub.s32 %v6707, %v6709
    %v6711 = vrot.slane %v6703, %v6710
    %v6713 = vunpack.c.l.s4 1966171168
    %v6714 = vunpack.c.0.s8 %v6713
    %v6715 = vlaneseq
    %v6716 = vshrl.u32 %v6715, 7
    %v6717 = vsub.s32 %v6714, %v6716
    %v6718 = vrot.slane %v6704, %v6717
    %v6719 = vcombine.high %v6711, %v6711
    %v6720 = vcombine.high %v6718, %v6718
    %v6722 = vunpack.c.l.s4 1966171168
    %v6723 = vunpack.c.0.s8 %v6722
    %v6724 = vlaneseq
    %v6725 = vshrl.u32 %v6724, 7
    %v6726 = vsub.s32 %v6723, %v6725
    %v6727 = vrot.slane %v6711, %v6726
    %v6729 = vunpack.c.l.s4 1966171168
    %v6730 = vunpack.c.0.s8 %v6729
    %v6731 = vlaneseq
    %v6732 = vshrl.u32 %v6731, 7
    %v6733 = vsub.s32 %v6730, %v6732
    %v6734 = vrot.slane %v6718, %v6733
    %v6736 = vunpack.c.l.s4 1966171168
    %v6737 = vunpack.c.0.s8 %v6736
    %v6738 = vlaneseq
    %v6739 = vshrl.u32 %v6738, 7
    %v6740 = vsub.s32 %v6737, %v6739
    %v6741 = vrot.slane %v6719, %v6740
    %v6743 = vunpack.c.l.s4 1966171168
    %v6744 = vunpack.c.0.s8 %v6743
    %v6745 = vlaneseq
    %v6746 = vshrl.u32 %v6745, 7
    %v6747 = vsub.s32 %v6744, %v6746
    %v6748 = vrot.slane %v6720, %v6747
    %v6749 = vcombine.high %v6727, %v6727
    %v6750 = vcombine.high %v6734, %v6734
    %v6751 = vcombine.high %v6741, %v6741
    %v6752 = vcombine.high %v6748, %v6748
    %v6761 = vadd.f32 %v6689, %v6727
    %v6762 = vadd.f32 %v6690, %v6741
    %v6763 = vadd.f32 %v6691, %v6749
    %v6764 = vadd.f32 %v6692, %v6751
    %v6765 = vadd.f32 %v6693, %v6734
    %v6766 = vadd.f32 %v6694, %v6748
    %v6767 = vadd.f32 %v6695, %v6750
    %v6768 = vadd.f32 %v6696, %v6752
    %v6769 = vld [vmem:[%s17] sm:$0x1]
    %v6770 = vld [vmem:[%s18] sm:$0x1]
    %v6779 = vcombine.low %v6761, %v6762
    %v6780 = vcombine.low %v6763, %v6764
    %v6781 = vcombine.low %v6765, %v6766
    %v6782 = vcombine.low %v6767, %v6768
    %v6784 = vunpack.c.l.s4 1966171168
    %v6785 = vunpack.c.0.s8 %v6784
    %v6786 = vlaneseq
    %v6787 = vshrl.u32 %v6786, 7
    %v6788 = vsub.s32 %v6785, %v6787
    %v6789 = vrot.slane %v6779, %v6788
    %v6791 = vunpack.c.l.s4 1966171168
    %v6792 = vunpack.c.0.s8 %v6791
    %v6793 = vlaneseq
    %v6794 = vshrl.u32 %v6793, 7
    %v6795 = vsub.s32 %v6792, %v6794
    %v6796 = vrot.slane %v6780, %v6795
    %v6798 = vunpack.c.l.s4 1966171168
    %v6799 = vunpack.c.0.s8 %v6798
    %v6800 = vlaneseq
    %v6801 = vshrl.u32 %v6800, 7
    %v6802 = vsub.s32 %v6799, %v6801
    %v6803 = vrot.slane %v6781, %v6802
    %v6805 = vunpack.c.l.s4 1966171168
    %v6806 = vunpack.c.0.s8 %v6805
    %v6807 = vlaneseq
    %v6808 = vshrl.u32 %v6807, 7
    %v6809 = vsub.s32 %v6806, %v6808
    %v6810 = vrot.slane %v6782, %v6809
    %v6811 = vcombine.low %v6789, %v6796
    %v6812 = vcombine.low %v6803, %v6810
    %v6814 = vunpack.c.l.s4 1966171168
    %v6815 = vunpack.c.0.s8 %v6814
    %v6816 = vlaneseq
    %v6817 = vshrl.u32 %v6816, 7
    %v6818 = vsub.s32 %v6815, %v6817
    %v6819 = vrot.slane %v6811, %v6818
    %v6821 = vunpack.c.l.s4 1966171168
    %v6822 = vunpack.c.0.s8 %v6821
    %v6823 = vlaneseq
    %v6824 = vshrl.u32 %v6823, 7
    %v6825 = vsub.s32 %v6822, %v6824
    %v6826 = vrot.slane %v6812, %v6825
    %v6827 = vcombine.low %v6819, %v6826
    %v6829 = vsel %vm401, %v6827, 0.0
    %6830 = vadd.xlane.f32.xlu0 %v6829
    %v6831 = vpop.xlane.xlu0 %6830
    %v6832 = vmul.f32 %v6831, %v409
    %v6834 = vlaneseq
    %v6835 = vshrl.u32 %v6834, 7
    %v6836 = vsub.s32 0, %v6835
    %v6837 = vrot.slane %v6832, %v6836
    %v6838 = vlaneseq
    %v6839 = vshrl.u32 %v6838, 7
    %v6840 = vsub.s32 1, %v6839
    %v6841 = vrot.slane %v6832, %v6840
    %v6842 = vlaneseq
    %v6843 = vshrl.u32 %v6842, 7
    %v6844 = vsub.s32 2, %v6843
    %v6845 = vrot.slane %v6832, %v6844
    %v6846 = vlaneseq
    %v6847 = vshrl.u32 %v6846, 7
    %v6848 = vsub.s32 3, %v6847
    %v6849 = vrot.slane %v6832, %v6848
    %v6850 = vlaneseq
    %v6851 = vshrl.u32 %v6850, 7
    %v6852 = vsub.s32 4, %v6851
    %v6853 = vrot.slane %v6832, %v6852
    %v6854 = vlaneseq
    %v6855 = vshrl.u32 %v6854, 7
    %v6856 = vsub.s32 5, %v6855
    %v6857 = vrot.slane %v6832, %v6856
    %v6858 = vlaneseq
    %v6859 = vshrl.u32 %v6858, 7
    %v6860 = vsub.s32 6, %v6859
    %v6861 = vrot.slane %v6832, %v6860
    %v6862 = vlaneseq
    %v6863 = vshrl.u32 %v6862, 7
    %v6864 = vsub.s32 7, %v6863
    %v6865 = vrot.slane %v6832, %v6864
    %v6874 = vsub.f32 %v6761, %v6837
    %v6875 = vsub.f32 %v6762, %v6841
    %v6876 = vsub.f32 %v6763, %v6845
    %v6877 = vsub.f32 %v6764, %v6849
    %v6878 = vsub.f32 %v6765, %v6853
    %v6879 = vsub.f32 %v6766, %v6857
    %v6880 = vsub.f32 %v6767, %v6861
    %v6881 = vsub.f32 %v6768, %v6865
    %v6882 = vmul.f32 %v6874, %v6874
    %v6883 = vmul.f32 %v6875, %v6875
    %v6884 = vmul.f32 %v6876, %v6876
    %v6885 = vmul.f32 %v6877, %v6877
    %v6886 = vmul.f32 %v6878, %v6878
    %v6887 = vmul.f32 %v6879, %v6879
    %v6888 = vmul.f32 %v6880, %v6880
    %v6889 = vmul.f32 %v6881, %v6881
    %v6898 = vcombine.low %v6882, %v6883
    %v6899 = vcombine.low %v6884, %v6885
    %v6900 = vcombine.low %v6886, %v6887
    %v6901 = vcombine.low %v6888, %v6889
    %v6903 = vunpack.c.l.s4 1966171168
    %v6904 = vunpack.c.0.s8 %v6903
    %v6905 = vlaneseq
    %v6906 = vshrl.u32 %v6905, 7
    %v6907 = vsub.s32 %v6904, %v6906
    %v6908 = vrot.slane %v6898, %v6907
    %v6910 = vunpack.c.l.s4 1966171168
    %v6911 = vunpack.c.0.s8 %v6910
    %v6912 = vlaneseq
    %v6913 = vshrl.u32 %v6912, 7
    %v6914 = vsub.s32 %v6911, %v6913
    %v6915 = vrot.slane %v6899, %v6914
    %v6917 = vunpack.c.l.s4 1966171168
    %v6918 = vunpack.c.0.s8 %v6917
    %v6919 = vlaneseq
    %v6920 = vshrl.u32 %v6919, 7
    %v6921 = vsub.s32 %v6918, %v6920
    %v6922 = vrot.slane %v6900, %v6921
    %v6924 = vunpack.c.l.s4 1966171168
    %v6925 = vunpack.c.0.s8 %v6924
    %v6926 = vlaneseq
    %v6927 = vshrl.u32 %v6926, 7
    %v6928 = vsub.s32 %v6925, %v6927
    %v6929 = vrot.slane %v6901, %v6928
    %v6930 = vcombine.low %v6908, %v6915
    %v6931 = vcombine.low %v6922, %v6929
    %v6933 = vunpack.c.l.s4 1966171168
    %v6934 = vunpack.c.0.s8 %v6933
    %v6935 = vlaneseq
    %v6936 = vshrl.u32 %v6935, 7
    %v6937 = vsub.s32 %v6934, %v6936
    %v6938 = vrot.slane %v6930, %v6937
    %v6940 = vunpack.c.l.s4 1966171168
    %v6941 = vunpack.c.0.s8 %v6940
    %v6942 = vlaneseq
    %v6943 = vshrl.u32 %v6942, 7
    %v6944 = vsub.s32 %v6941, %v6943
    %v6945 = vrot.slane %v6931, %v6944
    %v6946 = vcombine.low %v6938, %v6945
    %v6948 = vsel %vm401, %v6946, 0.0
    %6949 = vadd.xlane.f32.xlu0 %v6948
    %v6950 = vpop.xlane.xlu0 %6949
    %v6951 = vmul.f32 %v6950, %v409
    %v6952 = vadd.f32 %v6951, 1e-12
    %v6953 = vrsqrt.pop %v6952
    %v6955 = vlaneseq
    %v6956 = vshrl.u32 %v6955, 7
    %v6957 = vsub.s32 0, %v6956
    %v6958 = vrot.slane %v6953, %v6957
    %v6959 = vlaneseq
    %v6960 = vshrl.u32 %v6959, 7
    %v6961 = vsub.s32 5, %v6960
    %v6962 = vrot.slane %v6953, %v6961
    %v6965 = vmul.f32 %v6874, %v6958
    %v6966 = vmul.f32 %v6879, %v6962
    %v6968 = vlaneseq
    %v6969 = vshrl.u32 %v6968, 7
    %v6970 = vsub.s32 0, %v6969
    %v6971 = vrot.slane %v6769, %v6970
    %v6972 = vcombine.high %v6971, %v6971
    %v6974 = vunpack.c.l.s4 1966171168
    %v6975 = vunpack.c.0.s8 %v6974
    %v6976 = vlaneseq
    %v6977 = vshrl.u32 %v6976, 7
    %v6978 = vsub.s32 %v6975, %v6977
    %v6979 = vrot.slane %v6971, %v6978
    %v6981 = vunpack.c.l.s4 1966171168
    %v6982 = vunpack.c.0.s8 %v6981
    %v6983 = vlaneseq
    %v6984 = vshrl.u32 %v6983, 7
    %v6985 = vsub.s32 %v6982, %v6984
    %v6986 = vrot.slane %v6972, %v6985
    %v6987 = vcombine.high %v6986, %v6986
    %v6989 = vunpack.c.l.s4 1966171168
    %v6990 = vunpack.c.0.s8 %v6989
    %v6991 = vlaneseq
    %v6992 = vshrl.u32 %v6991, 7
    %v6993 = vsub.s32 %v6990, %v6992
    %v6994 = vrot.slane %v6979, %v6993
    %v6996 = vunpack.c.l.s4 1966171168
    %v6997 = vunpack.c.0.s8 %v6996
    %v6998 = vlaneseq
    %v6999 = vshrl.u32 %v6998, 7
    %v7000 = vsub.s32 %v6997, %v6999
    %v7001 = vrot.slane %v6987, %v7000
    %v7004 = vmul.f32 %v6965, %v6994
    %v7005 = vmul.f32 %v6966, %v7001
    %v7007 = vlaneseq
    %v7008 = vshrl.u32 %v7007, 7
    %v7009 = vsub.s32 0, %v7008
    %v7010 = vrot.slane %v6770, %v7009
    %v7011 = vcombine.high %v7010, %v7010
    %v7013 = vunpack.c.l.s4 1966171168
    %v7014 = vunpack.c.0.s8 %v7013
    %v7015 = vlaneseq
    %v7016 = vshrl.u32 %v7015, 7
    %v7017 = vsub.s32 %v7014, %v7016
    %v7018 = vrot.slane %v7010, %v7017
    %v7020 = vunpack.c.l.s4 1966171168
    %v7021 = vunpack.c.0.s8 %v7020
    %v7022 = vlaneseq
    %v7023 = vshrl.u32 %v7022, 7
    %v7024 = vsub.s32 %v7021, %v7023
    %v7025 = vrot.slane %v7011, %v7024
    %v7026 = vcombine.high %v7025, %v7025
    %v7028 = vunpack.c.l.s4 1966171168
    %v7029 = vunpack.c.0.s8 %v7028
    %v7030 = vlaneseq
    %v7031 = vshrl.u32 %v7030, 7
    %v7032 = vsub.s32 %v7029, %v7031
    %v7033 = vrot.slane %v7018, %v7032
    %v7035 = vunpack.c.l.s4 1966171168
    %v7036 = vunpack.c.0.s8 %v7035
    %v7037 = vlaneseq
    %v7038 = vshrl.u32 %v7037, 7
    %v7039 = vsub.s32 %v7036, %v7038
    %v7040 = vrot.slane %v7026, %v7039
    %v7043 = vadd.f32 %v7004, %v7033
    %v7044 = vadd.f32 %v7005, %v7040
    %v7045 = vpack.c.bf16 %v7043, %v7043
    %v7046 = vpack.c.bf16 %v7044, %v7044
    %v7047 = vld [vmem:[%s19] sm:$0xf]
    %v7048 = vld [vmem:[%s19 + $0x4] sm:$0xf]
    %v7049 = vld [vmem:[%s19 + $0x8] sm:$0xf]
    %v7050 = vld [vmem:[%s19 + $0xc] sm:$0xf]
    %v7051 = vld [vmem:[%s20] sm:$0x1]
    %v7053 = vlaneseq
    %v7054 = vshrl.u32 %v7053, 7
    %v7055 = vsub.s32 0, %v7054
    %v7056 = vrot.slane %v7051, %v7055
    %v7060 = vunpack.c.l.b16 %v7045
    %v7061 = vunpack.c.l.b16 %v7046
    %v7062 = vrot.slane %v7061, 7
    %vm7063 = vcmask 1041409
    %v7064 = vsel %vm7063, %v7062, %v7060
    %v7065 = vpack.c.b16 %v7064, %v7064
    %v7070 = vunpack.c.l.b16 %v7047
    %v7071 = vunpack.c.l.b16 %v7048
    %v7072 = vunpack.c.l.b16 %v7049
    %v7073 = vunpack.c.l.b16 %v7050
    %v7074 = vpack.c.b16 %v7071, %v7070
    %v7075 = vpack.c.b16 %v7073, %v7072
    %v7079 = vsel %vm401, %v7065, 0
    %7081 = vmatprep.subr.bf16.mxu0 0
    %7082 = vmatpush1.bf16.msra.mxu0 %v7074
    %7083 = vmatprep.subr.bf16.mxu0 0
    %7084 = vmatpush1.bf16.msra.mxu0 %v7075
    %7085 = vmatprep.subr.bf16.mxu0 0
    %7086 = vmatpush1.bf16.msra.mxu0 0
    %7087 = vmatprep.subr.bf16.mxu0 0
    %7088 = vmatpush1.bf16.msra.mxu0 0
    %7089 = vmatprep.subr.bf16.mxu0 0
    %7090 = vmatpush1.bf16.msra.mxu0 0
    %7091 = vmatprep.subr.bf16.mxu0 0
    %7092 = vmatpush1.bf16.msra.mxu0 0
    %7093 = vmatprep.subr.bf16.mxu0 0
    %7094 = vmatpush1.bf16.msra.mxu0 0
    %7095 = vmatprep.subr.bf16.mxu0 0
    %7096 = vmatpush1.bf16.msra.mxu0 0
    %7097 = vmatprep.subr.bf16.mxu0 0
    %7098 = vmatpush1.bf16.msra.mxu0 0
    %7099 = vmatprep.subr.bf16.mxu0 0
    %7100 = vmatpush1.bf16.msra.mxu0 0
    %7101 = vmatprep.subr.bf16.mxu0 0
    %7102 = vmatpush1.bf16.msra.mxu0 0
    %7103 = vmatprep.subr.bf16.mxu0 0
    %7104 = vmatpush1.bf16.msra.mxu0 0
    %7105 = vmatprep.subr.bf16.mxu0 0
    %7106 = vmatpush1.bf16.msra.mxu0 0
    %7107 = vmatprep.subr.bf16.mxu0 0
    %7108 = vmatpush1.bf16.msra.mxu0 0
    %7109 = vmatprep.subr.bf16.mxu0 0
    %7110 = vmatpush1.bf16.msra.mxu0 0
    %7111 = vmatprep.subr.bf16.mxu0 0
    %7112 = vmatpush1.bf16.msra.mxu0 0
    %7113 = vmatprep.mubr.bf16.mxu0 0
    %7114 = vmatmul.mubr.bf16.gmra.mrb[0].mxu0 %v7079
    %v7115 = vpop.f32.mrb[0].mxu0
    %v7116 = vadd.f32 %v7056, %v7115
    %v7117 = vpop.f32.mrb[0].mxu0
    %v7118 = vpop.f32.mrb[0].mxu0
    %v7119 = vpop.f32.mrb[0].mxu0
    %7120 = vdwg.mxu0
    %v7121 = vtanh.pop %v7116
    %v7122 = vpack.c.bf16 %v7121, %v7121
    %v7123 = vld [vmem:[%s21] sm:$0xff]
    %v7124 = vld [vmem:[%s21 + $0x8] sm:$0xf]
    %v7125 = vld [vmem:[%s21 + $0xc] sm:$0xff]
    %v7126 = vld [vmem:[%s21 + $0x14] sm:$0xf]
    %v7127 = vld [vmem:[%s21 + $0x18] sm:$0xff]
    %v7128 = vld [vmem:[%s21 + $0x20] sm:$0xf]
    %v7129 = vld [vmem:[%s21 + $0x24] sm:$0xff]
    %v7130 = vld [vmem:[%s21 + $0x2c] sm:$0xf]
    %v7131 = vld [vmem:[%s22] sm:$0x7]
    %v7133 = vlaneseq
    %v7134 = vshrl.u32 %v7133, 7
    %v7135 = vsub.s32 0, %v7134
    %v7136 = vrot.slane %v7131, %v7135
    %v7137 = vlaneseq
    %v7138 = vshrl.u32 %v7137, 7
    %v7139 = vsub.s32 1, %v7138
    %v7140 = vrot.slane %v7131, %v7139
    %v7141 = vlaneseq
    %v7142 = vshrl.u32 %v7141, 7
    %v7143 = vsub.s32 2, %v7142
    %v7144 = vrot.slane %v7131, %v7143
    %v7156 = vunpack.c.l.b16 %v7123
    %v7157 = vunpack.c.h.b16 %v7123
    %v7158 = vunpack.c.l.b16 %v7124
    %v7159 = vunpack.c.l.b16 %v7125
    %v7160 = vunpack.c.h.b16 %v7125
    %v7161 = vunpack.c.l.b16 %v7126
    %v7162 = vunpack.c.l.b16 %v7127
    %v7163 = vunpack.c.h.b16 %v7127
    %v7164 = vunpack.c.l.b16 %v7128
    %v7165 = vunpack.c.l.b16 %v7129
    %v7166 = vunpack.c.h.b16 %v7129
    %v7167 = vunpack.c.l.b16 %v7130
    %v7168 = vpack.c.b16 %v7159, %v7156
    %v7169 = vpack.c.b16 %v7160, %v7157
    %v7170 = vpack.c.b16 %v7161, %v7158
    %v7171 = vpack.c.b16 %v7165, %v7162
    %v7172 = vpack.c.b16 %v7166, %v7163
    %v7173 = vpack.c.b16 %v7167, %v7164
    %v7181 = vsel %vm401, %v7122, 0
    %7183 = vmatprep.subr.bf16.mxu0 %v7169
    %7184 = vmatpush1.bf16.msra.mxu0 %v7168
    %7185 = vmatprep.subr.bf16.mxu0 %v7172
    %7186 = vmatpush1.bf16.msra.mxu0 %v7171
    %7187 = vmatprep.subr.bf16.mxu0 0
    %7188 = vmatpush1.bf16.msra.mxu0 0
    %7189 = vmatprep.subr.bf16.mxu0 0
    %7190 = vmatpush1.bf16.msra.mxu0 0
    %7191 = vmatprep.subr.bf16.mxu0 0
    %7192 = vmatpush1.bf16.msra.mxu0 0
    %7193 = vmatprep.subr.bf16.mxu0 0
    %7194 = vmatpush1.bf16.msra.mxu0 0
    %7195 = vmatprep.subr.bf16.mxu0 0
    %7196 = vmatpush1.bf16.msra.mxu0 0
    %7197 = vmatprep.subr.bf16.mxu0 0
    %7198 = vmatpush1.bf16.msra.mxu0 0
    %7199 = vmatprep.subr.bf16.mxu0 0
    %7200 = vmatpush1.bf16.msra.mxu0 0
    %7201 = vmatprep.subr.bf16.mxu0 0
    %7202 = vmatpush1.bf16.msra.mxu0 0
    %7203 = vmatprep.subr.bf16.mxu0 0
    %7204 = vmatpush1.bf16.msra.mxu0 0
    %7205 = vmatprep.subr.bf16.mxu0 0
    %7206 = vmatpush1.bf16.msra.mxu0 0
    %7207 = vmatprep.subr.bf16.mxu0 0
    %7208 = vmatpush1.bf16.msra.mxu0 0
    %7209 = vmatprep.subr.bf16.mxu0 0
    %7210 = vmatpush1.bf16.msra.mxu0 0
    %7211 = vmatprep.subr.bf16.mxu0 0
    %7212 = vmatpush1.bf16.msra.mxu0 0
    %7213 = vmatprep.subr.bf16.mxu0 0
    %7214 = vmatpush1.bf16.msra.mxu0 0
    %7215 = vmatprep.mubr.bf16.mxu0 0
    %7216 = vmatmul.mubr.bf16.gmra.mrb[0].mxu0 %v7181
    %v7217 = vpop.f32.mrb[0].mxu0
    %v7218 = vadd.f32 %v7136, %v7217
    %v7219 = vpop.f32.mrb[0].mxu0
    %v7220 = vadd.f32 %v7140, %v7219
    %v7221 = vpop.f32.mrb[0].mxu0
    %v7222 = vpop.f32.mrb[0].mxu0
    %7223 = vdwg.mxu0
    %7224 = vmatprep.subr.bf16.mxu0 0
    %7225 = vmatpush1.bf16.msra.mxu0 %v7170
    %7226 = vmatprep.subr.bf16.mxu0 0
    %7227 = vmatpush1.bf16.msra.mxu0 %v7173
    %7228 = vmatprep.subr.bf16.mxu0 0
    %7229 = vmatpush1.bf16.msra.mxu0 0
    %7230 = vmatprep.subr.bf16.mxu0 0
    %7231 = vmatpush1.bf16.msra.mxu0 0
    %7232 = vmatprep.subr.bf16.mxu0 0
    %7233 = vmatpush1.bf16.msra.mxu0 0
    %7234 = vmatprep.subr.bf16.mxu0 0
    %7235 = vmatpush1.bf16.msra.mxu0 0
    %7236 = vmatprep.subr.bf16.mxu0 0
    %7237 = vmatpush1.bf16.msra.mxu0 0
    %7238 = vmatprep.subr.bf16.mxu0 0
    %7239 = vmatpush1.bf16.msra.mxu0 0
    %7240 = vmatprep.subr.bf16.mxu0 0
    %7241 = vmatpush1.bf16.msra.mxu0 0
    %7242 = vmatprep.subr.bf16.mxu0 0
    %7243 = vmatpush1.bf16.msra.mxu0 0
    %7244 = vmatprep.subr.bf16.mxu0 0
    %7245 = vmatpush1.bf16.msra.mxu0 0
    %7246 = vmatprep.subr.bf16.mxu0 0
    %7247 = vmatpush1.bf16.msra.mxu0 0
    %7248 = vmatprep.subr.bf16.mxu0 0
    %7249 = vmatpush1.bf16.msra.mxu0 0
    %7250 = vmatprep.subr.bf16.mxu0 0
    %7251 = vmatpush1.bf16.msra.mxu0 0
    %7252 = vmatprep.subr.bf16.mxu0 0
    %7253 = vmatpush1.bf16.msra.mxu0 0
    %7254 = vmatprep.subr.bf16.mxu0 0
    %7255 = vmatpush1.bf16.msra.mxu0 0
    %7256 = vmatprep.mubr.bf16.mxu0 0
    %7257 = vmatmul.mubr.bf16.gmra.mrb[0].mxu0 %v7181
    %v7258 = vpop.f32.mrb[0].mxu0
    %v7259 = vadd.f32 %v7144, %v7258
    %v7260 = vpop.f32.mrb[0].mxu0
    %v7261 = vpop.f32.mrb[0].mxu0
    %v7262 = vpop.f32.mrb[0].mxu0
    %7263 = vdwg.mxu0
    %v7267 = vcombine.low %v7218, %v7220
    %v7269 = vunpack.c.l.s4 1983009808
    %v7270 = vunpack.c.0.s8 %v7269
    %v7271 = vlaneseq
    %v7272 = vshrl.u32 %v7271, 7
    %v7273 = vsub.s32 %v7270, %v7272
    %v7274 = vrot.slane %v7267, %v7273
    %v7276 = vunpack.c.l.s4 1983009808
    %v7277 = vunpack.c.0.s8 %v7276
    %v7278 = vlaneseq
    %v7279 = vshrl.u32 %v7278, 7
    %v7280 = vsub.s32 %v7277, %v7279
    %v7281 = vrot.slane %v7259, %v7280
    %v7282 = vcombine.low %v7274, %v7281
    %7284 = vst [vmem:[#allocation2] sm:$0x3f] %v7282
    // Predicated region
    $region94: #{hf_vit_forward.1} parent=1 // pred_check
      _
    $region95: #{hf_vit_forward.1} parent=1 // pred_check_branch
      %7286 = sbr.rel (0) target = $region97
    $region96: #{hf_vit_forward.1} parent=1 // pred_region
      %s7288 = ssub.s32 96, 96
      %7289 = vsyncadd [#allocation3], %s7288
      %s7291 = sshll.u32 [#allocation2], 4
      %s7292 = int_to_ptr.vmem [resolvable:$true] %s7291
      %7294 = dma.vmem_to_hbm [thread:$0]  %s7292, 96, %s23, [#allocation3]
    $region97: #{hf_vit_forward.1} parent=1 // pred_fallthru
      _
    // Predicated region
    $region98: #{hf_vit_forward.1} parent=1 // pred_check
      _
    $region99: #{hf_vit_forward.1} parent=1 // pred_check_branch
      %7296 = sbr.rel (0) target = $region101
    $region100: #{hf_vit_forward.1} parent=1 // pred_region
      %7297 = dma.done [#allocation3], 96
    $region101: #{hf_vit_forward.1} parent=1 // pred_fallthru
      _
    %7298 = vsyncpa [#allocation3], 1

</llo_original>
